<compile_context>
chip_gen: v6e
topology: v6e:2x2x1
jax: 0.10.0
libtpu: 0.0.40
codegen_flags: <defaults>
</compile_context>

<pallas_src>
import math

import jax
import jax.numpy as jnp
from jax import lax  # noqa: F401
from jax.experimental import pallas as pl
from jax.experimental.pallas import tpu as pltpu

D_PAD = 384   # 3 * 128: contraction-aligned input size (logical D = 300)
H_PAD = 384   # 3 * 128: lane-aligned hidden size       (logical H = 300)
F_PAD = 512   # 4 * 128: lane-aligned fc size           (logical F = 400)


# --------------------------- fused encoder kernel ---------------------------
def encoder_kernel(x_ref, wih_ref, b_ref, whh_hbm, wfc_hbm, bfc_ref,
                   out_ref, htfc_ref, ct_ref,
                   gx_ref, whh_vmem, wfc_vmem, sem):
    """Fused LSTM over S steps + Linear on the final hidden state.

    x_ref:   (S*B, Dp) f32   row t*B + b is x[b, t], zero-padded D -> Dp
    wih_ref: (Dp, 4*Hp) bf16 gate order (i, f, g, o); g columns pre-scaled x2
    b_ref:   (1, 4*Hp)  f32  same gate order / scaling
    whh_hbm: (Hp, 4*Hp) bf16 left in HBM, manually DMA'd (overlapped)
    wfc_hbm: (Hp, Fp)   bf16 left in HBM, manually DMA'd (overlapped)
    bfc_ref: (1, Fp)    f32
    out_ref: (S*B, Hp) f32;  htfc_ref: (B, Fp) f32;  ct_ref: (B, Hp) f32
    Padded lanes of h/c stay exactly zero (zero weights/bias in padded cols).
    """
    SB, _ = x_ref.shape
    Hp = whh_vmem.shape[0]
    B = ct_ref.shape[0]
    S = SB // B

    # Kick off the recurrent / fc weight DMAs; hidden behind the input proj.
    whh_cp = pltpu.make_async_copy(whh_hbm, whh_vmem, sem.at[0])
    wfc_cp = pltpu.make_async_copy(wfc_hbm, wfc_vmem, sem.at[1])
    whh_cp.start()
    wfc_cp.start()

    # Hoisted input projection (+ bias): ONE (S*B, Dp) x (Dp, 4*Hp) matmul.
    gx_ref[...] = (jnp.dot(x_ref[...].astype(jnp.bfloat16), wih_ref[...],
                           preferred_element_type=jnp.float32)
                   + b_ref[...])

    def gate_math(gates, c):
        # One sigmoid pass over the whole (B, 4*Hp) slab; the g gate was
        # pre-scaled by 2, so tanh(x) = 2*sigmoid(2x) - 1 recovers it.
        s = jax.nn.sigmoid(gates)
        i_g = s[:, 0 * Hp:1 * Hp]
        f_g = s[:, 1 * Hp:2 * Hp]
        g_g = 2.0 * s[:, 2 * Hp:3 * Hp] - 1.0
        o_g = s[:, 3 * Hp:4 * Hp]
        c_new = f_g * c + i_g * g_g
        h_new = o_g * jnp.tanh(c_new)
        return h_new, c_new

    # Step 0: h0 = c0 = 0 -> no recurrent matmul; runs before the whh wait.
    c0 = jnp.zeros((B, Hp), jnp.float32)
    h, c = gate_math(gx_ref[0:B, :], c0)
    out_ref[0:B, :] = h.astype(out_ref.dtype)

    whh_cp.wait()
    whh = whh_vmem[...]          # loaded once, reused every step

    # Remaining steps, fully unrolled (S small & static -> static slices).
    for t in range(1, S):
        gates = (gx_ref[t * B:(t + 1) * B, :]
                 + jnp.dot(h.astype(jnp.bfloat16), whh,
                           preferred_element_type=jnp.float32))
        h, c = gate_math(gates, c)
        out_ref[t * B:(t + 1) * B, :] = h.astype(out_ref.dtype)

    ct_ref[...] = c.astype(ct_ref.dtype)

    # Fused fc_lstm on the final hidden state.
    wfc_cp.wait()
    htfc_ref[...] = (jnp.dot(h.astype(jnp.bfloat16), wfc_vmem[...],
                             preferred_element_type=jnp.float32)
                     + bfc_ref[...]).astype(htfc_ref.dtype)


# ------------------------------ param packing -------------------------------
def init_params(key, D=300, H=300, F=400):
    """PyTorch-style per-gate parameters (gate order i, f, g, o)."""
    ks = jax.random.split(key, 6)
    bound = 1.0 / math.sqrt(H)
    wih = jax.random.uniform(ks[0], (4, D, H), jnp.float32, -bound, bound)
    whh = jax.random.uniform(ks[1], (4, H, H), jnp.float32, -bound, bound)
    b_ih = jax.random.uniform(ks[2], (4, 1, H), jnp.float32, -bound, bound)
    b_hh = jax.random.uniform(ks[3], (4, 1, H), jnp.float32, -bound, bound)
    wfc = jax.random.uniform(ks[4], (H, F), jnp.float32, -bound, bound)
    bfc = jax.random.uniform(ks[5], (1, F), jnp.float32, -bound, bound)
    return {"wih": wih, "whh": whh, "b": b_ih + b_hh, "wfc": wfc, "bfc": bfc}


def pack_params(params, Dp=D_PAD, Hp=H_PAD, Fp=F_PAD):
    """Fuse the 4 gates, zero-pad D/H/F, pre-scale g-gate by 2, cast to bf16."""
    wih, whh, b = params["wih"], params["whh"], params["b"]
    wfc, bfc = params["wfc"], params["bfc"]
    G, D, H = wih.shape
    F = wfc.shape[-1]

    # Scale the g (cell-candidate) gate by 2 so the kernel can use a single
    # sigmoid pass (tanh(x) = 2*sigmoid(2x) - 1). Power-of-two scale costs
    # no bf16 precision.
    gate_scale = jnp.array([1.0, 1.0, 2.0, 1.0], jnp.float32).reshape(G, 1, 1)
    wih_s, whh_s, b_s = wih * gate_scale, whh * gate_scale, b * gate_scale

    wih_p = jnp.zeros((Dp, G, Hp), jnp.float32).at[:D, :, :H].set(
        jnp.transpose(wih_s, (1, 0, 2)))
    whh_p = jnp.zeros((Hp, G, Hp), jnp.float32).at[:H, :, :H].set(
        jnp.transpose(whh_s, (1, 0, 2)))
    b_p = jnp.zeros((G, Hp), jnp.float32).at[:, :H].set(b_s[:, 0, :])
    wfc_p = jnp.zeros((Hp, Fp), jnp.float32).at[:H, :F].set(wfc)
    bfc_p = jnp.zeros((1, Fp), jnp.float32).at[:, :F].set(bfc)

    return {
        "wih": wih_p.reshape(Dp, G * Hp).astype(jnp.bfloat16),
        "whh": whh_p.reshape(Hp, G * Hp).astype(jnp.bfloat16),
        "b": b_p.reshape(1, G * Hp),
        "wfc": wfc_p.astype(jnp.bfloat16),
        "bfc": bfc_p,
        "H": H,
        "F": F,
    }


# --------------------------------- wrapper -----------------------------------
def lstm_encoder(x, kp):
    """x: (B, S, D) float32 batch-first (PyTorch convention).

    Returns PyTorch-shaped results:
      out: (B, S, 300), ht: (1, B, 400)  (after fc_lstm), ct: (1, B, 300)
    """
    B, S, D = x.shape
    H, F = kp["H"], kp["F"]
    Dp = kp["wih"].shape[0]
    Hp = kp["whh"].shape[0]
    Fp = kp["wfc"].shape[-1]

    # time-major flattened rows: row t*B + b == x[b, t]; zero-pad D -> Dp.
    x_tm = jnp.transpose(x, (1, 0, 2)).reshape(S * B, D)
    x_pad = jnp.zeros((S * B, Dp), x.dtype).at[:, :D].set(x_tm)

    out_flat, htfc, ct = pl.pallas_call(
        encoder_kernel,
        out_shape=(
            jax.ShapeDtypeStruct((S * B, Hp), x.dtype),
            jax.ShapeDtypeStruct((B, Fp), x.dtype),
            jax.ShapeDtypeStruct((B, Hp), x.dtype),
        ),
        in_specs=[
            pl.BlockSpec(memory_space=pltpu.MemorySpace.VMEM),   # x (padded)
            pl.BlockSpec(memory_space=pltpu.MemorySpace.VMEM),   # wih
            pl.BlockSpec(memory_space=pltpu.MemorySpace.VMEM),   # b
            pl.BlockSpec(memory_space=pl.ANY),                   # whh: manual DMA
            pl.BlockSpec(memory_space=pl.ANY),                   # wfc: manual DMA
            pl.BlockSpec(memory_space=pltpu.MemorySpace.VMEM),   # bfc
        ],
        out_specs=(
            pl.BlockSpec(memory_space=pltpu.MemorySpace.VMEM),
            pl.BlockSpec(memory_space=pltpu.MemorySpace.VMEM),
            pl.BlockSpec(memory_space=pltpu.MemorySpace.VMEM),
        ),
        scratch_shapes=[
            pltpu.VMEM((S * B, 4 * Hp), jnp.float32),   # hoisted gates_x
            pltpu.VMEM((Hp, 4 * Hp), jnp.bfloat16),     # whh staged in VMEM
            pltpu.VMEM((Hp, Fp), jnp.bfloat16),         # wfc staged in VMEM
            pltpu.SemaphoreType.DMA((2,)),
        ],
        # Single invocation (no grid): ~3 MB VMEM footprint, weights loaded
        # exactly once.  TODO(synk): at large effective batch, add a
        # 'parallel' grid axis over B so v7x's second TensorCore is used.
    )(x_pad, kp["wih"], kp["b"], kp["whh"], kp["wfc"], kp["bfc"])

    out = jnp.transpose(out_flat[:, :H].reshape(S, B, H), (1, 0, 2))  # (B,S,H)
    return out, htfc[None, :, :F], ct[None, :, :H]


# --------------------------- pure-JAX reference ------------------------------
def ref_encoder(x, params):
    B, S, D = x.shape
    H = params["whh"].shape[-1]
    wih, whh, b = params["wih"], params["whh"], params["b"]
    h = jnp.zeros((B, H), jnp.float32)
    c = jnp.zeros((B, H), jnp.float32)
    outs = []
    for t in range(S):
        xt = x[:, t]
        i_g = jax.nn.sigmoid(xt @ wih[0] + h @ whh[0] + b[0])
        f_g = jax.nn.sigmoid(xt @ wih[1] + h @ whh[1] + b[1])
        g_g = jnp.tanh(xt @ wih[2] + h @ whh[2] + b[2])
        o_g = jax.nn.sigmoid(xt @ wih[3] + h @ whh[3] + b[3])
        c = f_g * c + i_g * g_g
        h = o_g * jnp.tanh(c)
        outs.append(h)
    out = jnp.stack(outs, axis=1)
    ht = h @ params["wfc"] + params["bfc"]
    return out, ht[None], c[None]


if __name__ == "__main__":
    key = jax.random.PRNGKey(0)
    k_x, k_p = jax.random.split(key)

    B, S, D = 2, 8, 300
    x = jax.random.normal(k_x, (B, S, D), jnp.float32)
    params = init_params(k_p, D=D, H=300, F=400)
    kparams = pack_params(params)

    out, ht, ct = jax.block_until_ready(lstm_encoder(x, kparams))

    assert out.shape == (B, S, 300)
    assert ht.shape == (1, B, 400)
    assert ct.shape == (1, B, 300)

    r_out, r_ht, r_ct = ref_encoder(x, params)
    assert jnp.allclose(out, r_out, rtol=1e-2, atol=1e-2)
    assert jnp.allclose(ht, r_ht, rtol=1e-2, atol=1e-2)
    assert jnp.allclose(ct, r_ct, rtol=1e-2, atol=1e-2)

    print("KERNEL_OK")
</pallas_src>

<mosaic_0001>
module attributes {stable_mosaic.version = 11 : i64} {
  func.func @encoder_kernel(%arg0: memref<16x384xf32, #tpu.memory_space<vmem>>, %arg1: memref<384x1536xbf16, #tpu.memory_space<vmem>>, %arg2: memref<1x1536xf32, #tpu.memory_space<vmem>>, %arg3: memref<384x1536xbf16, #tpu.memory_space<any>>, %arg4: memref<384x512xbf16, #tpu.memory_space<any>>, %arg5: memref<1x512xf32, #tpu.memory_space<vmem>>, %arg6: memref<16x384xf32, #tpu.memory_space<vmem>>, %arg7: memref<2x512xf32, #tpu.memory_space<vmem>>, %arg8: memref<2x384xf32, #tpu.memory_space<vmem>>, %arg9: memref<16x1536xf32, #tpu.memory_space<vmem>>, %arg10: memref<384x1536xbf16, #tpu.memory_space<vmem>>, %arg11: memref<384x512xbf16, #tpu.memory_space<vmem>>, %arg12: memref<2x!tpu.dma_semaphore, #tpu.memory_space<semaphore_mem>>) attributes {dimension_semantics = [], scalar_prefetch = 0 : i64, scratch_operands = 4 : i64, tpu.core_type = #tpu.core_type<tc>} {
    %c0_i32 = arith.constant 0 : i32
    %0 = tpu.memref_slice %arg12[%c0_i32] : memref<2x!tpu.dma_semaphore, #tpu.memory_space<semaphore_mem>> -> memref<1x!tpu.dma_semaphore, #tpu.memory_space<semaphore_mem>>
    %1 = tpu.memref_squeeze %0 : memref<1x!tpu.dma_semaphore, #tpu.memory_space<semaphore_mem>> -> memref<!tpu.dma_semaphore, #tpu.memory_space<semaphore_mem>>
    tpu.enqueue_dma source(%arg3 : memref<384x1536xbf16, #tpu.memory_space<any>>) target(%arg10 : memref<384x1536xbf16, #tpu.memory_space<vmem>>) target_semaphore(%1 : memref<!tpu.dma_semaphore, #tpu.memory_space<semaphore_mem>>)
    %c1_i32 = arith.constant 1 : i32
    %2 = tpu.memref_slice %arg12[%c1_i32] : memref<2x!tpu.dma_semaphore, #tpu.memory_space<semaphore_mem>> -> memref<1x!tpu.dma_semaphore, #tpu.memory_space<semaphore_mem>>
    %3 = tpu.memref_squeeze %2 : memref<1x!tpu.dma_semaphore, #tpu.memory_space<semaphore_mem>> -> memref<!tpu.dma_semaphore, #tpu.memory_space<semaphore_mem>>
    tpu.enqueue_dma source(%arg4 : memref<384x512xbf16, #tpu.memory_space<any>>) target(%arg11 : memref<384x512xbf16, #tpu.memory_space<vmem>>) target_semaphore(%3 : memref<!tpu.dma_semaphore, #tpu.memory_space<semaphore_mem>>)
    %c0 = arith.constant 0 : index
    %c0_0 = arith.constant 0 : index
    %4 = vector.load %arg0[%c0, %c0_0] : memref<16x384xf32, #tpu.memory_space<vmem>>, vector<16x384xf32>
    %5 = arith.truncf %4 : vector<16x384xf32> to vector<16x384xbf16>
    %c0_1 = arith.constant 0 : index
    %c0_2 = arith.constant 0 : index
    %6 = vector.load %arg1[%c0_1, %c0_2] : memref<384x1536xbf16, #tpu.memory_space<vmem>>, vector<384x1536xbf16>
    %cst = arith.constant dense<0.000000e+00> : vector<16x1536xf32>
    %7 = tpu.matmul %5, %6, %cst {dimension_numbers = #tpu.dot_dimension_numbers<[1], [0], [0], [1], [0, 0, 1, 1], [], []>} : vector<16x384xbf16>, vector<384x1536xbf16>, vector<16x1536xf32> -> vector<16x1536xf32>
    %c0_3 = arith.constant 0 : index
    %c0_4 = arith.constant 0 : index
    %8 = vector.load %arg2[%c0_3, %c0_4] : memref<1x1536xf32, #tpu.memory_space<vmem>>, vector<1x1536xf32>
    %9 = vector.broadcast %8 : vector<1x1536xf32> to vector<16x1536xf32>
    %10 = arith.addf %7, %9 : vector<16x1536xf32>
    %c0_5 = arith.constant 0 : index
    %c0_6 = arith.constant 0 : index
    %11 = vector.load %arg9[%c0_5, %c0_6] : memref<16x1536xf32, #tpu.memory_space<vmem>>, vector<16x1536xf32>
    tpu.vector_store %arg9[%c0_5, %c0_6], %10 {strides = array<i32>} : memref<16x1536xf32, #tpu.memory_space<vmem>>, vector<16x1536xf32>,
    %cst_7 = arith.constant 0.000000e+00 : f32
    %12 = vector.broadcast %cst_7 : f32 to vector<2x384xf32>
    %c0_8 = arith.constant 0 : index
    %c0_9 = arith.constant 0 : index
    %13 = vector.load %arg9[%c0_8, %c0_9] : memref<16x1536xf32, #tpu.memory_space<vmem>>, vector<2x1536xf32>
    %14 = arith.negf %13 : vector<2x1536xf32>
    %15 = math.exp %14 : vector<2x1536xf32>
    %cst_10 = arith.constant 1.000000e+00 : f32
    %16 = vector.broadcast %cst_10 : f32 to vector<2x1536xf32>
    %17 = arith.addf %16, %15 : vector<2x1536xf32>
    %18 = arith.divf %16, %17 : vector<2x1536xf32>
    %19 = vector.extract_strided_slice %18 {offsets = [0, 0], sizes = [2, 384], strides = [1, 1]} : vector<2x1536xf32> to vector<2x384xf32>
    %20 = vector.extract_strided_slice %18 {offsets = [0, 384], sizes = [2, 384], strides = [1, 1]} : vector<2x1536xf32> to vector<2x384xf32>
    %21 = vector.extract_strided_slice %18 {offsets = [0, 768], sizes = [2, 384], strides = [1, 1]} : vector<2x1536xf32> to vector<2x384xf32>
    %cst_11 = arith.constant 2.000000e+00 : f32
    %22 = vector.broadcast %cst_11 : f32 to vector<2x384xf32>
    %23 = arith.mulf %22, %21 : vector<2x384xf32>
    %cst_12 = arith.constant 1.000000e+00 : f32
    %24 = vector.broadcast %cst_12 : f32 to vector<2x384xf32>
    %25 = arith.subf %23, %24 : vector<2x384xf32>
    %26 = vector.extract_strided_slice %18 {offsets = [0, 1152], sizes = [2, 384], strides = [1, 1]} : vector<2x1536xf32> to vector<2x384xf32>
    %27 = arith.mulf %20, %12 : vector<2x384xf32>
    %28 = arith.mulf %19, %25 : vector<2x384xf32>
    %29 = arith.addf %27, %28 : vector<2x384xf32>
    %30 = math.tanh %29 : vector<2x384xf32>
    %31 = arith.mulf %26, %30 : vector<2x384xf32>
    %c0_13 = arith.constant 0 : index
    %c0_14 = arith.constant 0 : index
    %32 = vector.load %arg6[%c0_13, %c0_14] : memref<16x384xf32, #tpu.memory_space<vmem>>, vector<2x384xf32>
    tpu.vector_store %arg6[%c0_13, %c0_14], %31 {strides = array<i32>} : memref<16x384xf32, #tpu.memory_space<vmem>>, vector<2x384xf32>,
    %c0_i32_15 = arith.constant 0 : i32
    %33 = tpu.memref_slice %arg12[%c0_i32_15] : memref<2x!tpu.dma_semaphore, #tpu.memory_space<semaphore_mem>> -> memref<1x!tpu.dma_semaphore, #tpu.memory_space<semaphore_mem>>
    %34 = tpu.memref_squeeze %33 : memref<1x!tpu.dma_semaphore, #tpu.memory_space<semaphore_mem>> -> memref<!tpu.dma_semaphore, #tpu.memory_space<semaphore_mem>>
    tpu.wait_dma2 semaphore(%34 : memref<!tpu.dma_semaphore, #tpu.memory_space<semaphore_mem>>) src(%arg3 : memref<384x1536xbf16, #tpu.memory_space<any>>) dst(%arg10 : memref<384x1536xbf16, #tpu.memory_space<vmem>>)
    %c0_16 = arith.constant 0 : index
    %c0_17 = arith.constant 0 : index
    %35 = vector.load %arg10[%c0_16, %c0_17] : memref<384x1536xbf16, #tpu.memory_space<vmem>>, vector<384x1536xbf16>
    %c2 = arith.constant 2 : index
    %c0_18 = arith.constant 0 : index
    %36 = vector.load %arg9[%c2, %c0_18] : memref<16x1536xf32, #tpu.memory_space<vmem>>, vector<2x1536xf32>
    %37 = arith.truncf %31 : vector<2x384xf32> to vector<2x384xbf16>
    %cst_19 = arith.constant dense<0.000000e+00> : vector<2x1536xf32>
    %38 = tpu.matmul %37, %35, %cst_19 {dimension_numbers = #tpu.dot_dimension_numbers<[1], [0], [0], [1], [0, 0, 1, 1], [], []>} : vector<2x384xbf16>, vector<384x1536xbf16>, vector<2x1536xf32> -> vector<2x1536xf32>
    %39 = arith.addf %36, %38 : vector<2x1536xf32>
    %40 = arith.negf %39 : vector<2x1536xf32>
    %41 = math.exp %40 : vector<2x1536xf32>
    %cst_20 = arith.constant 1.000000e+00 : f32
    %42 = vector.broadcast %cst_20 : f32 to vector<2x1536xf32>
    %43 = arith.addf %42, %41 : vector<2x1536xf32>
    %44 = arith.divf %42, %43 : vector<2x1536xf32>
    %45 = vector.extract_strided_slice %44 {offsets = [0, 0], sizes = [2, 384], strides = [1, 1]} : vector<2x1536xf32> to vector<2x384xf32>
    %46 = vector.extract_strided_slice %44 {offsets = [0, 384], sizes = [2, 384], strides = [1, 1]} : vector<2x1536xf32> to vector<2x384xf32>
    %47 = vector.extract_strided_slice %44 {offsets = [0, 768], sizes = [2, 384], strides = [1, 1]} : vector<2x1536xf32> to vector<2x384xf32>
    %cst_21 = arith.constant 2.000000e+00 : f32
    %48 = vector.broadcast %cst_21 : f32 to vector<2x384xf32>
    %49 = arith.mulf %48, %47 : vector<2x384xf32>
    %cst_22 = arith.constant 1.000000e+00 : f32
    %50 = vector.broadcast %cst_22 : f32 to vector<2x384xf32>
    %51 = arith.subf %49, %50 : vector<2x384xf32>
    %52 = vector.extract_strided_slice %44 {offsets = [0, 1152], sizes = [2, 384], strides = [1, 1]} : vector<2x1536xf32> to vector<2x384xf32>
    %53 = arith.mulf %46, %29 : vector<2x384xf32>
    %54 = arith.mulf %45, %51 : vector<2x384xf32>
    %55 = arith.addf %53, %54 : vector<2x384xf32>
    %56 = math.tanh %55 : vector<2x384xf32>
    %57 = arith.mulf %52, %56 : vector<2x384xf32>
    %c2_23 = arith.constant 2 : index
    %c0_24 = arith.constant 0 : index
    %58 = vector.load %arg6[%c2_23, %c0_24] : memref<16x384xf32, #tpu.memory_space<vmem>>, vector<2x384xf32>
    tpu.vector_store %arg6[%c2_23, %c0_24], %57 {strides = array<i32>} : memref<16x384xf32, #tpu.memory_space<vmem>>, vector<2x384xf32>,
    %c4 = arith.constant 4 : index
    %c0_25 = arith.constant 0 : index
    %59 = vector.load %arg9[%c4, %c0_25] : memref<16x1536xf32, #tpu.memory_space<vmem>>, vector<2x1536xf32>
    %60 = arith.truncf %57 : vector<2x384xf32> to vector<2x384xbf16>
    %cst_26 = arith.constant dense<0.000000e+00> : vector<2x1536xf32>
    %61 = tpu.matmul %60, %35, %cst_26 {dimension_numbers = #tpu.dot_dimension_numbers<[1], [0], [0], [1], [0, 0, 1, 1], [], []>} : vector<2x384xbf16>, vector<384x1536xbf16>, vector<2x1536xf32> -> vector<2x1536xf32>
    %62 = arith.addf %59, %61 : vector<2x1536xf32>
    %63 = arith.negf %62 : vector<2x1536xf32>
    %64 = math.exp %63 : vector<2x1536xf32>
    %cst_27 = arith.constant 1.000000e+00 : f32
    %65 = vector.broadcast %cst_27 : f32 to vector<2x1536xf32>
    %66 = arith.addf %65, %64 : vector<2x1536xf32>
    %67 = arith.divf %65, %66 : vector<2x1536xf32>
    %68 = vector.extract_strided_slice %67 {offsets = [0, 0], sizes = [2, 384], strides = [1, 1]} : vector<2x1536xf32> to vector<2x384xf32>
    %69 = vector.extract_strided_slice %67 {offsets = [0, 384], sizes = [2, 384], strides = [1, 1]} : vector<2x1536xf32> to vector<2x384xf32>
    %70 = vector.extract_strided_slice %67 {offsets = [0, 768], sizes = [2, 384], strides = [1, 1]} : vector<2x1536xf32> to vector<2x384xf32>
    %cst_28 = arith.constant 2.000000e+00 : f32
    %71 = vector.broadcast %cst_28 : f32 to vector<2x384xf32>
    %72 = arith.mulf %71, %70 : vector<2x384xf32>
    %cst_29 = arith.constant 1.000000e+00 : f32
    %73 = vector.broadcast %cst_29 : f32 to vector<2x384xf32>
    %74 = arith.subf %72, %73 : vector<2x384xf32>
    %75 = vector.extract_strided_slice %67 {offsets = [0, 1152], sizes = [2, 384], strides = [1, 1]} : vector<2x1536xf32> to vector<2x384xf32>
    %76 = arith.mulf %69, %55 : vector<2x384xf32>
    %77 = arith.mulf %68, %74 : vector<2x384xf32>
    %78 = arith.addf %76, %77 : vector<2x384xf32>
    %79 = math.tanh %78 : vector<2x384xf32>
    %80 = arith.mulf %75, %79 : vector<2x384xf32>
    %c4_30 = arith.constant 4 : index
    %c0_31 = arith.constant 0 : index
    %81 = vector.load %arg6[%c4_30, %c0_31] : memref<16x384xf32, #tpu.memory_space<vmem>>, vector<2x384xf32>
    tpu.vector_store %arg6[%c4_30, %c0_31], %80 {strides = array<i32>} : memref<16x384xf32, #tpu.memory_space<vmem>>, vector<2x384xf32>,
    %c6 = arith.constant 6 : index
    %c0_32 = arith.constant 0 : index
    %82 = vector.load %arg9[%c6, %c0_32] : memref<16x1536xf32, #tpu.memory_space<vmem>>, vector<2x1536xf32>
    %83 = arith.truncf %80 : vector<2x384xf32> to vector<2x384xbf16>
    %cst_33 = arith.constant dense<0.000000e+00> : vector<2x1536xf32>
    %84 = tpu.matmul %83, %35, %cst_33 {dimension_numbers = #tpu.dot_dimension_numbers<[1], [0], [0], [1], [0, 0, 1, 1], [], []>} : vector<2x384xbf16>, vector<384x1536xbf16>, vector<2x1536xf32> -> vector<2x1536xf32>
    %85 = arith.addf %82, %84 : vector<2x1536xf32>
    %86 = arith.negf %85 : vector<2x1536xf32>
    %87 = math.exp %86 : vector<2x1536xf32>
    %cst_34 = arith.constant 1.000000e+00 : f32
    %88 = vector.broadcast %cst_34 : f32 to vector<2x1536xf32>
    %89 = arith.addf %88, %87 : vector<2x1536xf32>
    %90 = arith.divf %88, %89 : vector<2x1536xf32>
    %91 = vector.extract_strided_slice %90 {offsets = [0, 0], sizes = [2, 384], strides = [1, 1]} : vector<2x1536xf32> to vector<2x384xf32>
    %92 = vector.extract_strided_slice %90 {offsets = [0, 384], sizes = [2, 384], strides = [1, 1]} : vector<2x1536xf32> to vector<2x384xf32>
    %93 = vector.extract_strided_slice %90 {offsets = [0, 768], sizes = [2, 384], strides = [1, 1]} : vector<2x1536xf32> to vector<2x384xf32>
    %cst_35 = arith.constant 2.000000e+00 : f32
    %94 = vector.broadcast %cst_35 : f32 to vector<2x384xf32>
    %95 = arith.mulf %94, %93 : vector<2x384xf32>
    %cst_36 = arith.constant 1.000000e+00 : f32
    %96 = vector.broadcast %cst_36 : f32 to vector<2x384xf32>
    %97 = arith.subf %95, %96 : vector<2x384xf32>
    %98 = vector.extract_strided_slice %90 {offsets = [0, 1152], sizes = [2, 384], strides = [1, 1]} : vector<2x1536xf32> to vector<2x384xf32>
    %99 = arith.mulf %92, %78 : vector<2x384xf32>
    %100 = arith.mulf %91, %97 : vector<2x384xf32>
    %101 = arith.addf %99, %100 : vector<2x384xf32>
    %102 = math.tanh %101 : vector<2x384xf32>
    %103 = arith.mulf %98, %102 : vector<2x384xf32>
    %c6_37 = arith.constant 6 : index
    %c0_38 = arith.constant 0 : index
    %104 = vector.load %arg6[%c6_37, %c0_38] : memref<16x384xf32, #tpu.memory_space<vmem>>, vector<2x384xf32>
    tpu.vector_store %arg6[%c6_37, %c0_38], %103 {strides = array<i32>} : memref<16x384xf32, #tpu.memory_space<vmem>>, vector<2x384xf32>,
    %c8 = arith.constant 8 : index
    %c0_39 = arith.constant 0 : index
    %105 = vector.load %arg9[%c8, %c0_39] : memref<16x1536xf32, #tpu.memory_space<vmem>>, vector<2x1536xf32>
    %106 = arith.truncf %103 : vector<2x384xf32> to vector<2x384xbf16>
    %cst_40 = arith.constant dense<0.000000e+00> : vector<2x1536xf32>
    %107 = tpu.matmul %106, %35, %cst_40 {dimension_numbers = #tpu.dot_dimension_numbers<[1], [0], [0], [1], [0, 0, 1, 1], [], []>} : vector<2x384xbf16>, vector<384x1536xbf16>, vector<2x1536xf32> -> vector<2x1536xf32>
    %108 = arith.addf %105, %107 : vector<2x1536xf32>
    %109 = arith.negf %108 : vector<2x1536xf32>
    %110 = math.exp %109 : vector<2x1536xf32>
    %cst_41 = arith.constant 1.000000e+00 : f32
    %111 = vector.broadcast %cst_41 : f32 to vector<2x1536xf32>
    %112 = arith.addf %111, %110 : vector<2x1536xf32>
    %113 = arith.divf %111, %112 : vector<2x1536xf32>
    %114 = vector.extract_strided_slice %113 {offsets = [0, 0], sizes = [2, 384], strides = [1, 1]} : vector<2x1536xf32> to vector<2x384xf32>
    %115 = vector.extract_strided_slice %113 {offsets = [0, 384], sizes = [2, 384], strides = [1, 1]} : vector<2x1536xf32> to vector<2x384xf32>
    %116 = vector.extract_strided_slice %113 {offsets = [0, 768], sizes = [2, 384], strides = [1, 1]} : vector<2x1536xf32> to vector<2x384xf32>
    %cst_42 = arith.constant 2.000000e+00 : f32
    %117 = vector.broadcast %cst_42 : f32 to vector<2x384xf32>
    %118 = arith.mulf %117, %116 : vector<2x384xf32>
    %cst_43 = arith.constant 1.000000e+00 : f32
    %119 = vector.broadcast %cst_43 : f32 to vector<2x384xf32>
    %120 = arith.subf %118, %119 : vector<2x384xf32>
    %121 = vector.extract_strided_slice %113 {offsets = [0, 1152], sizes = [2, 384], strides = [1, 1]} : vector<2x1536xf32> to vector<2x384xf32>
    %122 = arith.mulf %115, %101 : vector<2x384xf32>
    %123 = arith.mulf %114, %120 : vector<2x384xf32>
    %124 = arith.addf %122, %123 : vector<2x384xf32>
    %125 = math.tanh %124 : vector<2x384xf32>
    %126 = arith.mulf %121, %125 : vector<2x384xf32>
    %c8_44 = arith.constant 8 : index
    %c0_45 = arith.constant 0 : index
    %127 = vector.load %arg6[%c8_44, %c0_45] : memref<16x384xf32, #tpu.memory_space<vmem>>, vector<2x384xf32>
    tpu.vector_store %arg6[%c8_44, %c0_45], %126 {strides = array<i32>} : memref<16x384xf32, #tpu.memory_space<vmem>>, vector<2x384xf32>,
    %c10 = arith.constant 10 : index
    %c0_46 = arith.constant 0 : index
    %128 = vector.load %arg9[%c10, %c0_46] : memref<16x1536xf32, #tpu.memory_space<vmem>>, vector<2x1536xf32>
    %129 = arith.truncf %126 : vector<2x384xf32> to vector<2x384xbf16>
    %cst_47 = arith.constant dense<0.000000e+00> : vector<2x1536xf32>
    %130 = tpu.matmul %129, %35, %cst_47 {dimension_numbers = #tpu.dot_dimension_numbers<[1], [0], [0], [1], [0, 0, 1, 1], [], []>} : vector<2x384xbf16>, vector<384x1536xbf16>, vector<2x1536xf32> -> vector<2x1536xf32>
    %131 = arith.addf %128, %130 : vector<2x1536xf32>
    %132 = arith.negf %131 : vector<2x1536xf32>
    %133 = math.exp %132 : vector<2x1536xf32>
    %cst_48 = arith.constant 1.000000e+00 : f32
    %134 = vector.broadcast %cst_48 : f32 to vector<2x1536xf32>
    %135 = arith.addf %134, %133 : vector<2x1536xf32>
    %136 = arith.divf %134, %135 : vector<2x1536xf32>
    %137 = vector.extract_strided_slice %136 {offsets = [0, 0], sizes = [2, 384], strides = [1, 1]} : vector<2x1536xf32> to vector<2x384xf32>
    %138 = vector.extract_strided_slice %136 {offsets = [0, 384], sizes = [2, 384], strides = [1, 1]} : vector<2x1536xf32> to vector<2x384xf32>
    %139 = vector.extract_strided_slice %136 {offsets = [0, 768], sizes = [2, 384], strides = [1, 1]} : vector<2x1536xf32> to vector<2x384xf32>
    %cst_49 = arith.constant 2.000000e+00 : f32
    %140 = vector.broadcast %cst_49 : f32 to vector<2x384xf32>
    %141 = arith.mulf %140, %139 : vector<2x384xf32>
    %cst_50 = arith.constant 1.000000e+00 : f32
    %142 = vector.broadcast %cst_50 : f32 to vector<2x384xf32>
    %143 = arith.subf %141, %142 : vector<2x384xf32>
    %144 = vector.extract_strided_slice %136 {offsets = [0, 1152], sizes = [2, 384], strides = [1, 1]} : vector<2x1536xf32> to vector<2x384xf32>
    %145 = arith.mulf %138, %124 : vector<2x384xf32>
    %146 = arith.mulf %137, %143 : vector<2x384xf32>
    %147 = arith.addf %145, %146 : vector<2x384xf32>
    %148 = math.tanh %147 : vector<2x384xf32>
    %149 = arith.mulf %144, %148 : vector<2x384xf32>
    %c10_51 = arith.constant 10 : index
    %c0_52 = arith.constant 0 : index
    %150 = vector.load %arg6[%c10_51, %c0_52] : memref<16x384xf32, #tpu.memory_space<vmem>>, vector<2x384xf32>
    tpu.vector_store %arg6[%c10_51, %c0_52], %149 {strides = array<i32>} : memref<16x384xf32, #tpu.memory_space<vmem>>, vector<2x384xf32>,
    %c12 = arith.constant 12 : index
    %c0_53 = arith.constant 0 : index
    %151 = vector.load %arg9[%c12, %c0_53] : memref<16x1536xf32, #tpu.memory_space<vmem>>, vector<2x1536xf32>
    %152 = arith.truncf %149 : vector<2x384xf32> to vector<2x384xbf16>
    %cst_54 = arith.constant dense<0.000000e+00> : vector<2x1536xf32>
    %153 = tpu.matmul %152, %35, %cst_54 {dimension_numbers = #tpu.dot_dimension_numbers<[1], [0], [0], [1], [0, 0, 1, 1], [], []>} : vector<2x384xbf16>, vector<384x1536xbf16>, vector<2x1536xf32> -> vector<2x1536xf32>
    %154 = arith.addf %151, %153 : vector<2x1536xf32>
    %155 = arith.negf %154 : vector<2x1536xf32>
    %156 = math.exp %155 : vector<2x1536xf32>
    %cst_55 = arith.constant 1.000000e+00 : f32
    %157 = vector.broadcast %cst_55 : f32 to vector<2x1536xf32>
    %158 = arith.addf %157, %156 : vector<2x1536xf32>
    %159 = arith.divf %157, %158 : vector<2x1536xf32>
    %160 = vector.extract_strided_slice %159 {offsets = [0, 0], sizes = [2, 384], strides = [1, 1]} : vector<2x1536xf32> to vector<2x384xf32>
    %161 = vector.extract_strided_slice %159 {offsets = [0, 384], sizes = [2, 384], strides = [1, 1]} : vector<2x1536xf32> to vector<2x384xf32>
    %162 = vector.extract_strided_slice %159 {offsets = [0, 768], sizes = [2, 384], strides = [1, 1]} : vector<2x1536xf32> to vector<2x384xf32>
    %cst_56 = arith.constant 2.000000e+00 : f32
    %163 = vector.broadcast %cst_56 : f32 to vector<2x384xf32>
    %164 = arith.mulf %163, %162 : vector<2x384xf32>
    %cst_57 = arith.constant 1.000000e+00 : f32
    %165 = vector.broadcast %cst_57 : f32 to vector<2x384xf32>
    %166 = arith.subf %164, %165 : vector<2x384xf32>
    %167 = vector.extract_strided_slice %159 {offsets = [0, 1152], sizes = [2, 384], strides = [1, 1]} : vector<2x1536xf32> to vector<2x384xf32>
    %168 = arith.mulf %161, %147 : vector<2x384xf32>
    %169 = arith.mulf %160, %166 : vector<2x384xf32>
    %170 = arith.addf %168, %169 : vector<2x384xf32>
    %171 = math.tanh %170 : vector<2x384xf32>
    %172 = arith.mulf %167, %171 : vector<2x384xf32>
    %c12_58 = arith.constant 12 : index
    %c0_59 = arith.constant 0 : index
    %173 = vector.load %arg6[%c12_58, %c0_59] : memref<16x384xf32, #tpu.memory_space<vmem>>, vector<2x384xf32>
    tpu.vector_store %arg6[%c12_58, %c0_59], %172 {strides = array<i32>} : memref<16x384xf32, #tpu.memory_space<vmem>>, vector<2x384xf32>,
    %c14 = arith.constant 14 : index
    %c0_60 = arith.constant 0 : index
    %174 = vector.load %arg9[%c14, %c0_60] : memref<16x1536xf32, #tpu.memory_space<vmem>>, vector<2x1536xf32>
    %175 = arith.truncf %172 : vector<2x384xf32> to vector<2x384xbf16>
    %cst_61 = arith.constant dense<0.000000e+00> : vector<2x1536xf32>
    %176 = tpu.matmul %175, %35, %cst_61 {dimension_numbers = #tpu.dot_dimension_numbers<[1], [0], [0], [1], [0, 0, 1, 1], [], []>} : vector<2x384xbf16>, vector<384x1536xbf16>, vector<2x1536xf32> -> vector<2x1536xf32>
    %177 = arith.addf %174, %176 : vector<2x1536xf32>
    %178 = arith.negf %177 : vector<2x1536xf32>
    %179 = math.exp %178 : vector<2x1536xf32>
    %cst_62 = arith.constant 1.000000e+00 : f32
    %180 = vector.broadcast %cst_62 : f32 to vector<2x1536xf32>
    %181 = arith.addf %180, %179 : vector<2x1536xf32>
    %182 = arith.divf %180, %181 : vector<2x1536xf32>
    %183 = vector.extract_strided_slice %182 {offsets = [0, 0], sizes = [2, 384], strides = [1, 1]} : vector<2x1536xf32> to vector<2x384xf32>
    %184 = vector.extract_strided_slice %182 {offsets = [0, 384], sizes = [2, 384], strides = [1, 1]} : vector<2x1536xf32> to vector<2x384xf32>
    %185 = vector.extract_strided_slice %182 {offsets = [0, 768], sizes = [2, 384], strides = [1, 1]} : vector<2x1536xf32> to vector<2x384xf32>
    %cst_63 = arith.constant 2.000000e+00 : f32
    %186 = vector.broadcast %cst_63 : f32 to vector<2x384xf32>
    %187 = arith.mulf %186, %185 : vector<2x384xf32>
    %cst_64 = arith.constant 1.000000e+00 : f32
    %188 = vector.broadcast %cst_64 : f32 to vector<2x384xf32>
    %189 = arith.subf %187, %188 : vector<2x384xf32>
    %190 = vector.extract_strided_slice %182 {offsets = [0, 1152], sizes = [2, 384], strides = [1, 1]} : vector<2x1536xf32> to vector<2x384xf32>
    %191 = arith.mulf %184, %170 : vector<2x384xf32>
    %192 = arith.mulf %183, %189 : vector<2x384xf32>
    %193 = arith.addf %191, %192 : vector<2x384xf32>
    %194 = math.tanh %193 : vector<2x384xf32>
    %195 = arith.mulf %190, %194 : vector<2x384xf32>
    %c14_65 = arith.constant 14 : index
    %c0_66 = arith.constant 0 : index
    %196 = vector.load %arg6[%c14_65, %c0_66] : memref<16x384xf32, #tpu.memory_space<vmem>>, vector<2x384xf32>
    tpu.vector_store %arg6[%c14_65, %c0_66], %195 {strides = array<i32>} : memref<16x384xf32, #tpu.memory_space<vmem>>, vector<2x384xf32>,
    %c0_67 = arith.constant 0 : index
    %c0_68 = arith.constant 0 : index
    %197 = vector.load %arg8[%c0_67, %c0_68] : memref<2x384xf32, #tpu.memory_space<vmem>>, vector<2x384xf32>
    tpu.vector_store %arg8[%c0_67, %c0_68], %193 {strides = array<i32>} : memref<2x384xf32, #tpu.memory_space<vmem>>, vector<2x384xf32>,
    %c1_i32_69 = arith.constant 1 : i32
    %198 = tpu.memref_slice %arg12[%c1_i32_69] : memref<2x!tpu.dma_semaphore, #tpu.memory_space<semaphore_mem>> -> memref<1x!tpu.dma_semaphore, #tpu.memory_space<semaphore_mem>>
    %199 = tpu.memref_squeeze %198 : memref<1x!tpu.dma_semaphore, #tpu.memory_space<semaphore_mem>> -> memref<!tpu.dma_semaphore, #tpu.memory_space<semaphore_mem>>
    tpu.wait_dma2 semaphore(%199 : memref<!tpu.dma_semaphore, #tpu.memory_space<semaphore_mem>>) src(%arg4 : memref<384x512xbf16, #tpu.memory_space<any>>) dst(%arg11 : memref<384x512xbf16, #tpu.memory_space<vmem>>)
    %200 = arith.truncf %195 : vector<2x384xf32> to vector<2x384xbf16>
    %c0_70 = arith.constant 0 : index
    %c0_71 = arith.constant 0 : index
    %201 = vector.load %arg11[%c0_70, %c0_71] : memref<384x512xbf16, #tpu.memory_space<vmem>>, vector<384x512xbf16>
    %cst_72 = arith.constant dense<0.000000e+00> : vector<2x512xf32>
    %202 = tpu.matmul %200, %201, %cst_72 {dimension_numbers = #tpu.dot_dimension_numbers<[1], [0], [0], [1], [0, 0, 1, 1], [], []>} : vector<2x384xbf16>, vector<384x512xbf16>, vector<2x512xf32> -> vector<2x512xf32>
    %c0_73 = arith.constant 0 : index
    %c0_74 = arith.constant 0 : index
    %203 = vector.load %arg5[%c0_73, %c0_74] : memref<1x512xf32, #tpu.memory_space<vmem>>, vector<1x512xf32>
    %204 = vector.broadcast %203 : vector<1x512xf32> to vector<2x512xf32>
    %205 = arith.addf %202, %204 : vector<2x512xf32>
    %c0_75 = arith.constant 0 : index
    %c0_76 = arith.constant 0 : index
    %206 = vector.load %arg7[%c0_75, %c0_76] : memref<2x512xf32, #tpu.memory_space<vmem>>, vector<2x512xf32>
    tpu.vector_store %arg7[%c0_75, %c0_76], %205 {strides = array<i32>} : memref<2x512xf32, #tpu.memory_space<vmem>>, vector<2x512xf32>,
    return
  }
}

</mosaic_0001>

<llo_original>
// kernel: tpu_custom_call.1
$region0: #{tpu_custom_call.1}
  #allocation0 [shape = 'u32[]', space=smem, size = 0x4, offset = 0x4, fixed_abs, tag = 'smem constant byte address 0x4 - core index']
  #allocation1 [shape = 'u32[144,128]{1,0:T(1,128)}', space=vmem, size = 0x12000, scoped, tag = 'internal scratch']
  #allocation2 [shape = 'f32[16,1536]{1,0:T(8,128)}', space=vmem, size = 0x18000, scoped, tag = 'scratch operand']
  #allocation3 [shape = 'bf16[384,1536]{1,0:T(8,128)(2,1)}', space=vmem, size = 0x120000, scoped, tag = 'scratch operand']
  #allocation4 [shape = 'bf16[384,512]{1,0:T(8,128)(2,1)}', space=vmem, size = 0x60000, scoped, tag = 'scratch operand']
  #allocation5 [shape = 's32[2]{0}', space=sflag, size = 0x8, scoped, tag = 'scratch operand']
  #allocation18 [shape = 's32[]', space=sflag, size = 0x4, offset = 0, fixed_abs, tag = 'sflag constant byte address 0x0 - dummy sync flag']
  #allocation19 [shape = 's32[]', space=sflag, size = 0x4, offset = 0, fixed_abs, tag = 'sflag constant byte address 0x0 - dummy sync flag']
  #allocation20 [shape = 'u32[]', space=smem, size = 0x4, offset = 0x44, fixed_abs, tag = 'smem constant byte address 0x44 - assertion arg 0']
  #allocation21 [shape = 'u32[]', space=smem, size = 0x4, offset = 0x48, fixed_abs, tag = 'smem constant byte address 0x48 - assertion arg 1']
  #allocation22 [shape = 's32[]', space=sflag, size = 0x4, offset = 0, fixed_abs, tag = 'sflag constant byte address 0x0 - dummy sync flag']
  #allocation23 [shape = 's32[]', space=sflag, size = 0x4, offset = 0, fixed_abs, tag = 'sflag constant byte address 0x0 - dummy sync flag']
  %s0 = inlined_call_operand.hbm [shape: f32[16,384], index: 0, kind: input, shape index: {}]
  %s1 = inlined_call_operand.hbm [shape: bf16[384,1536], index: 1, kind: input, shape index: {}]
  %s2 = inlined_call_operand.hbm [shape: f32[1,1536], index: 2, kind: input, shape index: {}]
  %s3 = inlined_call_operand.hbm [shape: bf16[384,1536], index: 3, kind: input, shape index: {}]
  %s4 = inlined_call_operand.hbm [shape: bf16[384,512], index: 4, kind: input, shape index: {}]
  %s5 = inlined_call_operand.hbm [shape: f32[1,512], index: 5, kind: input, shape index: {}]
  %s6 = inlined_call_operand.hbm [shape: f32[16,384], index: 6, kind: output, shape index: {0}]
  %s7 = inlined_call_operand.hbm [shape: f32[2,512], index: 7, kind: output, shape index: {1}]
  %s8 = inlined_call_operand.hbm [shape: f32[2,384], index: 8, kind: output, shape index: {2}]
  %9 = xla_tuple %s6, %s7, %s8
  %s10 = sld [smem:[#allocation0]]
  $region66: #{tpu_custom_call.1} parent=0
    _
  %s12 = ssub.s32 1, %s10
  %s13 = scalar_select 0, %s12, %s10
  $region1: #{tpu_custom_call.1} parent=0
    #allocation6 [shape = 'u8[24576]{0}', space=vmem, size = 0x6000, scoped, tag = 'input window, operand 0, single buffered']
    #allocation7 [shape = 's32[1]{0}', space=sflag, size = 0x4, scoped, tag = 'scoped memory for tpu_custom_call.1']
    #allocation8 [shape = 's32[1]{0}', space=sflag, size = 0x4, scoped, tag = 'scoped memory for tpu_custom_call.1']
    #allocation9 [shape = 'u8[1179648]{0}', space=vmem, size = 0x120000, scoped, tag = 'input window, operand 1, single buffered']
    #allocation10 [shape = 's32[1]{0}', space=sflag, size = 0x4, scoped, tag = 'scoped memory for tpu_custom_call.1']
    #allocation11 [shape = 'u8[6144]{0}', space=vmem, size = 0x1800, scoped, tag = 'input window, operand 2, single buffered']
    #allocation12 [shape = 'u8[2048]{0}', space=vmem, size = 0x800, scoped, tag = 'input window, operand 5, single buffered']
    #allocation13 [shape = 's32[1]{0}', space=sflag, size = 0x4, scoped, tag = 'scoped memory for tpu_custom_call.1']
    #allocation14 [shape = 'u8[24576]{0}', space=vmem, size = 0x6000, scoped, tag = 'output window, operand 0, single buffered']
    #allocation15 [shape = 'u8[4096]{0}', space=vmem, size = 0x1000, scoped, tag = 'output window, operand 1, single buffered']
    #allocation16 [shape = 's32[1]{0}', space=sflag, size = 0x4, scoped, tag = 'scoped memory for tpu_custom_call.1']
    #allocation17 [shape = 'u8[3072]{0}', space=vmem, size = 0xc00, scoped, tag = 'output window, operand 2, single buffered']
    %14 = vsyncpa [#allocation7], 0
    %15 = vsyncpa [#allocation10], 0
    %16 = vsyncpa [#allocation13], 0
    %17 = vsyncpa [#allocation8], 0
    %18 = vsyncpa [#allocation16], 0
    // Predicated region
    $region2: #{tpu_custom_call.1} parent=1 // pred_check
      _
    $region3: #{tpu_custom_call.1} parent=1 // pred_check_branch
      %20 = sbr.rel (0) target = $region5
    $region4: #{tpu_custom_call.1} parent=1 // pred_region
      %s22 = ssub.s32 768, 768
      %23 = vsyncadd [#allocation7], %s22
      %s24 = sshll.u32 [#allocation6], 4
      %s25 = int_to_ptr.vmem [resolvable:$true] %s24
      %30 = dma.hbm_to_vmem [thread:$0]  %s0, 768, %s25, [#allocation7], 384, 384, 24
    $region5: #{tpu_custom_call.1} parent=1 // pred_fallthru
      _
    // Predicated region
    $region6: #{tpu_custom_call.1} parent=1 // pred_check
      _
    $region7: #{tpu_custom_call.1} parent=1 // pred_check_branch
      %32 = sbr.rel (0) target = $region9
    $region8: #{tpu_custom_call.1} parent=1 // pred_region
      %s34 = ssub.s32 36864, 36864
      %35 = vsyncadd [#allocation10], %s34
      %s36 = sshll.u32 [#allocation9], 4
      %s37 = int_to_ptr.vmem [resolvable:$true] %s36
      %42 = dma.hbm_to_vmem [thread:$0]  %s1, 36864, %s37, [#allocation10], 768, 768, 48
    $region9: #{tpu_custom_call.1} parent=1 // pred_fallthru
      _
    // Predicated region
    $region10: #{tpu_custom_call.1} parent=1 // pred_check
      _
    $region11: #{tpu_custom_call.1} parent=1 // pred_check_branch
      %44 = sbr.rel (0) target = $region13
    $region12: #{tpu_custom_call.1} parent=1 // pred_region
      %s46 = ssub.s32 192, 192
      %47 = vsyncadd [#allocation10], %s46
      %s49 = sshll.u32 [#allocation11], 4
      %s50 = int_to_ptr.vmem [resolvable:$true] %s49
      %52 = dma.hbm_to_vmem [thread:$0]  %s2, 192, %s50, [#allocation10]
    $region13: #{tpu_custom_call.1} parent=1 // pred_fallthru
      _
    // Predicated region
    $region14: #{tpu_custom_call.1} parent=1 // pred_check
      _
    $region15: #{tpu_custom_call.1} parent=1 // pred_check_branch
      %54 = sbr.rel (0) target = $region17
    $region16: #{tpu_custom_call.1} parent=1 // pred_region
      %s56 = ssub.s32 64, 64
      %57 = vsyncadd [#allocation13], %s56
      %s59 = sshll.u32 [#allocation12], 4
      %s60 = int_to_ptr.vmem [resolvable:$true] %s59
      %62 = dma.hbm_to_vmem [thread:$0]  %s5, 64, %s60, [#allocation13]
    $region17: #{tpu_custom_call.1} parent=1 // pred_fallthru
      _
    // Predicated region
    $region18: #{tpu_custom_call.1} parent=1 // pred_check
      _
    $region19: #{tpu_custom_call.1} parent=1 // pred_check_branch
      %64 = sbr.rel (0) target = $region21
    $region20: #{tpu_custom_call.1} parent=1 // pred_region
      %65 = dma.done [#allocation7], 768
    $region21: #{tpu_custom_call.1} parent=1 // pred_fallthru
      _
    // Predicated region
    $region22: #{tpu_custom_call.1} parent=1 // pred_check
      _
    $region23: #{tpu_custom_call.1} parent=1 // pred_check_branch
      %67 = sbr.rel (0) target = $region25
    $region24: #{tpu_custom_call.1} parent=1 // pred_region
      %68 = dma.done [#allocation10], 36864
    $region25: #{tpu_custom_call.1} parent=1 // pred_fallthru
      _
    // Predicated region
    $region26: #{tpu_custom_call.1} parent=1 // pred_check
      _
    $region27: #{tpu_custom_call.1} parent=1 // pred_check_branch
      %70 = sbr.rel (0) target = $region29
    $region28: #{tpu_custom_call.1} parent=1 // pred_region
      %71 = dma.done [#allocation10], 192
    $region29: #{tpu_custom_call.1} parent=1 // pred_fallthru
      _
    // Predicated region
    $region30: #{tpu_custom_call.1} parent=1 // pred_check
      _
    $region31: #{tpu_custom_call.1} parent=1 // pred_check_branch
      %73 = sbr.rel (0) target = $region33
    $region32: #{tpu_custom_call.1} parent=1 // pred_region
      %74 = dma.done [#allocation13], 64
    $region33: #{tpu_custom_call.1} parent=1 // pred_fallthru
      _
    // Predicated region
    $region34: #{tpu_custom_call.1} parent=1 // pred_check
      _
    $region35: #{tpu_custom_call.1} parent=1 // pred_check_branch
      %77 = sbr.rel target = $region37
    $region36: #{tpu_custom_call.1} parent=1 // pred_region
      %78 = sst [smem:[#allocation20]] [#allocation19]
      %79 = sst [smem:[#allocation21]] [#allocation18]
    $region37: #{tpu_custom_call.1} parent=1 // pred_fallthru
      _
    %81 = shalt.err (0)
    %s83 = sshll.u32 [#allocation3], 4
    %s84 = int_to_ptr.vmem [resolvable:$true] %s83
    %86 = dma.hbm_to_vmem [thread:$0]  %s3, 36864, %s84, [#allocation5]
    %s87 = scalar_lea.sflag [#allocation5], 1
    // Predicated region
    $region38: #{tpu_custom_call.1} parent=1 // pred_check
      _
    $region39: #{tpu_custom_call.1} parent=1 // pred_check_branch
      %89 = sbr.rel target = $region41
    $region40: #{tpu_custom_call.1} parent=1 // pred_region
      %90 = sst [smem:[#allocation20]] [#allocation23]
      %91 = sst [smem:[#allocation21]] [#allocation22]
    $region41: #{tpu_custom_call.1} parent=1 // pred_fallthru
      _
    %93 = shalt.err (0)
    %s95 = sshll.u32 [#allocation4], 4
    %s96 = int_to_ptr.vmem [resolvable:$true] %s95
    %98 = dma.hbm_to_vmem [thread:$0]  %s4, 12288, %s96, %s87
    %v99 = vld [vmem:[#allocation6] sm:$0xff]
    %v100 = vld [vmem:[#allocation6 + $0x8] sm:$0xff]
    %v101 = vld [vmem:[#allocation6 + $0x10] sm:$0xff]
    %v102 = vld [vmem:[#allocation6 + $0x18] sm:$0xff]
    %v103 = vld [vmem:[#allocation6 + $0x20] sm:$0xff]
    %v104 = vld [vmem:[#allocation6 + $0x28] sm:$0xff]
    %v105 = vpack.c.bf16 %v102, %v99
    %v106 = vpack.c.bf16 %v103, %v100
    %v107 = vpack.c.bf16 %v104, %v101
    %v108 = vld [vmem:[#allocation9] sm:$0xff]
    %v109 = vld [vmem:[#allocation9 + $0x8] sm:$0xff]
    %v110 = vld [vmem:[#allocation9 + $0x10] sm:$0xff]
    %v111 = vld [vmem:[#allocation9 + $0x18] sm:$0xff]
    %v112 = vld [vmem:[#allocation9 + $0x20] sm:$0xff]
    %v113 = vld [vmem:[#allocation9 + $0x28] sm:$0xff]
    %v114 = vld [vmem:[#allocation9 + $0x30] sm:$0xff]
    %v115 = vld [vmem:[#allocation9 + $0x38] sm:$0xff]
    %v116 = vld [vmem:[#allocation9 + $0x40] sm:$0xff]
    %v117 = vld [vmem:[#allocation9 + $0x48] sm:$0xff]
    %v118 = vld [vmem:[#allocation9 + $0x50] sm:$0xff]
    %v119 = vld [vmem:[#allocation9 + $0x58] sm:$0xff]
    %v120 = vld [vmem:[#allocation9 + $0x60] sm:$0xff]
    %v121 = vld [vmem:[#allocation9 + $0x68] sm:$0xff]
    %v122 = vld [vmem:[#allocation9 + $0x70] sm:$0xff]
    %v123 = vld [vmem:[#allocation9 + $0x78] sm:$0xff]
    %v124 = vld [vmem:[#allocation9 + $0x80] sm:$0xff]
    %v125 = vld [vmem:[#allocation9 + $0x88] sm:$0xff]
    %v126 = vld [vmem:[#allocation9 + $0x90] sm:$0xff]
    %v127 = vld [vmem:[#allocation9 + $0x98] sm:$0xff]
    %v128 = vld [vmem:[#allocation9 + $0xa0] sm:$0xff]
    %v129 = vld [vmem:[#allocation9 + $0xa8] sm:$0xff]
    %v130 = vld [vmem:[#allocation9 + $0xb0] sm:$0xff]
    %v131 = vld [vmem:[#allocation9 + $0xb8] sm:$0xff]
    %v132 = vld [vmem:[#allocation9 + $0xc0] sm:$0xff]
    %v133 = vld [vmem:[#allocation9 + $0xc8] sm:$0xff]
    %v134 = vld [vmem:[#allocation9 + $0xd0] sm:$0xff]
    %v135 = vld [vmem:[#allocation9 + $0xd8] sm:$0xff]
    %v136 = vld [vmem:[#allocation9 + $0xe0] sm:$0xff]
    %v137 = vld [vmem:[#allocation9 + $0xe8] sm:$0xff]
    %v138 = vld [vmem:[#allocation9 + $0xf0] sm:$0xff]
    %v139 = vld [vmem:[#allocation9 + $0xf8] sm:$0xff]
    %v140 = vld [vmem:[#allocation9 + $0x100] sm:$0xff]
    %v141 = vld [vmem:[#allocation9 + $0x108] sm:$0xff]
    %v142 = vld [vmem:[#allocation9 + $0x110] sm:$0xff]
    %v143 = vld [vmem:[#allocation9 + $0x118] sm:$0xff]
    %v144 = vld [vmem:[#allocation9 + $0x120] sm:$0xff]
    %v145 = vld [vmem:[#allocation9 + $0x128] sm:$0xff]
    %v146 = vld [vmem:[#allocation9 + $0x130] sm:$0xff]
    %v147 = vld [vmem:[#allocation9 + $0x138] sm:$0xff]
    %v148 = vld [vmem:[#allocation9 + $0x140] sm:$0xff]
    %v149 = vld [vmem:[#allocation9 + $0x148] sm:$0xff]
    %v150 = vld [vmem:[#allocation9 + $0x150] sm:$0xff]
    %v151 = vld [vmem:[#allocation9 + $0x158] sm:$0xff]
    %v152 = vld [vmem:[#allocation9 + $0x160] sm:$0xff]
    %v153 = vld [vmem:[#allocation9 + $0x168] sm:$0xff]
    %v154 = vld [vmem:[#allocation9 + $0x170] sm:$0xff]
    %v155 = vld [vmem:[#allocation9 + $0x178] sm:$0xff]
    %v156 = vld [vmem:[#allocation9 + $0x180] sm:$0xff]
    %v157 = vld [vmem:[#allocation9 + $0x188] sm:$0xff]
    %v158 = vld [vmem:[#allocation9 + $0x190] sm:$0xff]
    %v159 = vld [vmem:[#allocation9 + $0x198] sm:$0xff]
    %v160 = vld [vmem:[#allocation9 + $0x1a0] sm:$0xff]
    %v161 = vld [vmem:[#allocation9 + $0x1a8] sm:$0xff]
    %v162 = vld [vmem:[#allocation9 + $0x1b0] sm:$0xff]
    %v163 = vld [vmem:[#allocation9 + $0x1b8] sm:$0xff]
    %v164 = vld [vmem:[#allocation9 + $0x1c0] sm:$0xff]
    %v165 = vld [vmem:[#allocation9 + $0x1c8] sm:$0xff]
    %v166 = vld [vmem:[#allocation9 + $0x1d0] sm:$0xff]
    %v167 = vld [vmem:[#allocation9 + $0x1d8] sm:$0xff]
    %v168 = vld [vmem:[#allocation9 + $0x1e0] sm:$0xff]
    %v169 = vld [vmem:[#allocation9 + $0x1e8] sm:$0xff]
    %v170 = vld [vmem:[#allocation9 + $0x1f0] sm:$0xff]
    %v171 = vld [vmem:[#allocation9 + $0x1f8] sm:$0xff]
    %v172 = vld [vmem:[#allocation9 + $0x200] sm:$0xff]
    %v173 = vld [vmem:[#allocation9 + $0x208] sm:$0xff]
    %v174 = vld [vmem:[#allocation9 + $0x210] sm:$0xff]
    %v175 = vld [vmem:[#allocation9 + $0x218] sm:$0xff]
    %v176 = vld [vmem:[#allocation9 + $0x220] sm:$0xff]
    %v177 = vld [vmem:[#allocation9 + $0x228] sm:$0xff]
    %v178 = vld [vmem:[#allocation9 + $0x230] sm:$0xff]
    %v179 = vld [vmem:[#allocation9 + $0x238] sm:$0xff]
    %v180 = vld [vmem:[#allocation9 + $0x240] sm:$0xff]
    %v181 = vld [vmem:[#allocation9 + $0x248] sm:$0xff]
    %v182 = vld [vmem:[#allocation9 + $0x250] sm:$0xff]
    %v183 = vld [vmem:[#allocation9 + $0x258] sm:$0xff]
    %v184 = vld [vmem:[#allocation9 + $0x260] sm:$0xff]
    %v185 = vld [vmem:[#allocation9 + $0x268] sm:$0xff]
    %v186 = vld [vmem:[#allocation9 + $0x270] sm:$0xff]
    %v187 = vld [vmem:[#allocation9 + $0x278] sm:$0xff]
    %v188 = vld [vmem:[#allocation9 + $0x280] sm:$0xff]
    %v189 = vld [vmem:[#allocation9 + $0x288] sm:$0xff]
    %v190 = vld [vmem:[#allocation9 + $0x290] sm:$0xff]
    %v191 = vld [vmem:[#allocation9 + $0x298] sm:$0xff]
    %v192 = vld [vmem:[#allocation9 + $0x2a0] sm:$0xff]
    %v193 = vld [vmem:[#allocation9 + $0x2a8] sm:$0xff]
    %v194 = vld [vmem:[#allocation9 + $0x2b0] sm:$0xff]
    %v195 = vld [vmem:[#allocation9 + $0x2b8] sm:$0xff]
    %v196 = vld [vmem:[#allocation9 + $0x2c0] sm:$0xff]
    %v197 = vld [vmem:[#allocation9 + $0x2c8] sm:$0xff]
    %v198 = vld [vmem:[#allocation9 + $0x2d0] sm:$0xff]
    %v199 = vld [vmem:[#allocation9 + $0x2d8] sm:$0xff]
    %v200 = vld [vmem:[#allocation9 + $0x2e0] sm:$0xff]
    %v201 = vld [vmem:[#allocation9 + $0x2e8] sm:$0xff]
    %v202 = vld [vmem:[#allocation9 + $0x2f0] sm:$0xff]
    %v203 = vld [vmem:[#allocation9 + $0x2f8] sm:$0xff]
    %v204 = vld [vmem:[#allocation9 + $0x300] sm:$0xff]
    %v205 = vld [vmem:[#allocation9 + $0x308] sm:$0xff]
    %v206 = vld [vmem:[#allocation9 + $0x310] sm:$0xff]
    %v207 = vld [vmem:[#allocation9 + $0x318] sm:$0xff]
    %v208 = vld [vmem:[#allocation9 + $0x320] sm:$0xff]
    %v209 = vld [vmem:[#allocation9 + $0x328] sm:$0xff]
    %v210 = vld [vmem:[#allocation9 + $0x330] sm:$0xff]
    %v211 = vld [vmem:[#allocation9 + $0x338] sm:$0xff]
    %v212 = vld [vmem:[#allocation9 + $0x340] sm:$0xff]
    %v213 = vld [vmem:[#allocation9 + $0x348] sm:$0xff]
    %v214 = vld [vmem:[#allocation9 + $0x350] sm:$0xff]
    %v215 = vld [vmem:[#allocation9 + $0x358] sm:$0xff]
    %v216 = vld [vmem:[#allocation9 + $0x360] sm:$0xff]
    %v217 = vld [vmem:[#allocation9 + $0x368] sm:$0xff]
    %v218 = vld [vmem:[#allocation9 + $0x370] sm:$0xff]
    %v219 = vld [vmem:[#allocation9 + $0x378] sm:$0xff]
    %v220 = vld [vmem:[#allocation9 + $0x380] sm:$0xff]
    %v221 = vld [vmem:[#allocation9 + $0x388] sm:$0xff]
    %v222 = vld [vmem:[#allocation9 + $0x390] sm:$0xff]
    %v223 = vld [vmem:[#allocation9 + $0x398] sm:$0xff]
    %v224 = vld [vmem:[#allocation9 + $0x3a0] sm:$0xff]
    %v225 = vld [vmem:[#allocation9 + $0x3a8] sm:$0xff]
    %v226 = vld [vmem:[#allocation9 + $0x3b0] sm:$0xff]
    %v227 = vld [vmem:[#allocation9 + $0x3b8] sm:$0xff]
    %v228 = vld [vmem:[#allocation9 + $0x3c0] sm:$0xff]
    %v229 = vld [vmem:[#allocation9 + $0x3c8] sm:$0xff]
    %v230 = vld [vmem:[#allocation9 + $0x3d0] sm:$0xff]
    %v231 = vld [vmem:[#allocation9 + $0x3d8] sm:$0xff]
    %v232 = vld [vmem:[#allocation9 + $0x3e0] sm:$0xff]
    %v233 = vld [vmem:[#allocation9 + $0x3e8] sm:$0xff]
    %v234 = vld [vmem:[#allocation9 + $0x3f0] sm:$0xff]
    %v235 = vld [vmem:[#allocation9 + $0x3f8] sm:$0xff]
    %v236 = vld [vmem:[#allocation9 + $0x400] sm:$0xff]
    %v237 = vld [vmem:[#allocation9 + $0x408] sm:$0xff]
    %v238 = vld [vmem:[#allocation9 + $0x410] sm:$0xff]
    %v239 = vld [vmem:[#allocation9 + $0x418] sm:$0xff]
    %v240 = vld [vmem:[#allocation9 + $0x420] sm:$0xff]
    %v241 = vld [vmem:[#allocation9 + $0x428] sm:$0xff]
    %v242 = vld [vmem:[#allocation9 + $0x430] sm:$0xff]
    %v243 = vld [vmem:[#allocation9 + $0x438] sm:$0xff]
    %v244 = vld [vmem:[#allocation9 + $0x440] sm:$0xff]
    %v245 = vld [vmem:[#allocation9 + $0x448] sm:$0xff]
    %v246 = vld [vmem:[#allocation9 + $0x450] sm:$0xff]
    %v247 = vld [vmem:[#allocation9 + $0x458] sm:$0xff]
    %v248 = vld [vmem:[#allocation9 + $0x460] sm:$0xff]
    %v249 = vld [vmem:[#allocation9 + $0x468] sm:$0xff]
    %v250 = vld [vmem:[#allocation9 + $0x470] sm:$0xff]
    %v251 = vld [vmem:[#allocation9 + $0x478] sm:$0xff]
    %v252 = vld [vmem:[#allocation9 + $0x480] sm:$0xff]
    %v253 = vld [vmem:[#allocation9 + $0x488] sm:$0xff]
    %v254 = vld [vmem:[#allocation9 + $0x490] sm:$0xff]
    %v255 = vld [vmem:[#allocation9 + $0x498] sm:$0xff]
    %v256 = vld [vmem:[#allocation9 + $0x4a0] sm:$0xff]
    %v257 = vld [vmem:[#allocation9 + $0x4a8] sm:$0xff]
    %v258 = vld [vmem:[#allocation9 + $0x4b0] sm:$0xff]
    %v259 = vld [vmem:[#allocation9 + $0x4b8] sm:$0xff]
    %v260 = vld [vmem:[#allocation9 + $0x4c0] sm:$0xff]
    %v261 = vld [vmem:[#allocation9 + $0x4c8] sm:$0xff]
    %v262 = vld [vmem:[#allocation9 + $0x4d0] sm:$0xff]
    %v263 = vld [vmem:[#allocation9 + $0x4d8] sm:$0xff]
    %v264 = vld [vmem:[#allocation9 + $0x4e0] sm:$0xff]
    %v265 = vld [vmem:[#allocation9 + $0x4e8] sm:$0xff]
    %v266 = vld [vmem:[#allocation9 + $0x4f0] sm:$0xff]
    %v267 = vld [vmem:[#allocation9 + $0x4f8] sm:$0xff]
    %v268 = vld [vmem:[#allocation9 + $0x500] sm:$0xff]
    %v269 = vld [vmem:[#allocation9 + $0x508] sm:$0xff]
    %v270 = vld [vmem:[#allocation9 + $0x510] sm:$0xff]
    %v271 = vld [vmem:[#allocation9 + $0x518] sm:$0xff]
    %v272 = vld [vmem:[#allocation9 + $0x520] sm:$0xff]
    %v273 = vld [vmem:[#allocation9 + $0x528] sm:$0xff]
    %v274 = vld [vmem:[#allocation9 + $0x530] sm:$0xff]
    %v275 = vld [vmem:[#allocation9 + $0x538] sm:$0xff]
    %v276 = vld [vmem:[#allocation9 + $0x540] sm:$0xff]
    %v277 = vld [vmem:[#allocation9 + $0x548] sm:$0xff]
    %v278 = vld [vmem:[#allocation9 + $0x550] sm:$0xff]
    %v279 = vld [vmem:[#allocation9 + $0x558] sm:$0xff]
    %v280 = vld [vmem:[#allocation9 + $0x560] sm:$0xff]
    %v281 = vld [vmem:[#allocation9 + $0x568] sm:$0xff]
    %v282 = vld [vmem:[#allocation9 + $0x570] sm:$0xff]
    %v283 = vld [vmem:[#allocation9 + $0x578] sm:$0xff]
    %v284 = vld [vmem:[#allocation9 + $0x580] sm:$0xff]
    %v285 = vld [vmem:[#allocation9 + $0x588] sm:$0xff]
    %v286 = vld [vmem:[#allocation9 + $0x590] sm:$0xff]
    %v287 = vld [vmem:[#allocation9 + $0x598] sm:$0xff]
    %v288 = vld [vmem:[#allocation9 + $0x5a0] sm:$0xff]
    %v289 = vld [vmem:[#allocation9 + $0x5a8] sm:$0xff]
    %v290 = vld [vmem:[#allocation9 + $0x5b0] sm:$0xff]
    %v291 = vld [vmem:[#allocation9 + $0x5b8] sm:$0xff]
    %v292 = vld [vmem:[#allocation9 + $0x5c0] sm:$0xff]
    %v293 = vld [vmem:[#allocation9 + $0x5c8] sm:$0xff]
    %v294 = vld [vmem:[#allocation9 + $0x5d0] sm:$0xff]
    %v295 = vld [vmem:[#allocation9 + $0x5d8] sm:$0xff]
    %v296 = vld [vmem:[#allocation9 + $0x5e0] sm:$0xff]
    %v297 = vld [vmem:[#allocation9 + $0x5e8] sm:$0xff]
    %v298 = vld [vmem:[#allocation9 + $0x5f0] sm:$0xff]
    %v299 = vld [vmem:[#allocation9 + $0x5f8] sm:$0xff]
    %v300 = vld [vmem:[#allocation9 + $0x600] sm:$0xff]
    %v301 = vld [vmem:[#allocation9 + $0x608] sm:$0xff]
    %v302 = vld [vmem:[#allocation9 + $0x610] sm:$0xff]
    %v303 = vld [vmem:[#allocation9 + $0x618] sm:$0xff]
    %v304 = vld [vmem:[#allocation9 + $0x620] sm:$0xff]
    %v305 = vld [vmem:[#allocation9 + $0x628] sm:$0xff]
    %v306 = vld [vmem:[#allocation9 + $0x630] sm:$0xff]
    %v307 = vld [vmem:[#allocation9 + $0x638] sm:$0xff]
    %v308 = vld [vmem:[#allocation9 + $0x640] sm:$0xff]
    %v309 = vld [vmem:[#allocation9 + $0x648] sm:$0xff]
    %v310 = vld [vmem:[#allocation9 + $0x650] sm:$0xff]
    %v311 = vld [vmem:[#allocation9 + $0x658] sm:$0xff]
    %v312 = vld [vmem:[#allocation9 + $0x660] sm:$0xff]
    %v313 = vld [vmem:[#allocation9 + $0x668] sm:$0xff]
    %v314 = vld [vmem:[#allocation9 + $0x670] sm:$0xff]
    %v315 = vld [vmem:[#allocation9 + $0x678] sm:$0xff]
    %v316 = vld [vmem:[#allocation9 + $0x680] sm:$0xff]
    %v317 = vld [vmem:[#allocation9 + $0x688] sm:$0xff]
    %v318 = vld [vmem:[#allocation9 + $0x690] sm:$0xff]
    %v319 = vld [vmem:[#allocation9 + $0x698] sm:$0xff]
    %v320 = vld [vmem:[#allocation9 + $0x6a0] sm:$0xff]
    %v321 = vld [vmem:[#allocation9 + $0x6a8] sm:$0xff]
    %v322 = vld [vmem:[#allocation9 + $0x6b0] sm:$0xff]
    %v323 = vld [vmem:[#allocation9 + $0x6b8] sm:$0xff]
    %v324 = vld [vmem:[#allocation9 + $0x6c0] sm:$0xff]
    %v325 = vld [vmem:[#allocation9 + $0x6c8] sm:$0xff]
    %v326 = vld [vmem:[#allocation9 + $0x6d0] sm:$0xff]
    %v327 = vld [vmem:[#allocation9 + $0x6d8] sm:$0xff]
    %v328 = vld [vmem:[#allocation9 + $0x6e0] sm:$0xff]
    %v329 = vld [vmem:[#allocation9 + $0x6e8] sm:$0xff]
    %v330 = vld [vmem:[#allocation9 + $0x6f0] sm:$0xff]
    %v331 = vld [vmem:[#allocation9 + $0x6f8] sm:$0xff]
    %v332 = vld [vmem:[#allocation9 + $0x700] sm:$0xff]
    %v333 = vld [vmem:[#allocation9 + $0x708] sm:$0xff]
    %v334 = vld [vmem:[#allocation9 + $0x710] sm:$0xff]
    %v335 = vld [vmem:[#allocation9 + $0x718] sm:$0xff]
    %v336 = vld [vmem:[#allocation9 + $0x720] sm:$0xff]
    %v337 = vld [vmem:[#allocation9 + $0x728] sm:$0xff]
    %v338 = vld [vmem:[#allocation9 + $0x730] sm:$0xff]
    %v339 = vld [vmem:[#allocation9 + $0x738] sm:$0xff]
    %v340 = vld [vmem:[#allocation9 + $0x740] sm:$0xff]
    %v341 = vld [vmem:[#allocation9 + $0x748] sm:$0xff]
    %v342 = vld [vmem:[#allocation9 + $0x750] sm:$0xff]
    %v343 = vld [vmem:[#allocation9 + $0x758] sm:$0xff]
    %v344 = vld [vmem:[#allocation9 + $0x760] sm:$0xff]
    %v345 = vld [vmem:[#allocation9 + $0x768] sm:$0xff]
    %v346 = vld [vmem:[#allocation9 + $0x770] sm:$0xff]
    %v347 = vld [vmem:[#allocation9 + $0x778] sm:$0xff]
    %v348 = vld [vmem:[#allocation9 + $0x780] sm:$0xff]
    %v349 = vld [vmem:[#allocation9 + $0x788] sm:$0xff]
    %v350 = vld [vmem:[#allocation9 + $0x790] sm:$0xff]
    %v351 = vld [vmem:[#allocation9 + $0x798] sm:$0xff]
    %v352 = vld [vmem:[#allocation9 + $0x7a0] sm:$0xff]
    %v353 = vld [vmem:[#allocation9 + $0x7a8] sm:$0xff]
    %v354 = vld [vmem:[#allocation9 + $0x7b0] sm:$0xff]
    %v355 = vld [vmem:[#allocation9 + $0x7b8] sm:$0xff]
    %v356 = vld [vmem:[#allocation9 + $0x7c0] sm:$0xff]
    %v357 = vld [vmem:[#allocation9 + $0x7c8] sm:$0xff]
    %v358 = vld [vmem:[#allocation9 + $0x7d0] sm:$0xff]
    %v359 = vld [vmem:[#allocation9 + $0x7d8] sm:$0xff]
    %v360 = vld [vmem:[#allocation9 + $0x7e0] sm:$0xff]
    %v361 = vld [vmem:[#allocation9 + $0x7e8] sm:$0xff]
    %v362 = vld [vmem:[#allocation9 + $0x7f0] sm:$0xff]
    %v363 = vld [vmem:[#allocation9 + $0x7f8] sm:$0xff]
    %v364 = vld [vmem:[#allocation9 + $0x800] sm:$0xff]
    %v365 = vld [vmem:[#allocation9 + $0x808] sm:$0xff]
    %v366 = vld [vmem:[#allocation9 + $0x810] sm:$0xff]
    %v367 = vld [vmem:[#allocation9 + $0x818] sm:$0xff]
    %v368 = vld [vmem:[#allocation9 + $0x820] sm:$0xff]
    %v369 = vld [vmem:[#allocation9 + $0x828] sm:$0xff]
    %v370 = vld [vmem:[#allocation9 + $0x830] sm:$0xff]
    %v371 = vld [vmem:[#allocation9 + $0x838] sm:$0xff]
    %v372 = vld [vmem:[#allocation9 + $0x840] sm:$0xff]
    %v373 = vld [vmem:[#allocation9 + $0x848] sm:$0xff]
    %v374 = vld [vmem:[#allocation9 + $0x850] sm:$0xff]
    %v375 = vld [vmem:[#allocation9 + $0x858] sm:$0xff]
    %v376 = vld [vmem:[#allocation9 + $0x860] sm:$0xff]
    %v377 = vld [vmem:[#allocation9 + $0x868] sm:$0xff]
    %v378 = vld [vmem:[#allocation9 + $0x870] sm:$0xff]
    %v379 = vld [vmem:[#allocation9 + $0x878] sm:$0xff]
    %v380 = vld [vmem:[#allocation9 + $0x880] sm:$0xff]
    %v381 = vld [vmem:[#allocation9 + $0x888] sm:$0xff]
    %v382 = vld [vmem:[#allocation9 + $0x890] sm:$0xff]
    %v383 = vld [vmem:[#allocation9 + $0x898] sm:$0xff]
    %v384 = vld [vmem:[#allocation9 + $0x8a0] sm:$0xff]
    %v385 = vld [vmem:[#allocation9 + $0x8a8] sm:$0xff]
    %v386 = vld [vmem:[#allocation9 + $0x8b0] sm:$0xff]
    %v387 = vld [vmem:[#allocation9 + $0x8b8] sm:$0xff]
    %v388 = vld [vmem:[#allocation9 + $0x8c0] sm:$0xff]
    %v389 = vld [vmem:[#allocation9 + $0x8c8] sm:$0xff]
    %v390 = vld [vmem:[#allocation9 + $0x8d0] sm:$0xff]
    %v391 = vld [vmem:[#allocation9 + $0x8d8] sm:$0xff]
    %v392 = vld [vmem:[#allocation9 + $0x8e0] sm:$0xff]
    %v393 = vld [vmem:[#allocation9 + $0x8e8] sm:$0xff]
    %v394 = vld [vmem:[#allocation9 + $0x8f0] sm:$0xff]
    %v395 = vld [vmem:[#allocation9 + $0x8f8] sm:$0xff]
    %v396 = vld [vmem:[#allocation11] sm:$0xff]
    %v397 = vld [vmem:[#allocation11 + $0x8] sm:$0xf]
    %v400 = vlaneseq
    %v401 = vshrl.u32 %v400, 7
    %v402 = vsub.s32 0, %v401
    %v403 = vrot.slane %v396, %v402
    %v404 = vlaneseq
    %v405 = vshrl.u32 %v404, 7
    %v406 = vsub.s32 1, %v405
    %v407 = vrot.slane %v396, %v406
    %v408 = vlaneseq
    %v409 = vshrl.u32 %v408, 7
    %v410 = vsub.s32 2, %v409
    %v411 = vrot.slane %v396, %v410
    %v412 = vlaneseq
    %v413 = vshrl.u32 %v412, 7
    %v414 = vsub.s32 3, %v413
    %v415 = vrot.slane %v396, %v414
    %v416 = vlaneseq
    %v417 = vshrl.u32 %v416, 7
    %v418 = vsub.s32 4, %v417
    %v419 = vrot.slane %v396, %v418
    %v420 = vlaneseq
    %v421 = vshrl.u32 %v420, 7
    %v422 = vsub.s32 5, %v421
    %v423 = vrot.slane %v396, %v422
    %v424 = vlaneseq
    %v425 = vshrl.u32 %v424, 7
    %v426 = vsub.s32 6, %v425
    %v427 = vrot.slane %v396, %v426
    %v428 = vlaneseq
    %v429 = vshrl.u32 %v428, 7
    %v430 = vsub.s32 7, %v429
    %v431 = vrot.slane %v396, %v430
    %v432 = vlaneseq
    %v433 = vshrl.u32 %v432, 7
    %v434 = vsub.s32 0, %v433
    %v435 = vrot.slane %v397, %v434
    %v436 = vlaneseq
    %v437 = vshrl.u32 %v436, 7
    %v438 = vsub.s32 1, %v437
    %v439 = vrot.slane %v397, %v438
    %v440 = vlaneseq
    %v441 = vshrl.u32 %v440, 7
    %v442 = vsub.s32 2, %v441
    %v443 = vrot.slane %v397, %v442
    %v444 = vlaneseq
    %v445 = vshrl.u32 %v444, 7
    %v446 = vsub.s32 3, %v445
    %v447 = vrot.slane %v397, %v446
    %v748 = vunpack.c.l.b16 %v108
    %v749 = vunpack.c.h.b16 %v108
    %v750 = vunpack.c.l.b16 %v109
    %v751 = vunpack.c.h.b16 %v109
    %v752 = vunpack.c.l.b16 %v110
    %v753 = vunpack.c.h.b16 %v110
    %v754 = vunpack.c.l.b16 %v111
    %v755 = vunpack.c.h.b16 %v111
    %v756 = vunpack.c.l.b16 %v112
    %v757 = vunpack.c.h.b16 %v112
    %v758 = vunpack.c.l.b16 %v113
    %v759 = vunpack.c.h.b16 %v113
    %v760 = vunpack.c.l.b16 %v114
    %v761 = vunpack.c.h.b16 %v114
    %v762 = vunpack.c.l.b16 %v115
    %v763 = vunpack.c.h.b16 %v115
    %v764 = vunpack.c.l.b16 %v116
    %v765 = vunpack.c.h.b16 %v116
    %v766 = vunpack.c.l.b16 %v117
    %v767 = vunpack.c.h.b16 %v117
    %v768 = vunpack.c.l.b16 %v118
    %v769 = vunpack.c.h.b16 %v118
    %v770 = vunpack.c.l.b16 %v119
    %v771 = vunpack.c.h.b16 %v119
    %v772 = vunpack.c.l.b16 %v120
    %v773 = vunpack.c.h.b16 %v120
    %v774 = vunpack.c.l.b16 %v121
    %v775 = vunpack.c.h.b16 %v121
    %v776 = vunpack.c.l.b16 %v122
    %v777 = vunpack.c.h.b16 %v122
    %v778 = vunpack.c.l.b16 %v123
    %v779 = vunpack.c.h.b16 %v123
    %v780 = vunpack.c.l.b16 %v124
    %v781 = vunpack.c.h.b16 %v124
    %v782 = vunpack.c.l.b16 %v125
    %v783 = vunpack.c.h.b16 %v125
    %v784 = vunpack.c.l.b16 %v126
    %v785 = vunpack.c.h.b16 %v126
    %v786 = vunpack.c.l.b16 %v127
    %v787 = vunpack.c.h.b16 %v127
    %v788 = vunpack.c.l.b16 %v128
    %v789 = vunpack.c.h.b16 %v128
    %v790 = vunpack.c.l.b16 %v129
    %v791 = vunpack.c.h.b16 %v129
    %v792 = vunpack.c.l.b16 %v130
    %v793 = vunpack.c.h.b16 %v130
    %v794 = vunpack.c.l.b16 %v131
    %v795 = vunpack.c.h.b16 %v131
    %v796 = vunpack.c.l.b16 %v132
    %v797 = vunpack.c.h.b16 %v132
    %v798 = vunpack.c.l.b16 %v133
    %v799 = vunpack.c.h.b16 %v133
    %v800 = vunpack.c.l.b16 %v134
    %v801 = vunpack.c.h.b16 %v134
    %v802 = vunpack.c.l.b16 %v135
    %v803 = vunpack.c.h.b16 %v135
    %v804 = vunpack.c.l.b16 %v136
    %v805 = vunpack.c.h.b16 %v136
    %v806 = vunpack.c.l.b16 %v137
    %v807 = vunpack.c.h.b16 %v137
    %v808 = vunpack.c.l.b16 %v138
    %v809 = vunpack.c.h.b16 %v138
    %v810 = vunpack.c.l.b16 %v139
    %v811 = vunpack.c.h.b16 %v139
    %v812 = vunpack.c.l.b16 %v140
    %v813 = vunpack.c.h.b16 %v140
    %v814 = vunpack.c.l.b16 %v141
    %v815 = vunpack.c.h.b16 %v141
    %v816 = vunpack.c.l.b16 %v142
    %v817 = vunpack.c.h.b16 %v142
    %v818 = vunpack.c.l.b16 %v143
    %v819 = vunpack.c.h.b16 %v143
    %v820 = vunpack.c.l.b16 %v144
    %v821 = vunpack.c.h.b16 %v144
    %v822 = vunpack.c.l.b16 %v145
    %v823 = vunpack.c.h.b16 %v145
    %v824 = vunpack.c.l.b16 %v146
    %v825 = vunpack.c.h.b16 %v146
    %v826 = vunpack.c.l.b16 %v147
    %v827 = vunpack.c.h.b16 %v147
    %v828 = vunpack.c.l.b16 %v148
    %v829 = vunpack.c.h.b16 %v148
    %v830 = vunpack.c.l.b16 %v149
    %v831 = vunpack.c.h.b16 %v149
    %v832 = vunpack.c.l.b16 %v150
    %v833 = vunpack.c.h.b16 %v150
    %v834 = vunpack.c.l.b16 %v151
    %v835 = vunpack.c.h.b16 %v151
    %v836 = vunpack.c.l.b16 %v152
    %v837 = vunpack.c.h.b16 %v152
    %v838 = vunpack.c.l.b16 %v153
    %v839 = vunpack.c.h.b16 %v153
    %v840 = vunpack.c.l.b16 %v154
    %v841 = vunpack.c.h.b16 %v154
    %v842 = vunpack.c.l.b16 %v155
    %v843 = vunpack.c.h.b16 %v155
    %v844 = vunpack.c.l.b16 %v156
    %v845 = vunpack.c.h.b16 %v156
    %v846 = vunpack.c.l.b16 %v157
    %v847 = vunpack.c.h.b16 %v157
    %v848 = vunpack.c.l.b16 %v158
    %v849 = vunpack.c.h.b16 %v158
    %v850 = vunpack.c.l.b16 %v159
    %v851 = vunpack.c.h.b16 %v159
    %v852 = vunpack.c.l.b16 %v160
    %v853 = vunpack.c.h.b16 %v160
    %v854 = vunpack.c.l.b16 %v161
    %v855 = vunpack.c.h.b16 %v161
    %v856 = vunpack.c.l.b16 %v162
    %v857 = vunpack.c.h.b16 %v162
    %v858 = vunpack.c.l.b16 %v163
    %v859 = vunpack.c.h.b16 %v163
    %v860 = vunpack.c.l.b16 %v164
    %v861 = vunpack.c.h.b16 %v164
    %v862 = vunpack.c.l.b16 %v165
    %v863 = vunpack.c.h.b16 %v165
    %v864 = vunpack.c.l.b16 %v166
    %v865 = vunpack.c.h.b16 %v166
    %v866 = vunpack.c.l.b16 %v167
    %v867 = vunpack.c.h.b16 %v167
    %v868 = vunpack.c.l.b16 %v168
    %v869 = vunpack.c.h.b16 %v168
    %v870 = vunpack.c.l.b16 %v169
    %v871 = vunpack.c.h.b16 %v169
    %v872 = vunpack.c.l.b16 %v170
    %v873 = vunpack.c.h.b16 %v170
    %v874 = vunpack.c.l.b16 %v171
    %v875 = vunpack.c.h.b16 %v171
    %v876 = vunpack.c.l.b16 %v172
    %v877 = vunpack.c.h.b16 %v172
    %v878 = vunpack.c.l.b16 %v173
    %v879 = vunpack.c.h.b16 %v173
    %v880 = vunpack.c.l.b16 %v174
    %v881 = vunpack.c.h.b16 %v174
    %v882 = vunpack.c.l.b16 %v175
    %v883 = vunpack.c.h.b16 %v175
    %v884 = vunpack.c.l.b16 %v176
    %v885 = vunpack.c.h.b16 %v176
    %v886 = vunpack.c.l.b16 %v177
    %v887 = vunpack.c.h.b16 %v177
    %v888 = vunpack.c.l.b16 %v178
    %v889 = vunpack.c.h.b16 %v178
    %v890 = vunpack.c.l.b16 %v179
    %v891 = vunpack.c.h.b16 %v179
    %v892 = vunpack.c.l.b16 %v180
    %v893 = vunpack.c.h.b16 %v180
    %v894 = vunpack.c.l.b16 %v181
    %v895 = vunpack.c.h.b16 %v181
    %v896 = vunpack.c.l.b16 %v182
    %v897 = vunpack.c.h.b16 %v182
    %v898 = vunpack.c.l.b16 %v183
    %v899 = vunpack.c.h.b16 %v183
    %v900 = vunpack.c.l.b16 %v184
    %v901 = vunpack.c.h.b16 %v184
    %v902 = vunpack.c.l.b16 %v185
    %v903 = vunpack.c.h.b16 %v185
    %v904 = vunpack.c.l.b16 %v186
    %v905 = vunpack.c.h.b16 %v186
    %v906 = vunpack.c.l.b16 %v187
    %v907 = vunpack.c.h.b16 %v187
    %v908 = vunpack.c.l.b16 %v188
    %v909 = vunpack.c.h.b16 %v188
    %v910 = vunpack.c.l.b16 %v189
    %v911 = vunpack.c.h.b16 %v189
    %v912 = vunpack.c.l.b16 %v190
    %v913 = vunpack.c.h.b16 %v190
    %v914 = vunpack.c.l.b16 %v191
    %v915 = vunpack.c.h.b16 %v191
    %v916 = vunpack.c.l.b16 %v192
    %v917 = vunpack.c.h.b16 %v192
    %v918 = vunpack.c.l.b16 %v193
    %v919 = vunpack.c.h.b16 %v193
    %v920 = vunpack.c.l.b16 %v194
    %v921 = vunpack.c.h.b16 %v194
    %v922 = vunpack.c.l.b16 %v195
    %v923 = vunpack.c.h.b16 %v195
    %v924 = vunpack.c.l.b16 %v196
    %v925 = vunpack.c.h.b16 %v196
    %v926 = vunpack.c.l.b16 %v197
    %v927 = vunpack.c.h.b16 %v197
    %v928 = vunpack.c.l.b16 %v198
    %v929 = vunpack.c.h.b16 %v198
    %v930 = vunpack.c.l.b16 %v199
    %v931 = vunpack.c.h.b16 %v199
    %v932 = vunpack.c.l.b16 %v200
    %v933 = vunpack.c.h.b16 %v200
    %v934 = vunpack.c.l.b16 %v201
    %v935 = vunpack.c.h.b16 %v201
    %v936 = vunpack.c.l.b16 %v202
    %v937 = vunpack.c.h.b16 %v202
    %v938 = vunpack.c.l.b16 %v203
    %v939 = vunpack.c.h.b16 %v203
    %v940 = vunpack.c.l.b16 %v204
    %v941 = vunpack.c.h.b16 %v204
    %v942 = vunpack.c.l.b16 %v205
    %v943 = vunpack.c.h.b16 %v205
    %v944 = vunpack.c.l.b16 %v206
    %v945 = vunpack.c.h.b16 %v206
    %v946 = vunpack.c.l.b16 %v207
    %v947 = vunpack.c.h.b16 %v207
    %v948 = vunpack.c.l.b16 %v208
    %v949 = vunpack.c.h.b16 %v208
    %v950 = vunpack.c.l.b16 %v209
    %v951 = vunpack.c.h.b16 %v209
    %v952 = vunpack.c.l.b16 %v210
    %v953 = vunpack.c.h.b16 %v210
    %v954 = vunpack.c.l.b16 %v211
    %v955 = vunpack.c.h.b16 %v211
    %v956 = vunpack.c.l.b16 %v212
    %v957 = vunpack.c.h.b16 %v212
    %v958 = vunpack.c.l.b16 %v213
    %v959 = vunpack.c.h.b16 %v213
    %v960 = vunpack.c.l.b16 %v214
    %v961 = vunpack.c.h.b16 %v214
    %v962 = vunpack.c.l.b16 %v215
    %v963 = vunpack.c.h.b16 %v215
    %v964 = vunpack.c.l.b16 %v216
    %v965 = vunpack.c.h.b16 %v216
    %v966 = vunpack.c.l.b16 %v217
    %v967 = vunpack.c.h.b16 %v217
    %v968 = vunpack.c.l.b16 %v218
    %v969 = vunpack.c.h.b16 %v218
    %v970 = vunpack.c.l.b16 %v219
    %v971 = vunpack.c.h.b16 %v219
    %v972 = vunpack.c.l.b16 %v220
    %v973 = vunpack.c.h.b16 %v220
    %v974 = vunpack.c.l.b16 %v221
    %v975 = vunpack.c.h.b16 %v221
    %v976 = vunpack.c.l.b16 %v222
    %v977 = vunpack.c.h.b16 %v222
    %v978 = vunpack.c.l.b16 %v223
    %v979 = vunpack.c.h.b16 %v223
    %v980 = vunpack.c.l.b16 %v224
    %v981 = vunpack.c.h.b16 %v224
    %v982 = vunpack.c.l.b16 %v225
    %v983 = vunpack.c.h.b16 %v225
    %v984 = vunpack.c.l.b16 %v226
    %v985 = vunpack.c.h.b16 %v226
    %v986 = vunpack.c.l.b16 %v227
    %v987 = vunpack.c.h.b16 %v227
    %v988 = vunpack.c.l.b16 %v228
    %v989 = vunpack.c.h.b16 %v228
    %v990 = vunpack.c.l.b16 %v229
    %v991 = vunpack.c.h.b16 %v229
    %v992 = vunpack.c.l.b16 %v230
    %v993 = vunpack.c.h.b16 %v230
    %v994 = vunpack.c.l.b16 %v231
    %v995 = vunpack.c.h.b16 %v231
    %v996 = vunpack.c.l.b16 %v232
    %v997 = vunpack.c.h.b16 %v232
    %v998 = vunpack.c.l.b16 %v233
    %v999 = vunpack.c.h.b16 %v233
    %v1000 = vunpack.c.l.b16 %v234
    %v1001 = vunpack.c.h.b16 %v234
    %v1002 = vunpack.c.l.b16 %v235
    %v1003 = vunpack.c.h.b16 %v235
    %v1004 = vunpack.c.l.b16 %v236
    %v1005 = vunpack.c.h.b16 %v236
    %v1006 = vunpack.c.l.b16 %v237
    %v1007 = vunpack.c.h.b16 %v237
    %v1008 = vunpack.c.l.b16 %v238
    %v1009 = vunpack.c.h.b16 %v238
    %v1010 = vunpack.c.l.b16 %v239
    %v1011 = vunpack.c.h.b16 %v239
    %v1012 = vunpack.c.l.b16 %v240
    %v1013 = vunpack.c.h.b16 %v240
    %v1014 = vunpack.c.l.b16 %v241
    %v1015 = vunpack.c.h.b16 %v241
    %v1016 = vunpack.c.l.b16 %v242
    %v1017 = vunpack.c.h.b16 %v242
    %v1018 = vunpack.c.l.b16 %v243
    %v1019 = vunpack.c.h.b16 %v243
    %v1020 = vunpack.c.l.b16 %v244
    %v1021 = vunpack.c.h.b16 %v244
    %v1022 = vunpack.c.l.b16 %v245
    %v1023 = vunpack.c.h.b16 %v245
    %v1024 = vunpack.c.l.b16 %v246
    %v1025 = vunpack.c.h.b16 %v246
    %v1026 = vunpack.c.l.b16 %v247
    %v1027 = vunpack.c.h.b16 %v247
    %v1028 = vunpack.c.l.b16 %v248
    %v1029 = vunpack.c.h.b16 %v248
    %v1030 = vunpack.c.l.b16 %v249
    %v1031 = vunpack.c.h.b16 %v249
    %v1032 = vunpack.c.l.b16 %v250
    %v1033 = vunpack.c.h.b16 %v250
    %v1034 = vunpack.c.l.b16 %v251
    %v1035 = vunpack.c.h.b16 %v251
    %v1036 = vunpack.c.l.b16 %v252
    %v1037 = vunpack.c.h.b16 %v252
    %v1038 = vunpack.c.l.b16 %v253
    %v1039 = vunpack.c.h.b16 %v253
    %v1040 = vunpack.c.l.b16 %v254
    %v1041 = vunpack.c.h.b16 %v254
    %v1042 = vunpack.c.l.b16 %v255
    %v1043 = vunpack.c.h.b16 %v255
    %v1044 = vunpack.c.l.b16 %v256
    %v1045 = vunpack.c.h.b16 %v256
    %v1046 = vunpack.c.l.b16 %v257
    %v1047 = vunpack.c.h.b16 %v257
    %v1048 = vunpack.c.l.b16 %v258
    %v1049 = vunpack.c.h.b16 %v258
    %v1050 = vunpack.c.l.b16 %v259
    %v1051 = vunpack.c.h.b16 %v259
    %v1052 = vunpack.c.l.b16 %v260
    %v1053 = vunpack.c.h.b16 %v260
    %v1054 = vunpack.c.l.b16 %v261
    %v1055 = vunpack.c.h.b16 %v261
    %v1056 = vunpack.c.l.b16 %v262
    %v1057 = vunpack.c.h.b16 %v262
    %v1058 = vunpack.c.l.b16 %v263
    %v1059 = vunpack.c.h.b16 %v263
    %v1060 = vunpack.c.l.b16 %v264
    %v1061 = vunpack.c.h.b16 %v264
    %v1062 = vunpack.c.l.b16 %v265
    %v1063 = vunpack.c.h.b16 %v265
    %v1064 = vunpack.c.l.b16 %v266
    %v1065 = vunpack.c.h.b16 %v266
    %v1066 = vunpack.c.l.b16 %v267
    %v1067 = vunpack.c.h.b16 %v267
    %v1068 = vunpack.c.l.b16 %v268
    %v1069 = vunpack.c.h.b16 %v268
    %v1070 = vunpack.c.l.b16 %v269
    %v1071 = vunpack.c.h.b16 %v269
    %v1072 = vunpack.c.l.b16 %v270
    %v1073 = vunpack.c.h.b16 %v270
    %v1074 = vunpack.c.l.b16 %v271
    %v1075 = vunpack.c.h.b16 %v271
    %v1076 = vunpack.c.l.b16 %v272
    %v1077 = vunpack.c.h.b16 %v272
    %v1078 = vunpack.c.l.b16 %v273
    %v1079 = vunpack.c.h.b16 %v273
    %v1080 = vunpack.c.l.b16 %v274
    %v1081 = vunpack.c.h.b16 %v274
    %v1082 = vunpack.c.l.b16 %v275
    %v1083 = vunpack.c.h.b16 %v275
    %v1084 = vunpack.c.l.b16 %v276
    %v1085 = vunpack.c.h.b16 %v276
    %v1086 = vunpack.c.l.b16 %v277
    %v1087 = vunpack.c.h.b16 %v277
    %v1088 = vunpack.c.l.b16 %v278
    %v1089 = vunpack.c.h.b16 %v278
    %v1090 = vunpack.c.l.b16 %v279
    %v1091 = vunpack.c.h.b16 %v279
    %v1092 = vunpack.c.l.b16 %v280
    %v1093 = vunpack.c.h.b16 %v280
    %v1094 = vunpack.c.l.b16 %v281
    %v1095 = vunpack.c.h.b16 %v281
    %v1096 = vunpack.c.l.b16 %v282
    %v1097 = vunpack.c.h.b16 %v282
    %v1098 = vunpack.c.l.b16 %v283
    %v1099 = vunpack.c.h.b16 %v283
    %v1100 = vunpack.c.l.b16 %v284
    %v1101 = vunpack.c.h.b16 %v284
    %v1102 = vunpack.c.l.b16 %v285
    %v1103 = vunpack.c.h.b16 %v285
    %v1104 = vunpack.c.l.b16 %v286
    %v1105 = vunpack.c.h.b16 %v286
    %v1106 = vunpack.c.l.b16 %v287
    %v1107 = vunpack.c.h.b16 %v287
    %v1108 = vunpack.c.l.b16 %v288
    %v1109 = vunpack.c.h.b16 %v288
    %v1110 = vunpack.c.l.b16 %v289
    %v1111 = vunpack.c.h.b16 %v289
    %v1112 = vunpack.c.l.b16 %v290
    %v1113 = vunpack.c.h.b16 %v290
    %v1114 = vunpack.c.l.b16 %v291
    %v1115 = vunpack.c.h.b16 %v291
    %v1116 = vunpack.c.l.b16 %v292
    %v1117 = vunpack.c.h.b16 %v292
    %v1118 = vunpack.c.l.b16 %v293
    %v1119 = vunpack.c.h.b16 %v293
    %v1120 = vunpack.c.l.b16 %v294
    %v1121 = vunpack.c.h.b16 %v294
    %v1122 = vunpack.c.l.b16 %v295
    %v1123 = vunpack.c.h.b16 %v295
    %v1124 = vunpack.c.l.b16 %v296
    %v1125 = vunpack.c.h.b16 %v296
    %v1126 = vunpack.c.l.b16 %v297
    %v1127 = vunpack.c.h.b16 %v297
    %v1128 = vunpack.c.l.b16 %v298
    %v1129 = vunpack.c.h.b16 %v298
    %v1130 = vunpack.c.l.b16 %v299
    %v1131 = vunpack.c.h.b16 %v299
    %v1132 = vunpack.c.l.b16 %v300
    %v1133 = vunpack.c.h.b16 %v300
    %v1134 = vunpack.c.l.b16 %v301
    %v1135 = vunpack.c.h.b16 %v301
    %v1136 = vunpack.c.l.b16 %v302
    %v1137 = vunpack.c.h.b16 %v302
    %v1138 = vunpack.c.l.b16 %v303
    %v1139 = vunpack.c.h.b16 %v303
    %v1140 = vunpack.c.l.b16 %v304
    %v1141 = vunpack.c.h.b16 %v304
    %v1142 = vunpack.c.l.b16 %v305
    %v1143 = vunpack.c.h.b16 %v305
    %v1144 = vunpack.c.l.b16 %v306
    %v1145 = vunpack.c.h.b16 %v306
    %v1146 = vunpack.c.l.b16 %v307
    %v1147 = vunpack.c.h.b16 %v307
    %v1148 = vunpack.c.l.b16 %v308
    %v1149 = vunpack.c.h.b16 %v308
    %v1150 = vunpack.c.l.b16 %v309
    %v1151 = vunpack.c.h.b16 %v309
    %v1152 = vunpack.c.l.b16 %v310
    %v1153 = vunpack.c.h.b16 %v310
    %v1154 = vunpack.c.l.b16 %v311
    %v1155 = vunpack.c.h.b16 %v311
    %v1156 = vunpack.c.l.b16 %v312
    %v1157 = vunpack.c.h.b16 %v312
    %v1158 = vunpack.c.l.b16 %v313
    %v1159 = vunpack.c.h.b16 %v313
    %v1160 = vunpack.c.l.b16 %v314
    %v1161 = vunpack.c.h.b16 %v314
    %v1162 = vunpack.c.l.b16 %v315
    %v1163 = vunpack.c.h.b16 %v315
    %v1164 = vunpack.c.l.b16 %v316
    %v1165 = vunpack.c.h.b16 %v316
    %v1166 = vunpack.c.l.b16 %v317
    %v1167 = vunpack.c.h.b16 %v317
    %v1168 = vunpack.c.l.b16 %v318
    %v1169 = vunpack.c.h.b16 %v318
    %v1170 = vunpack.c.l.b16 %v319
    %v1171 = vunpack.c.h.b16 %v319
    %v1172 = vunpack.c.l.b16 %v320
    %v1173 = vunpack.c.h.b16 %v320
    %v1174 = vunpack.c.l.b16 %v321
    %v1175 = vunpack.c.h.b16 %v321
    %v1176 = vunpack.c.l.b16 %v322
    %v1177 = vunpack.c.h.b16 %v322
    %v1178 = vunpack.c.l.b16 %v323
    %v1179 = vunpack.c.h.b16 %v323
    %v1180 = vunpack.c.l.b16 %v324
    %v1181 = vunpack.c.h.b16 %v324
    %v1182 = vunpack.c.l.b16 %v325
    %v1183 = vunpack.c.h.b16 %v325
    %v1184 = vunpack.c.l.b16 %v326
    %v1185 = vunpack.c.h.b16 %v326
    %v1186 = vunpack.c.l.b16 %v327
    %v1187 = vunpack.c.h.b16 %v327
    %v1188 = vunpack.c.l.b16 %v328
    %v1189 = vunpack.c.h.b16 %v328
    %v1190 = vunpack.c.l.b16 %v329
    %v1191 = vunpack.c.h.b16 %v329
    %v1192 = vunpack.c.l.b16 %v330
    %v1193 = vunpack.c.h.b16 %v330
    %v1194 = vunpack.c.l.b16 %v331
    %v1195 = vunpack.c.h.b16 %v331
    %v1196 = vunpack.c.l.b16 %v332
    %v1197 = vunpack.c.h.b16 %v332
    %v1198 = vunpack.c.l.b16 %v333
    %v1199 = vunpack.c.h.b16 %v333
    %v1200 = vunpack.c.l.b16 %v334
    %v1201 = vunpack.c.h.b16 %v334
    %v1202 = vunpack.c.l.b16 %v335
    %v1203 = vunpack.c.h.b16 %v335
    %v1204 = vunpack.c.l.b16 %v336
    %v1205 = vunpack.c.h.b16 %v336
    %v1206 = vunpack.c.l.b16 %v337
    %v1207 = vunpack.c.h.b16 %v337
    %v1208 = vunpack.c.l.b16 %v338
    %v1209 = vunpack.c.h.b16 %v338
    %v1210 = vunpack.c.l.b16 %v339
    %v1211 = vunpack.c.h.b16 %v339
    %v1212 = vunpack.c.l.b16 %v340
    %v1213 = vunpack.c.h.b16 %v340
    %v1214 = vunpack.c.l.b16 %v341
    %v1215 = vunpack.c.h.b16 %v341
    %v1216 = vunpack.c.l.b16 %v342
    %v1217 = vunpack.c.h.b16 %v342
    %v1218 = vunpack.c.l.b16 %v343
    %v1219 = vunpack.c.h.b16 %v343
    %v1220 = vunpack.c.l.b16 %v344
    %v1221 = vunpack.c.h.b16 %v344
    %v1222 = vunpack.c.l.b16 %v345
    %v1223 = vunpack.c.h.b16 %v345
    %v1224 = vunpack.c.l.b16 %v346
    %v1225 = vunpack.c.h.b16 %v346
    %v1226 = vunpack.c.l.b16 %v347
    %v1227 = vunpack.c.h.b16 %v347
    %v1228 = vunpack.c.l.b16 %v348
    %v1229 = vunpack.c.h.b16 %v348
    %v1230 = vunpack.c.l.b16 %v349
    %v1231 = vunpack.c.h.b16 %v349
    %v1232 = vunpack.c.l.b16 %v350
    %v1233 = vunpack.c.h.b16 %v350
    %v1234 = vunpack.c.l.b16 %v351
    %v1235 = vunpack.c.h.b16 %v351
    %v1236 = vunpack.c.l.b16 %v352
    %v1237 = vunpack.c.h.b16 %v352
    %v1238 = vunpack.c.l.b16 %v353
    %v1239 = vunpack.c.h.b16 %v353
    %v1240 = vunpack.c.l.b16 %v354
    %v1241 = vunpack.c.h.b16 %v354
    %v1242 = vunpack.c.l.b16 %v355
    %v1243 = vunpack.c.h.b16 %v355
    %v1244 = vunpack.c.l.b16 %v356
    %v1245 = vunpack.c.h.b16 %v356
    %v1246 = vunpack.c.l.b16 %v357
    %v1247 = vunpack.c.h.b16 %v357
    %v1248 = vunpack.c.l.b16 %v358
    %v1249 = vunpack.c.h.b16 %v358
    %v1250 = vunpack.c.l.b16 %v359
    %v1251 = vunpack.c.h.b16 %v359
    %v1252 = vunpack.c.l.b16 %v360
    %v1253 = vunpack.c.h.b16 %v360
    %v1254 = vunpack.c.l.b16 %v361
    %v1255 = vunpack.c.h.b16 %v361
    %v1256 = vunpack.c.l.b16 %v362
    %v1257 = vunpack.c.h.b16 %v362
    %v1258 = vunpack.c.l.b16 %v363
    %v1259 = vunpack.c.h.b16 %v363
    %v1260 = vunpack.c.l.b16 %v364
    %v1261 = vunpack.c.h.b16 %v364
    %v1262 = vunpack.c.l.b16 %v365
    %v1263 = vunpack.c.h.b16 %v365
    %v1264 = vunpack.c.l.b16 %v366
    %v1265 = vunpack.c.h.b16 %v366
    %v1266 = vunpack.c.l.b16 %v367
    %v1267 = vunpack.c.h.b16 %v367
    %v1268 = vunpack.c.l.b16 %v368
    %v1269 = vunpack.c.h.b16 %v368
    %v1270 = vunpack.c.l.b16 %v369
    %v1271 = vunpack.c.h.b16 %v369
    %v1272 = vunpack.c.l.b16 %v370
    %v1273 = vunpack.c.h.b16 %v370
    %v1274 = vunpack.c.l.b16 %v371
    %v1275 = vunpack.c.h.b16 %v371
    %v1276 = vunpack.c.l.b16 %v372
    %v1277 = vunpack.c.h.b16 %v372
    %v1278 = vunpack.c.l.b16 %v373
    %v1279 = vunpack.c.h.b16 %v373
    %v1280 = vunpack.c.l.b16 %v374
    %v1281 = vunpack.c.h.b16 %v374
    %v1282 = vunpack.c.l.b16 %v375
    %v1283 = vunpack.c.h.b16 %v375
    %v1284 = vunpack.c.l.b16 %v376
    %v1285 = vunpack.c.h.b16 %v376
    %v1286 = vunpack.c.l.b16 %v377
    %v1287 = vunpack.c.h.b16 %v377
    %v1288 = vunpack.c.l.b16 %v378
    %v1289 = vunpack.c.h.b16 %v378
    %v1290 = vunpack.c.l.b16 %v379
    %v1291 = vunpack.c.h.b16 %v379
    %v1292 = vunpack.c.l.b16 %v380
    %v1293 = vunpack.c.h.b16 %v380
    %v1294 = vunpack.c.l.b16 %v381
    %v1295 = vunpack.c.h.b16 %v381
    %v1296 = vunpack.c.l.b16 %v382
    %v1297 = vunpack.c.h.b16 %v382
    %v1298 = vunpack.c.l.b16 %v383
    %v1299 = vunpack.c.h.b16 %v383
    %v1300 = vunpack.c.l.b16 %v384
    %v1301 = vunpack.c.h.b16 %v384
    %v1302 = vunpack.c.l.b16 %v385
    %v1303 = vunpack.c.h.b16 %v385
    %v1304 = vunpack.c.l.b16 %v386
    %v1305 = vunpack.c.h.b16 %v386
    %v1306 = vunpack.c.l.b16 %v387
    %v1307 = vunpack.c.h.b16 %v387
    %v1308 = vunpack.c.l.b16 %v388
    %v1309 = vunpack.c.h.b16 %v388
    %v1310 = vunpack.c.l.b16 %v389
    %v1311 = vunpack.c.h.b16 %v389
    %v1312 = vunpack.c.l.b16 %v390
    %v1313 = vunpack.c.h.b16 %v390
    %v1314 = vunpack.c.l.b16 %v391
    %v1315 = vunpack.c.h.b16 %v391
    %v1316 = vunpack.c.l.b16 %v392
    %v1317 = vunpack.c.h.b16 %v392
    %v1318 = vunpack.c.l.b16 %v393
    %v1319 = vunpack.c.h.b16 %v393
    %v1320 = vunpack.c.l.b16 %v394
    %v1321 = vunpack.c.h.b16 %v394
    %v1322 = vunpack.c.l.b16 %v395
    %v1323 = vunpack.c.h.b16 %v395
    %v1324 = vpack.c.b16 %v760, %v748
    %v1325 = vpack.c.b16 %v761, %v749
    %v1326 = vpack.c.b16 %v762, %v750
    %v1327 = vpack.c.b16 %v763, %v751
    %v1328 = vpack.c.b16 %v764, %v752
    %v1329 = vpack.c.b16 %v765, %v753
    %v1330 = vpack.c.b16 %v766, %v754
    %v1331 = vpack.c.b16 %v767, %v755
    %v1332 = vpack.c.b16 %v768, %v756
    %v1333 = vpack.c.b16 %v769, %v757
    %v1334 = vpack.c.b16 %v770, %v758
    %v1335 = vpack.c.b16 %v771, %v759
    %v1336 = vpack.c.b16 %v784, %v772
    %v1337 = vpack.c.b16 %v785, %v773
    %v1338 = vpack.c.b16 %v786, %v774
    %v1339 = vpack.c.b16 %v787, %v775
    %v1340 = vpack.c.b16 %v788, %v776
    %v1341 = vpack.c.b16 %v789, %v777
    %v1342 = vpack.c.b16 %v790, %v778
    %v1343 = vpack.c.b16 %v791, %v779
    %v1344 = vpack.c.b16 %v792, %v780
    %v1345 = vpack.c.b16 %v793, %v781
    %v1346 = vpack.c.b16 %v794, %v782
    %v1347 = vpack.c.b16 %v795, %v783
    %v1348 = vpack.c.b16 %v808, %v796
    %v1349 = vpack.c.b16 %v809, %v797
    %v1350 = vpack.c.b16 %v810, %v798
    %v1351 = vpack.c.b16 %v811, %v799
    %v1352 = vpack.c.b16 %v812, %v800
    %v1353 = vpack.c.b16 %v813, %v801
    %v1354 = vpack.c.b16 %v814, %v802
    %v1355 = vpack.c.b16 %v815, %v803
    %v1356 = vpack.c.b16 %v816, %v804
    %v1357 = vpack.c.b16 %v817, %v805
    %v1358 = vpack.c.b16 %v818, %v806
    %v1359 = vpack.c.b16 %v819, %v807
    %v1360 = vpack.c.b16 %v832, %v820
    %v1361 = vpack.c.b16 %v833, %v821
    %v1362 = vpack.c.b16 %v834, %v822
    %v1363 = vpack.c.b16 %v835, %v823
    %v1364 = vpack.c.b16 %v836, %v824
    %v1365 = vpack.c.b16 %v837, %v825
    %v1366 = vpack.c.b16 %v838, %v826
    %v1367 = vpack.c.b16 %v839, %v827
    %v1368 = vpack.c.b16 %v840, %v828
    %v1369 = vpack.c.b16 %v841, %v829
    %v1370 = vpack.c.b16 %v842, %v830
    %v1371 = vpack.c.b16 %v843, %v831
    %v1372 = vpack.c.b16 %v856, %v844
    %v1373 = vpack.c.b16 %v857, %v845
    %v1374 = vpack.c.b16 %v858, %v846
    %v1375 = vpack.c.b16 %v859, %v847
    %v1376 = vpack.c.b16 %v860, %v848
    %v1377 = vpack.c.b16 %v861, %v849
    %v1378 = vpack.c.b16 %v862, %v850
    %v1379 = vpack.c.b16 %v863, %v851
    %v1380 = vpack.c.b16 %v864, %v852
    %v1381 = vpack.c.b16 %v865, %v853
    %v1382 = vpack.c.b16 %v866, %v854
    %v1383 = vpack.c.b16 %v867, %v855
    %v1384 = vpack.c.b16 %v880, %v868
    %v1385 = vpack.c.b16 %v881, %v869
    %v1386 = vpack.c.b16 %v882, %v870
    %v1387 = vpack.c.b16 %v883, %v871
    %v1388 = vpack.c.b16 %v884, %v872
    %v1389 = vpack.c.b16 %v885, %v873
    %v1390 = vpack.c.b16 %v886, %v874
    %v1391 = vpack.c.b16 %v887, %v875
    %v1392 = vpack.c.b16 %v888, %v876
    %v1393 = vpack.c.b16 %v889, %v877
    %v1394 = vpack.c.b16 %v890, %v878
    %v1395 = vpack.c.b16 %v891, %v879
    %v1396 = vpack.c.b16 %v904, %v892
    %v1397 = vpack.c.b16 %v905, %v893
    %v1398 = vpack.c.b16 %v906, %v894
    %v1399 = vpack.c.b16 %v907, %v895
    %v1400 = vpack.c.b16 %v908, %v896
    %v1401 = vpack.c.b16 %v909, %v897
    %v1402 = vpack.c.b16 %v910, %v898
    %v1403 = vpack.c.b16 %v911, %v899
    %v1404 = vpack.c.b16 %v912, %v900
    %v1405 = vpack.c.b16 %v913, %v901
    %v1406 = vpack.c.b16 %v914, %v902
    %v1407 = vpack.c.b16 %v915, %v903
    %v1408 = vpack.c.b16 %v928, %v916
    %v1409 = vpack.c.b16 %v929, %v917
    %v1410 = vpack.c.b16 %v930, %v918
    %v1411 = vpack.c.b16 %v931, %v919
    %v1412 = vpack.c.b16 %v932, %v920
    %v1413 = vpack.c.b16 %v933, %v921
    %v1414 = vpack.c.b16 %v934, %v922
    %v1415 = vpack.c.b16 %v935, %v923
    %v1416 = vpack.c.b16 %v936, %v924
    %v1417 = vpack.c.b16 %v937, %v925
    %v1418 = vpack.c.b16 %v938, %v926
    %v1419 = vpack.c.b16 %v939, %v927
    %v1420 = vpack.c.b16 %v952, %v940
    %v1421 = vpack.c.b16 %v953, %v941
    %v1422 = vpack.c.b16 %v954, %v942
    %v1423 = vpack.c.b16 %v955, %v943
    %v1424 = vpack.c.b16 %v956, %v944
    %v1425 = vpack.c.b16 %v957, %v945
    %v1426 = vpack.c.b16 %v958, %v946
    %v1427 = vpack.c.b16 %v959, %v947
    %v1428 = vpack.c.b16 %v960, %v948
    %v1429 = vpack.c.b16 %v961, %v949
    %v1430 = vpack.c.b16 %v962, %v950
    %v1431 = vpack.c.b16 %v963, %v951
    %v1432 = vpack.c.b16 %v976, %v964
    %v1433 = vpack.c.b16 %v977, %v965
    %v1434 = vpack.c.b16 %v978, %v966
    %v1435 = vpack.c.b16 %v979, %v967
    %v1436 = vpack.c.b16 %v980, %v968
    %v1437 = vpack.c.b16 %v981, %v969
    %v1438 = vpack.c.b16 %v982, %v970
    %v1439 = vpack.c.b16 %v983, %v971
    %v1440 = vpack.c.b16 %v984, %v972
    %v1441 = vpack.c.b16 %v985, %v973
    %v1442 = vpack.c.b16 %v986, %v974
    %v1443 = vpack.c.b16 %v987, %v975
    %v1444 = vpack.c.b16 %v1000, %v988
    %v1445 = vpack.c.b16 %v1001, %v989
    %v1446 = vpack.c.b16 %v1002, %v990
    %v1447 = vpack.c.b16 %v1003, %v991
    %v1448 = vpack.c.b16 %v1004, %v992
    %v1449 = vpack.c.b16 %v1005, %v993
    %v1450 = vpack.c.b16 %v1006, %v994
    %v1451 = vpack.c.b16 %v1007, %v995
    %v1452 = vpack.c.b16 %v1008, %v996
    %v1453 = vpack.c.b16 %v1009, %v997
    %v1454 = vpack.c.b16 %v1010, %v998
    %v1455 = vpack.c.b16 %v1011, %v999
    %v1456 = vpack.c.b16 %v1024, %v1012
    %v1457 = vpack.c.b16 %v1025, %v1013
    %v1458 = vpack.c.b16 %v1026, %v1014
    %v1459 = vpack.c.b16 %v1027, %v1015
    %v1460 = vpack.c.b16 %v1028, %v1016
    %v1461 = vpack.c.b16 %v1029, %v1017
    %v1462 = vpack.c.b16 %v1030, %v1018
    %v1463 = vpack.c.b16 %v1031, %v1019
    %v1464 = vpack.c.b16 %v1032, %v1020
    %v1465 = vpack.c.b16 %v1033, %v1021
    %v1466 = vpack.c.b16 %v1034, %v1022
    %v1467 = vpack.c.b16 %v1035, %v1023
    %v1468 = vpack.c.b16 %v1048, %v1036
    %v1469 = vpack.c.b16 %v1049, %v1037
    %v1470 = vpack.c.b16 %v1050, %v1038
    %v1471 = vpack.c.b16 %v1051, %v1039
    %v1472 = vpack.c.b16 %v1052, %v1040
    %v1473 = vpack.c.b16 %v1053, %v1041
    %v1474 = vpack.c.b16 %v1054, %v1042
    %v1475 = vpack.c.b16 %v1055, %v1043
    %v1476 = vpack.c.b16 %v1056, %v1044
    %v1477 = vpack.c.b16 %v1057, %v1045
    %v1478 = vpack.c.b16 %v1058, %v1046
    %v1479 = vpack.c.b16 %v1059, %v1047
    %v1480 = vpack.c.b16 %v1072, %v1060
    %v1481 = vpack.c.b16 %v1073, %v1061
    %v1482 = vpack.c.b16 %v1074, %v1062
    %v1483 = vpack.c.b16 %v1075, %v1063
    %v1484 = vpack.c.b16 %v1076, %v1064
    %v1485 = vpack.c.b16 %v1077, %v1065
    %v1486 = vpack.c.b16 %v1078, %v1066
    %v1487 = vpack.c.b16 %v1079, %v1067
    %v1488 = vpack.c.b16 %v1080, %v1068
    %v1489 = vpack.c.b16 %v1081, %v1069
    %v1490 = vpack.c.b16 %v1082, %v1070
    %v1491 = vpack.c.b16 %v1083, %v1071
    %v1492 = vpack.c.b16 %v1096, %v1084
    %v1493 = vpack.c.b16 %v1097, %v1085
    %v1494 = vpack.c.b16 %v1098, %v1086
    %v1495 = vpack.c.b16 %v1099, %v1087
    %v1496 = vpack.c.b16 %v1100, %v1088
    %v1497 = vpack.c.b16 %v1101, %v1089
    %v1498 = vpack.c.b16 %v1102, %v1090
    %v1499 = vpack.c.b16 %v1103, %v1091
    %v1500 = vpack.c.b16 %v1104, %v1092
    %v1501 = vpack.c.b16 %v1105, %v1093
    %v1502 = vpack.c.b16 %v1106, %v1094
    %v1503 = vpack.c.b16 %v1107, %v1095
    %v1504 = vpack.c.b16 %v1120, %v1108
    %v1505 = vpack.c.b16 %v1121, %v1109
    %v1506 = vpack.c.b16 %v1122, %v1110
    %v1507 = vpack.c.b16 %v1123, %v1111
    %v1508 = vpack.c.b16 %v1124, %v1112
    %v1509 = vpack.c.b16 %v1125, %v1113
    %v1510 = vpack.c.b16 %v1126, %v1114
    %v1511 = vpack.c.b16 %v1127, %v1115
    %v1512 = vpack.c.b16 %v1128, %v1116
    %v1513 = vpack.c.b16 %v1129, %v1117
    %v1514 = vpack.c.b16 %v1130, %v1118
    %v1515 = vpack.c.b16 %v1131, %v1119
    %v1516 = vpack.c.b16 %v1144, %v1132
    %v1517 = vpack.c.b16 %v1145, %v1133
    %v1518 = vpack.c.b16 %v1146, %v1134
    %v1519 = vpack.c.b16 %v1147, %v1135
    %v1520 = vpack.c.b16 %v1148, %v1136
    %v1521 = vpack.c.b16 %v1149, %v1137
    %v1522 = vpack.c.b16 %v1150, %v1138
    %v1523 = vpack.c.b16 %v1151, %v1139
    %v1524 = vpack.c.b16 %v1152, %v1140
    %v1525 = vpack.c.b16 %v1153, %v1141
    %v1526 = vpack.c.b16 %v1154, %v1142
    %v1527 = vpack.c.b16 %v1155, %v1143
    %v1528 = vpack.c.b16 %v1168, %v1156
    %v1529 = vpack.c.b16 %v1169, %v1157
    %v1530 = vpack.c.b16 %v1170, %v1158
    %v1531 = vpack.c.b16 %v1171, %v1159
    %v1532 = vpack.c.b16 %v1172, %v1160
    %v1533 = vpack.c.b16 %v1173, %v1161
    %v1534 = vpack.c.b16 %v1174, %v1162
    %v1535 = vpack.c.b16 %v1175, %v1163
    %v1536 = vpack.c.b16 %v1176, %v1164
    %v1537 = vpack.c.b16 %v1177, %v1165
    %v1538 = vpack.c.b16 %v1178, %v1166
    %v1539 = vpack.c.b16 %v1179, %v1167
    %v1540 = vpack.c.b16 %v1192, %v1180
    %v1541 = vpack.c.b16 %v1193, %v1181
    %v1542 = vpack.c.b16 %v1194, %v1182
    %v1543 = vpack.c.b16 %v1195, %v1183
    %v1544 = vpack.c.b16 %v1196, %v1184
    %v1545 = vpack.c.b16 %v1197, %v1185
    %v1546 = vpack.c.b16 %v1198, %v1186
    %v1547 = vpack.c.b16 %v1199, %v1187
    %v1548 = vpack.c.b16 %v1200, %v1188
    %v1549 = vpack.c.b16 %v1201, %v1189
    %v1550 = vpack.c.b16 %v1202, %v1190
    %v1551 = vpack.c.b16 %v1203, %v1191
    %v1552 = vpack.c.b16 %v1216, %v1204
    %v1553 = vpack.c.b16 %v1217, %v1205
    %v1554 = vpack.c.b16 %v1218, %v1206
    %v1555 = vpack.c.b16 %v1219, %v1207
    %v1556 = vpack.c.b16 %v1220, %v1208
    %v1557 = vpack.c.b16 %v1221, %v1209
    %v1558 = vpack.c.b16 %v1222, %v1210
    %v1559 = vpack.c.b16 %v1223, %v1211
    %v1560 = vpack.c.b16 %v1224, %v1212
    %v1561 = vpack.c.b16 %v1225, %v1213
    %v1562 = vpack.c.b16 %v1226, %v1214
    %v1563 = vpack.c.b16 %v1227, %v1215
    %v1564 = vpack.c.b16 %v1240, %v1228
    %v1565 = vpack.c.b16 %v1241, %v1229
    %v1566 = vpack.c.b16 %v1242, %v1230
    %v1567 = vpack.c.b16 %v1243, %v1231
    %v1568 = vpack.c.b16 %v1244, %v1232
    %v1569 = vpack.c.b16 %v1245, %v1233
    %v1570 = vpack.c.b16 %v1246, %v1234
    %v1571 = vpack.c.b16 %v1247, %v1235
    %v1572 = vpack.c.b16 %v1248, %v1236
    %v1573 = vpack.c.b16 %v1249, %v1237
    %v1574 = vpack.c.b16 %v1250, %v1238
    %v1575 = vpack.c.b16 %v1251, %v1239
    %v1576 = vpack.c.b16 %v1264, %v1252
    %v1577 = vpack.c.b16 %v1265, %v1253
    %v1578 = vpack.c.b16 %v1266, %v1254
    %v1579 = vpack.c.b16 %v1267, %v1255
    %v1580 = vpack.c.b16 %v1268, %v1256
    %v1581 = vpack.c.b16 %v1269, %v1257
    %v1582 = vpack.c.b16 %v1270, %v1258
    %v1583 = vpack.c.b16 %v1271, %v1259
    %v1584 = vpack.c.b16 %v1272, %v1260
    %v1585 = vpack.c.b16 %v1273, %v1261
    %v1586 = vpack.c.b16 %v1274, %v1262
    %v1587 = vpack.c.b16 %v1275, %v1263
    %v1588 = vpack.c.b16 %v1288, %v1276
    %v1589 = vpack.c.b16 %v1289, %v1277
    %v1590 = vpack.c.b16 %v1290, %v1278
    %v1591 = vpack.c.b16 %v1291, %v1279
    %v1592 = vpack.c.b16 %v1292, %v1280
    %v1593 = vpack.c.b16 %v1293, %v1281
    %v1594 = vpack.c.b16 %v1294, %v1282
    %v1595 = vpack.c.b16 %v1295, %v1283
    %v1596 = vpack.c.b16 %v1296, %v1284
    %v1597 = vpack.c.b16 %v1297, %v1285
    %v1598 = vpack.c.b16 %v1298, %v1286
    %v1599 = vpack.c.b16 %v1299, %v1287
    %v1600 = vpack.c.b16 %v1312, %v1300
    %v1601 = vpack.c.b16 %v1313, %v1301
    %v1602 = vpack.c.b16 %v1314, %v1302
    %v1603 = vpack.c.b16 %v1315, %v1303
    %v1604 = vpack.c.b16 %v1316, %v1304
    %v1605 = vpack.c.b16 %v1317, %v1305
    %v1606 = vpack.c.b16 %v1318, %v1306
    %v1607 = vpack.c.b16 %v1319, %v1307
    %v1608 = vpack.c.b16 %v1320, %v1308
    %v1609 = vpack.c.b16 %v1321, %v1309
    %v1610 = vpack.c.b16 %v1322, %v1310
    %v1611 = vpack.c.b16 %v1323, %v1311
    %1900 = vmatprep.subr.bf16.mxu0 %v1409
    %1901 = vmatpush1.bf16.msra.mxu0 %v1408
    %1902 = vmatprep.subr.bf16.mxu0 %v1397
    %1903 = vmatpush1.bf16.msra.mxu0 %v1396
    %1904 = vmatprep.subr.bf16.mxu0 %v1385
    %1905 = vmatpush1.bf16.msra.mxu0 %v1384
    %1906 = vmatprep.subr.bf16.mxu0 %v1373
    %1907 = vmatpush1.bf16.msra.mxu0 %v1372
    %1908 = vmatprep.subr.bf16.mxu0 %v1361
    %1909 = vmatpush1.bf16.msra.mxu0 %v1360
    %1910 = vmatprep.subr.bf16.mxu0 %v1349
    %1911 = vmatpush1.bf16.msra.mxu0 %v1348
    %1912 = vmatprep.subr.bf16.mxu0 %v1337
    %1913 = vmatpush1.bf16.msra.mxu0 %v1336
    %1914 = vmatprep.subr.bf16.mxu0 %v1325
    %1915 = vmatpush1.bf16.msra.mxu0 %v1324
    %1916 = vmatprep.subr.bf16.mxu0 %v1505
    %1917 = vmatpush2.bf16.msra.mxu0 %v1504
    %1918 = vmatprep.subr.bf16.mxu0 %v1493
    %1919 = vmatpush2.bf16.msra.mxu0 %v1492
    %1920 = vmatprep.subr.bf16.mxu0 %v1481
    %1921 = vmatpush2.bf16.msra.mxu0 %v1480
    %1922 = vmatprep.subr.bf16.mxu0 %v1469
    %1923 = vmatpush2.bf16.msra.mxu0 %v1468
    %1924 = vmatprep.subr.bf16.mxu0 %v1457
    %1925 = vmatpush2.bf16.msra.mxu0 %v1456
    %1926 = vmatprep.subr.bf16.mxu0 %v1445
    %1927 = vmatpush2.bf16.msra.mxu0 %v1444
    %1928 = vmatprep.subr.bf16.mxu0 %v1433
    %1929 = vmatpush2.bf16.msra.mxu0 %v1432
    %1930 = vmatprep.subr.bf16.mxu0 %v1421
    %1931 = vmatpush2.bf16.msra.mxu0 %v1420
    %1932 = vmatprep.mubr.bf16.mxu0 %v106
    %1933 = vmatmul.mubr.bf16.gmra.mxu0 %v105
    %v1934 = vpop.f32.mrf.mxu0
    %v1935 = vadd.f32 %v403, %v1934
    %v1936 = vpop.f32.mrf.mxu0
    %v1937 = vadd.f32 %v407, %v1936
    %v1938 = vpop.f32.mrf.mxu0
    %v1939 = vadd.f32 %v403, %v1938
    %v1940 = vpop.f32.mrf.mxu0
    %v1941 = vadd.f32 %v407, %v1940
    %1942 = vdwg.mxu0
    %1943 = vmatprep.subr.bf16.mxu0 %v1601
    %1944 = vmatpush1.bf16.msra.mxu0 %v1600
    %1945 = vmatprep.subr.bf16.mxu0 %v1589
    %1946 = vmatpush1.bf16.msra.mxu0 %v1588
    %1947 = vmatprep.subr.bf16.mxu0 %v1577
    %1948 = vmatpush1.bf16.msra.mxu0 %v1576
    %1949 = vmatprep.subr.bf16.mxu0 %v1565
    %1950 = vmatpush1.bf16.msra.mxu0 %v1564
    %1951 = vmatprep.subr.bf16.mxu0 %v1553
    %1952 = vmatpush1.bf16.msra.mxu0 %v1552
    %1953 = vmatprep.subr.bf16.mxu0 %v1541
    %1954 = vmatpush1.bf16.msra.mxu0 %v1540
    %1955 = vmatprep.subr.bf16.mxu0 %v1529
    %1956 = vmatpush1.bf16.msra.mxu0 %v1528
    %1957 = vmatprep.subr.bf16.mxu0 %v1517
    %1958 = vmatpush1.bf16.msra.mxu0 %v1516
    %1959 = vmatprep.subr.bf16.mxu0 0
    %1960 = vmatpush2.bf16.msra.mxu0 0
    %1961 = vmatprep.subr.bf16.mxu0 0
    %1962 = vmatpush2.bf16.msra.mxu0 0
    %1963 = vmatprep.subr.bf16.mxu0 0
    %1964 = vmatpush2.bf16.msra.mxu0 0
    %1965 = vmatprep.subr.bf16.mxu0 0
    %1966 = vmatpush2.bf16.msra.mxu0 0
    %1967 = vmatprep.subr.bf16.mxu0 0
    %1968 = vmatpush2.bf16.msra.mxu0 0
    %1969 = vmatprep.subr.bf16.mxu0 0
    %1970 = vmatpush2.bf16.msra.mxu0 0
    %1971 = vmatprep.subr.bf16.mxu0 0
    %1972 = vmatpush2.bf16.msra.mxu0 0
    %1973 = vmatprep.subr.bf16.mxu0 0
    %1974 = vmatpush2.bf16.msra.mxu0 0
    %1975 = vmatprep.mubr.bf16.mxu0 0
    %1976 = vmatmul.mubr.bf16.gmra.mxu0 %v107
    %v1977 = vpop.f32.mrf.mxu0
    %v1978 = vadd.f32 %v1935, %v1977
    %v1979 = vpop.f32.mrf.mxu0
    %v1980 = vadd.f32 %v1937, %v1979
    %v1981 = vpop.f32.mrf.mxu0
    %v1982 = vadd.f32 %v1939, %v1981
    %v1983 = vpop.f32.mrf.mxu0
    %v1984 = vadd.f32 %v1941, %v1983
    %1985 = vdwg.mxu0
    %1986 = vmatprep.subr.bf16.mxu0 %v1411
    %1987 = vmatpush1.bf16.msra.mxu0 %v1410
    %1988 = vmatprep.subr.bf16.mxu0 %v1399
    %1989 = vmatpush1.bf16.msra.mxu0 %v1398
    %1990 = vmatprep.subr.bf16.mxu0 %v1387
    %1991 = vmatpush1.bf16.msra.mxu0 %v1386
    %1992 = vmatprep.subr.bf16.mxu0 %v1375
    %1993 = vmatpush1.bf16.msra.mxu0 %v1374
    %1994 = vmatprep.subr.bf16.mxu0 %v1363
    %1995 = vmatpush1.bf16.msra.mxu0 %v1362
    %1996 = vmatprep.subr.bf16.mxu0 %v1351
    %1997 = vmatpush1.bf16.msra.mxu0 %v1350
    %1998 = vmatprep.subr.bf16.mxu0 %v1339
    %1999 = vmatpush1.bf16.msra.mxu0 %v1338
    %2000 = vmatprep.subr.bf16.mxu0 %v1327
    %2001 = vmatpush1.bf16.msra.mxu0 %v1326
    %2002 = vmatprep.subr.bf16.mxu0 %v1507
    %2003 = vmatpush2.bf16.msra.mxu0 %v1506
    %2004 = vmatprep.subr.bf16.mxu0 %v1495
    %2005 = vmatpush2.bf16.msra.mxu0 %v1494
    %2006 = vmatprep.subr.bf16.mxu0 %v1483
    %2007 = vmatpush2.bf16.msra.mxu0 %v1482
    %2008 = vmatprep.subr.bf16.mxu0 %v1471
    %2009 = vmatpush2.bf16.msra.mxu0 %v1470
    %2010 = vmatprep.subr.bf16.mxu0 %v1459
    %2011 = vmatpush2.bf16.msra.mxu0 %v1458
    %2012 = vmatprep.subr.bf16.mxu0 %v1447
    %2013 = vmatpush2.bf16.msra.mxu0 %v1446
    %2014 = vmatprep.subr.bf16.mxu0 %v1435
    %2015 = vmatpush2.bf16.msra.mxu0 %v1434
    %2016 = vmatprep.subr.bf16.mxu0 %v1423
    %2017 = vmatpush2.bf16.msra.mxu0 %v1422
    %2018 = vmatprep.mubr.bf16.mxu0 %v106
    %2019 = vmatmul.mubr.bf16.gmra.mxu0 %v105
    %v2020 = vpop.f32.mrf.mxu0
    %v2021 = vadd.f32 %v411, %v2020
    %v2022 = vpop.f32.mrf.mxu0
    %v2023 = vadd.f32 %v415, %v2022
    %v2024 = vpop.f32.mrf.mxu0
    %v2025 = vadd.f32 %v411, %v2024
    %v2026 = vpop.f32.mrf.mxu0
    %v2027 = vadd.f32 %v415, %v2026
    %2028 = vdwg.mxu0
    %2029 = vmatprep.subr.bf16.mxu0 %v1603
    %2030 = vmatpush1.bf16.msra.mxu0 %v1602
    %2031 = vmatprep.subr.bf16.mxu0 %v1591
    %2032 = vmatpush1.bf16.msra.mxu0 %v1590
    %2033 = vmatprep.subr.bf16.mxu0 %v1579
    %2034 = vmatpush1.bf16.msra.mxu0 %v1578
    %2035 = vmatprep.subr.bf16.mxu0 %v1567
    %2036 = vmatpush1.bf16.msra.mxu0 %v1566
    %2037 = vmatprep.subr.bf16.mxu0 %v1555
    %2038 = vmatpush1.bf16.msra.mxu0 %v1554
    %2039 = vmatprep.subr.bf16.mxu0 %v1543
    %2040 = vmatpush1.bf16.msra.mxu0 %v1542
    %2041 = vmatprep.subr.bf16.mxu0 %v1531
    %2042 = vmatpush1.bf16.msra.mxu0 %v1530
    %2043 = vmatprep.subr.bf16.mxu0 %v1519
    %2044 = vmatpush1.bf16.msra.mxu0 %v1518
    %2045 = vmatprep.subr.bf16.mxu0 0
    %2046 = vmatpush2.bf16.msra.mxu0 0
    %2047 = vmatprep.subr.bf16.mxu0 0
    %2048 = vmatpush2.bf16.msra.mxu0 0
    %2049 = vmatprep.subr.bf16.mxu0 0
    %2050 = vmatpush2.bf16.msra.mxu0 0
    %2051 = vmatprep.subr.bf16.mxu0 0
    %2052 = vmatpush2.bf16.msra.mxu0 0
    %2053 = vmatprep.subr.bf16.mxu0 0
    %2054 = vmatpush2.bf16.msra.mxu0 0
    %2055 = vmatprep.subr.bf16.mxu0 0
    %2056 = vmatpush2.bf16.msra.mxu0 0
    %2057 = vmatprep.subr.bf16.mxu0 0
    %2058 = vmatpush2.bf16.msra.mxu0 0
    %2059 = vmatprep.subr.bf16.mxu0 0
    %2060 = vmatpush2.bf16.msra.mxu0 0
    %2061 = vmatprep.mubr.bf16.mxu0 0
    %2062 = vmatmul.mubr.bf16.gmra.mxu0 %v107
    %v2063 = vpop.f32.mrf.mxu0
    %v2064 = vadd.f32 %v2021, %v2063
    %v2065 = vpop.f32.mrf.mxu0
    %v2066 = vadd.f32 %v2023, %v2065
    %v2067 = vpop.f32.mrf.mxu0
    %v2068 = vadd.f32 %v2025, %v2067
    %v2069 = vpop.f32.mrf.mxu0
    %v2070 = vadd.f32 %v2027, %v2069
    %2071 = vdwg.mxu0
    %2072 = vmatprep.subr.bf16.mxu0 %v1413
    %2073 = vmatpush1.bf16.msra.mxu0 %v1412
    %2074 = vmatprep.subr.bf16.mxu0 %v1401
    %2075 = vmatpush1.bf16.msra.mxu0 %v1400
    %2076 = vmatprep.subr.bf16.mxu0 %v1389
    %2077 = vmatpush1.bf16.msra.mxu0 %v1388
    %2078 = vmatprep.subr.bf16.mxu0 %v1377
    %2079 = vmatpush1.bf16.msra.mxu0 %v1376
    %2080 = vmatprep.subr.bf16.mxu0 %v1365
    %2081 = vmatpush1.bf16.msra.mxu0 %v1364
    %2082 = vmatprep.subr.bf16.mxu0 %v1353
    %2083 = vmatpush1.bf16.msra.mxu0 %v1352
    %2084 = vmatprep.subr.bf16.mxu0 %v1341
    %2085 = vmatpush1.bf16.msra.mxu0 %v1340
    %2086 = vmatprep.subr.bf16.mxu0 %v1329
    %2087 = vmatpush1.bf16.msra.mxu0 %v1328
    %2088 = vmatprep.subr.bf16.mxu0 %v1509
    %2089 = vmatpush2.bf16.msra.mxu0 %v1508
    %2090 = vmatprep.subr.bf16.mxu0 %v1497
    %2091 = vmatpush2.bf16.msra.mxu0 %v1496
    %2092 = vmatprep.subr.bf16.mxu0 %v1485
    %2093 = vmatpush2.bf16.msra.mxu0 %v1484
    %2094 = vmatprep.subr.bf16.mxu0 %v1473
    %2095 = vmatpush2.bf16.msra.mxu0 %v1472
    %2096 = vmatprep.subr.bf16.mxu0 %v1461
    %2097 = vmatpush2.bf16.msra.mxu0 %v1460
    %2098 = vmatprep.subr.bf16.mxu0 %v1449
    %2099 = vmatpush2.bf16.msra.mxu0 %v1448
    %2100 = vmatprep.subr.bf16.mxu0 %v1437
    %2101 = vmatpush2.bf16.msra.mxu0 %v1436
    %2102 = vmatprep.subr.bf16.mxu0 %v1425
    %2103 = vmatpush2.bf16.msra.mxu0 %v1424
    %2104 = vmatprep.mubr.bf16.mxu0 %v106
    %2105 = vmatmul.mubr.bf16.gmra.mxu0 %v105
    %v2106 = vpop.f32.mrf.mxu0
    %v2107 = vadd.f32 %v419, %v2106
    %v2108 = vpop.f32.mrf.mxu0
    %v2109 = vadd.f32 %v423, %v2108
    %v2110 = vpop.f32.mrf.mxu0
    %v2111 = vadd.f32 %v419, %v2110
    %v2112 = vpop.f32.mrf.mxu0
    %v2113 = vadd.f32 %v423, %v2112
    %2114 = vdwg.mxu0
    %2115 = vmatprep.subr.bf16.mxu0 %v1605
    %2116 = vmatpush1.bf16.msra.mxu0 %v1604
    %2117 = vmatprep.subr.bf16.mxu0 %v1593
    %2118 = vmatpush1.bf16.msra.mxu0 %v1592
    %2119 = vmatprep.subr.bf16.mxu0 %v1581
    %2120 = vmatpush1.bf16.msra.mxu0 %v1580
    %2121 = vmatprep.subr.bf16.mxu0 %v1569
    %2122 = vmatpush1.bf16.msra.mxu0 %v1568
    %2123 = vmatprep.subr.bf16.mxu0 %v1557
    %2124 = vmatpush1.bf16.msra.mxu0 %v1556
    %2125 = vmatprep.subr.bf16.mxu0 %v1545
    %2126 = vmatpush1.bf16.msra.mxu0 %v1544
    %2127 = vmatprep.subr.bf16.mxu0 %v1533
    %2128 = vmatpush1.bf16.msra.mxu0 %v1532
    %2129 = vmatprep.subr.bf16.mxu0 %v1521
    %2130 = vmatpush1.bf16.msra.mxu0 %v1520
    %2131 = vmatprep.subr.bf16.mxu0 0
    %2132 = vmatpush2.bf16.msra.mxu0 0
    %2133 = vmatprep.subr.bf16.mxu0 0
    %2134 = vmatpush2.bf16.msra.mxu0 0
    %2135 = vmatprep.subr.bf16.mxu0 0
    %2136 = vmatpush2.bf16.msra.mxu0 0
    %2137 = vmatprep.subr.bf16.mxu0 0
    %2138 = vmatpush2.bf16.msra.mxu0 0
    %2139 = vmatprep.subr.bf16.mxu0 0
    %2140 = vmatpush2.bf16.msra.mxu0 0
    %2141 = vmatprep.subr.bf16.mxu0 0
    %2142 = vmatpush2.bf16.msra.mxu0 0
    %2143 = vmatprep.subr.bf16.mxu0 0
    %2144 = vmatpush2.bf16.msra.mxu0 0
    %2145 = vmatprep.subr.bf16.mxu0 0
    %2146 = vmatpush2.bf16.msra.mxu0 0
    %2147 = vmatprep.mubr.bf16.mxu0 0
    %2148 = vmatmul.mubr.bf16.gmra.mxu0 %v107
    %v2149 = vpop.f32.mrf.mxu0
    %v2150 = vadd.f32 %v2107, %v2149
    %v2151 = vpop.f32.mrf.mxu0
    %v2152 = vadd.f32 %v2109, %v2151
    %v2153 = vpop.f32.mrf.mxu0
    %v2154 = vadd.f32 %v2111, %v2153
    %v2155 = vpop.f32.mrf.mxu0
    %v2156 = vadd.f32 %v2113, %v2155
    %2157 = vdwg.mxu0
    %2158 = vmatprep.subr.bf16.mxu0 %v1415
    %2159 = vmatpush1.bf16.msra.mxu0 %v1414
    %2160 = vmatprep.subr.bf16.mxu0 %v1403
    %2161 = vmatpush1.bf16.msra.mxu0 %v1402
    %2162 = vmatprep.subr.bf16.mxu0 %v1391
    %2163 = vmatpush1.bf16.msra.mxu0 %v1390
    %2164 = vmatprep.subr.bf16.mxu0 %v1379
    %2165 = vmatpush1.bf16.msra.mxu0 %v1378
    %2166 = vmatprep.subr.bf16.mxu0 %v1367
    %2167 = vmatpush1.bf16.msra.mxu0 %v1366
    %2168 = vmatprep.subr.bf16.mxu0 %v1355
    %2169 = vmatpush1.bf16.msra.mxu0 %v1354
    %2170 = vmatprep.subr.bf16.mxu0 %v1343
    %2171 = vmatpush1.bf16.msra.mxu0 %v1342
    %2172 = vmatprep.subr.bf16.mxu0 %v1331
    %2173 = vmatpush1.bf16.msra.mxu0 %v1330
    %2174 = vmatprep.subr.bf16.mxu0 %v1511
    %2175 = vmatpush2.bf16.msra.mxu0 %v1510
    %2176 = vmatprep.subr.bf16.mxu0 %v1499
    %2177 = vmatpush2.bf16.msra.mxu0 %v1498
    %2178 = vmatprep.subr.bf16.mxu0 %v1487
    %2179 = vmatpush2.bf16.msra.mxu0 %v1486
    %2180 = vmatprep.subr.bf16.mxu0 %v1475
    %2181 = vmatpush2.bf16.msra.mxu0 %v1474
    %2182 = vmatprep.subr.bf16.mxu0 %v1463
    %2183 = vmatpush2.bf16.msra.mxu0 %v1462
    %2184 = vmatprep.subr.bf16.mxu0 %v1451
    %2185 = vmatpush2.bf16.msra.mxu0 %v1450
    %2186 = vmatprep.subr.bf16.mxu0 %v1439
    %2187 = vmatpush2.bf16.msra.mxu0 %v1438
    %2188 = vmatprep.subr.bf16.mxu0 %v1427
    %2189 = vmatpush2.bf16.msra.mxu0 %v1426
    %2190 = vmatprep.mubr.bf16.mxu0 %v106
    %2191 = vmatmul.mubr.bf16.gmra.mxu0 %v105
    %v2192 = vpop.f32.mrf.mxu0
    %v2193 = vadd.f32 %v427, %v2192
    %v2194 = vpop.f32.mrf.mxu0
    %v2195 = vadd.f32 %v431, %v2194
    %v2196 = vpop.f32.mrf.mxu0
    %v2197 = vadd.f32 %v427, %v2196
    %v2198 = vpop.f32.mrf.mxu0
    %v2199 = vadd.f32 %v431, %v2198
    %2200 = vdwg.mxu0
    %2201 = vmatprep.subr.bf16.mxu0 %v1607
    %2202 = vmatpush1.bf16.msra.mxu0 %v1606
    %2203 = vmatprep.subr.bf16.mxu0 %v1595
    %2204 = vmatpush1.bf16.msra.mxu0 %v1594
    %2205 = vmatprep.subr.bf16.mxu0 %v1583
    %2206 = vmatpush1.bf16.msra.mxu0 %v1582
    %2207 = vmatprep.subr.bf16.mxu0 %v1571
    %2208 = vmatpush1.bf16.msra.mxu0 %v1570
    %2209 = vmatprep.subr.bf16.mxu0 %v1559
    %2210 = vmatpush1.bf16.msra.mxu0 %v1558
    %2211 = vmatprep.subr.bf16.mxu0 %v1547
    %2212 = vmatpush1.bf16.msra.mxu0 %v1546
    %2213 = vmatprep.subr.bf16.mxu0 %v1535
    %2214 = vmatpush1.bf16.msra.mxu0 %v1534
    %2215 = vmatprep.subr.bf16.mxu0 %v1523
    %2216 = vmatpush1.bf16.msra.mxu0 %v1522
    %2217 = vmatprep.subr.bf16.mxu0 0
    %2218 = vmatpush2.bf16.msra.mxu0 0
    %2219 = vmatprep.subr.bf16.mxu0 0
    %2220 = vmatpush2.bf16.msra.mxu0 0
    %2221 = vmatprep.subr.bf16.mxu0 0
    %2222 = vmatpush2.bf16.msra.mxu0 0
    %2223 = vmatprep.subr.bf16.mxu0 0
    %2224 = vmatpush2.bf16.msra.mxu0 0
    %2225 = vmatprep.subr.bf16.mxu0 0
    %2226 = vmatpush2.bf16.msra.mxu0 0
    %2227 = vmatprep.subr.bf16.mxu0 0
    %2228 = vmatpush2.bf16.msra.mxu0 0
    %2229 = vmatprep.subr.bf16.mxu0 0
    %2230 = vmatpush2.bf16.msra.mxu0 0
    %2231 = vmatprep.subr.bf16.mxu0 0
    %2232 = vmatpush2.bf16.msra.mxu0 0
    %2233 = vmatprep.mubr.bf16.mxu0 0
    %2234 = vmatmul.mubr.bf16.gmra.mxu0 %v107
    %v2235 = vpop.f32.mrf.mxu0
    %v2236 = vadd.f32 %v2193, %v2235
    %v2237 = vpop.f32.mrf.mxu0
    %v2238 = vadd.f32 %v2195, %v2237
    %v2239 = vpop.f32.mrf.mxu0
    %v2240 = vadd.f32 %v2197, %v2239
    %v2241 = vpop.f32.mrf.mxu0
    %v2242 = vadd.f32 %v2199, %v2241
    %2243 = vdwg.mxu0
    %2244 = vmatprep.subr.bf16.mxu0 %v1417
    %2245 = vmatpush1.bf16.msra.mxu0 %v1416
    %2246 = vmatprep.subr.bf16.mxu0 %v1405
    %2247 = vmatpush1.bf16.msra.mxu0 %v1404
    %2248 = vmatprep.subr.bf16.mxu0 %v1393
    %2249 = vmatpush1.bf16.msra.mxu0 %v1392
    %2250 = vmatprep.subr.bf16.mxu0 %v1381
    %2251 = vmatpush1.bf16.msra.mxu0 %v1380
    %2252 = vmatprep.subr.bf16.mxu0 %v1369
    %2253 = vmatpush1.bf16.msra.mxu0 %v1368
    %2254 = vmatprep.subr.bf16.mxu0 %v1357
    %2255 = vmatpush1.bf16.msra.mxu0 %v1356
    %2256 = vmatprep.subr.bf16.mxu0 %v1345
    %2257 = vmatpush1.bf16.msra.mxu0 %v1344
    %2258 = vmatprep.subr.bf16.mxu0 %v1333
    %2259 = vmatpush1.bf16.msra.mxu0 %v1332
    %2260 = vmatprep.subr.bf16.mxu0 %v1513
    %2261 = vmatpush2.bf16.msra.mxu0 %v1512
    %2262 = vmatprep.subr.bf16.mxu0 %v1501
    %2263 = vmatpush2.bf16.msra.mxu0 %v1500
    %2264 = vmatprep.subr.bf16.mxu0 %v1489
    %2265 = vmatpush2.bf16.msra.mxu0 %v1488
    %2266 = vmatprep.subr.bf16.mxu0 %v1477
    %2267 = vmatpush2.bf16.msra.mxu0 %v1476
    %2268 = vmatprep.subr.bf16.mxu0 %v1465
    %2269 = vmatpush2.bf16.msra.mxu0 %v1464
    %2270 = vmatprep.subr.bf16.mxu0 %v1453
    %2271 = vmatpush2.bf16.msra.mxu0 %v1452
    %2272 = vmatprep.subr.bf16.mxu0 %v1441
    %2273 = vmatpush2.bf16.msra.mxu0 %v1440
    %2274 = vmatprep.subr.bf16.mxu0 %v1429
    %2275 = vmatpush2.bf16.msra.mxu0 %v1428
    %2276 = vmatprep.mubr.bf16.mxu0 %v106
    %2277 = vmatmul.mubr.bf16.gmra.mxu0 %v105
    %v2278 = vpop.f32.mrf.mxu0
    %v2279 = vadd.f32 %v435, %v2278
    %v2280 = vpop.f32.mrf.mxu0
    %v2281 = vadd.f32 %v439, %v2280
    %v2282 = vpop.f32.mrf.mxu0
    %v2283 = vadd.f32 %v435, %v2282
    %v2284 = vpop.f32.mrf.mxu0
    %v2285 = vadd.f32 %v439, %v2284
    %2286 = vdwg.mxu0
    %2287 = vmatprep.subr.bf16.mxu0 %v1609
    %2288 = vmatpush1.bf16.msra.mxu0 %v1608
    %2289 = vmatprep.subr.bf16.mxu0 %v1597
    %2290 = vmatpush1.bf16.msra.mxu0 %v1596
    %2291 = vmatprep.subr.bf16.mxu0 %v1585
    %2292 = vmatpush1.bf16.msra.mxu0 %v1584
    %2293 = vmatprep.subr.bf16.mxu0 %v1573
    %2294 = vmatpush1.bf16.msra.mxu0 %v1572
    %2295 = vmatprep.subr.bf16.mxu0 %v1561
    %2296 = vmatpush1.bf16.msra.mxu0 %v1560
    %2297 = vmatprep.subr.bf16.mxu0 %v1549
    %2298 = vmatpush1.bf16.msra.mxu0 %v1548
    %2299 = vmatprep.subr.bf16.mxu0 %v1537
    %2300 = vmatpush1.bf16.msra.mxu0 %v1536
    %2301 = vmatprep.subr.bf16.mxu0 %v1525
    %2302 = vmatpush1.bf16.msra.mxu0 %v1524
    %2303 = vmatprep.subr.bf16.mxu0 0
    %2304 = vmatpush2.bf16.msra.mxu0 0
    %2305 = vmatprep.subr.bf16.mxu0 0
    %2306 = vmatpush2.bf16.msra.mxu0 0
    %2307 = vmatprep.subr.bf16.mxu0 0
    %2308 = vmatpush2.bf16.msra.mxu0 0
    %2309 = vmatprep.subr.bf16.mxu0 0
    %2310 = vmatpush2.bf16.msra.mxu0 0
    %2311 = vmatprep.subr.bf16.mxu0 0
    %2312 = vmatpush2.bf16.msra.mxu0 0
    %2313 = vmatprep.subr.bf16.mxu0 0
    %2314 = vmatpush2.bf16.msra.mxu0 0
    %2315 = vmatprep.subr.bf16.mxu0 0
    %2316 = vmatpush2.bf16.msra.mxu0 0
    %2317 = vmatprep.subr.bf16.mxu0 0
    %2318 = vmatpush2.bf16.msra.mxu0 0
    %2319 = vmatprep.mubr.bf16.mxu0 0
    %2320 = vmatmul.mubr.bf16.gmra.mxu0 %v107
    %v2321 = vpop.f32.mrf.mxu0
    %v2322 = vadd.f32 %v2279, %v2321
    %v2323 = vpop.f32.mrf.mxu0
    %v2324 = vadd.f32 %v2281, %v2323
    %v2325 = vpop.f32.mrf.mxu0
    %v2326 = vadd.f32 %v2283, %v2325
    %v2327 = vpop.f32.mrf.mxu0
    %v2328 = vadd.f32 %v2285, %v2327
    %2329 = vdwg.mxu0
    %2330 = vmatprep.subr.bf16.mxu0 %v1419
    %2331 = vmatpush1.bf16.msra.mxu0 %v1418
    %2332 = vmatprep.subr.bf16.mxu0 %v1407
    %2333 = vmatpush1.bf16.msra.mxu0 %v1406
    %2334 = vmatprep.subr.bf16.mxu0 %v1395
    %2335 = vmatpush1.bf16.msra.mxu0 %v1394
    %2336 = vmatprep.subr.bf16.mxu0 %v1383
    %2337 = vmatpush1.bf16.msra.mxu0 %v1382
    %2338 = vmatprep.subr.bf16.mxu0 %v1371
    %2339 = vmatpush1.bf16.msra.mxu0 %v1370
    %2340 = vmatprep.subr.bf16.mxu0 %v1359
    %2341 = vmatpush1.bf16.msra.mxu0 %v1358
    %2342 = vmatprep.subr.bf16.mxu0 %v1347
    %2343 = vmatpush1.bf16.msra.mxu0 %v1346
    %2344 = vmatprep.subr.bf16.mxu0 %v1335
    %2345 = vmatpush1.bf16.msra.mxu0 %v1334
    %2346 = vmatprep.subr.bf16.mxu0 %v1515
    %2347 = vmatpush2.bf16.msra.mxu0 %v1514
    %2348 = vmatprep.subr.bf16.mxu0 %v1503
    %2349 = vmatpush2.bf16.msra.mxu0 %v1502
    %2350 = vmatprep.subr.bf16.mxu0 %v1491
    %2351 = vmatpush2.bf16.msra.mxu0 %v1490
    %2352 = vmatprep.subr.bf16.mxu0 %v1479
    %2353 = vmatpush2.bf16.msra.mxu0 %v1478
    %2354 = vmatprep.subr.bf16.mxu0 %v1467
    %2355 = vmatpush2.bf16.msra.mxu0 %v1466
    %2356 = vmatprep.subr.bf16.mxu0 %v1455
    %2357 = vmatpush2.bf16.msra.mxu0 %v1454
    %2358 = vmatprep.subr.bf16.mxu0 %v1443
    %2359 = vmatpush2.bf16.msra.mxu0 %v1442
    %2360 = vmatprep.subr.bf16.mxu0 %v1431
    %2361 = vmatpush2.bf16.msra.mxu0 %v1430
    %2362 = vmatprep.mubr.bf16.mxu0 %v106
    %2363 = vmatmul.mubr.bf16.gmra.mxu0 %v105
    %v2364 = vpop.f32.mrf.mxu0
    %v2365 = vadd.f32 %v443, %v2364
    %v2366 = vpop.f32.mrf.mxu0
    %v2367 = vadd.f32 %v447, %v2366
    %v2368 = vpop.f32.mrf.mxu0
    %v2369 = vadd.f32 %v443, %v2368
    %v2370 = vpop.f32.mrf.mxu0
    %v2371 = vadd.f32 %v447, %v2370
    %2372 = vdwg.mxu0
    %2373 = vmatprep.subr.bf16.mxu0 %v1611
    %2374 = vmatpush1.bf16.msra.mxu0 %v1610
    %2375 = vmatprep.subr.bf16.mxu0 %v1599
    %2376 = vmatpush1.bf16.msra.mxu0 %v1598
    %2377 = vmatprep.subr.bf16.mxu0 %v1587
    %2378 = vmatpush1.bf16.msra.mxu0 %v1586
    %2379 = vmatprep.subr.bf16.mxu0 %v1575
    %2380 = vmatpush1.bf16.msra.mxu0 %v1574
    %2381 = vmatprep.subr.bf16.mxu0 %v1563
    %2382 = vmatpush1.bf16.msra.mxu0 %v1562
    %2383 = vmatprep.subr.bf16.mxu0 %v1551
    %2384 = vmatpush1.bf16.msra.mxu0 %v1550
    %2385 = vmatprep.subr.bf16.mxu0 %v1539
    %2386 = vmatpush1.bf16.msra.mxu0 %v1538
    %2387 = vmatprep.subr.bf16.mxu0 %v1527
    %2388 = vmatpush1.bf16.msra.mxu0 %v1526
    %2389 = vmatprep.subr.bf16.mxu0 0
    %2390 = vmatpush2.bf16.msra.mxu0 0
    %2391 = vmatprep.subr.bf16.mxu0 0
    %2392 = vmatpush2.bf16.msra.mxu0 0
    %2393 = vmatprep.subr.bf16.mxu0 0
    %2394 = vmatpush2.bf16.msra.mxu0 0
    %2395 = vmatprep.subr.bf16.mxu0 0
    %2396 = vmatpush2.bf16.msra.mxu0 0
    %2397 = vmatprep.subr.bf16.mxu0 0
    %2398 = vmatpush2.bf16.msra.mxu0 0
    %2399 = vmatprep.subr.bf16.mxu0 0
    %2400 = vmatpush2.bf16.msra.mxu0 0
    %2401 = vmatprep.subr.bf16.mxu0 0
    %2402 = vmatpush2.bf16.msra.mxu0 0
    %2403 = vmatprep.subr.bf16.mxu0 0
    %2404 = vmatpush2.bf16.msra.mxu0 0
    %2405 = vmatprep.mubr.bf16.mxu0 0
    %2406 = vmatmul.mubr.bf16.gmra.mxu0 %v107
    %v2407 = vpop.f32.mrf.mxu0
    %v2408 = vadd.f32 %v2365, %v2407
    %v2409 = vpop.f32.mrf.mxu0
    %v2410 = vadd.f32 %v2367, %v2409
    %v2411 = vpop.f32.mrf.mxu0
    %v2412 = vadd.f32 %v2369, %v2411
    %v2413 = vpop.f32.mrf.mxu0
    %v2414 = vadd.f32 %v2371, %v2413
    %2415 = vdwg.mxu0
    %2416 = vst [vmem:[#allocation2] sm:$0xff] %v1978
    %2417 = vst [vmem:[#allocation2 + $0x8] sm:$0xff] %v1980
    %2418 = vst [vmem:[#allocation2 + $0x10] sm:$0xff] %v2064
    %2419 = vst [vmem:[#allocation2 + $0x18] sm:$0xff] %v2066
    %2420 = vst [vmem:[#allocation2 + $0x20] sm:$0xff] %v2150
    %2421 = vst [vmem:[#allocation2 + $0x28] sm:$0xff] %v2152
    %2422 = vst [vmem:[#allocation2 + $0x30] sm:$0xff] %v2236
    %2423 = vst [vmem:[#allocation2 + $0x38] sm:$0xff] %v2238
    %2424 = vst [vmem:[#allocation2 + $0x40] sm:$0xff] %v2322
    %2425 = vst [vmem:[#allocation2 + $0x48] sm:$0xff] %v2324
    %2426 = vst [vmem:[#allocation2 + $0x50] sm:$0xff] %v2408
    %2427 = vst [vmem:[#allocation2 + $0x58] sm:$0xff] %v2410
    %2428 = vst [vmem:[#allocation2 + $0x60] sm:$0xff] %v1982
    %2429 = vst [vmem:[#allocation2 + $0x68] sm:$0xff] %v1984
    %2430 = vst [vmem:[#allocation2 + $0x70] sm:$0xff] %v2068
    %2431 = vst [vmem:[#allocation2 + $0x78] sm:$0xff] %v2070
    %2432 = vst [vmem:[#allocation2 + $0x80] sm:$0xff] %v2154
    %2433 = vst [vmem:[#allocation2 + $0x88] sm:$0xff] %v2156
    %2434 = vst [vmem:[#allocation2 + $0x90] sm:$0xff] %v2240
    %2435 = vst [vmem:[#allocation2 + $0x98] sm:$0xff] %v2242
    %2436 = vst [vmem:[#allocation2 + $0xa0] sm:$0xff] %v2326
    %2437 = vst [vmem:[#allocation2 + $0xa8] sm:$0xff] %v2328
    %2438 = vst [vmem:[#allocation2 + $0xb0] sm:$0xff] %v2412
    %2439 = vst [vmem:[#allocation2 + $0xb8] sm:$0xff] %v2414
    %v2440 = vld [vmem:[#allocation2] sm:$0x3]
    %v2441 = vld [vmem:[#allocation2 + $0x8] sm:$0x3]
    %v2442 = vld [vmem:[#allocation2 + $0x10] sm:$0x3]
    %v2443 = vld [vmem:[#allocation2 + $0x18] sm:$0x3]
    %v2444 = vld [vmem:[#allocation2 + $0x20] sm:$0x3]
    %v2445 = vld [vmem:[#allocation2 + $0x28] sm:$0x3]
    %v2446 = vld [vmem:[#allocation2 + $0x30] sm:$0x3]
    %v2447 = vld [vmem:[#allocation2 + $0x38] sm:$0x3]
    %v2448 = vld [vmem:[#allocation2 + $0x40] sm:$0x3]
    %v2449 = vld [vmem:[#allocation2 + $0x48] sm:$0x3]
    %v2450 = vld [vmem:[#allocation2 + $0x50] sm:$0x3]
    %v2451 = vld [vmem:[#allocation2 + $0x58] sm:$0x3]
    %v2452 = vxor.u32 %v2440, 2147483648
    %v2453 = vxor.u32 %v2441, 2147483648
    %v2454 = vxor.u32 %v2442, 2147483648
    %v2455 = vxor.u32 %v2443, 2147483648
    %v2456 = vxor.u32 %v2444, 2147483648
    %v2457 = vxor.u32 %v2445, 2147483648
    %v2458 = vxor.u32 %v2446, 2147483648
    %v2459 = vxor.u32 %v2447, 2147483648
    %v2460 = vxor.u32 %v2448, 2147483648
    %v2461 = vxor.u32 %v2449, 2147483648
    %v2462 = vxor.u32 %v2450, 2147483648
    %v2463 = vxor.u32 %v2451, 2147483648
    %v2464 = vmul.f32 %v2452, 1.442695
    %v2465 = vpow.pop %v2464
    %v2466 = vmul.f32 %v2453, 1.442695
    %v2467 = vpow.pop %v2466
    %v2468 = vmul.f32 %v2454, 1.442695
    %v2469 = vpow.pop %v2468
    %v2470 = vmul.f32 %v2455, 1.442695
    %v2471 = vpow.pop %v2470
    %v2472 = vmul.f32 %v2456, 1.442695
    %v2473 = vpow.pop %v2472
    %v2474 = vmul.f32 %v2457, 1.442695
    %v2475 = vpow.pop %v2474
    %v2476 = vmul.f32 %v2458, 1.442695
    %v2477 = vpow.pop %v2476
    %v2478 = vmul.f32 %v2459, 1.442695
    %v2479 = vpow.pop %v2478
    %v2480 = vmul.f32 %v2460, 1.442695
    %v2481 = vpow.pop %v2480
    %v2482 = vmul.f32 %v2461, 1.442695
    %v2483 = vpow.pop %v2482
    %v2484 = vmul.f32 %v2462, 1.442695
    %v2485 = vpow.pop %v2484
    %v2486 = vmul.f32 %v2463, 1.442695
    %v2487 = vpow.pop %v2486
    %v2488 = vadd.f32 %v2465, 1.0
    %v2489 = vadd.f32 %v2467, 1.0
    %v2490 = vadd.f32 %v2469, 1.0
    %v2491 = vadd.f32 %v2471, 1.0
    %v2492 = vadd.f32 %v2473, 1.0
    %v2493 = vadd.f32 %v2475, 1.0
    %v2494 = vadd.f32 %v2477, 1.0
    %v2495 = vadd.f32 %v2479, 1.0
    %v2496 = vadd.f32 %v2481, 1.0
    %v2497 = vadd.f32 %v2483, 1.0
    %v2498 = vadd.f32 %v2485, 1.0
    %v2499 = vadd.f32 %v2487, 1.0
    %v2500 = vrcp.pop %v2488
    %v2501 = vmul.f32 1.0, %v2500
    %v2502 = vrcp.pop %v2489
    %v2503 = vmul.f32 1.0, %v2502
    %v2504 = vrcp.pop %v2490
    %v2505 = vmul.f32 1.0, %v2504
    %v2506 = vrcp.pop %v2491
    %v2507 = vmul.f32 1.0, %v2506
    %v2508 = vrcp.pop %v2492
    %v2509 = vmul.f32 1.0, %v2508
    %v2510 = vrcp.pop %v2493
    %v2511 = vmul.f32 1.0, %v2510
    %v2512 = vrcp.pop %v2494
    %v2513 = vmul.f32 1.0, %v2512
    %v2514 = vrcp.pop %v2495
    %v2515 = vmul.f32 1.0, %v2514
    %v2516 = vrcp.pop %v2496
    %v2517 = vmul.f32 1.0, %v2516
    %v2518 = vrcp.pop %v2497
    %v2519 = vmul.f32 1.0, %v2518
    %v2520 = vrcp.pop %v2498
    %v2521 = vmul.f32 1.0, %v2520
    %v2522 = vrcp.pop %v2499
    %v2523 = vmul.f32 1.0, %v2522
    %v2524 = vmul.f32 %v2513, 2.0
    %v2525 = vmul.f32 %v2515, 2.0
    %v2526 = vmul.f32 %v2517, 2.0
    %v2527 = vsub.f32 %v2524, 1.0
    %v2528 = vsub.f32 %v2525, 1.0
    %v2529 = vsub.f32 %v2526, 1.0
    %v2530 = vmul.f32 %v2507, 0.0
    %v2531 = vmul.f32 %v2509, 0.0
    %v2532 = vmul.f32 %v2511, 0.0
    %v2533 = vmul.f32 %v2501, %v2527
    %v2534 = vmul.f32 %v2503, %v2528
    %v2535 = vmul.f32 %v2505, %v2529
    %v2536 = vadd.f32 %v2530, %v2533
    %v2537 = vadd.f32 %v2531, %v2534
    %v2538 = vadd.f32 %v2532, %v2535
    %v2539 = vtanh.pop %v2536
    %v2540 = vtanh.pop %v2537
    %v2541 = vtanh.pop %v2538
    %v2542 = vmul.f32 %v2519, %v2539
    %v2543 = vmul.f32 %v2521, %v2540
    %v2544 = vmul.f32 %v2523, %v2541
    %2545 = vst [vmem:[#allocation14] sm:$0x3] %v2542
    %2546 = vst [vmem:[#allocation14 + $0x8] sm:$0x3] %v2543
    %2547 = vst [vmem:[#allocation14 + $0x10] sm:$0x3] %v2544
    %s2548 = smul.u32 4, 48
    %s2549 = smul.u32 %s2548, 12
    %s2550 = sshll.u32 %s2549, 4
    %2551 = dma.done [#allocation5], %s2550
    %v2552 = vld [vmem:[#allocation3] sm:$0xff]
    %v2553 = vld [vmem:[#allocation3 + $0x8] sm:$0xff]
    %v2554 = vld [vmem:[#allocation3 + $0x10] sm:$0xff]
    %v2555 = vld [vmem:[#allocation3 + $0x18] sm:$0xff]
    %v2556 = vld [vmem:[#allocation3 + $0x20] sm:$0xff]
    %v2557 = vld [vmem:[#allocation3 + $0x28] sm:$0xff]
    %v2558 = vld [vmem:[#allocation3 + $0x30] sm:$0xff]
    %v2559 = vld [vmem:[#allocation3 + $0x38] sm:$0xff]
    %v2560 = vld [vmem:[#allocation3 + $0x40] sm:$0xff]
    %v2561 = vld [vmem:[#allocation3 + $0x48] sm:$0xff]
    %v2562 = vld [vmem:[#allocation3 + $0x50] sm:$0xff]
    %v2563 = vld [vmem:[#allocation3 + $0x58] sm:$0xff]
    %v2564 = vld [vmem:[#allocation3 + $0x60] sm:$0xff]
    %v2565 = vld [vmem:[#allocation3 + $0x68] sm:$0xff]
    %v2566 = vld [vmem:[#allocation3 + $0x70] sm:$0xff]
    %v2567 = vld [vmem:[#allocation3 + $0x78] sm:$0xff]
    %v2568 = vld [vmem:[#allocation3 + $0x80] sm:$0xff]
    %v2569 = vld [vmem:[#allocation3 + $0x88] sm:$0xff]
    %v2570 = vld [vmem:[#allocation3 + $0x90] sm:$0xff]
    %v2571 = vld [vmem:[#allocation3 + $0x98] sm:$0xff]
    %v2572 = vld [vmem:[#allocation3 + $0xa0] sm:$0xff]
    %v2573 = vld [vmem:[#allocation3 + $0xa8] sm:$0xff]
    %v2574 = vld [vmem:[#allocation3 + $0xb0] sm:$0xff]
    %v2575 = vld [vmem:[#allocation3 + $0xb8] sm:$0xff]
    %v2576 = vld [vmem:[#allocation3 + $0xc0] sm:$0xff]
    %v2577 = vld [vmem:[#allocation3 + $0xc8] sm:$0xff]
    %v2578 = vld [vmem:[#allocation3 + $0xd0] sm:$0xff]
    %v2579 = vld [vmem:[#allocation3 + $0xd8] sm:$0xff]
    %v2580 = vld [vmem:[#allocation3 + $0xe0] sm:$0xff]
    %v2581 = vld [vmem:[#allocation3 + $0xe8] sm:$0xff]
    %v2582 = vld [vmem:[#allocation3 + $0xf0] sm:$0xff]
    %v2583 = vld [vmem:[#allocation3 + $0xf8] sm:$0xff]
    %v2584 = vld [vmem:[#allocation3 + $0x100] sm:$0xff]
    %v2585 = vld [vmem:[#allocation3 + $0x108] sm:$0xff]
    %v2586 = vld [vmem:[#allocation3 + $0x110] sm:$0xff]
    %v2587 = vld [vmem:[#allocation3 + $0x118] sm:$0xff]
    %v2588 = vld [vmem:[#allocation3 + $0x120] sm:$0xff]
    %v2589 = vld [vmem:[#allocation3 + $0x128] sm:$0xff]
    %v2590 = vld [vmem:[#allocation3 + $0x130] sm:$0xff]
    %v2591 = vld [vmem:[#allocation3 + $0x138] sm:$0xff]
    %v2592 = vld [vmem:[#allocation3 + $0x140] sm:$0xff]
    %v2593 = vld [vmem:[#allocation3 + $0x148] sm:$0xff]
    %v2594 = vld [vmem:[#allocation3 + $0x150] sm:$0xff]
    %v2595 = vld [vmem:[#allocation3 + $0x158] sm:$0xff]
    %v2596 = vld [vmem:[#allocation3 + $0x160] sm:$0xff]
    %v2597 = vld [vmem:[#allocation3 + $0x168] sm:$0xff]
    %v2598 = vld [vmem:[#allocation3 + $0x170] sm:$0xff]
    %v2599 = vld [vmem:[#allocation3 + $0x178] sm:$0xff]
    %v2600 = vld [vmem:[#allocation3 + $0x180] sm:$0xff]
    %v2601 = vld [vmem:[#allocation3 + $0x188] sm:$0xff]
    %v2602 = vld [vmem:[#allocation3 + $0x190] sm:$0xff]
    %v2603 = vld [vmem:[#allocation3 + $0x198] sm:$0xff]
    %v2604 = vld [vmem:[#allocation3 + $0x1a0] sm:$0xff]
    %v2605 = vld [vmem:[#allocation3 + $0x1a8] sm:$0xff]
    %v2606 = vld [vmem:[#allocation3 + $0x1b0] sm:$0xff]
    %v2607 = vld [vmem:[#allocation3 + $0x1b8] sm:$0xff]
    %v2608 = vld [vmem:[#allocation3 + $0x1c0] sm:$0xff]
    %v2609 = vld [vmem:[#allocation3 + $0x1c8] sm:$0xff]
    %v2610 = vld [vmem:[#allocation3 + $0x1d0] sm:$0xff]
    %v2611 = vld [vmem:[#allocation3 + $0x1d8] sm:$0xff]
    %v2612 = vld [vmem:[#allocation3 + $0x1e0] sm:$0xff]
    %v2613 = vld [vmem:[#allocation3 + $0x1e8] sm:$0xff]
    %v2614 = vld [vmem:[#allocation3 + $0x1f0] sm:$0xff]
    %v2615 = vld [vmem:[#allocation3 + $0x1f8] sm:$0xff]
    %v2616 = vld [vmem:[#allocation3 + $0x200] sm:$0xff]
    %v2617 = vld [vmem:[#allocation3 + $0x208] sm:$0xff]
    %v2618 = vld [vmem:[#allocation3 + $0x210] sm:$0xff]
    %v2619 = vld [vmem:[#allocation3 + $0x218] sm:$0xff]
    %v2620 = vld [vmem:[#allocation3 + $0x220] sm:$0xff]
    %v2621 = vld [vmem:[#allocation3 + $0x228] sm:$0xff]
    %v2622 = vld [vmem:[#allocation3 + $0x230] sm:$0xff]
    %v2623 = vld [vmem:[#allocation3 + $0x238] sm:$0xff]
    %v2624 = vld [vmem:[#allocation3 + $0x240] sm:$0xff]
    %v2625 = vld [vmem:[#allocation3 + $0x248] sm:$0xff]
    %v2626 = vld [vmem:[#allocation3 + $0x250] sm:$0xff]
    %v2627 = vld [vmem:[#allocation3 + $0x258] sm:$0xff]
    %v2628 = vld [vmem:[#allocation3 + $0x260] sm:$0xff]
    %v2629 = vld [vmem:[#allocation3 + $0x268] sm:$0xff]
    %v2630 = vld [vmem:[#allocation3 + $0x270] sm:$0xff]
    %v2631 = vld [vmem:[#allocation3 + $0x278] sm:$0xff]
    %v2632 = vld [vmem:[#allocation3 + $0x280] sm:$0xff]
    %v2633 = vld [vmem:[#allocation3 + $0x288] sm:$0xff]
    %v2634 = vld [vmem:[#allocation3 + $0x290] sm:$0xff]
    %v2635 = vld [vmem:[#allocation3 + $0x298] sm:$0xff]
    %v2636 = vld [vmem:[#allocation3 + $0x2a0] sm:$0xff]
    %v2637 = vld [vmem:[#allocation3 + $0x2a8] sm:$0xff]
    %v2638 = vld [vmem:[#allocation3 + $0x2b0] sm:$0xff]
    %v2639 = vld [vmem:[#allocation3 + $0x2b8] sm:$0xff]
    %v2640 = vld [vmem:[#allocation3 + $0x2c0] sm:$0xff]
    %v2641 = vld [vmem:[#allocation3 + $0x2c8] sm:$0xff]
    %v2642 = vld [vmem:[#allocation3 + $0x2d0] sm:$0xff]
    %v2643 = vld [vmem:[#allocation3 + $0x2d8] sm:$0xff]
    %v2644 = vld [vmem:[#allocation3 + $0x2e0] sm:$0xff]
    %v2645 = vld [vmem:[#allocation3 + $0x2e8] sm:$0xff]
    %v2646 = vld [vmem:[#allocation3 + $0x2f0] sm:$0xff]
    %v2647 = vld [vmem:[#allocation3 + $0x2f8] sm:$0xff]
    %v2648 = vld [vmem:[#allocation3 + $0x300] sm:$0xff]
    %v2649 = vld [vmem:[#allocation3 + $0x308] sm:$0xff]
    %v2650 = vld [vmem:[#allocation3 + $0x310] sm:$0xff]
    %v2651 = vld [vmem:[#allocation3 + $0x318] sm:$0xff]
    %v2652 = vld [vmem:[#allocation3 + $0x320] sm:$0xff]
    %v2653 = vld [vmem:[#allocation3 + $0x328] sm:$0xff]
    %v2654 = vld [vmem:[#allocation3 + $0x330] sm:$0xff]
    %v2655 = vld [vmem:[#allocation3 + $0x338] sm:$0xff]
    %v2656 = vld [vmem:[#allocation3 + $0x340] sm:$0xff]
    %v2657 = vld [vmem:[#allocation3 + $0x348] sm:$0xff]
    %v2658 = vld [vmem:[#allocation3 + $0x350] sm:$0xff]
    %v2659 = vld [vmem:[#allocation3 + $0x358] sm:$0xff]
    %v2660 = vld [vmem:[#allocation3 + $0x360] sm:$0xff]
    %v2661 = vld [vmem:[#allocation3 + $0x368] sm:$0xff]
    %v2662 = vld [vmem:[#allocation3 + $0x370] sm:$0xff]
    %v2663 = vld [vmem:[#allocation3 + $0x378] sm:$0xff]
    %v2664 = vld [vmem:[#allocation3 + $0x380] sm:$0xff]
    %v2665 = vld [vmem:[#allocation3 + $0x388] sm:$0xff]
    %v2666 = vld [vmem:[#allocation3 + $0x390] sm:$0xff]
    %v2667 = vld [vmem:[#allocation3 + $0x398] sm:$0xff]
    %v2668 = vld [vmem:[#allocation3 + $0x3a0] sm:$0xff]
    %v2669 = vld [vmem:[#allocation3 + $0x3a8] sm:$0xff]
    %v2670 = vld [vmem:[#allocation3 + $0x3b0] sm:$0xff]
    %v2671 = vld [vmem:[#allocation3 + $0x3b8] sm:$0xff]
    %v2672 = vld [vmem:[#allocation3 + $0x3c0] sm:$0xff]
    %v2673 = vld [vmem:[#allocation3 + $0x3c8] sm:$0xff]
    %v2674 = vld [vmem:[#allocation3 + $0x3d0] sm:$0xff]
    %v2675 = vld [vmem:[#allocation3 + $0x3d8] sm:$0xff]
    %v2676 = vld [vmem:[#allocation3 + $0x3e0] sm:$0xff]
    %v2677 = vld [vmem:[#allocation3 + $0x3e8] sm:$0xff]
    %v2678 = vld [vmem:[#allocation3 + $0x3f0] sm:$0xff]
    %v2679 = vld [vmem:[#allocation3 + $0x3f8] sm:$0xff]
    %v2680 = vld [vmem:[#allocation3 + $0x400] sm:$0xff]
    %v2681 = vld [vmem:[#allocation3 + $0x408] sm:$0xff]
    %v2682 = vld [vmem:[#allocation3 + $0x410] sm:$0xff]
    %v2683 = vld [vmem:[#allocation3 + $0x418] sm:$0xff]
    %v2684 = vld [vmem:[#allocation3 + $0x420] sm:$0xff]
    %v2685 = vld [vmem:[#allocation3 + $0x428] sm:$0xff]
    %v2686 = vld [vmem:[#allocation3 + $0x430] sm:$0xff]
    %v2687 = vld [vmem:[#allocation3 + $0x438] sm:$0xff]
    %v2688 = vld [vmem:[#allocation3 + $0x440] sm:$0xff]
    %v2689 = vld [vmem:[#allocation3 + $0x448] sm:$0xff]
    %v2690 = vld [vmem:[#allocation3 + $0x450] sm:$0xff]
    %v2691 = vld [vmem:[#allocation3 + $0x458] sm:$0xff]
    %v2692 = vld [vmem:[#allocation3 + $0x460] sm:$0xff]
    %v2693 = vld [vmem:[#allocation3 + $0x468] sm:$0xff]
    %v2694 = vld [vmem:[#allocation3 + $0x470] sm:$0xff]
    %v2695 = vld [vmem:[#allocation3 + $0x478] sm:$0xff]
    %v2696 = vld [vmem:[#allocation3 + $0x480] sm:$0xff]
    %v2697 = vld [vmem:[#allocation3 + $0x488] sm:$0xff]
    %v2698 = vld [vmem:[#allocation3 + $0x490] sm:$0xff]
    %v2699 = vld [vmem:[#allocation3 + $0x498] sm:$0xff]
    %v2700 = vld [vmem:[#allocation3 + $0x4a0] sm:$0xff]
    %v2701 = vld [vmem:[#allocation3 + $0x4a8] sm:$0xff]
    %v2702 = vld [vmem:[#allocation3 + $0x4b0] sm:$0xff]
    %v2703 = vld [vmem:[#allocation3 + $0x4b8] sm:$0xff]
    %v2704 = vld [vmem:[#allocation3 + $0x4c0] sm:$0xff]
    %v2705 = vld [vmem:[#allocation3 + $0x4c8] sm:$0xff]
    %v2706 = vld [vmem:[#allocation3 + $0x4d0] sm:$0xff]
    %v2707 = vld [vmem:[#allocation3 + $0x4d8] sm:$0xff]
    %v2708 = vld [vmem:[#allocation3 + $0x4e0] sm:$0xff]
    %v2709 = vld [vmem:[#allocation3 + $0x4e8] sm:$0xff]
    %v2710 = vld [vmem:[#allocation3 + $0x4f0] sm:$0xff]
    %v2711 = vld [vmem:[#allocation3 + $0x4f8] sm:$0xff]
    %v2712 = vld [vmem:[#allocation3 + $0x500] sm:$0xff]
    %v2713 = vld [vmem:[#allocation3 + $0x508] sm:$0xff]
    %v2714 = vld [vmem:[#allocation3 + $0x510] sm:$0xff]
    %v2715 = vld [vmem:[#allocation3 + $0x518] sm:$0xff]
    %v2716 = vld [vmem:[#allocation3 + $0x520] sm:$0xff]
    %v2717 = vld [vmem:[#allocation3 + $0x528] sm:$0xff]
    %v2718 = vld [vmem:[#allocation3 + $0x530] sm:$0xff]
    %v2719 = vld [vmem:[#allocation3 + $0x538] sm:$0xff]
    %v2720 = vld [vmem:[#allocation3 + $0x540] sm:$0xff]
    %v2721 = vld [vmem:[#allocation3 + $0x548] sm:$0xff]
    %v2722 = vld [vmem:[#allocation3 + $0x550] sm:$0xff]
    %v2723 = vld [vmem:[#allocation3 + $0x558] sm:$0xff]
    %v2724 = vld [vmem:[#allocation3 + $0x560] sm:$0xff]
    %v2725 = vld [vmem:[#allocation3 + $0x568] sm:$0xff]
    %v2726 = vld [vmem:[#allocation3 + $0x570] sm:$0xff]
    %v2727 = vld [vmem:[#allocation3 + $0x578] sm:$0xff]
    %v2728 = vld [vmem:[#allocation3 + $0x580] sm:$0xff]
    %v2729 = vld [vmem:[#allocation3 + $0x588] sm:$0xff]
    %v2730 = vld [vmem:[#allocation3 + $0x590] sm:$0xff]
    %v2731 = vld [vmem:[#allocation3 + $0x598] sm:$0xff]
    %v2732 = vld [vmem:[#allocation3 + $0x5a0] sm:$0xff]
    %v2733 = vld [vmem:[#allocation3 + $0x5a8] sm:$0xff]
    %v2734 = vld [vmem:[#allocation3 + $0x5b0] sm:$0xff]
    %v2735 = vld [vmem:[#allocation3 + $0x5b8] sm:$0xff]
    %v2736 = vld [vmem:[#allocation3 + $0x5c0] sm:$0xff]
    %v2737 = vld [vmem:[#allocation3 + $0x5c8] sm:$0xff]
    %v2738 = vld [vmem:[#allocation3 + $0x5d0] sm:$0xff]
    %v2739 = vld [vmem:[#allocation3 + $0x5d8] sm:$0xff]
    %v2740 = vld [vmem:[#allocation3 + $0x5e0] sm:$0xff]
    %v2741 = vld [vmem:[#allocation3 + $0x5e8] sm:$0xff]
    %v2742 = vld [vmem:[#allocation3 + $0x5f0] sm:$0xff]
    %v2743 = vld [vmem:[#allocation3 + $0x5f8] sm:$0xff]
    %v2744 = vld [vmem:[#allocation3 + $0x600] sm:$0xff]
    %v2745 = vld [vmem:[#allocation3 + $0x608] sm:$0xff]
    %v2746 = vld [vmem:[#allocation3 + $0x610] sm:$0xff]
    %v2747 = vld [vmem:[#allocation3 + $0x618] sm:$0xff]
    %v2748 = vld [vmem:[#allocation3 + $0x620] sm:$0xff]
    %v2749 = vld [vmem:[#allocation3 + $0x628] sm:$0xff]
    %v2750 = vld [vmem:[#allocation3 + $0x630] sm:$0xff]
    %v2751 = vld [vmem:[#allocation3 + $0x638] sm:$0xff]
    %v2752 = vld [vmem:[#allocation3 + $0x640] sm:$0xff]
    %v2753 = vld [vmem:[#allocation3 + $0x648] sm:$0xff]
    %v2754 = vld [vmem:[#allocation3 + $0x650] sm:$0xff]
    %v2755 = vld [vmem:[#allocation3 + $0x658] sm:$0xff]
    %v2756 = vld [vmem:[#allocation3 + $0x660] sm:$0xff]
    %v2757 = vld [vmem:[#allocation3 + $0x668] sm:$0xff]
    %v2758 = vld [vmem:[#allocation3 + $0x670] sm:$0xff]
    %v2759 = vld [vmem:[#allocation3 + $0x678] sm:$0xff]
    %v2760 = vld [vmem:[#allocation3 + $0x680] sm:$0xff]
    %v2761 = vld [vmem:[#allocation3 + $0x688] sm:$0xff]
    %v2762 = vld [vmem:[#allocation3 + $0x690] sm:$0xff]
    %v2763 = vld [vmem:[#allocation3 + $0x698] sm:$0xff]
    %v2764 = vld [vmem:[#allocation3 + $0x6a0] sm:$0xff]
    %v2765 = vld [vmem:[#allocation3 + $0x6a8] sm:$0xff]
    %v2766 = vld [vmem:[#allocation3 + $0x6b0] sm:$0xff]
    %v2767 = vld [vmem:[#allocation3 + $0x6b8] sm:$0xff]
    %v2768 = vld [vmem:[#allocation3 + $0x6c0] sm:$0xff]
    %v2769 = vld [vmem:[#allocation3 + $0x6c8] sm:$0xff]
    %v2770 = vld [vmem:[#allocation3 + $0x6d0] sm:$0xff]
    %v2771 = vld [vmem:[#allocation3 + $0x6d8] sm:$0xff]
    %v2772 = vld [vmem:[#allocation3 + $0x6e0] sm:$0xff]
    %v2773 = vld [vmem:[#allocation3 + $0x6e8] sm:$0xff]
    %v2774 = vld [vmem:[#allocation3 + $0x6f0] sm:$0xff]
    %v2775 = vld [vmem:[#allocation3 + $0x6f8] sm:$0xff]
    %v2776 = vld [vmem:[#allocation3 + $0x700] sm:$0xff]
    %v2777 = vld [vmem:[#allocation3 + $0x708] sm:$0xff]
    %v2778 = vld [vmem:[#allocation3 + $0x710] sm:$0xff]
    %v2779 = vld [vmem:[#allocation3 + $0x718] sm:$0xff]
    %v2780 = vld [vmem:[#allocation3 + $0x720] sm:$0xff]
    %v2781 = vld [vmem:[#allocation3 + $0x728] sm:$0xff]
    %v2782 = vld [vmem:[#allocation3 + $0x730] sm:$0xff]
    %v2783 = vld [vmem:[#allocation3 + $0x738] sm:$0xff]
    %v2784 = vld [vmem:[#allocation3 + $0x740] sm:$0xff]
    %v2785 = vld [vmem:[#allocation3 + $0x748] sm:$0xff]
    %v2786 = vld [vmem:[#allocation3 + $0x750] sm:$0xff]
    %v2787 = vld [vmem:[#allocation3 + $0x758] sm:$0xff]
    %v2788 = vld [vmem:[#allocation3 + $0x760] sm:$0xff]
    %v2789 = vld [vmem:[#allocation3 + $0x768] sm:$0xff]
    %v2790 = vld [vmem:[#allocation3 + $0x770] sm:$0xff]
    %v2791 = vld [vmem:[#allocation3 + $0x778] sm:$0xff]
    %v2792 = vld [vmem:[#allocation3 + $0x780] sm:$0xff]
    %v2793 = vld [vmem:[#allocation3 + $0x788] sm:$0xff]
    %v2794 = vld [vmem:[#allocation3 + $0x790] sm:$0xff]
    %v2795 = vld [vmem:[#allocation3 + $0x798] sm:$0xff]
    %v2796 = vld [vmem:[#allocation3 + $0x7a0] sm:$0xff]
    %v2797 = vld [vmem:[#allocation3 + $0x7a8] sm:$0xff]
    %v2798 = vld [vmem:[#allocation3 + $0x7b0] sm:$0xff]
    %v2799 = vld [vmem:[#allocation3 + $0x7b8] sm:$0xff]
    %v2800 = vld [vmem:[#allocation3 + $0x7c0] sm:$0xff]
    %v2801 = vld [vmem:[#allocation3 + $0x7c8] sm:$0xff]
    %v2802 = vld [vmem:[#allocation3 + $0x7d0] sm:$0xff]
    %v2803 = vld [vmem:[#allocation3 + $0x7d8] sm:$0xff]
    %v2804 = vld [vmem:[#allocation3 + $0x7e0] sm:$0xff]
    %v2805 = vld [vmem:[#allocation3 + $0x7e8] sm:$0xff]
    %v2806 = vld [vmem:[#allocation3 + $0x7f0] sm:$0xff]
    %v2807 = vld [vmem:[#allocation3 + $0x7f8] sm:$0xff]
    %v2808 = vld [vmem:[#allocation3 + $0x800] sm:$0xff]
    %v2809 = vld [vmem:[#allocation3 + $0x808] sm:$0xff]
    %v2810 = vld [vmem:[#allocation3 + $0x810] sm:$0xff]
    %v2811 = vld [vmem:[#allocation3 + $0x818] sm:$0xff]
    %v2812 = vld [vmem:[#allocation3 + $0x820] sm:$0xff]
    %v2813 = vld [vmem:[#allocation3 + $0x828] sm:$0xff]
    %v2814 = vld [vmem:[#allocation3 + $0x830] sm:$0xff]
    %v2815 = vld [vmem:[#allocation3 + $0x838] sm:$0xff]
    %v2816 = vld [vmem:[#allocation3 + $0x840] sm:$0xff]
    %v2817 = vld [vmem:[#allocation3 + $0x848] sm:$0xff]
    %v2818 = vld [vmem:[#allocation3 + $0x850] sm:$0xff]
    %v2819 = vld [vmem:[#allocation3 + $0x858] sm:$0xff]
    %v2820 = vld [vmem:[#allocation3 + $0x860] sm:$0xff]
    %v2821 = vld [vmem:[#allocation3 + $0x868] sm:$0xff]
    %v2822 = vld [vmem:[#allocation3 + $0x870] sm:$0xff]
    %v2823 = vld [vmem:[#allocation3 + $0x878] sm:$0xff]
    %v2824 = vld [vmem:[#allocation3 + $0x880] sm:$0xff]
    %v2825 = vld [vmem:[#allocation3 + $0x888] sm:$0xff]
    %v2826 = vld [vmem:[#allocation3 + $0x890] sm:$0xff]
    %v2827 = vld [vmem:[#allocation3 + $0x898] sm:$0xff]
    %v2828 = vld [vmem:[#allocation3 + $0x8a0] sm:$0xff]
    %v2829 = vld [vmem:[#allocation3 + $0x8a8] sm:$0xff]
    %v2830 = vld [vmem:[#allocation3 + $0x8b0] sm:$0xff]
    %v2831 = vld [vmem:[#allocation3 + $0x8b8] sm:$0xff]
    %v2832 = vld [vmem:[#allocation3 + $0x8c0] sm:$0xff]
    %v2833 = vld [vmem:[#allocation3 + $0x8c8] sm:$0xff]
    %v2834 = vld [vmem:[#allocation3 + $0x8d0] sm:$0xff]
    %v2835 = vld [vmem:[#allocation3 + $0x8d8] sm:$0xff]
    %v2836 = vld [vmem:[#allocation3 + $0x8e0] sm:$0xff]
    %v2837 = vld [vmem:[#allocation3 + $0x8e8] sm:$0xff]
    %v2838 = vld [vmem:[#allocation3 + $0x8f0] sm:$0xff]
    %v2839 = vld [vmem:[#allocation3 + $0x8f8] sm:$0xff]
    %v2840 = vld [vmem:[#allocation2] sm:$0xc]
    %v2841 = vld [vmem:[#allocation2 + $0x8] sm:$0xc]
    %v2842 = vld [vmem:[#allocation2 + $0x10] sm:$0xc]
    %v2843 = vld [vmem:[#allocation2 + $0x18] sm:$0xc]
    %v2844 = vld [vmem:[#allocation2 + $0x20] sm:$0xc]
    %v2845 = vld [vmem:[#allocation2 + $0x28] sm:$0xc]
    %v2846 = vld [vmem:[#allocation2 + $0x30] sm:$0xc]
    %v2847 = vld [vmem:[#allocation2 + $0x38] sm:$0xc]
    %v2848 = vld [vmem:[#allocation2 + $0x40] sm:$0xc]
    %v2849 = vld [vmem:[#allocation2 + $0x48] sm:$0xc]
    %v2850 = vld [vmem:[#allocation2 + $0x50] sm:$0xc]
    %v2851 = vld [vmem:[#allocation2 + $0x58] sm:$0xc]
    %v2852 = vpack.c.bf16 %v2542, %v2542
    %v2853 = vpack.c.bf16 %v2543, %v2543
    %v2854 = vpack.c.bf16 %v2544, %v2544
    %v3143 = vunpack.c.l.b16 %v2552
    %v3144 = vunpack.c.h.b16 %v2552
    %v3145 = vunpack.c.l.b16 %v2553
    %v3146 = vunpack.c.h.b16 %v2553
    %v3147 = vunpack.c.l.b16 %v2554
    %v3148 = vunpack.c.h.b16 %v2554
    %v3149 = vunpack.c.l.b16 %v2555
    %v3150 = vunpack.c.h.b16 %v2555
    %v3151 = vunpack.c.l.b16 %v2556
    %v3152 = vunpack.c.h.b16 %v2556
    %v3153 = vunpack.c.l.b16 %v2557
    %v3154 = vunpack.c.h.b16 %v2557
    %v3155 = vunpack.c.l.b16 %v2558
    %v3156 = vunpack.c.h.b16 %v2558
    %v3157 = vunpack.c.l.b16 %v2559
    %v3158 = vunpack.c.h.b16 %v2559
    %v3159 = vunpack.c.l.b16 %v2560
    %v3160 = vunpack.c.h.b16 %v2560
    %v3161 = vunpack.c.l.b16 %v2561
    %v3162 = vunpack.c.h.b16 %v2561
    %v3163 = vunpack.c.l.b16 %v2562
    %v3164 = vunpack.c.h.b16 %v2562
    %v3165 = vunpack.c.l.b16 %v2563
    %v3166 = vunpack.c.h.b16 %v2563
    %v3167 = vunpack.c.l.b16 %v2564
    %v3168 = vunpack.c.h.b16 %v2564
    %v3169 = vunpack.c.l.b16 %v2565
    %v3170 = vunpack.c.h.b16 %v2565
    %v3171 = vunpack.c.l.b16 %v2566
    %v3172 = vunpack.c.h.b16 %v2566
    %v3173 = vunpack.c.l.b16 %v2567
    %v3174 = vunpack.c.h.b16 %v2567
    %v3175 = vunpack.c.l.b16 %v2568
    %v3176 = vunpack.c.h.b16 %v2568
    %v3177 = vunpack.c.l.b16 %v2569
    %v3178 = vunpack.c.h.b16 %v2569
    %v3179 = vunpack.c.l.b16 %v2570
    %v3180 = vunpack.c.h.b16 %v2570
    %v3181 = vunpack.c.l.b16 %v2571
    %v3182 = vunpack.c.h.b16 %v2571
    %v3183 = vunpack.c.l.b16 %v2572
    %v3184 = vunpack.c.h.b16 %v2572
    %v3185 = vunpack.c.l.b16 %v2573
    %v3186 = vunpack.c.h.b16 %v2573
    %v3187 = vunpack.c.l.b16 %v2574
    %v3188 = vunpack.c.h.b16 %v2574
    %v3189 = vunpack.c.l.b16 %v2575
    %v3190 = vunpack.c.h.b16 %v2575
    %v3191 = vunpack.c.l.b16 %v2576
    %v3192 = vunpack.c.h.b16 %v2576
    %v3193 = vunpack.c.l.b16 %v2577
    %v3194 = vunpack.c.h.b16 %v2577
    %v3195 = vunpack.c.l.b16 %v2578
    %v3196 = vunpack.c.h.b16 %v2578
    %v3197 = vunpack.c.l.b16 %v2579
    %v3198 = vunpack.c.h.b16 %v2579
    %v3199 = vunpack.c.l.b16 %v2580
    %v3200 = vunpack.c.h.b16 %v2580
    %v3201 = vunpack.c.l.b16 %v2581
    %v3202 = vunpack.c.h.b16 %v2581
    %v3203 = vunpack.c.l.b16 %v2582
    %v3204 = vunpack.c.h.b16 %v2582
    %v3205 = vunpack.c.l.b16 %v2583
    %v3206 = vunpack.c.h.b16 %v2583
    %v3207 = vunpack.c.l.b16 %v2584
    %v3208 = vunpack.c.h.b16 %v2584
    %v3209 = vunpack.c.l.b16 %v2585
    %v3210 = vunpack.c.h.b16 %v2585
    %v3211 = vunpack.c.l.b16 %v2586
    %v3212 = vunpack.c.h.b16 %v2586
    %v3213 = vunpack.c.l.b16 %v2587
    %v3214 = vunpack.c.h.b16 %v2587
    %v3215 = vunpack.c.l.b16 %v2588
    %v3216 = vunpack.c.h.b16 %v2588
    %v3217 = vunpack.c.l.b16 %v2589
    %v3218 = vunpack.c.h.b16 %v2589
    %v3219 = vunpack.c.l.b16 %v2590
    %v3220 = vunpack.c.h.b16 %v2590
    %v3221 = vunpack.c.l.b16 %v2591
    %v3222 = vunpack.c.h.b16 %v2591
    %v3223 = vunpack.c.l.b16 %v2592
    %v3224 = vunpack.c.h.b16 %v2592
    %v3225 = vunpack.c.l.b16 %v2593
    %v3226 = vunpack.c.h.b16 %v2593
    %v3227 = vunpack.c.l.b16 %v2594
    %v3228 = vunpack.c.h.b16 %v2594
    %v3229 = vunpack.c.l.b16 %v2595
    %v3230 = vunpack.c.h.b16 %v2595
    %v3231 = vunpack.c.l.b16 %v2596
    %v3232 = vunpack.c.h.b16 %v2596
    %v3233 = vunpack.c.l.b16 %v2597
    %v3234 = vunpack.c.h.b16 %v2597
    %v3235 = vunpack.c.l.b16 %v2598
    %v3236 = vunpack.c.h.b16 %v2598
    %v3237 = vunpack.c.l.b16 %v2599
    %v3238 = vunpack.c.h.b16 %v2599
    %v3239 = vunpack.c.l.b16 %v2600
    %v3240 = vunpack.c.h.b16 %v2600
    %v3241 = vunpack.c.l.b16 %v2601
    %v3242 = vunpack.c.h.b16 %v2601
    %v3243 = vunpack.c.l.b16 %v2602
    %v3244 = vunpack.c.h.b16 %v2602
    %v3245 = vunpack.c.l.b16 %v2603
    %v3246 = vunpack.c.h.b16 %v2603
    %v3247 = vunpack.c.l.b16 %v2604
    %v3248 = vunpack.c.h.b16 %v2604
    %v3249 = vunpack.c.l.b16 %v2605
    %v3250 = vunpack.c.h.b16 %v2605
    %v3251 = vunpack.c.l.b16 %v2606
    %v3252 = vunpack.c.h.b16 %v2606
    %v3253 = vunpack.c.l.b16 %v2607
    %v3254 = vunpack.c.h.b16 %v2607
    %v3255 = vunpack.c.l.b16 %v2608
    %v3256 = vunpack.c.h.b16 %v2608
    %v3257 = vunpack.c.l.b16 %v2609
    %v3258 = vunpack.c.h.b16 %v2609
    %v3259 = vunpack.c.l.b16 %v2610
    %v3260 = vunpack.c.h.b16 %v2610
    %v3261 = vunpack.c.l.b16 %v2611
    %v3262 = vunpack.c.h.b16 %v2611
    %v3263 = vunpack.c.l.b16 %v2612
    %v3264 = vunpack.c.h.b16 %v2612
    %v3265 = vunpack.c.l.b16 %v2613
    %v3266 = vunpack.c.h.b16 %v2613
    %v3267 = vunpack.c.l.b16 %v2614
    %v3268 = vunpack.c.h.b16 %v2614
    %v3269 = vunpack.c.l.b16 %v2615
    %v3270 = vunpack.c.h.b16 %v2615
    %v3271 = vunpack.c.l.b16 %v2616
    %v3272 = vunpack.c.h.b16 %v2616
    %v3273 = vunpack.c.l.b16 %v2617
    %v3274 = vunpack.c.h.b16 %v2617
    %v3275 = vunpack.c.l.b16 %v2618
    %v3276 = vunpack.c.h.b16 %v2618
    %v3277 = vunpack.c.l.b16 %v2619
    %v3278 = vunpack.c.h.b16 %v2619
    %v3279 = vunpack.c.l.b16 %v2620
    %v3280 = vunpack.c.h.b16 %v2620
    %v3281 = vunpack.c.l.b16 %v2621
    %v3282 = vunpack.c.h.b16 %v2621
    %v3283 = vunpack.c.l.b16 %v2622
    %v3284 = vunpack.c.h.b16 %v2622
    %v3285 = vunpack.c.l.b16 %v2623
    %v3286 = vunpack.c.h.b16 %v2623
    %v3287 = vunpack.c.l.b16 %v2624
    %v3288 = vunpack.c.h.b16 %v2624
    %v3289 = vunpack.c.l.b16 %v2625
    %v3290 = vunpack.c.h.b16 %v2625
    %v3291 = vunpack.c.l.b16 %v2626
    %v3292 = vunpack.c.h.b16 %v2626
    %v3293 = vunpack.c.l.b16 %v2627
    %v3294 = vunpack.c.h.b16 %v2627
    %v3295 = vunpack.c.l.b16 %v2628
    %v3296 = vunpack.c.h.b16 %v2628
    %v3297 = vunpack.c.l.b16 %v2629
    %v3298 = vunpack.c.h.b16 %v2629
    %v3299 = vunpack.c.l.b16 %v2630
    %v3300 = vunpack.c.h.b16 %v2630
    %v3301 = vunpack.c.l.b16 %v2631
    %v3302 = vunpack.c.h.b16 %v2631
    %v3303 = vunpack.c.l.b16 %v2632
    %v3304 = vunpack.c.h.b16 %v2632
    %v3305 = vunpack.c.l.b16 %v2633
    %v3306 = vunpack.c.h.b16 %v2633
    %v3307 = vunpack.c.l.b16 %v2634
    %v3308 = vunpack.c.h.b16 %v2634
    %v3309 = vunpack.c.l.b16 %v2635
    %v3310 = vunpack.c.h.b16 %v2635
    %v3311 = vunpack.c.l.b16 %v2636
    %v3312 = vunpack.c.h.b16 %v2636
    %v3313 = vunpack.c.l.b16 %v2637
    %v3314 = vunpack.c.h.b16 %v2637
    %v3315 = vunpack.c.l.b16 %v2638
    %v3316 = vunpack.c.h.b16 %v2638
    %v3317 = vunpack.c.l.b16 %v2639
    %v3318 = vunpack.c.h.b16 %v2639
    %v3319 = vunpack.c.l.b16 %v2640
    %v3320 = vunpack.c.h.b16 %v2640
    %v3321 = vunpack.c.l.b16 %v2641
    %v3322 = vunpack.c.h.b16 %v2641
    %v3323 = vunpack.c.l.b16 %v2642
    %v3324 = vunpack.c.h.b16 %v2642
    %v3325 = vunpack.c.l.b16 %v2643
    %v3326 = vunpack.c.h.b16 %v2643
    %v3327 = vunpack.c.l.b16 %v2644
    %v3328 = vunpack.c.h.b16 %v2644
    %v3329 = vunpack.c.l.b16 %v2645
    %v3330 = vunpack.c.h.b16 %v2645
    %v3331 = vunpack.c.l.b16 %v2646
    %v3332 = vunpack.c.h.b16 %v2646
    %v3333 = vunpack.c.l.b16 %v2647
    %v3334 = vunpack.c.h.b16 %v2647
    %v3335 = vunpack.c.l.b16 %v2648
    %v3336 = vunpack.c.h.b16 %v2648
    %v3337 = vunpack.c.l.b16 %v2649
    %v3338 = vunpack.c.h.b16 %v2649
    %v3339 = vunpack.c.l.b16 %v2650
    %v3340 = vunpack.c.h.b16 %v2650
    %v3341 = vunpack.c.l.b16 %v2651
    %v3342 = vunpack.c.h.b16 %v2651
    %v3343 = vunpack.c.l.b16 %v2652
    %v3344 = vunpack.c.h.b16 %v2652
    %v3345 = vunpack.c.l.b16 %v2653
    %v3346 = vunpack.c.h.b16 %v2653
    %v3347 = vunpack.c.l.b16 %v2654
    %v3348 = vunpack.c.h.b16 %v2654
    %v3349 = vunpack.c.l.b16 %v2655
    %v3350 = vunpack.c.h.b16 %v2655
    %v3351 = vunpack.c.l.b16 %v2656
    %v3352 = vunpack.c.h.b16 %v2656
    %v3353 = vunpack.c.l.b16 %v2657
    %v3354 = vunpack.c.h.b16 %v2657
    %v3355 = vunpack.c.l.b16 %v2658
    %v3356 = vunpack.c.h.b16 %v2658
    %v3357 = vunpack.c.l.b16 %v2659
    %v3358 = vunpack.c.h.b16 %v2659
    %v3359 = vunpack.c.l.b16 %v2660
    %v3360 = vunpack.c.h.b16 %v2660
    %v3361 = vunpack.c.l.b16 %v2661
    %v3362 = vunpack.c.h.b16 %v2661
    %v3363 = vunpack.c.l.b16 %v2662
    %v3364 = vunpack.c.h.b16 %v2662
    %v3365 = vunpack.c.l.b16 %v2663
    %v3366 = vunpack.c.h.b16 %v2663
    %v3367 = vunpack.c.l.b16 %v2664
    %v3368 = vunpack.c.h.b16 %v2664
    %v3369 = vunpack.c.l.b16 %v2665
    %v3370 = vunpack.c.h.b16 %v2665
    %v3371 = vunpack.c.l.b16 %v2666
    %v3372 = vunpack.c.h.b16 %v2666
    %v3373 = vunpack.c.l.b16 %v2667
    %v3374 = vunpack.c.h.b16 %v2667
    %v3375 = vunpack.c.l.b16 %v2668
    %v3376 = vunpack.c.h.b16 %v2668
    %v3377 = vunpack.c.l.b16 %v2669
    %v3378 = vunpack.c.h.b16 %v2669
    %v3379 = vunpack.c.l.b16 %v2670
    %v3380 = vunpack.c.h.b16 %v2670
    %v3381 = vunpack.c.l.b16 %v2671
    %v3382 = vunpack.c.h.b16 %v2671
    %v3383 = vunpack.c.l.b16 %v2672
    %v3384 = vunpack.c.h.b16 %v2672
    %v3385 = vunpack.c.l.b16 %v2673
    %v3386 = vunpack.c.h.b16 %v2673
    %v3387 = vunpack.c.l.b16 %v2674
    %v3388 = vunpack.c.h.b16 %v2674
    %v3389 = vunpack.c.l.b16 %v2675
    %v3390 = vunpack.c.h.b16 %v2675
    %v3391 = vunpack.c.l.b16 %v2676
    %v3392 = vunpack.c.h.b16 %v2676
    %v3393 = vunpack.c.l.b16 %v2677
    %v3394 = vunpack.c.h.b16 %v2677
    %v3395 = vunpack.c.l.b16 %v2678
    %v3396 = vunpack.c.h.b16 %v2678
    %v3397 = vunpack.c.l.b16 %v2679
    %v3398 = vunpack.c.h.b16 %v2679
    %v3399 = vunpack.c.l.b16 %v2680
    %v3400 = vunpack.c.h.b16 %v2680
    %v3401 = vunpack.c.l.b16 %v2681
    %v3402 = vunpack.c.h.b16 %v2681
    %v3403 = vunpack.c.l.b16 %v2682
    %v3404 = vunpack.c.h.b16 %v2682
    %v3405 = vunpack.c.l.b16 %v2683
    %v3406 = vunpack.c.h.b16 %v2683
    %v3407 = vunpack.c.l.b16 %v2684
    %v3408 = vunpack.c.h.b16 %v2684
    %v3409 = vunpack.c.l.b16 %v2685
    %v3410 = vunpack.c.h.b16 %v2685
    %v3411 = vunpack.c.l.b16 %v2686
    %v3412 = vunpack.c.h.b16 %v2686
    %v3413 = vunpack.c.l.b16 %v2687
    %v3414 = vunpack.c.h.b16 %v2687
    %v3415 = vunpack.c.l.b16 %v2688
    %v3416 = vunpack.c.h.b16 %v2688
    %v3417 = vunpack.c.l.b16 %v2689
    %v3418 = vunpack.c.h.b16 %v2689
    %v3419 = vunpack.c.l.b16 %v2690
    %v3420 = vunpack.c.h.b16 %v2690
    %v3421 = vunpack.c.l.b16 %v2691
    %v3422 = vunpack.c.h.b16 %v2691
    %v3423 = vunpack.c.l.b16 %v2692
    %v3424 = vunpack.c.h.b16 %v2692
    %v3425 = vunpack.c.l.b16 %v2693
    %v3426 = vunpack.c.h.b16 %v2693
    %v3427 = vunpack.c.l.b16 %v2694
    %v3428 = vunpack.c.h.b16 %v2694
    %v3429 = vunpack.c.l.b16 %v2695
    %v3430 = vunpack.c.h.b16 %v2695
    %v3431 = vunpack.c.l.b16 %v2696
    %v3432 = vunpack.c.h.b16 %v2696
    %v3433 = vunpack.c.l.b16 %v2697
    %v3434 = vunpack.c.h.b16 %v2697
    %v3435 = vunpack.c.l.b16 %v2698
    %v3436 = vunpack.c.h.b16 %v2698
    %v3437 = vunpack.c.l.b16 %v2699
    %v3438 = vunpack.c.h.b16 %v2699
    %v3439 = vunpack.c.l.b16 %v2700
    %v3440 = vunpack.c.h.b16 %v2700
    %v3441 = vunpack.c.l.b16 %v2701
    %v3442 = vunpack.c.h.b16 %v2701
    %v3443 = vunpack.c.l.b16 %v2702
    %v3444 = vunpack.c.h.b16 %v2702
    %v3445 = vunpack.c.l.b16 %v2703
    %v3446 = vunpack.c.h.b16 %v2703
    %v3447 = vunpack.c.l.b16 %v2704
    %v3448 = vunpack.c.h.b16 %v2704
    %v3449 = vunpack.c.l.b16 %v2705
    %v3450 = vunpack.c.h.b16 %v2705
    %v3451 = vunpack.c.l.b16 %v2706
    %v3452 = vunpack.c.h.b16 %v2706
    %v3453 = vunpack.c.l.b16 %v2707
    %v3454 = vunpack.c.h.b16 %v2707
    %v3455 = vunpack.c.l.b16 %v2708
    %v3456 = vunpack.c.h.b16 %v2708
    %v3457 = vunpack.c.l.b16 %v2709
    %v3458 = vunpack.c.h.b16 %v2709
    %v3459 = vunpack.c.l.b16 %v2710
    %v3460 = vunpack.c.h.b16 %v2710
    %v3461 = vunpack.c.l.b16 %v2711
    %v3462 = vunpack.c.h.b16 %v2711
    %v3463 = vunpack.c.l.b16 %v2712
    %v3464 = vunpack.c.h.b16 %v2712
    %v3465 = vunpack.c.l.b16 %v2713
    %v3466 = vunpack.c.h.b16 %v2713
    %v3467 = vunpack.c.l.b16 %v2714
    %v3468 = vunpack.c.h.b16 %v2714
    %v3469 = vunpack.c.l.b16 %v2715
    %v3470 = vunpack.c.h.b16 %v2715
    %v3471 = vunpack.c.l.b16 %v2716
    %v3472 = vunpack.c.h.b16 %v2716
    %v3473 = vunpack.c.l.b16 %v2717
    %v3474 = vunpack.c.h.b16 %v2717
    %v3475 = vunpack.c.l.b16 %v2718
    %v3476 = vunpack.c.h.b16 %v2718
    %v3477 = vunpack.c.l.b16 %v2719
    %v3478 = vunpack.c.h.b16 %v2719
    %v3479 = vunpack.c.l.b16 %v2720
    %v3480 = vunpack.c.h.b16 %v2720
    %v3481 = vunpack.c.l.b16 %v2721
    %v3482 = vunpack.c.h.b16 %v2721
    %v3483 = vunpack.c.l.b16 %v2722
    %v3484 = vunpack.c.h.b16 %v2722
    %v3485 = vunpack.c.l.b16 %v2723
    %v3486 = vunpack.c.h.b16 %v2723
    %v3487 = vunpack.c.l.b16 %v2724
    %v3488 = vunpack.c.h.b16 %v2724
    %v3489 = vunpack.c.l.b16 %v2725
    %v3490 = vunpack.c.h.b16 %v2725
    %v3491 = vunpack.c.l.b16 %v2726
    %v3492 = vunpack.c.h.b16 %v2726
    %v3493 = vunpack.c.l.b16 %v2727
    %v3494 = vunpack.c.h.b16 %v2727
    %v3495 = vunpack.c.l.b16 %v2728
    %v3496 = vunpack.c.h.b16 %v2728
    %v3497 = vunpack.c.l.b16 %v2729
    %v3498 = vunpack.c.h.b16 %v2729
    %v3499 = vunpack.c.l.b16 %v2730
    %v3500 = vunpack.c.h.b16 %v2730
    %v3501 = vunpack.c.l.b16 %v2731
    %v3502 = vunpack.c.h.b16 %v2731
    %v3503 = vunpack.c.l.b16 %v2732
    %v3504 = vunpack.c.h.b16 %v2732
    %v3505 = vunpack.c.l.b16 %v2733
    %v3506 = vunpack.c.h.b16 %v2733
    %v3507 = vunpack.c.l.b16 %v2734
    %v3508 = vunpack.c.h.b16 %v2734
    %v3509 = vunpack.c.l.b16 %v2735
    %v3510 = vunpack.c.h.b16 %v2735
    %v3511 = vunpack.c.l.b16 %v2736
    %v3512 = vunpack.c.h.b16 %v2736
    %v3513 = vunpack.c.l.b16 %v2737
    %v3514 = vunpack.c.h.b16 %v2737
    %v3515 = vunpack.c.l.b16 %v2738
    %v3516 = vunpack.c.h.b16 %v2738
    %v3517 = vunpack.c.l.b16 %v2739
    %v3518 = vunpack.c.h.b16 %v2739
    %v3519 = vunpack.c.l.b16 %v2740
    %v3520 = vunpack.c.h.b16 %v2740
    %v3521 = vunpack.c.l.b16 %v2741
    %v3522 = vunpack.c.h.b16 %v2741
    %v3523 = vunpack.c.l.b16 %v2742
    %v3524 = vunpack.c.h.b16 %v2742
    %v3525 = vunpack.c.l.b16 %v2743
    %v3526 = vunpack.c.h.b16 %v2743
    %v3527 = vunpack.c.l.b16 %v2744
    %v3528 = vunpack.c.h.b16 %v2744
    %v3529 = vunpack.c.l.b16 %v2745
    %v3530 = vunpack.c.h.b16 %v2745
    %v3531 = vunpack.c.l.b16 %v2746
    %v3532 = vunpack.c.h.b16 %v2746
    %v3533 = vunpack.c.l.b16 %v2747
    %v3534 = vunpack.c.h.b16 %v2747
    %v3535 = vunpack.c.l.b16 %v2748
    %v3536 = vunpack.c.h.b16 %v2748
    %v3537 = vunpack.c.l.b16 %v2749
    %v3538 = vunpack.c.h.b16 %v2749
    %v3539 = vunpack.c.l.b16 %v2750
    %v3540 = vunpack.c.h.b16 %v2750
    %v3541 = vunpack.c.l.b16 %v2751
    %v3542 = vunpack.c.h.b16 %v2751
    %v3543 = vunpack.c.l.b16 %v2752
    %v3544 = vunpack.c.h.b16 %v2752
    %v3545 = vunpack.c.l.b16 %v2753
    %v3546 = vunpack.c.h.b16 %v2753
    %v3547 = vunpack.c.l.b16 %v2754
    %v3548 = vunpack.c.h.b16 %v2754
    %v3549 = vunpack.c.l.b16 %v2755
    %v3550 = vunpack.c.h.b16 %v2755
    %v3551 = vunpack.c.l.b16 %v2756
    %v3552 = vunpack.c.h.b16 %v2756
    %v3553 = vunpack.c.l.b16 %v2757
    %v3554 = vunpack.c.h.b16 %v2757
    %v3555 = vunpack.c.l.b16 %v2758
    %v3556 = vunpack.c.h.b16 %v2758
    %v3557 = vunpack.c.l.b16 %v2759
    %v3558 = vunpack.c.h.b16 %v2759
    %v3559 = vunpack.c.l.b16 %v2760
    %v3560 = vunpack.c.h.b16 %v2760
    %v3561 = vunpack.c.l.b16 %v2761
    %v3562 = vunpack.c.h.b16 %v2761
    %v3563 = vunpack.c.l.b16 %v2762
    %v3564 = vunpack.c.h.b16 %v2762
    %v3565 = vunpack.c.l.b16 %v2763
    %v3566 = vunpack.c.h.b16 %v2763
    %v3567 = vunpack.c.l.b16 %v2764
    %v3568 = vunpack.c.h.b16 %v2764
    %v3569 = vunpack.c.l.b16 %v2765
    %v3570 = vunpack.c.h.b16 %v2765
    %v3571 = vunpack.c.l.b16 %v2766
    %v3572 = vunpack.c.h.b16 %v2766
    %v3573 = vunpack.c.l.b16 %v2767
    %v3574 = vunpack.c.h.b16 %v2767
    %v3575 = vunpack.c.l.b16 %v2768
    %v3576 = vunpack.c.h.b16 %v2768
    %v3577 = vunpack.c.l.b16 %v2769
    %v3578 = vunpack.c.h.b16 %v2769
    %v3579 = vunpack.c.l.b16 %v2770
    %v3580 = vunpack.c.h.b16 %v2770
    %v3581 = vunpack.c.l.b16 %v2771
    %v3582 = vunpack.c.h.b16 %v2771
    %v3583 = vunpack.c.l.b16 %v2772
    %v3584 = vunpack.c.h.b16 %v2772
    %v3585 = vunpack.c.l.b16 %v2773
    %v3586 = vunpack.c.h.b16 %v2773
    %v3587 = vunpack.c.l.b16 %v2774
    %v3588 = vunpack.c.h.b16 %v2774
    %v3589 = vunpack.c.l.b16 %v2775
    %v3590 = vunpack.c.h.b16 %v2775
    %v3591 = vunpack.c.l.b16 %v2776
    %v3592 = vunpack.c.h.b16 %v2776
    %v3593 = vunpack.c.l.b16 %v2777
    %v3594 = vunpack.c.h.b16 %v2777
    %v3595 = vunpack.c.l.b16 %v2778
    %v3596 = vunpack.c.h.b16 %v2778
    %v3597 = vunpack.c.l.b16 %v2779
    %v3598 = vunpack.c.h.b16 %v2779
    %v3599 = vunpack.c.l.b16 %v2780
    %v3600 = vunpack.c.h.b16 %v2780
    %v3601 = vunpack.c.l.b16 %v2781
    %v3602 = vunpack.c.h.b16 %v2781
    %v3603 = vunpack.c.l.b16 %v2782
    %v3604 = vunpack.c.h.b16 %v2782
    %v3605 = vunpack.c.l.b16 %v2783
    %v3606 = vunpack.c.h.b16 %v2783
    %v3607 = vunpack.c.l.b16 %v2784
    %v3608 = vunpack.c.h.b16 %v2784
    %v3609 = vunpack.c.l.b16 %v2785
    %v3610 = vunpack.c.h.b16 %v2785
    %v3611 = vunpack.c.l.b16 %v2786
    %v3612 = vunpack.c.h.b16 %v2786
    %v3613 = vunpack.c.l.b16 %v2787
    %v3614 = vunpack.c.h.b16 %v2787
    %v3615 = vunpack.c.l.b16 %v2788
    %v3616 = vunpack.c.h.b16 %v2788
    %v3617 = vunpack.c.l.b16 %v2789
    %v3618 = vunpack.c.h.b16 %v2789
    %v3619 = vunpack.c.l.b16 %v2790
    %v3620 = vunpack.c.h.b16 %v2790
    %v3621 = vunpack.c.l.b16 %v2791
    %v3622 = vunpack.c.h.b16 %v2791
    %v3623 = vunpack.c.l.b16 %v2792
    %v3624 = vunpack.c.h.b16 %v2792
    %v3625 = vunpack.c.l.b16 %v2793
    %v3626 = vunpack.c.h.b16 %v2793
    %v3627 = vunpack.c.l.b16 %v2794
    %v3628 = vunpack.c.h.b16 %v2794
    %v3629 = vunpack.c.l.b16 %v2795
    %v3630 = vunpack.c.h.b16 %v2795
    %v3631 = vunpack.c.l.b16 %v2796
    %v3632 = vunpack.c.h.b16 %v2796
    %v3633 = vunpack.c.l.b16 %v2797
    %v3634 = vunpack.c.h.b16 %v2797
    %v3635 = vunpack.c.l.b16 %v2798
    %v3636 = vunpack.c.h.b16 %v2798
    %v3637 = vunpack.c.l.b16 %v2799
    %v3638 = vunpack.c.h.b16 %v2799
    %v3639 = vunpack.c.l.b16 %v2800
    %v3640 = vunpack.c.h.b16 %v2800
    %v3641 = vunpack.c.l.b16 %v2801
    %v3642 = vunpack.c.h.b16 %v2801
    %v3643 = vunpack.c.l.b16 %v2802
    %v3644 = vunpack.c.h.b16 %v2802
    %v3645 = vunpack.c.l.b16 %v2803
    %v3646 = vunpack.c.h.b16 %v2803
    %v3647 = vunpack.c.l.b16 %v2804
    %v3648 = vunpack.c.h.b16 %v2804
    %v3649 = vunpack.c.l.b16 %v2805
    %v3650 = vunpack.c.h.b16 %v2805
    %v3651 = vunpack.c.l.b16 %v2806
    %v3652 = vunpack.c.h.b16 %v2806
    %v3653 = vunpack.c.l.b16 %v2807
    %v3654 = vunpack.c.h.b16 %v2807
    %v3655 = vunpack.c.l.b16 %v2808
    %v3656 = vunpack.c.h.b16 %v2808
    %v3657 = vunpack.c.l.b16 %v2809
    %v3658 = vunpack.c.h.b16 %v2809
    %v3659 = vunpack.c.l.b16 %v2810
    %v3660 = vunpack.c.h.b16 %v2810
    %v3661 = vunpack.c.l.b16 %v2811
    %v3662 = vunpack.c.h.b16 %v2811
    %v3663 = vunpack.c.l.b16 %v2812
    %v3664 = vunpack.c.h.b16 %v2812
    %v3665 = vunpack.c.l.b16 %v2813
    %v3666 = vunpack.c.h.b16 %v2813
    %v3667 = vunpack.c.l.b16 %v2814
    %v3668 = vunpack.c.h.b16 %v2814
    %v3669 = vunpack.c.l.b16 %v2815
    %v3670 = vunpack.c.h.b16 %v2815
    %v3671 = vunpack.c.l.b16 %v2816
    %v3672 = vunpack.c.h.b16 %v2816
    %v3673 = vunpack.c.l.b16 %v2817
    %v3674 = vunpack.c.h.b16 %v2817
    %v3675 = vunpack.c.l.b16 %v2818
    %v3676 = vunpack.c.h.b16 %v2818
    %v3677 = vunpack.c.l.b16 %v2819
    %v3678 = vunpack.c.h.b16 %v2819
    %v3679 = vunpack.c.l.b16 %v2820
    %v3680 = vunpack.c.h.b16 %v2820
    %v3681 = vunpack.c.l.b16 %v2821
    %v3682 = vunpack.c.h.b16 %v2821
    %v3683 = vunpack.c.l.b16 %v2822
    %v3684 = vunpack.c.h.b16 %v2822
    %v3685 = vunpack.c.l.b16 %v2823
    %v3686 = vunpack.c.h.b16 %v2823
    %v3687 = vunpack.c.l.b16 %v2824
    %v3688 = vunpack.c.h.b16 %v2824
    %v3689 = vunpack.c.l.b16 %v2825
    %v3690 = vunpack.c.h.b16 %v2825
    %v3691 = vunpack.c.l.b16 %v2826
    %v3692 = vunpack.c.h.b16 %v2826
    %v3693 = vunpack.c.l.b16 %v2827
    %v3694 = vunpack.c.h.b16 %v2827
    %v3695 = vunpack.c.l.b16 %v2828
    %v3696 = vunpack.c.h.b16 %v2828
    %v3697 = vunpack.c.l.b16 %v2829
    %v3698 = vunpack.c.h.b16 %v2829
    %v3699 = vunpack.c.l.b16 %v2830
    %v3700 = vunpack.c.h.b16 %v2830
    %v3701 = vunpack.c.l.b16 %v2831
    %v3702 = vunpack.c.h.b16 %v2831
    %v3703 = vunpack.c.l.b16 %v2832
    %v3704 = vunpack.c.h.b16 %v2832
    %v3705 = vunpack.c.l.b16 %v2833
    %v3706 = vunpack.c.h.b16 %v2833
    %v3707 = vunpack.c.l.b16 %v2834
    %v3708 = vunpack.c.h.b16 %v2834
    %v3709 = vunpack.c.l.b16 %v2835
    %v3710 = vunpack.c.h.b16 %v2835
    %v3711 = vunpack.c.l.b16 %v2836
    %v3712 = vunpack.c.h.b16 %v2836
    %v3713 = vunpack.c.l.b16 %v2837
    %v3714 = vunpack.c.h.b16 %v2837
    %v3715 = vunpack.c.l.b16 %v2838
    %v3716 = vunpack.c.h.b16 %v2838
    %v3717 = vunpack.c.l.b16 %v2839
    %v3718 = vunpack.c.h.b16 %v2839
    %v3719 = vpack.c.b16 %v3155, %v3143
    %v3720 = vpack.c.b16 %v3156, %v3144
    %v3721 = vpack.c.b16 %v3157, %v3145
    %v3722 = vpack.c.b16 %v3158, %v3146
    %v3723 = vpack.c.b16 %v3159, %v3147
    %v3724 = vpack.c.b16 %v3160, %v3148
    %v3725 = vpack.c.b16 %v3161, %v3149
    %v3726 = vpack.c.b16 %v3162, %v3150
    %v3727 = vpack.c.b16 %v3163, %v3151
    %v3728 = vpack.c.b16 %v3164, %v3152
    %v3729 = vpack.c.b16 %v3165, %v3153
    %v3730 = vpack.c.b16 %v3166, %v3154
    %v3731 = vpack.c.b16 %v3179, %v3167
    %v3732 = vpack.c.b16 %v3180, %v3168
    %v3733 = vpack.c.b16 %v3181, %v3169
    %v3734 = vpack.c.b16 %v3182, %v3170
    %v3735 = vpack.c.b16 %v3183, %v3171
    %v3736 = vpack.c.b16 %v3184, %v3172
    %v3737 = vpack.c.b16 %v3185, %v3173
    %v3738 = vpack.c.b16 %v3186, %v3174
    %v3739 = vpack.c.b16 %v3187, %v3175
    %v3740 = vpack.c.b16 %v3188, %v3176
    %v3741 = vpack.c.b16 %v3189, %v3177
    %v3742 = vpack.c.b16 %v3190, %v3178
    %v3743 = vpack.c.b16 %v3203, %v3191
    %v3744 = vpack.c.b16 %v3204, %v3192
    %v3745 = vpack.c.b16 %v3205, %v3193
    %v3746 = vpack.c.b16 %v3206, %v3194
    %v3747 = vpack.c.b16 %v3207, %v3195
    %v3748 = vpack.c.b16 %v3208, %v3196
    %v3749 = vpack.c.b16 %v3209, %v3197
    %v3750 = vpack.c.b16 %v3210, %v3198
    %v3751 = vpack.c.b16 %v3211, %v3199
    %v3752 = vpack.c.b16 %v3212, %v3200
    %v3753 = vpack.c.b16 %v3213, %v3201
    %v3754 = vpack.c.b16 %v3214, %v3202
    %v3755 = vpack.c.b16 %v3227, %v3215
    %v3756 = vpack.c.b16 %v3228, %v3216
    %v3757 = vpack.c.b16 %v3229, %v3217
    %v3758 = vpack.c.b16 %v3230, %v3218
    %v3759 = vpack.c.b16 %v3231, %v3219
    %v3760 = vpack.c.b16 %v3232, %v3220
    %v3761 = vpack.c.b16 %v3233, %v3221
    %v3762 = vpack.c.b16 %v3234, %v3222
    %v3763 = vpack.c.b16 %v3235, %v3223
    %v3764 = vpack.c.b16 %v3236, %v3224
    %v3765 = vpack.c.b16 %v3237, %v3225
    %v3766 = vpack.c.b16 %v3238, %v3226
    %v3767 = vpack.c.b16 %v3251, %v3239
    %v3768 = vpack.c.b16 %v3252, %v3240
    %v3769 = vpack.c.b16 %v3253, %v3241
    %v3770 = vpack.c.b16 %v3254, %v3242
    %v3771 = vpack.c.b16 %v3255, %v3243
    %v3772 = vpack.c.b16 %v3256, %v3244
    %v3773 = vpack.c.b16 %v3257, %v3245
    %v3774 = vpack.c.b16 %v3258, %v3246
    %v3775 = vpack.c.b16 %v3259, %v3247
    %v3776 = vpack.c.b16 %v3260, %v3248
    %v3777 = vpack.c.b16 %v3261, %v3249
    %v3778 = vpack.c.b16 %v3262, %v3250
    %v3779 = vpack.c.b16 %v3275, %v3263
    %v3780 = vpack.c.b16 %v3276, %v3264
    %v3781 = vpack.c.b16 %v3277, %v3265
    %v3782 = vpack.c.b16 %v3278, %v3266
    %v3783 = vpack.c.b16 %v3279, %v3267
    %v3784 = vpack.c.b16 %v3280, %v3268
    %v3785 = vpack.c.b16 %v3281, %v3269
    %v3786 = vpack.c.b16 %v3282, %v3270
    %v3787 = vpack.c.b16 %v3283, %v3271
    %v3788 = vpack.c.b16 %v3284, %v3272
    %v3789 = vpack.c.b16 %v3285, %v3273
    %v3790 = vpack.c.b16 %v3286, %v3274
    %v3791 = vpack.c.b16 %v3299, %v3287
    %v3792 = vpack.c.b16 %v3300, %v3288
    %v3793 = vpack.c.b16 %v3301, %v3289
    %v3794 = vpack.c.b16 %v3302, %v3290
    %v3795 = vpack.c.b16 %v3303, %v3291
    %v3796 = vpack.c.b16 %v3304, %v3292
    %v3797 = vpack.c.b16 %v3305, %v3293
    %v3798 = vpack.c.b16 %v3306, %v3294
    %v3799 = vpack.c.b16 %v3307, %v3295
    %v3800 = vpack.c.b16 %v3308, %v3296
    %v3801 = vpack.c.b16 %v3309, %v3297
    %v3802 = vpack.c.b16 %v3310, %v3298
    %v3803 = vpack.c.b16 %v3323, %v3311
    %v3804 = vpack.c.b16 %v3324, %v3312
    %v3805 = vpack.c.b16 %v3325, %v3313
    %v3806 = vpack.c.b16 %v3326, %v3314
    %v3807 = vpack.c.b16 %v3327, %v3315
    %v3808 = vpack.c.b16 %v3328, %v3316
    %v3809 = vpack.c.b16 %v3329, %v3317
    %v3810 = vpack.c.b16 %v3330, %v3318
    %v3811 = vpack.c.b16 %v3331, %v3319
    %v3812 = vpack.c.b16 %v3332, %v3320
    %v3813 = vpack.c.b16 %v3333, %v3321
    %v3814 = vpack.c.b16 %v3334, %v3322
    %v3815 = vpack.c.b16 %v3347, %v3335
    %v3816 = vpack.c.b16 %v3348, %v3336
    %v3817 = vpack.c.b16 %v3349, %v3337
    %v3818 = vpack.c.b16 %v3350, %v3338
    %v3819 = vpack.c.b16 %v3351, %v3339
    %v3820 = vpack.c.b16 %v3352, %v3340
    %v3821 = vpack.c.b16 %v3353, %v3341
    %v3822 = vpack.c.b16 %v3354, %v3342
    %v3823 = vpack.c.b16 %v3355, %v3343
    %v3824 = vpack.c.b16 %v3356, %v3344
    %v3825 = vpack.c.b16 %v3357, %v3345
    %v3826 = vpack.c.b16 %v3358, %v3346
    %v3827 = vpack.c.b16 %v3371, %v3359
    %v3828 = vpack.c.b16 %v3372, %v3360
    %v3829 = vpack.c.b16 %v3373, %v3361
    %v3830 = vpack.c.b16 %v3374, %v3362
    %v3831 = vpack.c.b16 %v3375, %v3363
    %v3832 = vpack.c.b16 %v3376, %v3364
    %v3833 = vpack.c.b16 %v3377, %v3365
    %v3834 = vpack.c.b16 %v3378, %v3366
    %v3835 = vpack.c.b16 %v3379, %v3367
    %v3836 = vpack.c.b16 %v3380, %v3368
    %v3837 = vpack.c.b16 %v3381, %v3369
    %v3838 = vpack.c.b16 %v3382, %v3370
    %v3839 = vpack.c.b16 %v3395, %v3383
    %v3840 = vpack.c.b16 %v3396, %v3384
    %v3841 = vpack.c.b16 %v3397, %v3385
    %v3842 = vpack.c.b16 %v3398, %v3386
    %v3843 = vpack.c.b16 %v3399, %v3387
    %v3844 = vpack.c.b16 %v3400, %v3388
    %v3845 = vpack.c.b16 %v3401, %v3389
    %v3846 = vpack.c.b16 %v3402, %v3390
    %v3847 = vpack.c.b16 %v3403, %v3391
    %v3848 = vpack.c.b16 %v3404, %v3392
    %v3849 = vpack.c.b16 %v3405, %v3393
    %v3850 = vpack.c.b16 %v3406, %v3394
    %v3851 = vpack.c.b16 %v3419, %v3407
    %v3852 = vpack.c.b16 %v3420, %v3408
    %v3853 = vpack.c.b16 %v3421, %v3409
    %v3854 = vpack.c.b16 %v3422, %v3410
    %v3855 = vpack.c.b16 %v3423, %v3411
    %v3856 = vpack.c.b16 %v3424, %v3412
    %v3857 = vpack.c.b16 %v3425, %v3413
    %v3858 = vpack.c.b16 %v3426, %v3414
    %v3859 = vpack.c.b16 %v3427, %v3415
    %v3860 = vpack.c.b16 %v3428, %v3416
    %v3861 = vpack.c.b16 %v3429, %v3417
    %v3862 = vpack.c.b16 %v3430, %v3418
    %v3863 = vpack.c.b16 %v3443, %v3431
    %v3864 = vpack.c.b16 %v3444, %v3432
    %v3865 = vpack.c.b16 %v3445, %v3433
    %v3866 = vpack.c.b16 %v3446, %v3434
    %v3867 = vpack.c.b16 %v3447, %v3435
    %v3868 = vpack.c.b16 %v3448, %v3436
    %v3869 = vpack.c.b16 %v3449, %v3437
    %v3870 = vpack.c.b16 %v3450, %v3438
    %v3871 = vpack.c.b16 %v3451, %v3439
    %v3872 = vpack.c.b16 %v3452, %v3440
    %v3873 = vpack.c.b16 %v3453, %v3441
    %v3874 = vpack.c.b16 %v3454, %v3442
    %v3875 = vpack.c.b16 %v3467, %v3455
    %v3876 = vpack.c.b16 %v3468, %v3456
    %v3877 = vpack.c.b16 %v3469, %v3457
    %v3878 = vpack.c.b16 %v3470, %v3458
    %v3879 = vpack.c.b16 %v3471, %v3459
    %v3880 = vpack.c.b16 %v3472, %v3460
    %v3881 = vpack.c.b16 %v3473, %v3461
    %v3882 = vpack.c.b16 %v3474, %v3462
    %v3883 = vpack.c.b16 %v3475, %v3463
    %v3884 = vpack.c.b16 %v3476, %v3464
    %v3885 = vpack.c.b16 %v3477, %v3465
    %v3886 = vpack.c.b16 %v3478, %v3466
    %v3887 = vpack.c.b16 %v3491, %v3479
    %v3888 = vpack.c.b16 %v3492, %v3480
    %v3889 = vpack.c.b16 %v3493, %v3481
    %v3890 = vpack.c.b16 %v3494, %v3482
    %v3891 = vpack.c.b16 %v3495, %v3483
    %v3892 = vpack.c.b16 %v3496, %v3484
    %v3893 = vpack.c.b16 %v3497, %v3485
    %v3894 = vpack.c.b16 %v3498, %v3486
    %v3895 = vpack.c.b16 %v3499, %v3487
    %v3896 = vpack.c.b16 %v3500, %v3488
    %v3897 = vpack.c.b16 %v3501, %v3489
    %v3898 = vpack.c.b16 %v3502, %v3490
    %v3899 = vpack.c.b16 %v3515, %v3503
    %v3900 = vpack.c.b16 %v3516, %v3504
    %v3901 = vpack.c.b16 %v3517, %v3505
    %v3902 = vpack.c.b16 %v3518, %v3506
    %v3903 = vpack.c.b16 %v3519, %v3507
    %v3904 = vpack.c.b16 %v3520, %v3508
    %v3905 = vpack.c.b16 %v3521, %v3509
    %v3906 = vpack.c.b16 %v3522, %v3510
    %v3907 = vpack.c.b16 %v3523, %v3511
    %v3908 = vpack.c.b16 %v3524, %v3512
    %v3909 = vpack.c.b16 %v3525, %v3513
    %v3910 = vpack.c.b16 %v3526, %v3514
    %v3911 = vpack.c.b16 %v3539, %v3527
    %v3912 = vpack.c.b16 %v3540, %v3528
    %v3913 = vpack.c.b16 %v3541, %v3529
    %v3914 = vpack.c.b16 %v3542, %v3530
    %v3915 = vpack.c.b16 %v3543, %v3531
    %v3916 = vpack.c.b16 %v3544, %v3532
    %v3917 = vpack.c.b16 %v3545, %v3533
    %v3918 = vpack.c.b16 %v3546, %v3534
    %v3919 = vpack.c.b16 %v3547, %v3535
    %v3920 = vpack.c.b16 %v3548, %v3536
    %v3921 = vpack.c.b16 %v3549, %v3537
    %v3922 = vpack.c.b16 %v3550, %v3538
    %v3923 = vpack.c.b16 %v3563, %v3551
    %v3924 = vpack.c.b16 %v3564, %v3552
    %v3925 = vpack.c.b16 %v3565, %v3553
    %v3926 = vpack.c.b16 %v3566, %v3554
    %v3927 = vpack.c.b16 %v3567, %v3555
    %v3928 = vpack.c.b16 %v3568, %v3556
    %v3929 = vpack.c.b16 %v3569, %v3557
    %v3930 = vpack.c.b16 %v3570, %v3558
    %v3931 = vpack.c.b16 %v3571, %v3559
    %v3932 = vpack.c.b16 %v3572, %v3560
    %v3933 = vpack.c.b16 %v3573, %v3561
    %v3934 = vpack.c.b16 %v3574, %v3562
    %v3935 = vpack.c.b16 %v3587, %v3575
    %v3936 = vpack.c.b16 %v3588, %v3576
    %v3937 = vpack.c.b16 %v3589, %v3577
    %v3938 = vpack.c.b16 %v3590, %v3578
    %v3939 = vpack.c.b16 %v3591, %v3579
    %v3940 = vpack.c.b16 %v3592, %v3580
    %v3941 = vpack.c.b16 %v3593, %v3581
    %v3942 = vpack.c.b16 %v3594, %v3582
    %v3943 = vpack.c.b16 %v3595, %v3583
    %v3944 = vpack.c.b16 %v3596, %v3584
    %v3945 = vpack.c.b16 %v3597, %v3585
    %v3946 = vpack.c.b16 %v3598, %v3586
    %v3947 = vpack.c.b16 %v3611, %v3599
    %v3948 = vpack.c.b16 %v3612, %v3600
    %v3949 = vpack.c.b16 %v3613, %v3601
    %v3950 = vpack.c.b16 %v3614, %v3602
    %v3951 = vpack.c.b16 %v3615, %v3603
    %v3952 = vpack.c.b16 %v3616, %v3604
    %v3953 = vpack.c.b16 %v3617, %v3605
    %v3954 = vpack.c.b16 %v3618, %v3606
    %v3955 = vpack.c.b16 %v3619, %v3607
    %v3956 = vpack.c.b16 %v3620, %v3608
    %v3957 = vpack.c.b16 %v3621, %v3609
    %v3958 = vpack.c.b16 %v3622, %v3610
    %v3959 = vpack.c.b16 %v3635, %v3623
    %v3960 = vpack.c.b16 %v3636, %v3624
    %v3961 = vpack.c.b16 %v3637, %v3625
    %v3962 = vpack.c.b16 %v3638, %v3626
    %v3963 = vpack.c.b16 %v3639, %v3627
    %v3964 = vpack.c.b16 %v3640, %v3628
    %v3965 = vpack.c.b16 %v3641, %v3629
    %v3966 = vpack.c.b16 %v3642, %v3630
    %v3967 = vpack.c.b16 %v3643, %v3631
    %v3968 = vpack.c.b16 %v3644, %v3632
    %v3969 = vpack.c.b16 %v3645, %v3633
    %v3970 = vpack.c.b16 %v3646, %v3634
    %v3971 = vpack.c.b16 %v3659, %v3647
    %v3972 = vpack.c.b16 %v3660, %v3648
    %v3973 = vpack.c.b16 %v3661, %v3649
    %v3974 = vpack.c.b16 %v3662, %v3650
    %v3975 = vpack.c.b16 %v3663, %v3651
    %v3976 = vpack.c.b16 %v3664, %v3652
    %v3977 = vpack.c.b16 %v3665, %v3653
    %v3978 = vpack.c.b16 %v3666, %v3654
    %v3979 = vpack.c.b16 %v3667, %v3655
    %v3980 = vpack.c.b16 %v3668, %v3656
    %v3981 = vpack.c.b16 %v3669, %v3657
    %v3982 = vpack.c.b16 %v3670, %v3658
    %v3983 = vpack.c.b16 %v3683, %v3671
    %v3984 = vpack.c.b16 %v3684, %v3672
    %v3985 = vpack.c.b16 %v3685, %v3673
    %v3986 = vpack.c.b16 %v3686, %v3674
    %v3987 = vpack.c.b16 %v3687, %v3675
    %v3988 = vpack.c.b16 %v3688, %v3676
    %v3989 = vpack.c.b16 %v3689, %v3677
    %v3990 = vpack.c.b16 %v3690, %v3678
    %v3991 = vpack.c.b16 %v3691, %v3679
    %v3992 = vpack.c.b16 %v3692, %v3680
    %v3993 = vpack.c.b16 %v3693, %v3681
    %v3994 = vpack.c.b16 %v3694, %v3682
    %v3995 = vpack.c.b16 %v3707, %v3695
    %v3996 = vpack.c.b16 %v3708, %v3696
    %v3997 = vpack.c.b16 %v3709, %v3697
    %v3998 = vpack.c.b16 %v3710, %v3698
    %v3999 = vpack.c.b16 %v3711, %v3699
    %v4000 = vpack.c.b16 %v3712, %v3700
    %v4001 = vpack.c.b16 %v3713, %v3701
    %v4002 = vpack.c.b16 %v3714, %v3702
    %v4003 = vpack.c.b16 %v3715, %v3703
    %v4004 = vpack.c.b16 %v3716, %v3704
    %v4005 = vpack.c.b16 %v3717, %v3705
    %v4006 = vpack.c.b16 %v3718, %v3706
    %4295 = vmatprep.subr.bf16.mxu0 %v3804
    %4296 = vmatpush1.bf16.msra.mxu0 %v3803
    %4297 = vmatprep.subr.bf16.mxu0 %v3792
    %4298 = vmatpush1.bf16.msra.mxu0 %v3791
    %4299 = vmatprep.subr.bf16.mxu0 %v3780
    %4300 = vmatpush1.bf16.msra.mxu0 %v3779
    %4301 = vmatprep.subr.bf16.mxu0 %v3768
    %4302 = vmatpush1.bf16.msra.mxu0 %v3767
    %4303 = vmatprep.subr.bf16.mxu0 %v3756
    %4304 = vmatpush1.bf16.msra.mxu0 %v3755
    %4305 = vmatprep.subr.bf16.mxu0 %v3744
    %4306 = vmatpush1.bf16.msra.mxu0 %v3743
    %4307 = vmatprep.subr.bf16.mxu0 %v3732
    %4308 = vmatpush1.bf16.msra.mxu0 %v3731
    %4309 = vmatprep.subr.bf16.mxu0 %v3720
    %4310 = vmatpush1.bf16.msra.mxu0 %v3719
    %4311 = vmatprep.subr.bf16.mxu0 %v3900
    %4312 = vmatpush2.bf16.msra.mxu0 %v3899
    %4313 = vmatprep.subr.bf16.mxu0 %v3888
    %4314 = vmatpush2.bf16.msra.mxu0 %v3887
    %4315 = vmatprep.subr.bf16.mxu0 %v3876
    %4316 = vmatpush2.bf16.msra.mxu0 %v3875
    %4317 = vmatprep.subr.bf16.mxu0 %v3864
    %4318 = vmatpush2.bf16.msra.mxu0 %v3863
    %4319 = vmatprep.subr.bf16.mxu0 %v3852
    %4320 = vmatpush2.bf16.msra.mxu0 %v3851
    %4321 = vmatprep.subr.bf16.mxu0 %v3840
    %4322 = vmatpush2.bf16.msra.mxu0 %v3839
    %4323 = vmatprep.subr.bf16.mxu0 %v3828
    %4324 = vmatpush2.bf16.msra.mxu0 %v3827
    %4325 = vmatprep.subr.bf16.mxu0 %v3816
    %4326 = vmatpush2.bf16.msra.mxu0 %v3815
    %4327 = vmatprep.mubr.bf16.mxu0 %v2853
    %4328 = vmatmul.mubr.bf16.gmra.mxu0 %v2852
    %v4329 = vpop.f32.mrf.mxu0
    %v4330 = vadd.f32 0.0, %v4329
    %v4331 = vpop.f32.mrf.mxu0
    %v4332 = vadd.f32 0.0, %v4331
    %v4333 = vpop.f32.mrf.mxu0
    %v4334 = vpop.f32.mrf.mxu0
    %4335 = vdwg.mxu0
    %4336 = vmatprep.subr.bf16.mxu0 %v3996
    %4337 = vmatpush1.bf16.msra.mxu0 %v3995
    %4338 = vmatprep.subr.bf16.mxu0 %v3984
    %4339 = vmatpush1.bf16.msra.mxu0 %v3983
    %4340 = vmatprep.subr.bf16.mxu0 %v3972
    %4341 = vmatpush1.bf16.msra.mxu0 %v3971
    %4342 = vmatprep.subr.bf16.mxu0 %v3960
    %4343 = vmatpush1.bf16.msra.mxu0 %v3959
    %4344 = vmatprep.subr.bf16.mxu0 %v3948
    %4345 = vmatpush1.bf16.msra.mxu0 %v3947
    %4346 = vmatprep.subr.bf16.mxu0 %v3936
    %4347 = vmatpush1.bf16.msra.mxu0 %v3935
    %4348 = vmatprep.subr.bf16.mxu0 %v3924
    %4349 = vmatpush1.bf16.msra.mxu0 %v3923
    %4350 = vmatprep.subr.bf16.mxu0 %v3912
    %4351 = vmatpush1.bf16.msra.mxu0 %v3911
    %4352 = vmatprep.subr.bf16.mxu0 0
    %4353 = vmatpush2.bf16.msra.mxu0 0
    %4354 = vmatprep.subr.bf16.mxu0 0
    %4355 = vmatpush2.bf16.msra.mxu0 0
    %4356 = vmatprep.subr.bf16.mxu0 0
    %4357 = vmatpush2.bf16.msra.mxu0 0
    %4358 = vmatprep.subr.bf16.mxu0 0
    %4359 = vmatpush2.bf16.msra.mxu0 0
    %4360 = vmatprep.subr.bf16.mxu0 0
    %4361 = vmatpush2.bf16.msra.mxu0 0
    %4362 = vmatprep.subr.bf16.mxu0 0
    %4363 = vmatpush2.bf16.msra.mxu0 0
    %4364 = vmatprep.subr.bf16.mxu0 0
    %4365 = vmatpush2.bf16.msra.mxu0 0
    %4366 = vmatprep.subr.bf16.mxu0 0
    %4367 = vmatpush2.bf16.msra.mxu0 0
    %4368 = vmatprep.mubr.bf16.mxu0 0
    %4369 = vmatmul.mubr.bf16.gmra.mxu0 %v2854
    %v4370 = vpop.f32.mrf.mxu0
    %v4371 = vadd.f32 %v4330, %v4370
    %v4372 = vpop.f32.mrf.mxu0
    %v4373 = vadd.f32 %v4332, %v4372
    %v4374 = vpop.f32.mrf.mxu0
    %v4375 = vpop.f32.mrf.mxu0
    %4376 = vdwg.mxu0
    %4377 = vmatprep.subr.bf16.mxu0 %v3806
    %4378 = vmatpush1.bf16.msra.mxu0 %v3805
    %4379 = vmatprep.subr.bf16.mxu0 %v3794
    %4380 = vmatpush1.bf16.msra.mxu0 %v3793
    %4381 = vmatprep.subr.bf16.mxu0 %v3782
    %4382 = vmatpush1.bf16.msra.mxu0 %v3781
    %4383 = vmatprep.subr.bf16.mxu0 %v3770
    %4384 = vmatpush1.bf16.msra.mxu0 %v3769
    %4385 = vmatprep.subr.bf16.mxu0 %v3758
    %4386 = vmatpush1.bf16.msra.mxu0 %v3757
    %4387 = vmatprep.subr.bf16.mxu0 %v3746
    %4388 = vmatpush1.bf16.msra.mxu0 %v3745
    %4389 = vmatprep.subr.bf16.mxu0 %v3734
    %4390 = vmatpush1.bf16.msra.mxu0 %v3733
    %4391 = vmatprep.subr.bf16.mxu0 %v3722
    %4392 = vmatpush1.bf16.msra.mxu0 %v3721
    %4393 = vmatprep.subr.bf16.mxu0 %v3902
    %4394 = vmatpush2.bf16.msra.mxu0 %v3901
    %4395 = vmatprep.subr.bf16.mxu0 %v3890
    %4396 = vmatpush2.bf16.msra.mxu0 %v3889
    %4397 = vmatprep.subr.bf16.mxu0 %v3878
    %4398 = vmatpush2.bf16.msra.mxu0 %v3877
    %4399 = vmatprep.subr.bf16.mxu0 %v3866
    %4400 = vmatpush2.bf16.msra.mxu0 %v3865
    %4401 = vmatprep.subr.bf16.mxu0 %v3854
    %4402 = vmatpush2.bf16.msra.mxu0 %v3853
    %4403 = vmatprep.subr.bf16.mxu0 %v3842
    %4404 = vmatpush2.bf16.msra.mxu0 %v3841
    %4405 = vmatprep.subr.bf16.mxu0 %v3830
    %4406 = vmatpush2.bf16.msra.mxu0 %v3829
    %4407 = vmatprep.subr.bf16.mxu0 %v3818
    %4408 = vmatpush2.bf16.msra.mxu0 %v3817
    %4409 = vmatprep.mubr.bf16.mxu0 %v2853
    %4410 = vmatmul.mubr.bf16.gmra.mxu0 %v2852
    %v4411 = vpop.f32.mrf.mxu0
    %v4412 = vadd.f32 0.0, %v4411
    %v4413 = vpop.f32.mrf.mxu0
    %v4414 = vadd.f32 0.0, %v4413
    %v4415 = vpop.f32.mrf.mxu0
    %v4416 = vpop.f32.mrf.mxu0
    %4417 = vdwg.mxu0
    %4418 = vmatprep.subr.bf16.mxu0 %v3998
    %4419 = vmatpush1.bf16.msra.mxu0 %v3997
    %4420 = vmatprep.subr.bf16.mxu0 %v3986
    %4421 = vmatpush1.bf16.msra.mxu0 %v3985
    %4422 = vmatprep.subr.bf16.mxu0 %v3974
    %4423 = vmatpush1.bf16.msra.mxu0 %v3973
    %4424 = vmatprep.subr.bf16.mxu0 %v3962
    %4425 = vmatpush1.bf16.msra.mxu0 %v3961
    %4426 = vmatprep.subr.bf16.mxu0 %v3950
    %4427 = vmatpush1.bf16.msra.mxu0 %v3949
    %4428 = vmatprep.subr.bf16.mxu0 %v3938
    %4429 = vmatpush1.bf16.msra.mxu0 %v3937
    %4430 = vmatprep.subr.bf16.mxu0 %v3926
    %4431 = vmatpush1.bf16.msra.mxu0 %v3925
    %4432 = vmatprep.subr.bf16.mxu0 %v3914
    %4433 = vmatpush1.bf16.msra.mxu0 %v3913
    %4434 = vmatprep.subr.bf16.mxu0 0
    %4435 = vmatpush2.bf16.msra.mxu0 0
    %4436 = vmatprep.subr.bf16.mxu0 0
    %4437 = vmatpush2.bf16.msra.mxu0 0
    %4438 = vmatprep.subr.bf16.mxu0 0
    %4439 = vmatpush2.bf16.msra.mxu0 0
    %4440 = vmatprep.subr.bf16.mxu0 0
    %4441 = vmatpush2.bf16.msra.mxu0 0
    %4442 = vmatprep.subr.bf16.mxu0 0
    %4443 = vmatpush2.bf16.msra.mxu0 0
    %4444 = vmatprep.subr.bf16.mxu0 0
    %4445 = vmatpush2.bf16.msra.mxu0 0
    %4446 = vmatprep.subr.bf16.mxu0 0
    %4447 = vmatpush2.bf16.msra.mxu0 0
    %4448 = vmatprep.subr.bf16.mxu0 0
    %4449 = vmatpush2.bf16.msra.mxu0 0
    %4450 = vmatprep.mubr.bf16.mxu0 0
    %4451 = vmatmul.mubr.bf16.gmra.mxu0 %v2854
    %v4452 = vpop.f32.mrf.mxu0
    %v4453 = vadd.f32 %v4412, %v4452
    %v4454 = vpop.f32.mrf.mxu0
    %v4455 = vadd.f32 %v4414, %v4454
    %v4456 = vpop.f32.mrf.mxu0
    %v4457 = vpop.f32.mrf.mxu0
    %4458 = vdwg.mxu0
    %4459 = vmatprep.subr.bf16.mxu0 %v3808
    %4460 = vmatpush1.bf16.msra.mxu0 %v3807
    %4461 = vmatprep.subr.bf16.mxu0 %v3796
    %4462 = vmatpush1.bf16.msra.mxu0 %v3795
    %4463 = vmatprep.subr.bf16.mxu0 %v3784
    %4464 = vmatpush1.bf16.msra.mxu0 %v3783
    %4465 = vmatprep.subr.bf16.mxu0 %v3772
    %4466 = vmatpush1.bf16.msra.mxu0 %v3771
    %4467 = vmatprep.subr.bf16.mxu0 %v3760
    %4468 = vmatpush1.bf16.msra.mxu0 %v3759
    %4469 = vmatprep.subr.bf16.mxu0 %v3748
    %4470 = vmatpush1.bf16.msra.mxu0 %v3747
    %4471 = vmatprep.subr.bf16.mxu0 %v3736
    %4472 = vmatpush1.bf16.msra.mxu0 %v3735
    %4473 = vmatprep.subr.bf16.mxu0 %v3724
    %4474 = vmatpush1.bf16.msra.mxu0 %v3723
    %4475 = vmatprep.subr.bf16.mxu0 %v3904
    %4476 = vmatpush2.bf16.msra.mxu0 %v3903
    %4477 = vmatprep.subr.bf16.mxu0 %v3892
    %4478 = vmatpush2.bf16.msra.mxu0 %v3891
    %4479 = vmatprep.subr.bf16.mxu0 %v3880
    %4480 = vmatpush2.bf16.msra.mxu0 %v3879
    %4481 = vmatprep.subr.bf16.mxu0 %v3868
    %4482 = vmatpush2.bf16.msra.mxu0 %v3867
    %4483 = vmatprep.subr.bf16.mxu0 %v3856
    %4484 = vmatpush2.bf16.msra.mxu0 %v3855
    %4485 = vmatprep.subr.bf16.mxu0 %v3844
    %4486 = vmatpush2.bf16.msra.mxu0 %v3843
    %4487 = vmatprep.subr.bf16.mxu0 %v3832
    %4488 = vmatpush2.bf16.msra.mxu0 %v3831
    %4489 = vmatprep.subr.bf16.mxu0 %v3820
    %4490 = vmatpush2.bf16.msra.mxu0 %v3819
    %4491 = vmatprep.mubr.bf16.mxu0 %v2853
    %4492 = vmatmul.mubr.bf16.gmra.mxu0 %v2852
    %v4493 = vpop.f32.mrf.mxu0
    %v4494 = vadd.f32 0.0, %v4493
    %v4495 = vpop.f32.mrf.mxu0
    %v4496 = vadd.f32 0.0, %v4495
    %v4497 = vpop.f32.mrf.mxu0
    %v4498 = vpop.f32.mrf.mxu0
    %4499 = vdwg.mxu0
    %4500 = vmatprep.subr.bf16.mxu0 %v4000
    %4501 = vmatpush1.bf16.msra.mxu0 %v3999
    %4502 = vmatprep.subr.bf16.mxu0 %v3988
    %4503 = vmatpush1.bf16.msra.mxu0 %v3987
    %4504 = vmatprep.subr.bf16.mxu0 %v3976
    %4505 = vmatpush1.bf16.msra.mxu0 %v3975
    %4506 = vmatprep.subr.bf16.mxu0 %v3964
    %4507 = vmatpush1.bf16.msra.mxu0 %v3963
    %4508 = vmatprep.subr.bf16.mxu0 %v3952
    %4509 = vmatpush1.bf16.msra.mxu0 %v3951
    %4510 = vmatprep.subr.bf16.mxu0 %v3940
    %4511 = vmatpush1.bf16.msra.mxu0 %v3939
    %4512 = vmatprep.subr.bf16.mxu0 %v3928
    %4513 = vmatpush1.bf16.msra.mxu0 %v3927
    %4514 = vmatprep.subr.bf16.mxu0 %v3916
    %4515 = vmatpush1.bf16.msra.mxu0 %v3915
    %4516 = vmatprep.subr.bf16.mxu0 0
    %4517 = vmatpush2.bf16.msra.mxu0 0
    %4518 = vmatprep.subr.bf16.mxu0 0
    %4519 = vmatpush2.bf16.msra.mxu0 0
    %4520 = vmatprep.subr.bf16.mxu0 0
    %4521 = vmatpush2.bf16.msra.mxu0 0
    %4522 = vmatprep.subr.bf16.mxu0 0
    %4523 = vmatpush2.bf16.msra.mxu0 0
    %4524 = vmatprep.subr.bf16.mxu0 0
    %4525 = vmatpush2.bf16.msra.mxu0 0
    %4526 = vmatprep.subr.bf16.mxu0 0
    %4527 = vmatpush2.bf16.msra.mxu0 0
    %4528 = vmatprep.subr.bf16.mxu0 0
    %4529 = vmatpush2.bf16.msra.mxu0 0
    %4530 = vmatprep.subr.bf16.mxu0 0
    %4531 = vmatpush2.bf16.msra.mxu0 0
    %4532 = vmatprep.mubr.bf16.mxu0 0
    %4533 = vmatmul.mubr.bf16.gmra.mxu0 %v2854
    %v4534 = vpop.f32.mrf.mxu0
    %v4535 = vadd.f32 %v4494, %v4534
    %v4536 = vpop.f32.mrf.mxu0
    %v4537 = vadd.f32 %v4496, %v4536
    %v4538 = vpop.f32.mrf.mxu0
    %v4539 = vpop.f32.mrf.mxu0
    %4540 = vdwg.mxu0
    %4541 = vmatprep.subr.bf16.mxu0 %v3810
    %4542 = vmatpush1.bf16.msra.mxu0 %v3809
    %4543 = vmatprep.subr.bf16.mxu0 %v3798
    %4544 = vmatpush1.bf16.msra.mxu0 %v3797
    %4545 = vmatprep.subr.bf16.mxu0 %v3786
    %4546 = vmatpush1.bf16.msra.mxu0 %v3785
    %4547 = vmatprep.subr.bf16.mxu0 %v3774
    %4548 = vmatpush1.bf16.msra.mxu0 %v3773
    %4549 = vmatprep.subr.bf16.mxu0 %v3762
    %4550 = vmatpush1.bf16.msra.mxu0 %v3761
    %4551 = vmatprep.subr.bf16.mxu0 %v3750
    %4552 = vmatpush1.bf16.msra.mxu0 %v3749
    %4553 = vmatprep.subr.bf16.mxu0 %v3738
    %4554 = vmatpush1.bf16.msra.mxu0 %v3737
    %4555 = vmatprep.subr.bf16.mxu0 %v3726
    %4556 = vmatpush1.bf16.msra.mxu0 %v3725
    %4557 = vmatprep.subr.bf16.mxu0 %v3906
    %4558 = vmatpush2.bf16.msra.mxu0 %v3905
    %4559 = vmatprep.subr.bf16.mxu0 %v3894
    %4560 = vmatpush2.bf16.msra.mxu0 %v3893
    %4561 = vmatprep.subr.bf16.mxu0 %v3882
    %4562 = vmatpush2.bf16.msra.mxu0 %v3881
    %4563 = vmatprep.subr.bf16.mxu0 %v3870
    %4564 = vmatpush2.bf16.msra.mxu0 %v3869
    %4565 = vmatprep.subr.bf16.mxu0 %v3858
    %4566 = vmatpush2.bf16.msra.mxu0 %v3857
    %4567 = vmatprep.subr.bf16.mxu0 %v3846
    %4568 = vmatpush2.bf16.msra.mxu0 %v3845
    %4569 = vmatprep.subr.bf16.mxu0 %v3834
    %4570 = vmatpush2.bf16.msra.mxu0 %v3833
    %4571 = vmatprep.subr.bf16.mxu0 %v3822
    %4572 = vmatpush2.bf16.msra.mxu0 %v3821
    %4573 = vmatprep.mubr.bf16.mxu0 %v2853
    %4574 = vmatmul.mubr.bf16.gmra.mxu0 %v2852
    %v4575 = vpop.f32.mrf.mxu0
    %v4576 = vadd.f32 0.0, %v4575
    %v4577 = vpop.f32.mrf.mxu0
    %v4578 = vadd.f32 0.0, %v4577
    %v4579 = vpop.f32.mrf.mxu0
    %v4580 = vpop.f32.mrf.mxu0
    %4581 = vdwg.mxu0
    %4582 = vmatprep.subr.bf16.mxu0 %v4002
    %4583 = vmatpush1.bf16.msra.mxu0 %v4001
    %4584 = vmatprep.subr.bf16.mxu0 %v3990
    %4585 = vmatpush1.bf16.msra.mxu0 %v3989
    %4586 = vmatprep.subr.bf16.mxu0 %v3978
    %4587 = vmatpush1.bf16.msra.mxu0 %v3977
    %4588 = vmatprep.subr.bf16.mxu0 %v3966
    %4589 = vmatpush1.bf16.msra.mxu0 %v3965
    %4590 = vmatprep.subr.bf16.mxu0 %v3954
    %4591 = vmatpush1.bf16.msra.mxu0 %v3953
    %4592 = vmatprep.subr.bf16.mxu0 %v3942
    %4593 = vmatpush1.bf16.msra.mxu0 %v3941
    %4594 = vmatprep.subr.bf16.mxu0 %v3930
    %4595 = vmatpush1.bf16.msra.mxu0 %v3929
    %4596 = vmatprep.subr.bf16.mxu0 %v3918
    %4597 = vmatpush1.bf16.msra.mxu0 %v3917
    %4598 = vmatprep.subr.bf16.mxu0 0
    %4599 = vmatpush2.bf16.msra.mxu0 0
    %4600 = vmatprep.subr.bf16.mxu0 0
    %4601 = vmatpush2.bf16.msra.mxu0 0
    %4602 = vmatprep.subr.bf16.mxu0 0
    %4603 = vmatpush2.bf16.msra.mxu0 0
    %4604 = vmatprep.subr.bf16.mxu0 0
    %4605 = vmatpush2.bf16.msra.mxu0 0
    %4606 = vmatprep.subr.bf16.mxu0 0
    %4607 = vmatpush2.bf16.msra.mxu0 0
    %4608 = vmatprep.subr.bf16.mxu0 0
    %4609 = vmatpush2.bf16.msra.mxu0 0
    %4610 = vmatprep.subr.bf16.mxu0 0
    %4611 = vmatpush2.bf16.msra.mxu0 0
    %4612 = vmatprep.subr.bf16.mxu0 0
    %4613 = vmatpush2.bf16.msra.mxu0 0
    %4614 = vmatprep.mubr.bf16.mxu0 0
    %4615 = vmatmul.mubr.bf16.gmra.mxu0 %v2854
    %v4616 = vpop.f32.mrf.mxu0
    %v4617 = vadd.f32 %v4576, %v4616
    %v4618 = vpop.f32.mrf.mxu0
    %v4619 = vadd.f32 %v4578, %v4618
    %v4620 = vpop.f32.mrf.mxu0
    %v4621 = vpop.f32.mrf.mxu0
    %4622 = vdwg.mxu0
    %4623 = vmatprep.subr.bf16.mxu0 %v3812
    %4624 = vmatpush1.bf16.msra.mxu0 %v3811
    %4625 = vmatprep.subr.bf16.mxu0 %v3800
    %4626 = vmatpush1.bf16.msra.mxu0 %v3799
    %4627 = vmatprep.subr.bf16.mxu0 %v3788
    %4628 = vmatpush1.bf16.msra.mxu0 %v3787
    %4629 = vmatprep.subr.bf16.mxu0 %v3776
    %4630 = vmatpush1.bf16.msra.mxu0 %v3775
    %4631 = vmatprep.subr.bf16.mxu0 %v3764
    %4632 = vmatpush1.bf16.msra.mxu0 %v3763
    %4633 = vmatprep.subr.bf16.mxu0 %v3752
    %4634 = vmatpush1.bf16.msra.mxu0 %v3751
    %4635 = vmatprep.subr.bf16.mxu0 %v3740
    %4636 = vmatpush1.bf16.msra.mxu0 %v3739
    %4637 = vmatprep.subr.bf16.mxu0 %v3728
    %4638 = vmatpush1.bf16.msra.mxu0 %v3727
    %4639 = vmatprep.subr.bf16.mxu0 %v3908
    %4640 = vmatpush2.bf16.msra.mxu0 %v3907
    %4641 = vmatprep.subr.bf16.mxu0 %v3896
    %4642 = vmatpush2.bf16.msra.mxu0 %v3895
    %4643 = vmatprep.subr.bf16.mxu0 %v3884
    %4644 = vmatpush2.bf16.msra.mxu0 %v3883
    %4645 = vmatprep.subr.bf16.mxu0 %v3872
    %4646 = vmatpush2.bf16.msra.mxu0 %v3871
    %4647 = vmatprep.subr.bf16.mxu0 %v3860
    %4648 = vmatpush2.bf16.msra.mxu0 %v3859
    %4649 = vmatprep.subr.bf16.mxu0 %v3848
    %4650 = vmatpush2.bf16.msra.mxu0 %v3847
    %4651 = vmatprep.subr.bf16.mxu0 %v3836
    %4652 = vmatpush2.bf16.msra.mxu0 %v3835
    %4653 = vmatprep.subr.bf16.mxu0 %v3824
    %4654 = vmatpush2.bf16.msra.mxu0 %v3823
    %4655 = vmatprep.mubr.bf16.mxu0 %v2853
    %4656 = vmatmul.mubr.bf16.gmra.mxu0 %v2852
    %v4657 = vpop.f32.mrf.mxu0
    %v4658 = vadd.f32 0.0, %v4657
    %v4659 = vpop.f32.mrf.mxu0
    %v4660 = vadd.f32 0.0, %v4659
    %v4661 = vpop.f32.mrf.mxu0
    %v4662 = vpop.f32.mrf.mxu0
    %4663 = vdwg.mxu0
    %4664 = vmatprep.subr.bf16.mxu0 %v4004
    %4665 = vmatpush1.bf16.msra.mxu0 %v4003
    %4666 = vmatprep.subr.bf16.mxu0 %v3992
    %4667 = vmatpush1.bf16.msra.mxu0 %v3991
    %4668 = vmatprep.subr.bf16.mxu0 %v3980
    %4669 = vmatpush1.bf16.msra.mxu0 %v3979
    %4670 = vmatprep.subr.bf16.mxu0 %v3968
    %4671 = vmatpush1.bf16.msra.mxu0 %v3967
    %4672 = vmatprep.subr.bf16.mxu0 %v3956
    %4673 = vmatpush1.bf16.msra.mxu0 %v3955
    %4674 = vmatprep.subr.bf16.mxu0 %v3944
    %4675 = vmatpush1.bf16.msra.mxu0 %v3943
    %4676 = vmatprep.subr.bf16.mxu0 %v3932
    %4677 = vmatpush1.bf16.msra.mxu0 %v3931
    %4678 = vmatprep.subr.bf16.mxu0 %v3920
    %4679 = vmatpush1.bf16.msra.mxu0 %v3919
    %4680 = vmatprep.subr.bf16.mxu0 0
    %4681 = vmatpush2.bf16.msra.mxu0 0
    %4682 = vmatprep.subr.bf16.mxu0 0
    %4683 = vmatpush2.bf16.msra.mxu0 0
    %4684 = vmatprep.subr.bf16.mxu0 0
    %4685 = vmatpush2.bf16.msra.mxu0 0
    %4686 = vmatprep.subr.bf16.mxu0 0
    %4687 = vmatpush2.bf16.msra.mxu0 0
    %4688 = vmatprep.subr.bf16.mxu0 0
    %4689 = vmatpush2.bf16.msra.mxu0 0
    %4690 = vmatprep.subr.bf16.mxu0 0
    %4691 = vmatpush2.bf16.msra.mxu0 0
    %4692 = vmatprep.subr.bf16.mxu0 0
    %4693 = vmatpush2.bf16.msra.mxu0 0
    %4694 = vmatprep.subr.bf16.mxu0 0
    %4695 = vmatpush2.bf16.msra.mxu0 0
    %4696 = vmatprep.mubr.bf16.mxu0 0
    %4697 = vmatmul.mubr.bf16.gmra.mxu0 %v2854
    %v4698 = vpop.f32.mrf.mxu0
    %v4699 = vadd.f32 %v4658, %v4698
    %v4700 = vpop.f32.mrf.mxu0
    %v4701 = vadd.f32 %v4660, %v4700
    %v4702 = vpop.f32.mrf.mxu0
    %v4703 = vpop.f32.mrf.mxu0
    %4704 = vdwg.mxu0
    %4705 = vmatprep.subr.bf16.mxu0 %v3814
    %4706 = vmatpush1.bf16.msra.mxu0 %v3813
    %4707 = vmatprep.subr.bf16.mxu0 %v3802
    %4708 = vmatpush1.bf16.msra.mxu0 %v3801
    %4709 = vmatprep.subr.bf16.mxu0 %v3790
    %4710 = vmatpush1.bf16.msra.mxu0 %v3789
    %4711 = vmatprep.subr.bf16.mxu0 %v3778
    %4712 = vmatpush1.bf16.msra.mxu0 %v3777
    %4713 = vmatprep.subr.bf16.mxu0 %v3766
    %4714 = vmatpush1.bf16.msra.mxu0 %v3765
    %4715 = vmatprep.subr.bf16.mxu0 %v3754
    %4716 = vmatpush1.bf16.msra.mxu0 %v3753
    %4717 = vmatprep.subr.bf16.mxu0 %v3742
    %4718 = vmatpush1.bf16.msra.mxu0 %v3741
    %4719 = vmatprep.subr.bf16.mxu0 %v3730
    %4720 = vmatpush1.bf16.msra.mxu0 %v3729
    %4721 = vmatprep.subr.bf16.mxu0 %v3910
    %4722 = vmatpush2.bf16.msra.mxu0 %v3909
    %4723 = vmatprep.subr.bf16.mxu0 %v3898
    %4724 = vmatpush2.bf16.msra.mxu0 %v3897
    %4725 = vmatprep.subr.bf16.mxu0 %v3886
    %4726 = vmatpush2.bf16.msra.mxu0 %v3885
    %4727 = vmatprep.subr.bf16.mxu0 %v3874
    %4728 = vmatpush2.bf16.msra.mxu0 %v3873
    %4729 = vmatprep.subr.bf16.mxu0 %v3862
    %4730 = vmatpush2.bf16.msra.mxu0 %v3861
    %4731 = vmatprep.subr.bf16.mxu0 %v3850
    %4732 = vmatpush2.bf16.msra.mxu0 %v3849
    %4733 = vmatprep.subr.bf16.mxu0 %v3838
    %4734 = vmatpush2.bf16.msra.mxu0 %v3837
    %4735 = vmatprep.subr.bf16.mxu0 %v3826
    %4736 = vmatpush2.bf16.msra.mxu0 %v3825
    %4737 = vmatprep.mubr.bf16.mxu0 %v2853
    %4738 = vmatmul.mubr.bf16.gmra.mxu0 %v2852
    %v4739 = vpop.f32.mrf.mxu0
    %v4740 = vadd.f32 0.0, %v4739
    %v4741 = vpop.f32.mrf.mxu0
    %v4742 = vadd.f32 0.0, %v4741
    %v4743 = vpop.f32.mrf.mxu0
    %v4744 = vpop.f32.mrf.mxu0
    %4745 = vdwg.mxu0
    %4746 = vmatprep.subr.bf16.mxu0 %v4006
    %4747 = vmatpush1.bf16.msra.mxu0 %v4005
    %4748 = vmatprep.subr.bf16.mxu0 %v3994
    %4749 = vmatpush1.bf16.msra.mxu0 %v3993
    %4750 = vmatprep.subr.bf16.mxu0 %v3982
    %4751 = vmatpush1.bf16.msra.mxu0 %v3981
    %4752 = vmatprep.subr.bf16.mxu0 %v3970
    %4753 = vmatpush1.bf16.msra.mxu0 %v3969
    %4754 = vmatprep.subr.bf16.mxu0 %v3958
    %4755 = vmatpush1.bf16.msra.mxu0 %v3957
    %4756 = vmatprep.subr.bf16.mxu0 %v3946
    %4757 = vmatpush1.bf16.msra.mxu0 %v3945
    %4758 = vmatprep.subr.bf16.mxu0 %v3934
    %4759 = vmatpush1.bf16.msra.mxu0 %v3933
    %4760 = vmatprep.subr.bf16.mxu0 %v3922
    %4761 = vmatpush1.bf16.msra.mxu0 %v3921
    %4762 = vmatprep.subr.bf16.mxu0 0
    %4763 = vmatpush2.bf16.msra.mxu0 0
    %4764 = vmatprep.subr.bf16.mxu0 0
    %4765 = vmatpush2.bf16.msra.mxu0 0
    %4766 = vmatprep.subr.bf16.mxu0 0
    %4767 = vmatpush2.bf16.msra.mxu0 0
    %4768 = vmatprep.subr.bf16.mxu0 0
    %4769 = vmatpush2.bf16.msra.mxu0 0
    %4770 = vmatprep.subr.bf16.mxu0 0
    %4771 = vmatpush2.bf16.msra.mxu0 0
    %4772 = vmatprep.subr.bf16.mxu0 0
    %4773 = vmatpush2.bf16.msra.mxu0 0
    %4774 = vmatprep.subr.bf16.mxu0 0
    %4775 = vmatpush2.bf16.msra.mxu0 0
    %4776 = vmatprep.subr.bf16.mxu0 0
    %4777 = vmatpush2.bf16.msra.mxu0 0
    %4778 = vmatprep.mubr.bf16.mxu0 0
    %4779 = vmatmul.mubr.bf16.gmra.mxu0 %v2854
    %v4780 = vpop.f32.mrf.mxu0
    %v4781 = vadd.f32 %v4740, %v4780
    %v4782 = vpop.f32.mrf.mxu0
    %v4783 = vadd.f32 %v4742, %v4782
    %v4784 = vpop.f32.mrf.mxu0
    %v4785 = vpop.f32.mrf.mxu0
    %4786 = vdwg.mxu0
    %v4799 = vrot.slane %v4371, 6
    %v4800 = vrot.slane %v4373, 6
    %v4801 = vrot.slane %v4453, 6
    %v4802 = vrot.slane %v4455, 6
    %v4803 = vrot.slane %v4535, 6
    %v4804 = vrot.slane %v4537, 6
    %v4805 = vrot.slane %v4617, 6
    %v4806 = vrot.slane %v4619, 6
    %v4807 = vrot.slane %v4699, 6
    %v4808 = vrot.slane %v4701, 6
    %v4809 = vrot.slane %v4781, 6
    %v4810 = vrot.slane %v4783, 6
    %v4823 = vadd.f32 %v2840, %v4799
    %v4824 = vadd.f32 %v2841, %v4800
    %v4825 = vadd.f32 %v2842, %v4801
    %v4826 = vadd.f32 %v2843, %v4802
    %v4827 = vadd.f32 %v2844, %v4803
    %v4828 = vadd.f32 %v2845, %v4804
    %v4829 = vadd.f32 %v2846, %v4805
    %v4830 = vadd.f32 %v2847, %v4806
    %v4831 = vadd.f32 %v2848, %v4807
    %v4832 = vadd.f32 %v2849, %v4808
    %v4833 = vadd.f32 %v2850, %v4809
    %v4834 = vadd.f32 %v2851, %v4810
    %v4835 = vxor.u32 %v4823, 2147483648
    %v4836 = vxor.u32 %v4824, 2147483648
    %v4837 = vxor.u32 %v4825, 2147483648
    %v4838 = vxor.u32 %v4826, 2147483648
    %v4839 = vxor.u32 %v4827, 2147483648
    %v4840 = vxor.u32 %v4828, 2147483648
    %v4841 = vxor.u32 %v4829, 2147483648
    %v4842 = vxor.u32 %v4830, 2147483648
    %v4843 = vxor.u32 %v4831, 2147483648
    %v4844 = vxor.u32 %v4832, 2147483648
    %v4845 = vxor.u32 %v4833, 2147483648
    %v4846 = vxor.u32 %v4834, 2147483648
    %v4847 = vmul.f32 %v4835, 1.442695
    %v4848 = vpow.pop %v4847
    %v4849 = vmul.f32 %v4836, 1.442695
    %v4850 = vpow.pop %v4849
    %v4851 = vmul.f32 %v4837, 1.442695
    %v4852 = vpow.pop %v4851
    %v4853 = vmul.f32 %v4838, 1.442695
    %v4854 = vpow.pop %v4853
    %v4855 = vmul.f32 %v4839, 1.442695
    %v4856 = vpow.pop %v4855
    %v4857 = vmul.f32 %v4840, 1.442695
    %v4858 = vpow.pop %v4857
    %v4859 = vmul.f32 %v4841, 1.442695
    %v4860 = vpow.pop %v4859
    %v4861 = vmul.f32 %v4842, 1.442695
    %v4862 = vpow.pop %v4861
    %v4863 = vmul.f32 %v4843, 1.442695
    %v4864 = vpow.pop %v4863
    %v4865 = vmul.f32 %v4844, 1.442695
    %v4866 = vpow.pop %v4865
    %v4867 = vmul.f32 %v4845, 1.442695
    %v4868 = vpow.pop %v4867
    %v4869 = vmul.f32 %v4846, 1.442695
    %v4870 = vpow.pop %v4869
    %v4871 = vadd.f32 %v4848, 1.0
    %v4872 = vadd.f32 %v4850, 1.0
    %v4873 = vadd.f32 %v4852, 1.0
    %v4874 = vadd.f32 %v4854, 1.0
    %v4875 = vadd.f32 %v4856, 1.0
    %v4876 = vadd.f32 %v4858, 1.0
    %v4877 = vadd.f32 %v4860, 1.0
    %v4878 = vadd.f32 %v4862, 1.0
    %v4879 = vadd.f32 %v4864, 1.0
    %v4880 = vadd.f32 %v4866, 1.0
    %v4881 = vadd.f32 %v4868, 1.0
    %v4882 = vadd.f32 %v4870, 1.0
    %v4883 = vrcp.pop %v4871
    %v4884 = vmul.f32 1.0, %v4883
    %v4885 = vrcp.pop %v4872
    %v4886 = vmul.f32 1.0, %v4885
    %v4887 = vrcp.pop %v4873
    %v4888 = vmul.f32 1.0, %v4887
    %v4889 = vrcp.pop %v4874
    %v4890 = vmul.f32 1.0, %v4889
    %v4891 = vrcp.pop %v4875
    %v4892 = vmul.f32 1.0, %v4891
    %v4893 = vrcp.pop %v4876
    %v4894 = vmul.f32 1.0, %v4893
    %v4895 = vrcp.pop %v4877
    %v4896 = vmul.f32 1.0, %v4895
    %v4897 = vrcp.pop %v4878
    %v4898 = vmul.f32 1.0, %v4897
    %v4899 = vrcp.pop %v4879
    %v4900 = vmul.f32 1.0, %v4899
    %v4901 = vrcp.pop %v4880
    %v4902 = vmul.f32 1.0, %v4901
    %v4903 = vrcp.pop %v4881
    %v4904 = vmul.f32 1.0, %v4903
    %v4905 = vrcp.pop %v4882
    %v4906 = vmul.f32 1.0, %v4905
    %v4907 = vmul.f32 %v4896, 2.0
    %v4908 = vmul.f32 %v4898, 2.0
    %v4909 = vmul.f32 %v4900, 2.0
    %v4910 = vsub.f32 %v4907, 1.0
    %v4911 = vsub.f32 %v4908, 1.0
    %v4912 = vsub.f32 %v4909, 1.0
    %v4916 = vrot.slane %v2536, 6
    %v4917 = vrot.slane %v2537, 6
    %v4918 = vrot.slane %v2538, 6
    %v4922 = vmul.f32 %v4890, %v4916
    %v4923 = vmul.f32 %v4892, %v4917
    %v4924 = vmul.f32 %v4894, %v4918
    %v4925 = vmul.f32 %v4884, %v4910
    %v4926 = vmul.f32 %v4886, %v4911
    %v4927 = vmul.f32 %v4888, %v4912
    %v4928 = vadd.f32 %v4922, %v4925
    %v4929 = vadd.f32 %v4923, %v4926
    %v4930 = vadd.f32 %v4924, %v4927
    %v4931 = vtanh.pop %v4928
    %v4932 = vtanh.pop %v4929
    %v4933 = vtanh.pop %v4930
    %v4934 = vmul.f32 %v4902, %v4931
    %v4935 = vmul.f32 %v4904, %v4932
    %v4936 = vmul.f32 %v4906, %v4933
    %4937 = vst [vmem:[#allocation14] sm:$0xc] %v4934
    %4938 = vst [vmem:[#allocation14 + $0x8] sm:$0xc] %v4935
    %4939 = vst [vmem:[#allocation14 + $0x10] sm:$0xc] %v4936
    %v4940 = vld [vmem:[#allocation2] sm:$0x30]
    %v4941 = vld [vmem:[#allocation2 + $0x8] sm:$0x30]
    %v4942 = vld [vmem:[#allocation2 + $0x10] sm:$0x30]
    %v4943 = vld [vmem:[#allocation2 + $0x18] sm:$0x30]
    %v4944 = vld [vmem:[#allocation2 + $0x20] sm:$0x30]
    %v4945 = vld [vmem:[#allocation2 + $0x28] sm:$0x30]
    %v4946 = vld [vmem:[#allocation2 + $0x30] sm:$0x30]
    %v4947 = vld [vmem:[#allocation2 + $0x38] sm:$0x30]
    %v4948 = vld [vmem:[#allocation2 + $0x40] sm:$0x30]
    %v4949 = vld [vmem:[#allocation2 + $0x48] sm:$0x30]
    %v4950 = vld [vmem:[#allocation2 + $0x50] sm:$0x30]
    %v4951 = vld [vmem:[#allocation2 + $0x58] sm:$0x30]
    %v4952 = vpack.c.bf16 %v4934, %v4934
    %v4953 = vpack.c.bf16 %v4935, %v4935
    %v4954 = vpack.c.bf16 %v4936, %v4936
    %v4958 = vrot.slane %v4952, 1
    %v4959 = vrot.slane %v4953, 1
    %v4960 = vrot.slane %v4954, 1
    %4964 = vmatprep.subr.bf16.mxu0 %v3804
    %4965 = vmatpush1.bf16.msra.mxu0 %v3803
    %4966 = vmatprep.subr.bf16.mxu0 %v3792
    %4967 = vmatpush1.bf16.msra.mxu0 %v3791
    %4968 = vmatprep.subr.bf16.mxu0 %v3780
    %4969 = vmatpush1.bf16.msra.mxu0 %v3779
    %4970 = vmatprep.subr.bf16.mxu0 %v3768
    %4971 = vmatpush1.bf16.msra.mxu0 %v3767
    %4972 = vmatprep.subr.bf16.mxu0 %v3756
    %4973 = vmatpush1.bf16.msra.mxu0 %v3755
    %4974 = vmatprep.subr.bf16.mxu0 %v3744
    %4975 = vmatpush1.bf16.msra.mxu0 %v3743
    %4976 = vmatprep.subr.bf16.mxu0 %v3732
    %4977 = vmatpush1.bf16.msra.mxu0 %v3731
    %4978 = vmatprep.subr.bf16.mxu0 %v3720
    %4979 = vmatpush1.bf16.msra.mxu0 %v3719
    %4980 = vmatprep.subr.bf16.mxu0 %v3900
    %4981 = vmatpush2.bf16.msra.mxu0 %v3899
    %4982 = vmatprep.subr.bf16.mxu0 %v3888
    %4983 = vmatpush2.bf16.msra.mxu0 %v3887
    %4984 = vmatprep.subr.bf16.mxu0 %v3876
    %4985 = vmatpush2.bf16.msra.mxu0 %v3875
    %4986 = vmatprep.subr.bf16.mxu0 %v3864
    %4987 = vmatpush2.bf16.msra.mxu0 %v3863
    %4988 = vmatprep.subr.bf16.mxu0 %v3852
    %4989 = vmatpush2.bf16.msra.mxu0 %v3851
    %4990 = vmatprep.subr.bf16.mxu0 %v3840
    %4991 = vmatpush2.bf16.msra.mxu0 %v3839
    %4992 = vmatprep.subr.bf16.mxu0 %v3828
    %4993 = vmatpush2.bf16.msra.mxu0 %v3827
    %4994 = vmatprep.subr.bf16.mxu0 %v3816
    %4995 = vmatpush2.bf16.msra.mxu0 %v3815
    %4996 = vmatprep.mubr.bf16.mxu0 %v4959
    %4997 = vmatmul.mubr.bf16.gmra.mxu0 %v4958
    %v4998 = vpop.f32.mrf.mxu0
    %v4999 = vadd.f32 0.0, %v4998
    %v5000 = vpop.f32.mrf.mxu0
    %v5001 = vadd.f32 0.0, %v5000
    %v5002 = vpop.f32.mrf.mxu0
    %v5003 = vpop.f32.mrf.mxu0
    %5004 = vdwg.mxu0
    %5005 = vmatprep.subr.bf16.mxu0 %v3996
    %5006 = vmatpush1.bf16.msra.mxu0 %v3995
    %5007 = vmatprep.subr.bf16.mxu0 %v3984
    %5008 = vmatpush1.bf16.msra.mxu0 %v3983
    %5009 = vmatprep.subr.bf16.mxu0 %v3972
    %5010 = vmatpush1.bf16.msra.mxu0 %v3971
    %5011 = vmatprep.subr.bf16.mxu0 %v3960
    %5012 = vmatpush1.bf16.msra.mxu0 %v3959
    %5013 = vmatprep.subr.bf16.mxu0 %v3948
    %5014 = vmatpush1.bf16.msra.mxu0 %v3947
    %5015 = vmatprep.subr.bf16.mxu0 %v3936
    %5016 = vmatpush1.bf16.msra.mxu0 %v3935
    %5017 = vmatprep.subr.bf16.mxu0 %v3924
    %5018 = vmatpush1.bf16.msra.mxu0 %v3923
    %5019 = vmatprep.subr.bf16.mxu0 %v3912
    %5020 = vmatpush1.bf16.msra.mxu0 %v3911
    %5021 = vmatprep.subr.bf16.mxu0 0
    %5022 = vmatpush2.bf16.msra.mxu0 0
    %5023 = vmatprep.subr.bf16.mxu0 0
    %5024 = vmatpush2.bf16.msra.mxu0 0
    %5025 = vmatprep.subr.bf16.mxu0 0
    %5026 = vmatpush2.bf16.msra.mxu0 0
    %5027 = vmatprep.subr.bf16.mxu0 0
    %5028 = vmatpush2.bf16.msra.mxu0 0
    %5029 = vmatprep.subr.bf16.mxu0 0
    %5030 = vmatpush2.bf16.msra.mxu0 0
    %5031 = vmatprep.subr.bf16.mxu0 0
    %5032 = vmatpush2.bf16.msra.mxu0 0
    %5033 = vmatprep.subr.bf16.mxu0 0
    %5034 = vmatpush2.bf16.msra.mxu0 0
    %5035 = vmatprep.subr.bf16.mxu0 0
    %5036 = vmatpush2.bf16.msra.mxu0 0
    %5037 = vmatprep.mubr.bf16.mxu0 0
    %5038 = vmatmul.mubr.bf16.gmra.mxu0 %v4960
    %v5039 = vpop.f32.mrf.mxu0
    %v5040 = vadd.f32 %v4999, %v5039
    %v5041 = vpop.f32.mrf.mxu0
    %v5042 = vadd.f32 %v5001, %v5041
    %v5043 = vpop.f32.mrf.mxu0
    %v5044 = vpop.f32.mrf.mxu0
    %5045 = vdwg.mxu0
    %5046 = vmatprep.subr.bf16.mxu0 %v3806
    %5047 = vmatpush1.bf16.msra.mxu0 %v3805
    %5048 = vmatprep.subr.bf16.mxu0 %v3794
    %5049 = vmatpush1.bf16.msra.mxu0 %v3793
    %5050 = vmatprep.subr.bf16.mxu0 %v3782
    %5051 = vmatpush1.bf16.msra.mxu0 %v3781
    %5052 = vmatprep.subr.bf16.mxu0 %v3770
    %5053 = vmatpush1.bf16.msra.mxu0 %v3769
    %5054 = vmatprep.subr.bf16.mxu0 %v3758
    %5055 = vmatpush1.bf16.msra.mxu0 %v3757
    %5056 = vmatprep.subr.bf16.mxu0 %v3746
    %5057 = vmatpush1.bf16.msra.mxu0 %v3745
    %5058 = vmatprep.subr.bf16.mxu0 %v3734
    %5059 = vmatpush1.bf16.msra.mxu0 %v3733
    %5060 = vmatprep.subr.bf16.mxu0 %v3722
    %5061 = vmatpush1.bf16.msra.mxu0 %v3721
    %5062 = vmatprep.subr.bf16.mxu0 %v3902
    %5063 = vmatpush2.bf16.msra.mxu0 %v3901
    %5064 = vmatprep.subr.bf16.mxu0 %v3890
    %5065 = vmatpush2.bf16.msra.mxu0 %v3889
    %5066 = vmatprep.subr.bf16.mxu0 %v3878
    %5067 = vmatpush2.bf16.msra.mxu0 %v3877
    %5068 = vmatprep.subr.bf16.mxu0 %v3866
    %5069 = vmatpush2.bf16.msra.mxu0 %v3865
    %5070 = vmatprep.subr.bf16.mxu0 %v3854
    %5071 = vmatpush2.bf16.msra.mxu0 %v3853
    %5072 = vmatprep.subr.bf16.mxu0 %v3842
    %5073 = vmatpush2.bf16.msra.mxu0 %v3841
    %5074 = vmatprep.subr.bf16.mxu0 %v3830
    %5075 = vmatpush2.bf16.msra.mxu0 %v3829
    %5076 = vmatprep.subr.bf16.mxu0 %v3818
    %5077 = vmatpush2.bf16.msra.mxu0 %v3817
    %5078 = vmatprep.mubr.bf16.mxu0 %v4959
    %5079 = vmatmul.mubr.bf16.gmra.mxu0 %v4958
    %v5080 = vpop.f32.mrf.mxu0
    %v5081 = vadd.f32 0.0, %v5080
    %v5082 = vpop.f32.mrf.mxu0
    %v5083 = vadd.f32 0.0, %v5082
    %v5084 = vpop.f32.mrf.mxu0
    %v5085 = vpop.f32.mrf.mxu0
    %5086 = vdwg.mxu0
    %5087 = vmatprep.subr.bf16.mxu0 %v3998
    %5088 = vmatpush1.bf16.msra.mxu0 %v3997
    %5089 = vmatprep.subr.bf16.mxu0 %v3986
    %5090 = vmatpush1.bf16.msra.mxu0 %v3985
    %5091 = vmatprep.subr.bf16.mxu0 %v3974
    %5092 = vmatpush1.bf16.msra.mxu0 %v3973
    %5093 = vmatprep.subr.bf16.mxu0 %v3962
    %5094 = vmatpush1.bf16.msra.mxu0 %v3961
    %5095 = vmatprep.subr.bf16.mxu0 %v3950
    %5096 = vmatpush1.bf16.msra.mxu0 %v3949
    %5097 = vmatprep.subr.bf16.mxu0 %v3938
    %5098 = vmatpush1.bf16.msra.mxu0 %v3937
    %5099 = vmatprep.subr.bf16.mxu0 %v3926
    %5100 = vmatpush1.bf16.msra.mxu0 %v3925
    %5101 = vmatprep.subr.bf16.mxu0 %v3914
    %5102 = vmatpush1.bf16.msra.mxu0 %v3913
    %5103 = vmatprep.subr.bf16.mxu0 0
    %5104 = vmatpush2.bf16.msra.mxu0 0
    %5105 = vmatprep.subr.bf16.mxu0 0
    %5106 = vmatpush2.bf16.msra.mxu0 0
    %5107 = vmatprep.subr.bf16.mxu0 0
    %5108 = vmatpush2.bf16.msra.mxu0 0
    %5109 = vmatprep.subr.bf16.mxu0 0
    %5110 = vmatpush2.bf16.msra.mxu0 0
    %5111 = vmatprep.subr.bf16.mxu0 0
    %5112 = vmatpush2.bf16.msra.mxu0 0
    %5113 = vmatprep.subr.bf16.mxu0 0
    %5114 = vmatpush2.bf16.msra.mxu0 0
    %5115 = vmatprep.subr.bf16.mxu0 0
    %5116 = vmatpush2.bf16.msra.mxu0 0
    %5117 = vmatprep.subr.bf16.mxu0 0
    %5118 = vmatpush2.bf16.msra.mxu0 0
    %5119 = vmatprep.mubr.bf16.mxu0 0
    %5120 = vmatmul.mubr.bf16.gmra.mxu0 %v4960
    %v5121 = vpop.f32.mrf.mxu0
    %v5122 = vadd.f32 %v5081, %v5121
    %v5123 = vpop.f32.mrf.mxu0
    %v5124 = vadd.f32 %v5083, %v5123
    %v5125 = vpop.f32.mrf.mxu0
    %v5126 = vpop.f32.mrf.mxu0
    %5127 = vdwg.mxu0
    %5128 = vmatprep.subr.bf16.mxu0 %v3808
    %5129 = vmatpush1.bf16.msra.mxu0 %v3807
    %5130 = vmatprep.subr.bf16.mxu0 %v3796
    %5131 = vmatpush1.bf16.msra.mxu0 %v3795
    %5132 = vmatprep.subr.bf16.mxu0 %v3784
    %5133 = vmatpush1.bf16.msra.mxu0 %v3783
    %5134 = vmatprep.subr.bf16.mxu0 %v3772
    %5135 = vmatpush1.bf16.msra.mxu0 %v3771
    %5136 = vmatprep.subr.bf16.mxu0 %v3760
    %5137 = vmatpush1.bf16.msra.mxu0 %v3759
    %5138 = vmatprep.subr.bf16.mxu0 %v3748
    %5139 = vmatpush1.bf16.msra.mxu0 %v3747
    %5140 = vmatprep.subr.bf16.mxu0 %v3736
    %5141 = vmatpush1.bf16.msra.mxu0 %v3735
    %5142 = vmatprep.subr.bf16.mxu0 %v3724
    %5143 = vmatpush1.bf16.msra.mxu0 %v3723
    %5144 = vmatprep.subr.bf16.mxu0 %v3904
    %5145 = vmatpush2.bf16.msra.mxu0 %v3903
    %5146 = vmatprep.subr.bf16.mxu0 %v3892
    %5147 = vmatpush2.bf16.msra.mxu0 %v3891
    %5148 = vmatprep.subr.bf16.mxu0 %v3880
    %5149 = vmatpush2.bf16.msra.mxu0 %v3879
    %5150 = vmatprep.subr.bf16.mxu0 %v3868
    %5151 = vmatpush2.bf16.msra.mxu0 %v3867
    %5152 = vmatprep.subr.bf16.mxu0 %v3856
    %5153 = vmatpush2.bf16.msra.mxu0 %v3855
    %5154 = vmatprep.subr.bf16.mxu0 %v3844
    %5155 = vmatpush2.bf16.msra.mxu0 %v3843
    %5156 = vmatprep.subr.bf16.mxu0 %v3832
    %5157 = vmatpush2.bf16.msra.mxu0 %v3831
    %5158 = vmatprep.subr.bf16.mxu0 %v3820
    %5159 = vmatpush2.bf16.msra.mxu0 %v3819
    %5160 = vmatprep.mubr.bf16.mxu0 %v4959
    %5161 = vmatmul.mubr.bf16.gmra.mxu0 %v4958
    %v5162 = vpop.f32.mrf.mxu0
    %v5163 = vadd.f32 0.0, %v5162
    %v5164 = vpop.f32.mrf.mxu0
    %v5165 = vadd.f32 0.0, %v5164
    %v5166 = vpop.f32.mrf.mxu0
    %v5167 = vpop.f32.mrf.mxu0
    %5168 = vdwg.mxu0
    %5169 = vmatprep.subr.bf16.mxu0 %v4000
    %5170 = vmatpush1.bf16.msra.mxu0 %v3999
    %5171 = vmatprep.subr.bf16.mxu0 %v3988
    %5172 = vmatpush1.bf16.msra.mxu0 %v3987
    %5173 = vmatprep.subr.bf16.mxu0 %v3976
    %5174 = vmatpush1.bf16.msra.mxu0 %v3975
    %5175 = vmatprep.subr.bf16.mxu0 %v3964
    %5176 = vmatpush1.bf16.msra.mxu0 %v3963
    %5177 = vmatprep.subr.bf16.mxu0 %v3952
    %5178 = vmatpush1.bf16.msra.mxu0 %v3951
    %5179 = vmatprep.subr.bf16.mxu0 %v3940
    %5180 = vmatpush1.bf16.msra.mxu0 %v3939
    %5181 = vmatprep.subr.bf16.mxu0 %v3928
    %5182 = vmatpush1.bf16.msra.mxu0 %v3927
    %5183 = vmatprep.subr.bf16.mxu0 %v3916
    %5184 = vmatpush1.bf16.msra.mxu0 %v3915
    %5185 = vmatprep.subr.bf16.mxu0 0
    %5186 = vmatpush2.bf16.msra.mxu0 0
    %5187 = vmatprep.subr.bf16.mxu0 0
    %5188 = vmatpush2.bf16.msra.mxu0 0
    %5189 = vmatprep.subr.bf16.mxu0 0
    %5190 = vmatpush2.bf16.msra.mxu0 0
    %5191 = vmatprep.subr.bf16.mxu0 0
    %5192 = vmatpush2.bf16.msra.mxu0 0
    %5193 = vmatprep.subr.bf16.mxu0 0
    %5194 = vmatpush2.bf16.msra.mxu0 0
    %5195 = vmatprep.subr.bf16.mxu0 0
    %5196 = vmatpush2.bf16.msra.mxu0 0
    %5197 = vmatprep.subr.bf16.mxu0 0
    %5198 = vmatpush2.bf16.msra.mxu0 0
    %5199 = vmatprep.subr.bf16.mxu0 0
    %5200 = vmatpush2.bf16.msra.mxu0 0
    %5201 = vmatprep.mubr.bf16.mxu0 0
    %5202 = vmatmul.mubr.bf16.gmra.mxu0 %v4960
    %v5203 = vpop.f32.mrf.mxu0
    %v5204 = vadd.f32 %v5163, %v5203
    %v5205 = vpop.f32.mrf.mxu0
    %v5206 = vadd.f32 %v5165, %v5205
    %v5207 = vpop.f32.mrf.mxu0
    %v5208 = vpop.f32.mrf.mxu0
    %5209 = vdwg.mxu0
    %5210 = vmatprep.subr.bf16.mxu0 %v3810
    %5211 = vmatpush1.bf16.msra.mxu0 %v3809
    %5212 = vmatprep.subr.bf16.mxu0 %v3798
    %5213 = vmatpush1.bf16.msra.mxu0 %v3797
    %5214 = vmatprep.subr.bf16.mxu0 %v3786
    %5215 = vmatpush1.bf16.msra.mxu0 %v3785
    %5216 = vmatprep.subr.bf16.mxu0 %v3774
    %5217 = vmatpush1.bf16.msra.mxu0 %v3773
    %5218 = vmatprep.subr.bf16.mxu0 %v3762
    %5219 = vmatpush1.bf16.msra.mxu0 %v3761
    %5220 = vmatprep.subr.bf16.mxu0 %v3750
    %5221 = vmatpush1.bf16.msra.mxu0 %v3749
    %5222 = vmatprep.subr.bf16.mxu0 %v3738
    %5223 = vmatpush1.bf16.msra.mxu0 %v3737
    %5224 = vmatprep.subr.bf16.mxu0 %v3726
    %5225 = vmatpush1.bf16.msra.mxu0 %v3725
    %5226 = vmatprep.subr.bf16.mxu0 %v3906
    %5227 = vmatpush2.bf16.msra.mxu0 %v3905
    %5228 = vmatprep.subr.bf16.mxu0 %v3894
    %5229 = vmatpush2.bf16.msra.mxu0 %v3893
    %5230 = vmatprep.subr.bf16.mxu0 %v3882
    %5231 = vmatpush2.bf16.msra.mxu0 %v3881
    %5232 = vmatprep.subr.bf16.mxu0 %v3870
    %5233 = vmatpush2.bf16.msra.mxu0 %v3869
    %5234 = vmatprep.subr.bf16.mxu0 %v3858
    %5235 = vmatpush2.bf16.msra.mxu0 %v3857
    %5236 = vmatprep.subr.bf16.mxu0 %v3846
    %5237 = vmatpush2.bf16.msra.mxu0 %v3845
    %5238 = vmatprep.subr.bf16.mxu0 %v3834
    %5239 = vmatpush2.bf16.msra.mxu0 %v3833
    %5240 = vmatprep.subr.bf16.mxu0 %v3822
    %5241 = vmatpush2.bf16.msra.mxu0 %v3821
    %5242 = vmatprep.mubr.bf16.mxu0 %v4959
    %5243 = vmatmul.mubr.bf16.gmra.mxu0 %v4958
    %v5244 = vpop.f32.mrf.mxu0
    %v5245 = vadd.f32 0.0, %v5244
    %v5246 = vpop.f32.mrf.mxu0
    %v5247 = vadd.f32 0.0, %v5246
    %v5248 = vpop.f32.mrf.mxu0
    %v5249 = vpop.f32.mrf.mxu0
    %5250 = vdwg.mxu0
    %5251 = vmatprep.subr.bf16.mxu0 %v4002
    %5252 = vmatpush1.bf16.msra.mxu0 %v4001
    %5253 = vmatprep.subr.bf16.mxu0 %v3990
    %5254 = vmatpush1.bf16.msra.mxu0 %v3989
    %5255 = vmatprep.subr.bf16.mxu0 %v3978
    %5256 = vmatpush1.bf16.msra.mxu0 %v3977
    %5257 = vmatprep.subr.bf16.mxu0 %v3966
    %5258 = vmatpush1.bf16.msra.mxu0 %v3965
    %5259 = vmatprep.subr.bf16.mxu0 %v3954
    %5260 = vmatpush1.bf16.msra.mxu0 %v3953
    %5261 = vmatprep.subr.bf16.mxu0 %v3942
    %5262 = vmatpush1.bf16.msra.mxu0 %v3941
    %5263 = vmatprep.subr.bf16.mxu0 %v3930
    %5264 = vmatpush1.bf16.msra.mxu0 %v3929
    %5265 = vmatprep.subr.bf16.mxu0 %v3918
    %5266 = vmatpush1.bf16.msra.mxu0 %v3917
    %5267 = vmatprep.subr.bf16.mxu0 0
    %5268 = vmatpush2.bf16.msra.mxu0 0
    %5269 = vmatprep.subr.bf16.mxu0 0
    %5270 = vmatpush2.bf16.msra.mxu0 0
    %5271 = vmatprep.subr.bf16.mxu0 0
    %5272 = vmatpush2.bf16.msra.mxu0 0
    %5273 = vmatprep.subr.bf16.mxu0 0
    %5274 = vmatpush2.bf16.msra.mxu0 0
    %5275 = vmatprep.subr.bf16.mxu0 0
    %5276 = vmatpush2.bf16.msra.mxu0 0
    %5277 = vmatprep.subr.bf16.mxu0 0
    %5278 = vmatpush2.bf16.msra.mxu0 0
    %5279 = vmatprep.subr.bf16.mxu0 0
    %5280 = vmatpush2.bf16.msra.mxu0 0
    %5281 = vmatprep.subr.bf16.mxu0 0
    %5282 = vmatpush2.bf16.msra.mxu0 0
    %5283 = vmatprep.mubr.bf16.mxu0 0
    %5284 = vmatmul.mubr.bf16.gmra.mxu0 %v4960
    %v5285 = vpop.f32.mrf.mxu0
    %v5286 = vadd.f32 %v5245, %v5285
    %v5287 = vpop.f32.mrf.mxu0
    %v5288 = vadd.f32 %v5247, %v5287
    %v5289 = vpop.f32.mrf.mxu0
    %v5290 = vpop.f32.mrf.mxu0
    %5291 = vdwg.mxu0
    %5292 = vmatprep.subr.bf16.mxu0 %v3812
    %5293 = vmatpush1.bf16.msra.mxu0 %v3811
    %5294 = vmatprep.subr.bf16.mxu0 %v3800
    %5295 = vmatpush1.bf16.msra.mxu0 %v3799
    %5296 = vmatprep.subr.bf16.mxu0 %v3788
    %5297 = vmatpush1.bf16.msra.mxu0 %v3787
    %5298 = vmatprep.subr.bf16.mxu0 %v3776
    %5299 = vmatpush1.bf16.msra.mxu0 %v3775
    %5300 = vmatprep.subr.bf16.mxu0 %v3764
    %5301 = vmatpush1.bf16.msra.mxu0 %v3763
    %5302 = vmatprep.subr.bf16.mxu0 %v3752
    %5303 = vmatpush1.bf16.msra.mxu0 %v3751
    %5304 = vmatprep.subr.bf16.mxu0 %v3740
    %5305 = vmatpush1.bf16.msra.mxu0 %v3739
    %5306 = vmatprep.subr.bf16.mxu0 %v3728
    %5307 = vmatpush1.bf16.msra.mxu0 %v3727
    %5308 = vmatprep.subr.bf16.mxu0 %v3908
    %5309 = vmatpush2.bf16.msra.mxu0 %v3907
    %5310 = vmatprep.subr.bf16.mxu0 %v3896
    %5311 = vmatpush2.bf16.msra.mxu0 %v3895
    %5312 = vmatprep.subr.bf16.mxu0 %v3884
    %5313 = vmatpush2.bf16.msra.mxu0 %v3883
    %5314 = vmatprep.subr.bf16.mxu0 %v3872
    %5315 = vmatpush2.bf16.msra.mxu0 %v3871
    %5316 = vmatprep.subr.bf16.mxu0 %v3860
    %5317 = vmatpush2.bf16.msra.mxu0 %v3859
    %5318 = vmatprep.subr.bf16.mxu0 %v3848
    %5319 = vmatpush2.bf16.msra.mxu0 %v3847
    %5320 = vmatprep.subr.bf16.mxu0 %v3836
    %5321 = vmatpush2.bf16.msra.mxu0 %v3835
    %5322 = vmatprep.subr.bf16.mxu0 %v3824
    %5323 = vmatpush2.bf16.msra.mxu0 %v3823
    %5324 = vmatprep.mubr.bf16.mxu0 %v4959
    %5325 = vmatmul.mubr.bf16.gmra.mxu0 %v4958
    %v5326 = vpop.f32.mrf.mxu0
    %v5327 = vadd.f32 0.0, %v5326
    %v5328 = vpop.f32.mrf.mxu0
    %v5329 = vadd.f32 0.0, %v5328
    %v5330 = vpop.f32.mrf.mxu0
    %v5331 = vpop.f32.mrf.mxu0
    %5332 = vdwg.mxu0
    %5333 = vmatprep.subr.bf16.mxu0 %v4004
    %5334 = vmatpush1.bf16.msra.mxu0 %v4003
    %5335 = vmatprep.subr.bf16.mxu0 %v3992
    %5336 = vmatpush1.bf16.msra.mxu0 %v3991
    %5337 = vmatprep.subr.bf16.mxu0 %v3980
    %5338 = vmatpush1.bf16.msra.mxu0 %v3979
    %5339 = vmatprep.subr.bf16.mxu0 %v3968
    %5340 = vmatpush1.bf16.msra.mxu0 %v3967
    %5341 = vmatprep.subr.bf16.mxu0 %v3956
    %5342 = vmatpush1.bf16.msra.mxu0 %v3955
    %5343 = vmatprep.subr.bf16.mxu0 %v3944
    %5344 = vmatpush1.bf16.msra.mxu0 %v3943
    %5345 = vmatprep.subr.bf16.mxu0 %v3932
    %5346 = vmatpush1.bf16.msra.mxu0 %v3931
    %5347 = vmatprep.subr.bf16.mxu0 %v3920
    %5348 = vmatpush1.bf16.msra.mxu0 %v3919
    %5349 = vmatprep.subr.bf16.mxu0 0
    %5350 = vmatpush2.bf16.msra.mxu0 0
    %5351 = vmatprep.subr.bf16.mxu0 0
    %5352 = vmatpush2.bf16.msra.mxu0 0
    %5353 = vmatprep.subr.bf16.mxu0 0
    %5354 = vmatpush2.bf16.msra.mxu0 0
    %5355 = vmatprep.subr.bf16.mxu0 0
    %5356 = vmatpush2.bf16.msra.mxu0 0
    %5357 = vmatprep.subr.bf16.mxu0 0
    %5358 = vmatpush2.bf16.msra.mxu0 0
    %5359 = vmatprep.subr.bf16.mxu0 0
    %5360 = vmatpush2.bf16.msra.mxu0 0
    %5361 = vmatprep.subr.bf16.mxu0 0
    %5362 = vmatpush2.bf16.msra.mxu0 0
    %5363 = vmatprep.subr.bf16.mxu0 0
    %5364 = vmatpush2.bf16.msra.mxu0 0
    %5365 = vmatprep.mubr.bf16.mxu0 0
    %5366 = vmatmul.mubr.bf16.gmra.mxu0 %v4960
    %v5367 = vpop.f32.mrf.mxu0
    %v5368 = vadd.f32 %v5327, %v5367
    %v5369 = vpop.f32.mrf.mxu0
    %v5370 = vadd.f32 %v5329, %v5369
    %v5371 = vpop.f32.mrf.mxu0
    %v5372 = vpop.f32.mrf.mxu0
    %5373 = vdwg.mxu0
    %5374 = vmatprep.subr.bf16.mxu0 %v3814
    %5375 = vmatpush1.bf16.msra.mxu0 %v3813
    %5376 = vmatprep.subr.bf16.mxu0 %v3802
    %5377 = vmatpush1.bf16.msra.mxu0 %v3801
    %5378 = vmatprep.subr.bf16.mxu0 %v3790
    %5379 = vmatpush1.bf16.msra.mxu0 %v3789
    %5380 = vmatprep.subr.bf16.mxu0 %v3778
    %5381 = vmatpush1.bf16.msra.mxu0 %v3777
    %5382 = vmatprep.subr.bf16.mxu0 %v3766
    %5383 = vmatpush1.bf16.msra.mxu0 %v3765
    %5384 = vmatprep.subr.bf16.mxu0 %v3754
    %5385 = vmatpush1.bf16.msra.mxu0 %v3753
    %5386 = vmatprep.subr.bf16.mxu0 %v3742
    %5387 = vmatpush1.bf16.msra.mxu0 %v3741
    %5388 = vmatprep.subr.bf16.mxu0 %v3730
    %5389 = vmatpush1.bf16.msra.mxu0 %v3729
    %5390 = vmatprep.subr.bf16.mxu0 %v3910
    %5391 = vmatpush2.bf16.msra.mxu0 %v3909
    %5392 = vmatprep.subr.bf16.mxu0 %v3898
    %5393 = vmatpush2.bf16.msra.mxu0 %v3897
    %5394 = vmatprep.subr.bf16.mxu0 %v3886
    %5395 = vmatpush2.bf16.msra.mxu0 %v3885
    %5396 = vmatprep.subr.bf16.mxu0 %v3874
    %5397 = vmatpush2.bf16.msra.mxu0 %v3873
    %5398 = vmatprep.subr.bf16.mxu0 %v3862
    %5399 = vmatpush2.bf16.msra.mxu0 %v3861
    %5400 = vmatprep.subr.bf16.mxu0 %v3850
    %5401 = vmatpush2.bf16.msra.mxu0 %v3849
    %5402 = vmatprep.subr.bf16.mxu0 %v3838
    %5403 = vmatpush2.bf16.msra.mxu0 %v3837
    %5404 = vmatprep.subr.bf16.mxu0 %v3826
    %5405 = vmatpush2.bf16.msra.mxu0 %v3825
    %5406 = vmatprep.mubr.bf16.mxu0 %v4959
    %5407 = vmatmul.mubr.bf16.gmra.mxu0 %v4958
    %v5408 = vpop.f32.mrf.mxu0
    %v5409 = vadd.f32 0.0, %v5408
    %v5410 = vpop.f32.mrf.mxu0
    %v5411 = vadd.f32 0.0, %v5410
    %v5412 = vpop.f32.mrf.mxu0
    %v5413 = vpop.f32.mrf.mxu0
    %5414 = vdwg.mxu0
    %5415 = vmatprep.subr.bf16.mxu0 %v4006
    %5416 = vmatpush1.bf16.msra.mxu0 %v4005
    %5417 = vmatprep.subr.bf16.mxu0 %v3994
    %5418 = vmatpush1.bf16.msra.mxu0 %v3993
    %5419 = vmatprep.subr.bf16.mxu0 %v3982
    %5420 = vmatpush1.bf16.msra.mxu0 %v3981
    %5421 = vmatprep.subr.bf16.mxu0 %v3970
    %5422 = vmatpush1.bf16.msra.mxu0 %v3969
    %5423 = vmatprep.subr.bf16.mxu0 %v3958
    %5424 = vmatpush1.bf16.msra.mxu0 %v3957
    %5425 = vmatprep.subr.bf16.mxu0 %v3946
    %5426 = vmatpush1.bf16.msra.mxu0 %v3945
    %5427 = vmatprep.subr.bf16.mxu0 %v3934
    %5428 = vmatpush1.bf16.msra.mxu0 %v3933
    %5429 = vmatprep.subr.bf16.mxu0 %v3922
    %5430 = vmatpush1.bf16.msra.mxu0 %v3921
    %5431 = vmatprep.subr.bf16.mxu0 0
    %5432 = vmatpush2.bf16.msra.mxu0 0
    %5433 = vmatprep.subr.bf16.mxu0 0
    %5434 = vmatpush2.bf16.msra.mxu0 0
    %5435 = vmatprep.subr.bf16.mxu0 0
    %5436 = vmatpush2.bf16.msra.mxu0 0
    %5437 = vmatprep.subr.bf16.mxu0 0
    %5438 = vmatpush2.bf16.msra.mxu0 0
    %5439 = vmatprep.subr.bf16.mxu0 0
    %5440 = vmatpush2.bf16.msra.mxu0 0
    %5441 = vmatprep.subr.bf16.mxu0 0
    %5442 = vmatpush2.bf16.msra.mxu0 0
    %5443 = vmatprep.subr.bf16.mxu0 0
    %5444 = vmatpush2.bf16.msra.mxu0 0
    %5445 = vmatprep.subr.bf16.mxu0 0
    %5446 = vmatpush2.bf16.msra.mxu0 0
    %5447 = vmatprep.mubr.bf16.mxu0 0
    %5448 = vmatmul.mubr.bf16.gmra.mxu0 %v4960
    %v5449 = vpop.f32.mrf.mxu0
    %v5450 = vadd.f32 %v5409, %v5449
    %v5451 = vpop.f32.mrf.mxu0
    %v5452 = vadd.f32 %v5411, %v5451
    %v5453 = vpop.f32.mrf.mxu0
    %v5454 = vpop.f32.mrf.mxu0
    %5455 = vdwg.mxu0
    %v5468 = vrot.slane %v5040, 4
    %v5469 = vrot.slane %v5042, 4
    %v5470 = vrot.slane %v5122, 4
    %v5471 = vrot.slane %v5124, 4
    %v5472 = vrot.slane %v5204, 4
    %v5473 = vrot.slane %v5206, 4
    %v5474 = vrot.slane %v5286, 4
    %v5475 = vrot.slane %v5288, 4
    %v5476 = vrot.slane %v5368, 4
    %v5477 = vrot.slane %v5370, 4
    %v5478 = vrot.slane %v5450, 4
    %v5479 = vrot.slane %v5452, 4
    %v5492 = vadd.f32 %v4940, %v5468
    %v5493 = vadd.f32 %v4941, %v5469
    %v5494 = vadd.f32 %v4942, %v5470
    %v5495 = vadd.f32 %v4943, %v5471
    %v5496 = vadd.f32 %v4944, %v5472
    %v5497 = vadd.f32 %v4945, %v5473
    %v5498 = vadd.f32 %v4946, %v5474
    %v5499 = vadd.f32 %v4947, %v5475
    %v5500 = vadd.f32 %v4948, %v5476
    %v5501 = vadd.f32 %v4949, %v5477
    %v5502 = vadd.f32 %v4950, %v5478
    %v5503 = vadd.f32 %v4951, %v5479
    %v5504 = vxor.u32 %v5492, 2147483648
    %v5505 = vxor.u32 %v5493, 2147483648
    %v5506 = vxor.u32 %v5494, 2147483648
    %v5507 = vxor.u32 %v5495, 2147483648
    %v5508 = vxor.u32 %v5496, 2147483648
    %v5509 = vxor.u32 %v5497, 2147483648
    %v5510 = vxor.u32 %v5498, 2147483648
    %v5511 = vxor.u32 %v5499, 2147483648
    %v5512 = vxor.u32 %v5500, 2147483648
    %v5513 = vxor.u32 %v5501, 2147483648
    %v5514 = vxor.u32 %v5502, 2147483648
    %v5515 = vxor.u32 %v5503, 2147483648
    %v5516 = vmul.f32 %v5504, 1.442695
    %v5517 = vpow.pop %v5516
    %v5518 = vmul.f32 %v5505, 1.442695
    %v5519 = vpow.pop %v5518
    %v5520 = vmul.f32 %v5506, 1.442695
    %v5521 = vpow.pop %v5520
    %v5522 = vmul.f32 %v5507, 1.442695
    %v5523 = vpow.pop %v5522
    %v5524 = vmul.f32 %v5508, 1.442695
    %v5525 = vpow.pop %v5524
    %v5526 = vmul.f32 %v5509, 1.442695
    %v5527 = vpow.pop %v5526
    %v5528 = vmul.f32 %v5510, 1.442695
    %v5529 = vpow.pop %v5528
    %v5530 = vmul.f32 %v5511, 1.442695
    %v5531 = vpow.pop %v5530
    %v5532 = vmul.f32 %v5512, 1.442695
    %v5533 = vpow.pop %v5532
    %v5534 = vmul.f32 %v5513, 1.442695
    %v5535 = vpow.pop %v5534
    %v5536 = vmul.f32 %v5514, 1.442695
    %v5537 = vpow.pop %v5536
    %v5538 = vmul.f32 %v5515, 1.442695
    %v5539 = vpow.pop %v5538
    %v5540 = vadd.f32 %v5517, 1.0
    %v5541 = vadd.f32 %v5519, 1.0
    %v5542 = vadd.f32 %v5521, 1.0
    %v5543 = vadd.f32 %v5523, 1.0
    %v5544 = vadd.f32 %v5525, 1.0
    %v5545 = vadd.f32 %v5527, 1.0
    %v5546 = vadd.f32 %v5529, 1.0
    %v5547 = vadd.f32 %v5531, 1.0
    %v5548 = vadd.f32 %v5533, 1.0
    %v5549 = vadd.f32 %v5535, 1.0
    %v5550 = vadd.f32 %v5537, 1.0
    %v5551 = vadd.f32 %v5539, 1.0
    %v5552 = vrcp.pop %v5540
    %v5553 = vmul.f32 1.0, %v5552
    %v5554 = vrcp.pop %v5541
    %v5555 = vmul.f32 1.0, %v5554
    %v5556 = vrcp.pop %v5542
    %v5557 = vmul.f32 1.0, %v5556
    %v5558 = vrcp.pop %v5543
    %v5559 = vmul.f32 1.0, %v5558
    %v5560 = vrcp.pop %v5544
    %v5561 = vmul.f32 1.0, %v5560
    %v5562 = vrcp.pop %v5545
    %v5563 = vmul.f32 1.0, %v5562
    %v5564 = vrcp.pop %v5546
    %v5565 = vmul.f32 1.0, %v5564
    %v5566 = vrcp.pop %v5547
    %v5567 = vmul.f32 1.0, %v5566
    %v5568 = vrcp.pop %v5548
    %v5569 = vmul.f32 1.0, %v5568
    %v5570 = vrcp.pop %v5549
    %v5571 = vmul.f32 1.0, %v5570
    %v5572 = vrcp.pop %v5550
    %v5573 = vmul.f32 1.0, %v5572
    %v5574 = vrcp.pop %v5551
    %v5575 = vmul.f32 1.0, %v5574
    %v5576 = vmul.f32 %v5565, 2.0
    %v5577 = vmul.f32 %v5567, 2.0
    %v5578 = vmul.f32 %v5569, 2.0
    %v5579 = vsub.f32 %v5576, 1.0
    %v5580 = vsub.f32 %v5577, 1.0
    %v5581 = vsub.f32 %v5578, 1.0
    %v5585 = vrot.slane %v4928, 6
    %v5586 = vrot.slane %v4929, 6
    %v5587 = vrot.slane %v4930, 6
    %v5591 = vmul.f32 %v5559, %v5585
    %v5592 = vmul.f32 %v5561, %v5586
    %v5593 = vmul.f32 %v5563, %v5587
    %v5594 = vmul.f32 %v5553, %v5579
    %v5595 = vmul.f32 %v5555, %v5580
    %v5596 = vmul.f32 %v5557, %v5581
    %v5597 = vadd.f32 %v5591, %v5594
    %v5598 = vadd.f32 %v5592, %v5595
    %v5599 = vadd.f32 %v5593, %v5596
    %v5600 = vtanh.pop %v5597
    %v5601 = vtanh.pop %v5598
    %v5602 = vtanh.pop %v5599
    %v5603 = vmul.f32 %v5571, %v5600
    %v5604 = vmul.f32 %v5573, %v5601
    %v5605 = vmul.f32 %v5575, %v5602
    %5606 = vst [vmem:[#allocation14] sm:$0x30] %v5603
    %5607 = vst [vmem:[#allocation14 + $0x8] sm:$0x30] %v5604
    %5608 = vst [vmem:[#allocation14 + $0x10] sm:$0x30] %v5605
    %v5609 = vld [vmem:[#allocation2] sm:$0xc0]
    %v5610 = vld [vmem:[#allocation2 + $0x8] sm:$0xc0]
    %v5611 = vld [vmem:[#allocation2 + $0x10] sm:$0xc0]
    %v5612 = vld [vmem:[#allocation2 + $0x18] sm:$0xc0]
    %v5613 = vld [vmem:[#allocation2 + $0x20] sm:$0xc0]
    %v5614 = vld [vmem:[#allocation2 + $0x28] sm:$0xc0]
    %v5615 = vld [vmem:[#allocation2 + $0x30] sm:$0xc0]
    %v5616 = vld [vmem:[#allocation2 + $0x38] sm:$0xc0]
    %v5617 = vld [vmem:[#allocation2 + $0x40] sm:$0xc0]
    %v5618 = vld [vmem:[#allocation2 + $0x48] sm:$0xc0]
    %v5619 = vld [vmem:[#allocation2 + $0x50] sm:$0xc0]
    %v5620 = vld [vmem:[#allocation2 + $0x58] sm:$0xc0]
    %v5621 = vpack.c.bf16 %v5603, %v5603
    %v5622 = vpack.c.bf16 %v5604, %v5604
    %v5623 = vpack.c.bf16 %v5605, %v5605
    %v5627 = vrot.slane %v5621, 2
    %v5628 = vrot.slane %v5622, 2
    %v5629 = vrot.slane %v5623, 2
    %5633 = vmatprep.subr.bf16.mxu0 %v3804
    %5634 = vmatpush1.bf16.msra.mxu0 %v3803
    %5635 = vmatprep.subr.bf16.mxu0 %v3792
    %5636 = vmatpush1.bf16.msra.mxu0 %v3791
    %5637 = vmatprep.subr.bf16.mxu0 %v3780
    %5638 = vmatpush1.bf16.msra.mxu0 %v3779
    %5639 = vmatprep.subr.bf16.mxu0 %v3768
    %5640 = vmatpush1.bf16.msra.mxu0 %v3767
    %5641 = vmatprep.subr.bf16.mxu0 %v3756
    %5642 = vmatpush1.bf16.msra.mxu0 %v3755
    %5643 = vmatprep.subr.bf16.mxu0 %v3744
    %5644 = vmatpush1.bf16.msra.mxu0 %v3743
    %5645 = vmatprep.subr.bf16.mxu0 %v3732
    %5646 = vmatpush1.bf16.msra.mxu0 %v3731
    %5647 = vmatprep.subr.bf16.mxu0 %v3720
    %5648 = vmatpush1.bf16.msra.mxu0 %v3719
    %5649 = vmatprep.subr.bf16.mxu0 %v3900
    %5650 = vmatpush2.bf16.msra.mxu0 %v3899
    %5651 = vmatprep.subr.bf16.mxu0 %v3888
    %5652 = vmatpush2.bf16.msra.mxu0 %v3887
    %5653 = vmatprep.subr.bf16.mxu0 %v3876
    %5654 = vmatpush2.bf16.msra.mxu0 %v3875
    %5655 = vmatprep.subr.bf16.mxu0 %v3864
    %5656 = vmatpush2.bf16.msra.mxu0 %v3863
    %5657 = vmatprep.subr.bf16.mxu0 %v3852
    %5658 = vmatpush2.bf16.msra.mxu0 %v3851
    %5659 = vmatprep.subr.bf16.mxu0 %v3840
    %5660 = vmatpush2.bf16.msra.mxu0 %v3839
    %5661 = vmatprep.subr.bf16.mxu0 %v3828
    %5662 = vmatpush2.bf16.msra.mxu0 %v3827
    %5663 = vmatprep.subr.bf16.mxu0 %v3816
    %5664 = vmatpush2.bf16.msra.mxu0 %v3815
    %5665 = vmatprep.mubr.bf16.mxu0 %v5628
    %5666 = vmatmul.mubr.bf16.gmra.mxu0 %v5627
    %v5667 = vpop.f32.mrf.mxu0
    %v5668 = vadd.f32 0.0, %v5667
    %v5669 = vpop.f32.mrf.mxu0
    %v5670 = vadd.f32 0.0, %v5669
    %v5671 = vpop.f32.mrf.mxu0
    %v5672 = vpop.f32.mrf.mxu0
    %5673 = vdwg.mxu0
    %5674 = vmatprep.subr.bf16.mxu0 %v3996
    %5675 = vmatpush1.bf16.msra.mxu0 %v3995
    %5676 = vmatprep.subr.bf16.mxu0 %v3984
    %5677 = vmatpush1.bf16.msra.mxu0 %v3983
    %5678 = vmatprep.subr.bf16.mxu0 %v3972
    %5679 = vmatpush1.bf16.msra.mxu0 %v3971
    %5680 = vmatprep.subr.bf16.mxu0 %v3960
    %5681 = vmatpush1.bf16.msra.mxu0 %v3959
    %5682 = vmatprep.subr.bf16.mxu0 %v3948
    %5683 = vmatpush1.bf16.msra.mxu0 %v3947
    %5684 = vmatprep.subr.bf16.mxu0 %v3936
    %5685 = vmatpush1.bf16.msra.mxu0 %v3935
    %5686 = vmatprep.subr.bf16.mxu0 %v3924
    %5687 = vmatpush1.bf16.msra.mxu0 %v3923
    %5688 = vmatprep.subr.bf16.mxu0 %v3912
    %5689 = vmatpush1.bf16.msra.mxu0 %v3911
    %5690 = vmatprep.subr.bf16.mxu0 0
    %5691 = vmatpush2.bf16.msra.mxu0 0
    %5692 = vmatprep.subr.bf16.mxu0 0
    %5693 = vmatpush2.bf16.msra.mxu0 0
    %5694 = vmatprep.subr.bf16.mxu0 0
    %5695 = vmatpush2.bf16.msra.mxu0 0
    %5696 = vmatprep.subr.bf16.mxu0 0
    %5697 = vmatpush2.bf16.msra.mxu0 0
    %5698 = vmatprep.subr.bf16.mxu0 0
    %5699 = vmatpush2.bf16.msra.mxu0 0
    %5700 = vmatprep.subr.bf16.mxu0 0
    %5701 = vmatpush2.bf16.msra.mxu0 0
    %5702 = vmatprep.subr.bf16.mxu0 0
    %5703 = vmatpush2.bf16.msra.mxu0 0
    %5704 = vmatprep.subr.bf16.mxu0 0
    %5705 = vmatpush2.bf16.msra.mxu0 0
    %5706 = vmatprep.mubr.bf16.mxu0 0
    %5707 = vmatmul.mubr.bf16.gmra.mxu0 %v5629
    %v5708 = vpop.f32.mrf.mxu0
    %v5709 = vadd.f32 %v5668, %v5708
    %v5710 = vpop.f32.mrf.mxu0
    %v5711 = vadd.f32 %v5670, %v5710
    %v5712 = vpop.f32.mrf.mxu0
    %v5713 = vpop.f32.mrf.mxu0
    %5714 = vdwg.mxu0
    %5715 = vmatprep.subr.bf16.mxu0 %v3806
    %5716 = vmatpush1.bf16.msra.mxu0 %v3805
    %5717 = vmatprep.subr.bf16.mxu0 %v3794
    %5718 = vmatpush1.bf16.msra.mxu0 %v3793
    %5719 = vmatprep.subr.bf16.mxu0 %v3782
    %5720 = vmatpush1.bf16.msra.mxu0 %v3781
    %5721 = vmatprep.subr.bf16.mxu0 %v3770
    %5722 = vmatpush1.bf16.msra.mxu0 %v3769
    %5723 = vmatprep.subr.bf16.mxu0 %v3758
    %5724 = vmatpush1.bf16.msra.mxu0 %v3757
    %5725 = vmatprep.subr.bf16.mxu0 %v3746
    %5726 = vmatpush1.bf16.msra.mxu0 %v3745
    %5727 = vmatprep.subr.bf16.mxu0 %v3734
    %5728 = vmatpush1.bf16.msra.mxu0 %v3733
    %5729 = vmatprep.subr.bf16.mxu0 %v3722
    %5730 = vmatpush1.bf16.msra.mxu0 %v3721
    %5731 = vmatprep.subr.bf16.mxu0 %v3902
    %5732 = vmatpush2.bf16.msra.mxu0 %v3901
    %5733 = vmatprep.subr.bf16.mxu0 %v3890
    %5734 = vmatpush2.bf16.msra.mxu0 %v3889
    %5735 = vmatprep.subr.bf16.mxu0 %v3878
    %5736 = vmatpush2.bf16.msra.mxu0 %v3877
    %5737 = vmatprep.subr.bf16.mxu0 %v3866
    %5738 = vmatpush2.bf16.msra.mxu0 %v3865
    %5739 = vmatprep.subr.bf16.mxu0 %v3854
    %5740 = vmatpush2.bf16.msra.mxu0 %v3853
    %5741 = vmatprep.subr.bf16.mxu0 %v3842
    %5742 = vmatpush2.bf16.msra.mxu0 %v3841
    %5743 = vmatprep.subr.bf16.mxu0 %v3830
    %5744 = vmatpush2.bf16.msra.mxu0 %v3829
    %5745 = vmatprep.subr.bf16.mxu0 %v3818
    %5746 = vmatpush2.bf16.msra.mxu0 %v3817
    %5747 = vmatprep.mubr.bf16.mxu0 %v5628
    %5748 = vmatmul.mubr.bf16.gmra.mxu0 %v5627
    %v5749 = vpop.f32.mrf.mxu0
    %v5750 = vadd.f32 0.0, %v5749
    %v5751 = vpop.f32.mrf.mxu0
    %v5752 = vadd.f32 0.0, %v5751
    %v5753 = vpop.f32.mrf.mxu0
    %v5754 = vpop.f32.mrf.mxu0
    %5755 = vdwg.mxu0
    %5756 = vmatprep.subr.bf16.mxu0 %v3998
    %5757 = vmatpush1.bf16.msra.mxu0 %v3997
    %5758 = vmatprep.subr.bf16.mxu0 %v3986
    %5759 = vmatpush1.bf16.msra.mxu0 %v3985
    %5760 = vmatprep.subr.bf16.mxu0 %v3974
    %5761 = vmatpush1.bf16.msra.mxu0 %v3973
    %5762 = vmatprep.subr.bf16.mxu0 %v3962
    %5763 = vmatpush1.bf16.msra.mxu0 %v3961
    %5764 = vmatprep.subr.bf16.mxu0 %v3950
    %5765 = vmatpush1.bf16.msra.mxu0 %v3949
    %5766 = vmatprep.subr.bf16.mxu0 %v3938
    %5767 = vmatpush1.bf16.msra.mxu0 %v3937
    %5768 = vmatprep.subr.bf16.mxu0 %v3926
    %5769 = vmatpush1.bf16.msra.mxu0 %v3925
    %5770 = vmatprep.subr.bf16.mxu0 %v3914
    %5771 = vmatpush1.bf16.msra.mxu0 %v3913
    %5772 = vmatprep.subr.bf16.mxu0 0
    %5773 = vmatpush2.bf16.msra.mxu0 0
    %5774 = vmatprep.subr.bf16.mxu0 0
    %5775 = vmatpush2.bf16.msra.mxu0 0
    %5776 = vmatprep.subr.bf16.mxu0 0
    %5777 = vmatpush2.bf16.msra.mxu0 0
    %5778 = vmatprep.subr.bf16.mxu0 0
    %5779 = vmatpush2.bf16.msra.mxu0 0
    %5780 = vmatprep.subr.bf16.mxu0 0
    %5781 = vmatpush2.bf16.msra.mxu0 0
    %5782 = vmatprep.subr.bf16.mxu0 0
    %5783 = vmatpush2.bf16.msra.mxu0 0
    %5784 = vmatprep.subr.bf16.mxu0 0
    %5785 = vmatpush2.bf16.msra.mxu0 0
    %5786 = vmatprep.subr.bf16.mxu0 0
    %5787 = vmatpush2.bf16.msra.mxu0 0
    %5788 = vmatprep.mubr.bf16.mxu0 0
    %5789 = vmatmul.mubr.bf16.gmra.mxu0 %v5629
    %v5790 = vpop.f32.mrf.mxu0
    %v5791 = vadd.f32 %v5750, %v5790
    %v5792 = vpop.f32.mrf.mxu0
    %v5793 = vadd.f32 %v5752, %v5792
    %v5794 = vpop.f32.mrf.mxu0
    %v5795 = vpop.f32.mrf.mxu0
    %5796 = vdwg.mxu0
    %5797 = vmatprep.subr.bf16.mxu0 %v3808
    %5798 = vmatpush1.bf16.msra.mxu0 %v3807
    %5799 = vmatprep.subr.bf16.mxu0 %v3796
    %5800 = vmatpush1.bf16.msra.mxu0 %v3795
    %5801 = vmatprep.subr.bf16.mxu0 %v3784
    %5802 = vmatpush1.bf16.msra.mxu0 %v3783
    %5803 = vmatprep.subr.bf16.mxu0 %v3772
    %5804 = vmatpush1.bf16.msra.mxu0 %v3771
    %5805 = vmatprep.subr.bf16.mxu0 %v3760
    %5806 = vmatpush1.bf16.msra.mxu0 %v3759
    %5807 = vmatprep.subr.bf16.mxu0 %v3748
    %5808 = vmatpush1.bf16.msra.mxu0 %v3747
    %5809 = vmatprep.subr.bf16.mxu0 %v3736
    %5810 = vmatpush1.bf16.msra.mxu0 %v3735
    %5811 = vmatprep.subr.bf16.mxu0 %v3724
    %5812 = vmatpush1.bf16.msra.mxu0 %v3723
    %5813 = vmatprep.subr.bf16.mxu0 %v3904
    %5814 = vmatpush2.bf16.msra.mxu0 %v3903
    %5815 = vmatprep.subr.bf16.mxu0 %v3892
    %5816 = vmatpush2.bf16.msra.mxu0 %v3891
    %5817 = vmatprep.subr.bf16.mxu0 %v3880
    %5818 = vmatpush2.bf16.msra.mxu0 %v3879
    %5819 = vmatprep.subr.bf16.mxu0 %v3868
    %5820 = vmatpush2.bf16.msra.mxu0 %v3867
    %5821 = vmatprep.subr.bf16.mxu0 %v3856
    %5822 = vmatpush2.bf16.msra.mxu0 %v3855
    %5823 = vmatprep.subr.bf16.mxu0 %v3844
    %5824 = vmatpush2.bf16.msra.mxu0 %v3843
    %5825 = vmatprep.subr.bf16.mxu0 %v3832
    %5826 = vmatpush2.bf16.msra.mxu0 %v3831
    %5827 = vmatprep.subr.bf16.mxu0 %v3820
    %5828 = vmatpush2.bf16.msra.mxu0 %v3819
    %5829 = vmatprep.mubr.bf16.mxu0 %v5628
    %5830 = vmatmul.mubr.bf16.gmra.mxu0 %v5627
    %v5831 = vpop.f32.mrf.mxu0
    %v5832 = vadd.f32 0.0, %v5831
    %v5833 = vpop.f32.mrf.mxu0
    %v5834 = vadd.f32 0.0, %v5833
    %v5835 = vpop.f32.mrf.mxu0
    %v5836 = vpop.f32.mrf.mxu0
    %5837 = vdwg.mxu0
    %5838 = vmatprep.subr.bf16.mxu0 %v4000
    %5839 = vmatpush1.bf16.msra.mxu0 %v3999
    %5840 = vmatprep.subr.bf16.mxu0 %v3988
    %5841 = vmatpush1.bf16.msra.mxu0 %v3987
    %5842 = vmatprep.subr.bf16.mxu0 %v3976
    %5843 = vmatpush1.bf16.msra.mxu0 %v3975
    %5844 = vmatprep.subr.bf16.mxu0 %v3964
    %5845 = vmatpush1.bf16.msra.mxu0 %v3963
    %5846 = vmatprep.subr.bf16.mxu0 %v3952
    %5847 = vmatpush1.bf16.msra.mxu0 %v3951
    %5848 = vmatprep.subr.bf16.mxu0 %v3940
    %5849 = vmatpush1.bf16.msra.mxu0 %v3939
    %5850 = vmatprep.subr.bf16.mxu0 %v3928
    %5851 = vmatpush1.bf16.msra.mxu0 %v3927
    %5852 = vmatprep.subr.bf16.mxu0 %v3916
    %5853 = vmatpush1.bf16.msra.mxu0 %v3915
    %5854 = vmatprep.subr.bf16.mxu0 0
    %5855 = vmatpush2.bf16.msra.mxu0 0
    %5856 = vmatprep.subr.bf16.mxu0 0
    %5857 = vmatpush2.bf16.msra.mxu0 0
    %5858 = vmatprep.subr.bf16.mxu0 0
    %5859 = vmatpush2.bf16.msra.mxu0 0
    %5860 = vmatprep.subr.bf16.mxu0 0
    %5861 = vmatpush2.bf16.msra.mxu0 0
    %5862 = vmatprep.subr.bf16.mxu0 0
    %5863 = vmatpush2.bf16.msra.mxu0 0
    %5864 = vmatprep.subr.bf16.mxu0 0
    %5865 = vmatpush2.bf16.msra.mxu0 0
    %5866 = vmatprep.subr.bf16.mxu0 0
    %5867 = vmatpush2.bf16.msra.mxu0 0
    %5868 = vmatprep.subr.bf16.mxu0 0
    %5869 = vmatpush2.bf16.msra.mxu0 0
    %5870 = vmatprep.mubr.bf16.mxu0 0
    %5871 = vmatmul.mubr.bf16.gmra.mxu0 %v5629
    %v5872 = vpop.f32.mrf.mxu0
    %v5873 = vadd.f32 %v5832, %v5872
    %v5874 = vpop.f32.mrf.mxu0
    %v5875 = vadd.f32 %v5834, %v5874
    %v5876 = vpop.f32.mrf.mxu0
    %v5877 = vpop.f32.mrf.mxu0
    %5878 = vdwg.mxu0
    %5879 = vmatprep.subr.bf16.mxu0 %v3810
    %5880 = vmatpush1.bf16.msra.mxu0 %v3809
    %5881 = vmatprep.subr.bf16.mxu0 %v3798
    %5882 = vmatpush1.bf16.msra.mxu0 %v3797
    %5883 = vmatprep.subr.bf16.mxu0 %v3786
    %5884 = vmatpush1.bf16.msra.mxu0 %v3785
    %5885 = vmatprep.subr.bf16.mxu0 %v3774
    %5886 = vmatpush1.bf16.msra.mxu0 %v3773
    %5887 = vmatprep.subr.bf16.mxu0 %v3762
    %5888 = vmatpush1.bf16.msra.mxu0 %v3761
    %5889 = vmatprep.subr.bf16.mxu0 %v3750
    %5890 = vmatpush1.bf16.msra.mxu0 %v3749
    %5891 = vmatprep.subr.bf16.mxu0 %v3738
    %5892 = vmatpush1.bf16.msra.mxu0 %v3737
    %5893 = vmatprep.subr.bf16.mxu0 %v3726
    %5894 = vmatpush1.bf16.msra.mxu0 %v3725
    %5895 = vmatprep.subr.bf16.mxu0 %v3906
    %5896 = vmatpush2.bf16.msra.mxu0 %v3905
    %5897 = vmatprep.subr.bf16.mxu0 %v3894
    %5898 = vmatpush2.bf16.msra.mxu0 %v3893
    %5899 = vmatprep.subr.bf16.mxu0 %v3882
    %5900 = vmatpush2.bf16.msra.mxu0 %v3881
    %5901 = vmatprep.subr.bf16.mxu0 %v3870
    %5902 = vmatpush2.bf16.msra.mxu0 %v3869
    %5903 = vmatprep.subr.bf16.mxu0 %v3858
    %5904 = vmatpush2.bf16.msra.mxu0 %v3857
    %5905 = vmatprep.subr.bf16.mxu0 %v3846
    %5906 = vmatpush2.bf16.msra.mxu0 %v3845
    %5907 = vmatprep.subr.bf16.mxu0 %v3834
    %5908 = vmatpush2.bf16.msra.mxu0 %v3833
    %5909 = vmatprep.subr.bf16.mxu0 %v3822
    %5910 = vmatpush2.bf16.msra.mxu0 %v3821
    %5911 = vmatprep.mubr.bf16.mxu0 %v5628
    %5912 = vmatmul.mubr.bf16.gmra.mxu0 %v5627
    %v5913 = vpop.f32.mrf.mxu0
    %v5914 = vadd.f32 0.0, %v5913
    %v5915 = vpop.f32.mrf.mxu0
    %v5916 = vadd.f32 0.0, %v5915
    %v5917 = vpop.f32.mrf.mxu0
    %v5918 = vpop.f32.mrf.mxu0
    %5919 = vdwg.mxu0
    %5920 = vmatprep.subr.bf16.mxu0 %v4002
    %5921 = vmatpush1.bf16.msra.mxu0 %v4001
    %5922 = vmatprep.subr.bf16.mxu0 %v3990
    %5923 = vmatpush1.bf16.msra.mxu0 %v3989
    %5924 = vmatprep.subr.bf16.mxu0 %v3978
    %5925 = vmatpush1.bf16.msra.mxu0 %v3977
    %5926 = vmatprep.subr.bf16.mxu0 %v3966
    %5927 = vmatpush1.bf16.msra.mxu0 %v3965
    %5928 = vmatprep.subr.bf16.mxu0 %v3954
    %5929 = vmatpush1.bf16.msra.mxu0 %v3953
    %5930 = vmatprep.subr.bf16.mxu0 %v3942
    %5931 = vmatpush1.bf16.msra.mxu0 %v3941
    %5932 = vmatprep.subr.bf16.mxu0 %v3930
    %5933 = vmatpush1.bf16.msra.mxu0 %v3929
    %5934 = vmatprep.subr.bf16.mxu0 %v3918
    %5935 = vmatpush1.bf16.msra.mxu0 %v3917
    %5936 = vmatprep.subr.bf16.mxu0 0
    %5937 = vmatpush2.bf16.msra.mxu0 0
    %5938 = vmatprep.subr.bf16.mxu0 0
    %5939 = vmatpush2.bf16.msra.mxu0 0
    %5940 = vmatprep.subr.bf16.mxu0 0
    %5941 = vmatpush2.bf16.msra.mxu0 0
    %5942 = vmatprep.subr.bf16.mxu0 0
    %5943 = vmatpush2.bf16.msra.mxu0 0
    %5944 = vmatprep.subr.bf16.mxu0 0
    %5945 = vmatpush2.bf16.msra.mxu0 0
    %5946 = vmatprep.subr.bf16.mxu0 0
    %5947 = vmatpush2.bf16.msra.mxu0 0
    %5948 = vmatprep.subr.bf16.mxu0 0
    %5949 = vmatpush2.bf16.msra.mxu0 0
    %5950 = vmatprep.subr.bf16.mxu0 0
    %5951 = vmatpush2.bf16.msra.mxu0 0
    %5952 = vmatprep.mubr.bf16.mxu0 0
    %5953 = vmatmul.mubr.bf16.gmra.mxu0 %v5629
    %v5954 = vpop.f32.mrf.mxu0
    %v5955 = vadd.f32 %v5914, %v5954
    %v5956 = vpop.f32.mrf.mxu0
    %v5957 = vadd.f32 %v5916, %v5956
    %v5958 = vpop.f32.mrf.mxu0
    %v5959 = vpop.f32.mrf.mxu0
    %5960 = vdwg.mxu0
    %5961 = vmatprep.subr.bf16.mxu0 %v3812
    %5962 = vmatpush1.bf16.msra.mxu0 %v3811
    %5963 = vmatprep.subr.bf16.mxu0 %v3800
    %5964 = vmatpush1.bf16.msra.mxu0 %v3799
    %5965 = vmatprep.subr.bf16.mxu0 %v3788
    %5966 = vmatpush1.bf16.msra.mxu0 %v3787
    %5967 = vmatprep.subr.bf16.mxu0 %v3776
    %5968 = vmatpush1.bf16.msra.mxu0 %v3775
    %5969 = vmatprep.subr.bf16.mxu0 %v3764
    %5970 = vmatpush1.bf16.msra.mxu0 %v3763
    %5971 = vmatprep.subr.bf16.mxu0 %v3752
    %5972 = vmatpush1.bf16.msra.mxu0 %v3751
    %5973 = vmatprep.subr.bf16.mxu0 %v3740
    %5974 = vmatpush1.bf16.msra.mxu0 %v3739
    %5975 = vmatprep.subr.bf16.mxu0 %v3728
    %5976 = vmatpush1.bf16.msra.mxu0 %v3727
    %5977 = vmatprep.subr.bf16.mxu0 %v3908
    %5978 = vmatpush2.bf16.msra.mxu0 %v3907
    %5979 = vmatprep.subr.bf16.mxu0 %v3896
    %5980 = vmatpush2.bf16.msra.mxu0 %v3895
    %5981 = vmatprep.subr.bf16.mxu0 %v3884
    %5982 = vmatpush2.bf16.msra.mxu0 %v3883
    %5983 = vmatprep.subr.bf16.mxu0 %v3872
    %5984 = vmatpush2.bf16.msra.mxu0 %v3871
    %5985 = vmatprep.subr.bf16.mxu0 %v3860
    %5986 = vmatpush2.bf16.msra.mxu0 %v3859
    %5987 = vmatprep.subr.bf16.mxu0 %v3848
    %5988 = vmatpush2.bf16.msra.mxu0 %v3847
    %5989 = vmatprep.subr.bf16.mxu0 %v3836
    %5990 = vmatpush2.bf16.msra.mxu0 %v3835
    %5991 = vmatprep.subr.bf16.mxu0 %v3824
    %5992 = vmatpush2.bf16.msra.mxu0 %v3823
    %5993 = vmatprep.mubr.bf16.mxu0 %v5628
    %5994 = vmatmul.mubr.bf16.gmra.mxu0 %v5627
    %v5995 = vpop.f32.mrf.mxu0
    %v5996 = vadd.f32 0.0, %v5995
    %v5997 = vpop.f32.mrf.mxu0
    %v5998 = vadd.f32 0.0, %v5997
    %v5999 = vpop.f32.mrf.mxu0
    %v6000 = vpop.f32.mrf.mxu0
    %6001 = vdwg.mxu0
    %6002 = vmatprep.subr.bf16.mxu0 %v4004
    %6003 = vmatpush1.bf16.msra.mxu0 %v4003
    %6004 = vmatprep.subr.bf16.mxu0 %v3992
    %6005 = vmatpush1.bf16.msra.mxu0 %v3991
    %6006 = vmatprep.subr.bf16.mxu0 %v3980
    %6007 = vmatpush1.bf16.msra.mxu0 %v3979
    %6008 = vmatprep.subr.bf16.mxu0 %v3968
    %6009 = vmatpush1.bf16.msra.mxu0 %v3967
    %6010 = vmatprep.subr.bf16.mxu0 %v3956
    %6011 = vmatpush1.bf16.msra.mxu0 %v3955
    %6012 = vmatprep.subr.bf16.mxu0 %v3944
    %6013 = vmatpush1.bf16.msra.mxu0 %v3943
    %6014 = vmatprep.subr.bf16.mxu0 %v3932
    %6015 = vmatpush1.bf16.msra.mxu0 %v3931
    %6016 = vmatprep.subr.bf16.mxu0 %v3920
    %6017 = vmatpush1.bf16.msra.mxu0 %v3919
    %6018 = vmatprep.subr.bf16.mxu0 0
    %6019 = vmatpush2.bf16.msra.mxu0 0
    %6020 = vmatprep.subr.bf16.mxu0 0
    %6021 = vmatpush2.bf16.msra.mxu0 0
    %6022 = vmatprep.subr.bf16.mxu0 0
    %6023 = vmatpush2.bf16.msra.mxu0 0
    %6024 = vmatprep.subr.bf16.mxu0 0
    %6025 = vmatpush2.bf16.msra.mxu0 0
    %6026 = vmatprep.subr.bf16.mxu0 0
    %6027 = vmatpush2.bf16.msra.mxu0 0
    %6028 = vmatprep.subr.bf16.mxu0 0
    %6029 = vmatpush2.bf16.msra.mxu0 0
    %6030 = vmatprep.subr.bf16.mxu0 0
    %6031 = vmatpush2.bf16.msra.mxu0 0
    %6032 = vmatprep.subr.bf16.mxu0 0
    %6033 = vmatpush2.bf16.msra.mxu0 0
    %6034 = vmatprep.mubr.bf16.mxu0 0
    %6035 = vmatmul.mubr.bf16.gmra.mxu0 %v5629
    %v6036 = vpop.f32.mrf.mxu0
    %v6037 = vadd.f32 %v5996, %v6036
    %v6038 = vpop.f32.mrf.mxu0
    %v6039 = vadd.f32 %v5998, %v6038
    %v6040 = vpop.f32.mrf.mxu0
    %v6041 = vpop.f32.mrf.mxu0
    %6042 = vdwg.mxu0
    %6043 = vmatprep.subr.bf16.mxu0 %v3814
    %6044 = vmatpush1.bf16.msra.mxu0 %v3813
    %6045 = vmatprep.subr.bf16.mxu0 %v3802
    %6046 = vmatpush1.bf16.msra.mxu0 %v3801
    %6047 = vmatprep.subr.bf16.mxu0 %v3790
    %6048 = vmatpush1.bf16.msra.mxu0 %v3789
    %6049 = vmatprep.subr.bf16.mxu0 %v3778
    %6050 = vmatpush1.bf16.msra.mxu0 %v3777
    %6051 = vmatprep.subr.bf16.mxu0 %v3766
    %6052 = vmatpush1.bf16.msra.mxu0 %v3765
    %6053 = vmatprep.subr.bf16.mxu0 %v3754
    %6054 = vmatpush1.bf16.msra.mxu0 %v3753
    %6055 = vmatprep.subr.bf16.mxu0 %v3742
    %6056 = vmatpush1.bf16.msra.mxu0 %v3741
    %6057 = vmatprep.subr.bf16.mxu0 %v3730
    %6058 = vmatpush1.bf16.msra.mxu0 %v3729
    %6059 = vmatprep.subr.bf16.mxu0 %v3910
    %6060 = vmatpush2.bf16.msra.mxu0 %v3909
    %6061 = vmatprep.subr.bf16.mxu0 %v3898
    %6062 = vmatpush2.bf16.msra.mxu0 %v3897
    %6063 = vmatprep.subr.bf16.mxu0 %v3886
    %6064 = vmatpush2.bf16.msra.mxu0 %v3885
    %6065 = vmatprep.subr.bf16.mxu0 %v3874
    %6066 = vmatpush2.bf16.msra.mxu0 %v3873
    %6067 = vmatprep.subr.bf16.mxu0 %v3862
    %6068 = vmatpush2.bf16.msra.mxu0 %v3861
    %6069 = vmatprep.subr.bf16.mxu0 %v3850
    %6070 = vmatpush2.bf16.msra.mxu0 %v3849
    %6071 = vmatprep.subr.bf16.mxu0 %v3838
    %6072 = vmatpush2.bf16.msra.mxu0 %v3837
    %6073 = vmatprep.subr.bf16.mxu0 %v3826
    %6074 = vmatpush2.bf16.msra.mxu0 %v3825
    %6075 = vmatprep.mubr.bf16.mxu0 %v5628
    %6076 = vmatmul.mubr.bf16.gmra.mxu0 %v5627
    %v6077 = vpop.f32.mrf.mxu0
    %v6078 = vadd.f32 0.0, %v6077
    %v6079 = vpop.f32.mrf.mxu0
    %v6080 = vadd.f32 0.0, %v6079
    %v6081 = vpop.f32.mrf.mxu0
    %v6082 = vpop.f32.mrf.mxu0
    %6083 = vdwg.mxu0
    %6084 = vmatprep.subr.bf16.mxu0 %v4006
    %6085 = vmatpush1.bf16.msra.mxu0 %v4005
    %6086 = vmatprep.subr.bf16.mxu0 %v3994
    %6087 = vmatpush1.bf16.msra.mxu0 %v3993
    %6088 = vmatprep.subr.bf16.mxu0 %v3982
    %6089 = vmatpush1.bf16.msra.mxu0 %v3981
    %6090 = vmatprep.subr.bf16.mxu0 %v3970
    %6091 = vmatpush1.bf16.msra.mxu0 %v3969
    %6092 = vmatprep.subr.bf16.mxu0 %v3958
    %6093 = vmatpush1.bf16.msra.mxu0 %v3957
    %6094 = vmatprep.subr.bf16.mxu0 %v3946
    %6095 = vmatpush1.bf16.msra.mxu0 %v3945
    %6096 = vmatprep.subr.bf16.mxu0 %v3934
    %6097 = vmatpush1.bf16.msra.mxu0 %v3933
    %6098 = vmatprep.subr.bf16.mxu0 %v3922
    %6099 = vmatpush1.bf16.msra.mxu0 %v3921
    %6100 = vmatprep.subr.bf16.mxu0 0
    %6101 = vmatpush2.bf16.msra.mxu0 0
    %6102 = vmatprep.subr.bf16.mxu0 0
    %6103 = vmatpush2.bf16.msra.mxu0 0
    %6104 = vmatprep.subr.bf16.mxu0 0
    %6105 = vmatpush2.bf16.msra.mxu0 0
    %6106 = vmatprep.subr.bf16.mxu0 0
    %6107 = vmatpush2.bf16.msra.mxu0 0
    %6108 = vmatprep.subr.bf16.mxu0 0
    %6109 = vmatpush2.bf16.msra.mxu0 0
    %6110 = vmatprep.subr.bf16.mxu0 0
    %6111 = vmatpush2.bf16.msra.mxu0 0
    %6112 = vmatprep.subr.bf16.mxu0 0
    %6113 = vmatpush2.bf16.msra.mxu0 0
    %6114 = vmatprep.subr.bf16.mxu0 0
    %6115 = vmatpush2.bf16.msra.mxu0 0
    %6116 = vmatprep.mubr.bf16.mxu0 0
    %6117 = vmatmul.mubr.bf16.gmra.mxu0 %v5629
    %v6118 = vpop.f32.mrf.mxu0
    %v6119 = vadd.f32 %v6078, %v6118
    %v6120 = vpop.f32.mrf.mxu0
    %v6121 = vadd.f32 %v6080, %v6120
    %v6122 = vpop.f32.mrf.mxu0
    %v6123 = vpop.f32.mrf.mxu0
    %6124 = vdwg.mxu0
    %v6137 = vrot.slane %v5709, 2
    %v6138 = vrot.slane %v5711, 2
    %v6139 = vrot.slane %v5791, 2
    %v6140 = vrot.slane %v5793, 2
    %v6141 = vrot.slane %v5873, 2
    %v6142 = vrot.slane %v5875, 2
    %v6143 = vrot.slane %v5955, 2
    %v6144 = vrot.slane %v5957, 2
    %v6145 = vrot.slane %v6037, 2
    %v6146 = vrot.slane %v6039, 2
    %v6147 = vrot.slane %v6119, 2
    %v6148 = vrot.slane %v6121, 2
    %v6161 = vadd.f32 %v5609, %v6137
    %v6162 = vadd.f32 %v5610, %v6138
    %v6163 = vadd.f32 %v5611, %v6139
    %v6164 = vadd.f32 %v5612, %v6140
    %v6165 = vadd.f32 %v5613, %v6141
    %v6166 = vadd.f32 %v5614, %v6142
    %v6167 = vadd.f32 %v5615, %v6143
    %v6168 = vadd.f32 %v5616, %v6144
    %v6169 = vadd.f32 %v5617, %v6145
    %v6170 = vadd.f32 %v5618, %v6146
    %v6171 = vadd.f32 %v5619, %v6147
    %v6172 = vadd.f32 %v5620, %v6148
    %v6173 = vxor.u32 %v6161, 2147483648
    %v6174 = vxor.u32 %v6162, 2147483648
    %v6175 = vxor.u32 %v6163, 2147483648
    %v6176 = vxor.u32 %v6164, 2147483648
    %v6177 = vxor.u32 %v6165, 2147483648
    %v6178 = vxor.u32 %v6166, 2147483648
    %v6179 = vxor.u32 %v6167, 2147483648
    %v6180 = vxor.u32 %v6168, 2147483648
    %v6181 = vxor.u32 %v6169, 2147483648
    %v6182 = vxor.u32 %v6170, 2147483648
    %v6183 = vxor.u32 %v6171, 2147483648
    %v6184 = vxor.u32 %v6172, 2147483648
    %v6185 = vmul.f32 %v6173, 1.442695
    %v6186 = vpow.pop %v6185
    %v6187 = vmul.f32 %v6174, 1.442695
    %v6188 = vpow.pop %v6187
    %v6189 = vmul.f32 %v6175, 1.442695
    %v6190 = vpow.pop %v6189
    %v6191 = vmul.f32 %v6176, 1.442695
    %v6192 = vpow.pop %v6191
    %v6193 = vmul.f32 %v6177, 1.442695
    %v6194 = vpow.pop %v6193
    %v6195 = vmul.f32 %v6178, 1.442695
    %v6196 = vpow.pop %v6195
    %v6197 = vmul.f32 %v6179, 1.442695
    %v6198 = vpow.pop %v6197
    %v6199 = vmul.f32 %v6180, 1.442695
    %v6200 = vpow.pop %v6199
    %v6201 = vmul.f32 %v6181, 1.442695
    %v6202 = vpow.pop %v6201
    %v6203 = vmul.f32 %v6182, 1.442695
    %v6204 = vpow.pop %v6203
    %v6205 = vmul.f32 %v6183, 1.442695
    %v6206 = vpow.pop %v6205
    %v6207 = vmul.f32 %v6184, 1.442695
    %v6208 = vpow.pop %v6207
    %v6209 = vadd.f32 %v6186, 1.0
    %v6210 = vadd.f32 %v6188, 1.0
    %v6211 = vadd.f32 %v6190, 1.0
    %v6212 = vadd.f32 %v6192, 1.0
    %v6213 = vadd.f32 %v6194, 1.0
    %v6214 = vadd.f32 %v6196, 1.0
    %v6215 = vadd.f32 %v6198, 1.0
    %v6216 = vadd.f32 %v6200, 1.0
    %v6217 = vadd.f32 %v6202, 1.0
    %v6218 = vadd.f32 %v6204, 1.0
    %v6219 = vadd.f32 %v6206, 1.0
    %v6220 = vadd.f32 %v6208, 1.0
    %v6221 = vrcp.pop %v6209
    %v6222 = vmul.f32 1.0, %v6221
    %v6223 = vrcp.pop %v6210
    %v6224 = vmul.f32 1.0, %v6223
    %v6225 = vrcp.pop %v6211
    %v6226 = vmul.f32 1.0, %v6225
    %v6227 = vrcp.pop %v6212
    %v6228 = vmul.f32 1.0, %v6227
    %v6229 = vrcp.pop %v6213
    %v6230 = vmul.f32 1.0, %v6229
    %v6231 = vrcp.pop %v6214
    %v6232 = vmul.f32 1.0, %v6231
    %v6233 = vrcp.pop %v6215
    %v6234 = vmul.f32 1.0, %v6233
    %v6235 = vrcp.pop %v6216
    %v6236 = vmul.f32 1.0, %v6235
    %v6237 = vrcp.pop %v6217
    %v6238 = vmul.f32 1.0, %v6237
    %v6239 = vrcp.pop %v6218
    %v6240 = vmul.f32 1.0, %v6239
    %v6241 = vrcp.pop %v6219
    %v6242 = vmul.f32 1.0, %v6241
    %v6243 = vrcp.pop %v6220
    %v6244 = vmul.f32 1.0, %v6243
    %v6245 = vmul.f32 %v6234, 2.0
    %v6246 = vmul.f32 %v6236, 2.0
    %v6247 = vmul.f32 %v6238, 2.0
    %v6248 = vsub.f32 %v6245, 1.0
    %v6249 = vsub.f32 %v6246, 1.0
    %v6250 = vsub.f32 %v6247, 1.0
    %v6254 = vrot.slane %v5597, 6
    %v6255 = vrot.slane %v5598, 6
    %v6256 = vrot.slane %v5599, 6
    %v6260 = vmul.f32 %v6228, %v6254
    %v6261 = vmul.f32 %v6230, %v6255
    %v6262 = vmul.f32 %v6232, %v6256
    %v6263 = vmul.f32 %v6222, %v6248
    %v6264 = vmul.f32 %v6224, %v6249
    %v6265 = vmul.f32 %v6226, %v6250
    %v6266 = vadd.f32 %v6260, %v6263
    %v6267 = vadd.f32 %v6261, %v6264
    %v6268 = vadd.f32 %v6262, %v6265
    %v6269 = vtanh.pop %v6266
    %v6270 = vtanh.pop %v6267
    %v6271 = vtanh.pop %v6268
    %v6272 = vmul.f32 %v6240, %v6269
    %v6273 = vmul.f32 %v6242, %v6270
    %v6274 = vmul.f32 %v6244, %v6271
    %6275 = vst [vmem:[#allocation14] sm:$0xc0] %v6272
    %6276 = vst [vmem:[#allocation14 + $0x8] sm:$0xc0] %v6273
    %6277 = vst [vmem:[#allocation14 + $0x10] sm:$0xc0] %v6274
    %v6278 = vld [vmem:[#allocation2 + $0x60] sm:$0x3]
    %v6279 = vld [vmem:[#allocation2 + $0x68] sm:$0x3]
    %v6280 = vld [vmem:[#allocation2 + $0x70] sm:$0x3]
    %v6281 = vld [vmem:[#allocation2 + $0x78] sm:$0x3]
    %v6282 = vld [vmem:[#allocation2 + $0x80] sm:$0x3]
    %v6283 = vld [vmem:[#allocation2 + $0x88] sm:$0x3]
    %v6284 = vld [vmem:[#allocation2 + $0x90] sm:$0x3]
    %v6285 = vld [vmem:[#allocation2 + $0x98] sm:$0x3]
    %v6286 = vld [vmem:[#allocation2 + $0xa0] sm:$0x3]
    %v6287 = vld [vmem:[#allocation2 + $0xa8] sm:$0x3]
    %v6288 = vld [vmem:[#allocation2 + $0xb0] sm:$0x3]
    %v6289 = vld [vmem:[#allocation2 + $0xb8] sm:$0x3]
    %v6290 = vpack.c.bf16 %v6272, %v6272
    %v6291 = vpack.c.bf16 %v6273, %v6273
    %v6292 = vpack.c.bf16 %v6274, %v6274
    %v6296 = vrot.slane %v6290, 3
    %v6297 = vrot.slane %v6291, 3
    %v6298 = vrot.slane %v6292, 3
    %6302 = vmatprep.subr.bf16.mxu0 %v3804
    %6303 = vmatpush1.bf16.msra.mxu0 %v3803
    %6304 = vmatprep.subr.bf16.mxu0 %v3792
    %6305 = vmatpush1.bf16.msra.mxu0 %v3791
    %6306 = vmatprep.subr.bf16.mxu0 %v3780
    %6307 = vmatpush1.bf16.msra.mxu0 %v3779
    %6308 = vmatprep.subr.bf16.mxu0 %v3768
    %6309 = vmatpush1.bf16.msra.mxu0 %v3767
    %6310 = vmatprep.subr.bf16.mxu0 %v3756
    %6311 = vmatpush1.bf16.msra.mxu0 %v3755
    %6312 = vmatprep.subr.bf16.mxu0 %v3744
    %6313 = vmatpush1.bf16.msra.mxu0 %v3743
    %6314 = vmatprep.subr.bf16.mxu0 %v3732
    %6315 = vmatpush1.bf16.msra.mxu0 %v3731
    %6316 = vmatprep.subr.bf16.mxu0 %v3720
    %6317 = vmatpush1.bf16.msra.mxu0 %v3719
    %6318 = vmatprep.subr.bf16.mxu0 %v3900
    %6319 = vmatpush2.bf16.msra.mxu0 %v3899
    %6320 = vmatprep.subr.bf16.mxu0 %v3888
    %6321 = vmatpush2.bf16.msra.mxu0 %v3887
    %6322 = vmatprep.subr.bf16.mxu0 %v3876
    %6323 = vmatpush2.bf16.msra.mxu0 %v3875
    %6324 = vmatprep.subr.bf16.mxu0 %v3864
    %6325 = vmatpush2.bf16.msra.mxu0 %v3863
    %6326 = vmatprep.subr.bf16.mxu0 %v3852
    %6327 = vmatpush2.bf16.msra.mxu0 %v3851
    %6328 = vmatprep.subr.bf16.mxu0 %v3840
    %6329 = vmatpush2.bf16.msra.mxu0 %v3839
    %6330 = vmatprep.subr.bf16.mxu0 %v3828
    %6331 = vmatpush2.bf16.msra.mxu0 %v3827
    %6332 = vmatprep.subr.bf16.mxu0 %v3816
    %6333 = vmatpush2.bf16.msra.mxu0 %v3815
    %6334 = vmatprep.mubr.bf16.mxu0 %v6297
    %6335 = vmatmul.mubr.bf16.gmra.mxu0 %v6296
    %v6336 = vpop.f32.mrf.mxu0
    %v6337 = vadd.f32 0.0, %v6336
    %v6338 = vpop.f32.mrf.mxu0
    %v6339 = vadd.f32 0.0, %v6338
    %v6340 = vpop.f32.mrf.mxu0
    %v6341 = vpop.f32.mrf.mxu0
    %6342 = vdwg.mxu0
    %6343 = vmatprep.subr.bf16.mxu0 %v3996
    %6344 = vmatpush1.bf16.msra.mxu0 %v3995
    %6345 = vmatprep.subr.bf16.mxu0 %v3984
    %6346 = vmatpush1.bf16.msra.mxu0 %v3983
    %6347 = vmatprep.subr.bf16.mxu0 %v3972
    %6348 = vmatpush1.bf16.msra.mxu0 %v3971
    %6349 = vmatprep.subr.bf16.mxu0 %v3960
    %6350 = vmatpush1.bf16.msra.mxu0 %v3959
    %6351 = vmatprep.subr.bf16.mxu0 %v3948
    %6352 = vmatpush1.bf16.msra.mxu0 %v3947
    %6353 = vmatprep.subr.bf16.mxu0 %v3936
    %6354 = vmatpush1.bf16.msra.mxu0 %v3935
    %6355 = vmatprep.subr.bf16.mxu0 %v3924
    %6356 = vmatpush1.bf16.msra.mxu0 %v3923
    %6357 = vmatprep.subr.bf16.mxu0 %v3912
    %6358 = vmatpush1.bf16.msra.mxu0 %v3911
    %6359 = vmatprep.subr.bf16.mxu0 0
    %6360 = vmatpush2.bf16.msra.mxu0 0
    %6361 = vmatprep.subr.bf16.mxu0 0
    %6362 = vmatpush2.bf16.msra.mxu0 0
    %6363 = vmatprep.subr.bf16.mxu0 0
    %6364 = vmatpush2.bf16.msra.mxu0 0
    %6365 = vmatprep.subr.bf16.mxu0 0
    %6366 = vmatpush2.bf16.msra.mxu0 0
    %6367 = vmatprep.subr.bf16.mxu0 0
    %6368 = vmatpush2.bf16.msra.mxu0 0
    %6369 = vmatprep.subr.bf16.mxu0 0
    %6370 = vmatpush2.bf16.msra.mxu0 0
    %6371 = vmatprep.subr.bf16.mxu0 0
    %6372 = vmatpush2.bf16.msra.mxu0 0
    %6373 = vmatprep.subr.bf16.mxu0 0
    %6374 = vmatpush2.bf16.msra.mxu0 0
    %6375 = vmatprep.mubr.bf16.mxu0 0
    %6376 = vmatmul.mubr.bf16.gmra.mxu0 %v6298
    %v6377 = vpop.f32.mrf.mxu0
    %v6378 = vadd.f32 %v6337, %v6377
    %v6379 = vpop.f32.mrf.mxu0
    %v6380 = vadd.f32 %v6339, %v6379
    %v6381 = vpop.f32.mrf.mxu0
    %v6382 = vpop.f32.mrf.mxu0
    %6383 = vdwg.mxu0
    %6384 = vmatprep.subr.bf16.mxu0 %v3806
    %6385 = vmatpush1.bf16.msra.mxu0 %v3805
    %6386 = vmatprep.subr.bf16.mxu0 %v3794
    %6387 = vmatpush1.bf16.msra.mxu0 %v3793
    %6388 = vmatprep.subr.bf16.mxu0 %v3782
    %6389 = vmatpush1.bf16.msra.mxu0 %v3781
    %6390 = vmatprep.subr.bf16.mxu0 %v3770
    %6391 = vmatpush1.bf16.msra.mxu0 %v3769
    %6392 = vmatprep.subr.bf16.mxu0 %v3758
    %6393 = vmatpush1.bf16.msra.mxu0 %v3757
    %6394 = vmatprep.subr.bf16.mxu0 %v3746
    %6395 = vmatpush1.bf16.msra.mxu0 %v3745
    %6396 = vmatprep.subr.bf16.mxu0 %v3734
    %6397 = vmatpush1.bf16.msra.mxu0 %v3733
    %6398 = vmatprep.subr.bf16.mxu0 %v3722
    %6399 = vmatpush1.bf16.msra.mxu0 %v3721
    %6400 = vmatprep.subr.bf16.mxu0 %v3902
    %6401 = vmatpush2.bf16.msra.mxu0 %v3901
    %6402 = vmatprep.subr.bf16.mxu0 %v3890
    %6403 = vmatpush2.bf16.msra.mxu0 %v3889
    %6404 = vmatprep.subr.bf16.mxu0 %v3878
    %6405 = vmatpush2.bf16.msra.mxu0 %v3877
    %6406 = vmatprep.subr.bf16.mxu0 %v3866
    %6407 = vmatpush2.bf16.msra.mxu0 %v3865
    %6408 = vmatprep.subr.bf16.mxu0 %v3854
    %6409 = vmatpush2.bf16.msra.mxu0 %v3853
    %6410 = vmatprep.subr.bf16.mxu0 %v3842
    %6411 = vmatpush2.bf16.msra.mxu0 %v3841
    %6412 = vmatprep.subr.bf16.mxu0 %v3830
    %6413 = vmatpush2.bf16.msra.mxu0 %v3829
    %6414 = vmatprep.subr.bf16.mxu0 %v3818
    %6415 = vmatpush2.bf16.msra.mxu0 %v3817
    %6416 = vmatprep.mubr.bf16.mxu0 %v6297
    %6417 = vmatmul.mubr.bf16.gmra.mxu0 %v6296
    %v6418 = vpop.f32.mrf.mxu0
    %v6419 = vadd.f32 0.0, %v6418
    %v6420 = vpop.f32.mrf.mxu0
    %v6421 = vadd.f32 0.0, %v6420
    %v6422 = vpop.f32.mrf.mxu0
    %v6423 = vpop.f32.mrf.mxu0
    %6424 = vdwg.mxu0
    %6425 = vmatprep.subr.bf16.mxu0 %v3998
    %6426 = vmatpush1.bf16.msra.mxu0 %v3997
    %6427 = vmatprep.subr.bf16.mxu0 %v3986
    %6428 = vmatpush1.bf16.msra.mxu0 %v3985
    %6429 = vmatprep.subr.bf16.mxu0 %v3974
    %6430 = vmatpush1.bf16.msra.mxu0 %v3973
    %6431 = vmatprep.subr.bf16.mxu0 %v3962
    %6432 = vmatpush1.bf16.msra.mxu0 %v3961
    %6433 = vmatprep.subr.bf16.mxu0 %v3950
    %6434 = vmatpush1.bf16.msra.mxu0 %v3949
    %6435 = vmatprep.subr.bf16.mxu0 %v3938
    %6436 = vmatpush1.bf16.msra.mxu0 %v3937
    %6437 = vmatprep.subr.bf16.mxu0 %v3926
    %6438 = vmatpush1.bf16.msra.mxu0 %v3925
    %6439 = vmatprep.subr.bf16.mxu0 %v3914
    %6440 = vmatpush1.bf16.msra.mxu0 %v3913
    %6441 = vmatprep.subr.bf16.mxu0 0
    %6442 = vmatpush2.bf16.msra.mxu0 0
    %6443 = vmatprep.subr.bf16.mxu0 0
    %6444 = vmatpush2.bf16.msra.mxu0 0
    %6445 = vmatprep.subr.bf16.mxu0 0
    %6446 = vmatpush2.bf16.msra.mxu0 0
    %6447 = vmatprep.subr.bf16.mxu0 0
    %6448 = vmatpush2.bf16.msra.mxu0 0
    %6449 = vmatprep.subr.bf16.mxu0 0
    %6450 = vmatpush2.bf16.msra.mxu0 0
    %6451 = vmatprep.subr.bf16.mxu0 0
    %6452 = vmatpush2.bf16.msra.mxu0 0
    %6453 = vmatprep.subr.bf16.mxu0 0
    %6454 = vmatpush2.bf16.msra.mxu0 0
    %6455 = vmatprep.subr.bf16.mxu0 0
    %6456 = vmatpush2.bf16.msra.mxu0 0
    %6457 = vmatprep.mubr.bf16.mxu0 0
    %6458 = vmatmul.mubr.bf16.gmra.mxu0 %v6298
    %v6459 = vpop.f32.mrf.mxu0
    %v6460 = vadd.f32 %v6419, %v6459
    %v6461 = vpop.f32.mrf.mxu0
    %v6462 = vadd.f32 %v6421, %v6461
    %v6463 = vpop.f32.mrf.mxu0
    %v6464 = vpop.f32.mrf.mxu0
    %6465 = vdwg.mxu0
    %6466 = vmatprep.subr.bf16.mxu0 %v3808
    %6467 = vmatpush1.bf16.msra.mxu0 %v3807
    %6468 = vmatprep.subr.bf16.mxu0 %v3796
    %6469 = vmatpush1.bf16.msra.mxu0 %v3795
    %6470 = vmatprep.subr.bf16.mxu0 %v3784
    %6471 = vmatpush1.bf16.msra.mxu0 %v3783
    %6472 = vmatprep.subr.bf16.mxu0 %v3772
    %6473 = vmatpush1.bf16.msra.mxu0 %v3771
    %6474 = vmatprep.subr.bf16.mxu0 %v3760
    %6475 = vmatpush1.bf16.msra.mxu0 %v3759
    %6476 = vmatprep.subr.bf16.mxu0 %v3748
    %6477 = vmatpush1.bf16.msra.mxu0 %v3747
    %6478 = vmatprep.subr.bf16.mxu0 %v3736
    %6479 = vmatpush1.bf16.msra.mxu0 %v3735
    %6480 = vmatprep.subr.bf16.mxu0 %v3724
    %6481 = vmatpush1.bf16.msra.mxu0 %v3723
    %6482 = vmatprep.subr.bf16.mxu0 %v3904
    %6483 = vmatpush2.bf16.msra.mxu0 %v3903
    %6484 = vmatprep.subr.bf16.mxu0 %v3892
    %6485 = vmatpush2.bf16.msra.mxu0 %v3891
    %6486 = vmatprep.subr.bf16.mxu0 %v3880
    %6487 = vmatpush2.bf16.msra.mxu0 %v3879
    %6488 = vmatprep.subr.bf16.mxu0 %v3868
    %6489 = vmatpush2.bf16.msra.mxu0 %v3867
    %6490 = vmatprep.subr.bf16.mxu0 %v3856
    %6491 = vmatpush2.bf16.msra.mxu0 %v3855
    %6492 = vmatprep.subr.bf16.mxu0 %v3844
    %6493 = vmatpush2.bf16.msra.mxu0 %v3843
    %6494 = vmatprep.subr.bf16.mxu0 %v3832
    %6495 = vmatpush2.bf16.msra.mxu0 %v3831
    %6496 = vmatprep.subr.bf16.mxu0 %v3820
    %6497 = vmatpush2.bf16.msra.mxu0 %v3819
    %6498 = vmatprep.mubr.bf16.mxu0 %v6297
    %6499 = vmatmul.mubr.bf16.gmra.mxu0 %v6296
    %v6500 = vpop.f32.mrf.mxu0
    %v6501 = vadd.f32 0.0, %v6500
    %v6502 = vpop.f32.mrf.mxu0
    %v6503 = vadd.f32 0.0, %v6502
    %v6504 = vpop.f32.mrf.mxu0
    %v6505 = vpop.f32.mrf.mxu0
    %6506 = vdwg.mxu0
    %6507 = vmatprep.subr.bf16.mxu0 %v4000
    %6508 = vmatpush1.bf16.msra.mxu0 %v3999
    %6509 = vmatprep.subr.bf16.mxu0 %v3988
    %6510 = vmatpush1.bf16.msra.mxu0 %v3987
    %6511 = vmatprep.subr.bf16.mxu0 %v3976
    %6512 = vmatpush1.bf16.msra.mxu0 %v3975
    %6513 = vmatprep.subr.bf16.mxu0 %v3964
    %6514 = vmatpush1.bf16.msra.mxu0 %v3963
    %6515 = vmatprep.subr.bf16.mxu0 %v3952
    %6516 = vmatpush1.bf16.msra.mxu0 %v3951
    %6517 = vmatprep.subr.bf16.mxu0 %v3940
    %6518 = vmatpush1.bf16.msra.mxu0 %v3939
    %6519 = vmatprep.subr.bf16.mxu0 %v3928
    %6520 = vmatpush1.bf16.msra.mxu0 %v3927
    %6521 = vmatprep.subr.bf16.mxu0 %v3916
    %6522 = vmatpush1.bf16.msra.mxu0 %v3915
    %6523 = vmatprep.subr.bf16.mxu0 0
    %6524 = vmatpush2.bf16.msra.mxu0 0
    %6525 = vmatprep.subr.bf16.mxu0 0
    %6526 = vmatpush2.bf16.msra.mxu0 0
    %6527 = vmatprep.subr.bf16.mxu0 0
    %6528 = vmatpush2.bf16.msra.mxu0 0
    %6529 = vmatprep.subr.bf16.mxu0 0
    %6530 = vmatpush2.bf16.msra.mxu0 0
    %6531 = vmatprep.subr.bf16.mxu0 0
    %6532 = vmatpush2.bf16.msra.mxu0 0
    %6533 = vmatprep.subr.bf16.mxu0 0
    %6534 = vmatpush2.bf16.msra.mxu0 0
    %6535 = vmatprep.subr.bf16.mxu0 0
    %6536 = vmatpush2.bf16.msra.mxu0 0
    %6537 = vmatprep.subr.bf16.mxu0 0
    %6538 = vmatpush2.bf16.msra.mxu0 0
    %6539 = vmatprep.mubr.bf16.mxu0 0
    %6540 = vmatmul.mubr.bf16.gmra.mxu0 %v6298
    %v6541 = vpop.f32.mrf.mxu0
    %v6542 = vadd.f32 %v6501, %v6541
    %v6543 = vpop.f32.mrf.mxu0
    %v6544 = vadd.f32 %v6503, %v6543
    %v6545 = vpop.f32.mrf.mxu0
    %v6546 = vpop.f32.mrf.mxu0
    %6547 = vdwg.mxu0
    %6548 = vmatprep.subr.bf16.mxu0 %v3810
    %6549 = vmatpush1.bf16.msra.mxu0 %v3809
    %6550 = vmatprep.subr.bf16.mxu0 %v3798
    %6551 = vmatpush1.bf16.msra.mxu0 %v3797
    %6552 = vmatprep.subr.bf16.mxu0 %v3786
    %6553 = vmatpush1.bf16.msra.mxu0 %v3785
    %6554 = vmatprep.subr.bf16.mxu0 %v3774
    %6555 = vmatpush1.bf16.msra.mxu0 %v3773
    %6556 = vmatprep.subr.bf16.mxu0 %v3762
    %6557 = vmatpush1.bf16.msra.mxu0 %v3761
    %6558 = vmatprep.subr.bf16.mxu0 %v3750
    %6559 = vmatpush1.bf16.msra.mxu0 %v3749
    %6560 = vmatprep.subr.bf16.mxu0 %v3738
    %6561 = vmatpush1.bf16.msra.mxu0 %v3737
    %6562 = vmatprep.subr.bf16.mxu0 %v3726
    %6563 = vmatpush1.bf16.msra.mxu0 %v3725
    %6564 = vmatprep.subr.bf16.mxu0 %v3906
    %6565 = vmatpush2.bf16.msra.mxu0 %v3905
    %6566 = vmatprep.subr.bf16.mxu0 %v3894
    %6567 = vmatpush2.bf16.msra.mxu0 %v3893
    %6568 = vmatprep.subr.bf16.mxu0 %v3882
    %6569 = vmatpush2.bf16.msra.mxu0 %v3881
    %6570 = vmatprep.subr.bf16.mxu0 %v3870
    %6571 = vmatpush2.bf16.msra.mxu0 %v3869
    %6572 = vmatprep.subr.bf16.mxu0 %v3858
    %6573 = vmatpush2.bf16.msra.mxu0 %v3857
    %6574 = vmatprep.subr.bf16.mxu0 %v3846
    %6575 = vmatpush2.bf16.msra.mxu0 %v3845
    %6576 = vmatprep.subr.bf16.mxu0 %v3834
    %6577 = vmatpush2.bf16.msra.mxu0 %v3833
    %6578 = vmatprep.subr.bf16.mxu0 %v3822
    %6579 = vmatpush2.bf16.msra.mxu0 %v3821
    %6580 = vmatprep.mubr.bf16.mxu0 %v6297
    %6581 = vmatmul.mubr.bf16.gmra.mxu0 %v6296
    %v6582 = vpop.f32.mrf.mxu0
    %v6583 = vadd.f32 0.0, %v6582
    %v6584 = vpop.f32.mrf.mxu0
    %v6585 = vadd.f32 0.0, %v6584
    %v6586 = vpop.f32.mrf.mxu0
    %v6587 = vpop.f32.mrf.mxu0
    %6588 = vdwg.mxu0
    %6589 = vmatprep.subr.bf16.mxu0 %v4002
    %6590 = vmatpush1.bf16.msra.mxu0 %v4001
    %6591 = vmatprep.subr.bf16.mxu0 %v3990
    %6592 = vmatpush1.bf16.msra.mxu0 %v3989
    %6593 = vmatprep.subr.bf16.mxu0 %v3978
    %6594 = vmatpush1.bf16.msra.mxu0 %v3977
    %6595 = vmatprep.subr.bf16.mxu0 %v3966
    %6596 = vmatpush1.bf16.msra.mxu0 %v3965
    %6597 = vmatprep.subr.bf16.mxu0 %v3954
    %6598 = vmatpush1.bf16.msra.mxu0 %v3953
    %6599 = vmatprep.subr.bf16.mxu0 %v3942
    %6600 = vmatpush1.bf16.msra.mxu0 %v3941
    %6601 = vmatprep.subr.bf16.mxu0 %v3930
    %6602 = vmatpush1.bf16.msra.mxu0 %v3929
    %6603 = vmatprep.subr.bf16.mxu0 %v3918
    %6604 = vmatpush1.bf16.msra.mxu0 %v3917
    %6605 = vmatprep.subr.bf16.mxu0 0
    %6606 = vmatpush2.bf16.msra.mxu0 0
    %6607 = vmatprep.subr.bf16.mxu0 0
    %6608 = vmatpush2.bf16.msra.mxu0 0
    %6609 = vmatprep.subr.bf16.mxu0 0
    %6610 = vmatpush2.bf16.msra.mxu0 0
    %6611 = vmatprep.subr.bf16.mxu0 0
    %6612 = vmatpush2.bf16.msra.mxu0 0
    %6613 = vmatprep.subr.bf16.mxu0 0
    %6614 = vmatpush2.bf16.msra.mxu0 0
    %6615 = vmatprep.subr.bf16.mxu0 0
    %6616 = vmatpush2.bf16.msra.mxu0 0
    %6617 = vmatprep.subr.bf16.mxu0 0
    %6618 = vmatpush2.bf16.msra.mxu0 0
    %6619 = vmatprep.subr.bf16.mxu0 0
    %6620 = vmatpush2.bf16.msra.mxu0 0
    %6621 = vmatprep.mubr.bf16.mxu0 0
    %6622 = vmatmul.mubr.bf16.gmra.mxu0 %v6298
    %v6623 = vpop.f32.mrf.mxu0
    %v6624 = vadd.f32 %v6583, %v6623
    %v6625 = vpop.f32.mrf.mxu0
    %v6626 = vadd.f32 %v6585, %v6625
    %v6627 = vpop.f32.mrf.mxu0
    %v6628 = vpop.f32.mrf.mxu0
    %6629 = vdwg.mxu0
    %6630 = vmatprep.subr.bf16.mxu0 %v3812
    %6631 = vmatpush1.bf16.msra.mxu0 %v3811
    %6632 = vmatprep.subr.bf16.mxu0 %v3800
    %6633 = vmatpush1.bf16.msra.mxu0 %v3799
    %6634 = vmatprep.subr.bf16.mxu0 %v3788
    %6635 = vmatpush1.bf16.msra.mxu0 %v3787
    %6636 = vmatprep.subr.bf16.mxu0 %v3776
    %6637 = vmatpush1.bf16.msra.mxu0 %v3775
    %6638 = vmatprep.subr.bf16.mxu0 %v3764
    %6639 = vmatpush1.bf16.msra.mxu0 %v3763
    %6640 = vmatprep.subr.bf16.mxu0 %v3752
    %6641 = vmatpush1.bf16.msra.mxu0 %v3751
    %6642 = vmatprep.subr.bf16.mxu0 %v3740
    %6643 = vmatpush1.bf16.msra.mxu0 %v3739
    %6644 = vmatprep.subr.bf16.mxu0 %v3728
    %6645 = vmatpush1.bf16.msra.mxu0 %v3727
    %6646 = vmatprep.subr.bf16.mxu0 %v3908
    %6647 = vmatpush2.bf16.msra.mxu0 %v3907
    %6648 = vmatprep.subr.bf16.mxu0 %v3896
    %6649 = vmatpush2.bf16.msra.mxu0 %v3895
    %6650 = vmatprep.subr.bf16.mxu0 %v3884
    %6651 = vmatpush2.bf16.msra.mxu0 %v3883
    %6652 = vmatprep.subr.bf16.mxu0 %v3872
    %6653 = vmatpush2.bf16.msra.mxu0 %v3871
    %6654 = vmatprep.subr.bf16.mxu0 %v3860
    %6655 = vmatpush2.bf16.msra.mxu0 %v3859
    %6656 = vmatprep.subr.bf16.mxu0 %v3848
    %6657 = vmatpush2.bf16.msra.mxu0 %v3847
    %6658 = vmatprep.subr.bf16.mxu0 %v3836
    %6659 = vmatpush2.bf16.msra.mxu0 %v3835
    %6660 = vmatprep.subr.bf16.mxu0 %v3824
    %6661 = vmatpush2.bf16.msra.mxu0 %v3823
    %6662 = vmatprep.mubr.bf16.mxu0 %v6297
    %6663 = vmatmul.mubr.bf16.gmra.mxu0 %v6296
    %v6664 = vpop.f32.mrf.mxu0
    %v6665 = vadd.f32 0.0, %v6664
    %v6666 = vpop.f32.mrf.mxu0
    %v6667 = vadd.f32 0.0, %v6666
    %v6668 = vpop.f32.mrf.mxu0
    %v6669 = vpop.f32.mrf.mxu0
    %6670 = vdwg.mxu0
    %6671 = vmatprep.subr.bf16.mxu0 %v4004
    %6672 = vmatpush1.bf16.msra.mxu0 %v4003
    %6673 = vmatprep.subr.bf16.mxu0 %v3992
    %6674 = vmatpush1.bf16.msra.mxu0 %v3991
    %6675 = vmatprep.subr.bf16.mxu0 %v3980
    %6676 = vmatpush1.bf16.msra.mxu0 %v3979
    %6677 = vmatprep.subr.bf16.mxu0 %v3968
    %6678 = vmatpush1.bf16.msra.mxu0 %v3967
    %6679 = vmatprep.subr.bf16.mxu0 %v3956
    %6680 = vmatpush1.bf16.msra.mxu0 %v3955
    %6681 = vmatprep.subr.bf16.mxu0 %v3944
    %6682 = vmatpush1.bf16.msra.mxu0 %v3943
    %6683 = vmatprep.subr.bf16.mxu0 %v3932
    %6684 = vmatpush1.bf16.msra.mxu0 %v3931
    %6685 = vmatprep.subr.bf16.mxu0 %v3920
    %6686 = vmatpush1.bf16.msra.mxu0 %v3919
    %6687 = vmatprep.subr.bf16.mxu0 0
    %6688 = vmatpush2.bf16.msra.mxu0 0
    %6689 = vmatprep.subr.bf16.mxu0 0
    %6690 = vmatpush2.bf16.msra.mxu0 0
    %6691 = vmatprep.subr.bf16.mxu0 0
    %6692 = vmatpush2.bf16.msra.mxu0 0
    %6693 = vmatprep.subr.bf16.mxu0 0
    %6694 = vmatpush2.bf16.msra.mxu0 0
    %6695 = vmatprep.subr.bf16.mxu0 0
    %6696 = vmatpush2.bf16.msra.mxu0 0
    %6697 = vmatprep.subr.bf16.mxu0 0
    %6698 = vmatpush2.bf16.msra.mxu0 0
    %6699 = vmatprep.subr.bf16.mxu0 0
    %6700 = vmatpush2.bf16.msra.mxu0 0
    %6701 = vmatprep.subr.bf16.mxu0 0
    %6702 = vmatpush2.bf16.msra.mxu0 0
    %6703 = vmatprep.mubr.bf16.mxu0 0
    %6704 = vmatmul.mubr.bf16.gmra.mxu0 %v6298
    %v6705 = vpop.f32.mrf.mxu0
    %v6706 = vadd.f32 %v6665, %v6705
    %v6707 = vpop.f32.mrf.mxu0
    %v6708 = vadd.f32 %v6667, %v6707
    %v6709 = vpop.f32.mrf.mxu0
    %v6710 = vpop.f32.mrf.mxu0
    %6711 = vdwg.mxu0
    %6712 = vmatprep.subr.bf16.mxu0 %v3814
    %6713 = vmatpush1.bf16.msra.mxu0 %v3813
    %6714 = vmatprep.subr.bf16.mxu0 %v3802
    %6715 = vmatpush1.bf16.msra.mxu0 %v3801
    %6716 = vmatprep.subr.bf16.mxu0 %v3790
    %6717 = vmatpush1.bf16.msra.mxu0 %v3789
    %6718 = vmatprep.subr.bf16.mxu0 %v3778
    %6719 = vmatpush1.bf16.msra.mxu0 %v3777
    %6720 = vmatprep.subr.bf16.mxu0 %v3766
    %6721 = vmatpush1.bf16.msra.mxu0 %v3765
    %6722 = vmatprep.subr.bf16.mxu0 %v3754
    %6723 = vmatpush1.bf16.msra.mxu0 %v3753
    %6724 = vmatprep.subr.bf16.mxu0 %v3742
    %6725 = vmatpush1.bf16.msra.mxu0 %v3741
    %6726 = vmatprep.subr.bf16.mxu0 %v3730
    %6727 = vmatpush1.bf16.msra.mxu0 %v3729
    %6728 = vmatprep.subr.bf16.mxu0 %v3910
    %6729 = vmatpush2.bf16.msra.mxu0 %v3909
    %6730 = vmatprep.subr.bf16.mxu0 %v3898
    %6731 = vmatpush2.bf16.msra.mxu0 %v3897
    %6732 = vmatprep.subr.bf16.mxu0 %v3886
    %6733 = vmatpush2.bf16.msra.mxu0 %v3885
    %6734 = vmatprep.subr.bf16.mxu0 %v3874
    %6735 = vmatpush2.bf16.msra.mxu0 %v3873
    %6736 = vmatprep.subr.bf16.mxu0 %v3862
    %6737 = vmatpush2.bf16.msra.mxu0 %v3861
    %6738 = vmatprep.subr.bf16.mxu0 %v3850
    %6739 = vmatpush2.bf16.msra.mxu0 %v3849
    %6740 = vmatprep.subr.bf16.mxu0 %v3838
    %6741 = vmatpush2.bf16.msra.mxu0 %v3837
    %6742 = vmatprep.subr.bf16.mxu0 %v3826
    %6743 = vmatpush2.bf16.msra.mxu0 %v3825
    %6744 = vmatprep.mubr.bf16.mxu0 %v6297
    %6745 = vmatmul.mubr.bf16.gmra.mxu0 %v6296
    %v6746 = vpop.f32.mrf.mxu0
    %v6747 = vadd.f32 0.0, %v6746
    %v6748 = vpop.f32.mrf.mxu0
    %v6749 = vadd.f32 0.0, %v6748
    %v6750 = vpop.f32.mrf.mxu0
    %v6751 = vpop.f32.mrf.mxu0
    %6752 = vdwg.mxu0
    %6753 = vmatprep.subr.bf16.mxu0 %v4006
    %6754 = vmatpush1.bf16.msra.mxu0 %v4005
    %6755 = vmatprep.subr.bf16.mxu0 %v3994
    %6756 = vmatpush1.bf16.msra.mxu0 %v3993
    %6757 = vmatprep.subr.bf16.mxu0 %v3982
    %6758 = vmatpush1.bf16.msra.mxu0 %v3981
    %6759 = vmatprep.subr.bf16.mxu0 %v3970
    %6760 = vmatpush1.bf16.msra.mxu0 %v3969
    %6761 = vmatprep.subr.bf16.mxu0 %v3958
    %6762 = vmatpush1.bf16.msra.mxu0 %v3957
    %6763 = vmatprep.subr.bf16.mxu0 %v3946
    %6764 = vmatpush1.bf16.msra.mxu0 %v3945
    %6765 = vmatprep.subr.bf16.mxu0 %v3934
    %6766 = vmatpush1.bf16.msra.mxu0 %v3933
    %6767 = vmatprep.subr.bf16.mxu0 %v3922
    %6768 = vmatpush1.bf16.msra.mxu0 %v3921
    %6769 = vmatprep.subr.bf16.mxu0 0
    %6770 = vmatpush2.bf16.msra.mxu0 0
    %6771 = vmatprep.subr.bf16.mxu0 0
    %6772 = vmatpush2.bf16.msra.mxu0 0
    %6773 = vmatprep.subr.bf16.mxu0 0
    %6774 = vmatpush2.bf16.msra.mxu0 0
    %6775 = vmatprep.subr.bf16.mxu0 0
    %6776 = vmatpush2.bf16.msra.mxu0 0
    %6777 = vmatprep.subr.bf16.mxu0 0
    %6778 = vmatpush2.bf16.msra.mxu0 0
    %6779 = vmatprep.subr.bf16.mxu0 0
    %6780 = vmatpush2.bf16.msra.mxu0 0
    %6781 = vmatprep.subr.bf16.mxu0 0
    %6782 = vmatpush2.bf16.msra.mxu0 0
    %6783 = vmatprep.subr.bf16.mxu0 0
    %6784 = vmatpush2.bf16.msra.mxu0 0
    %6785 = vmatprep.mubr.bf16.mxu0 0
    %6786 = vmatmul.mubr.bf16.gmra.mxu0 %v6298
    %v6787 = vpop.f32.mrf.mxu0
    %v6788 = vadd.f32 %v6747, %v6787
    %v6789 = vpop.f32.mrf.mxu0
    %v6790 = vadd.f32 %v6749, %v6789
    %v6791 = vpop.f32.mrf.mxu0
    %v6792 = vpop.f32.mrf.mxu0
    %6793 = vdwg.mxu0
    %v6794 = vadd.f32 %v6278, %v6378
    %v6795 = vadd.f32 %v6279, %v6380
    %v6796 = vadd.f32 %v6280, %v6460
    %v6797 = vadd.f32 %v6281, %v6462
    %v6798 = vadd.f32 %v6282, %v6542
    %v6799 = vadd.f32 %v6283, %v6544
    %v6800 = vadd.f32 %v6284, %v6624
    %v6801 = vadd.f32 %v6285, %v6626
    %v6802 = vadd.f32 %v6286, %v6706
    %v6803 = vadd.f32 %v6287, %v6708
    %v6804 = vadd.f32 %v6288, %v6788
    %v6805 = vadd.f32 %v6289, %v6790
    %v6806 = vxor.u32 %v6794, 2147483648
    %v6807 = vxor.u32 %v6795, 2147483648
    %v6808 = vxor.u32 %v6796, 2147483648
    %v6809 = vxor.u32 %v6797, 2147483648
    %v6810 = vxor.u32 %v6798, 2147483648
    %v6811 = vxor.u32 %v6799, 2147483648
    %v6812 = vxor.u32 %v6800, 2147483648
    %v6813 = vxor.u32 %v6801, 2147483648
    %v6814 = vxor.u32 %v6802, 2147483648
    %v6815 = vxor.u32 %v6803, 2147483648
    %v6816 = vxor.u32 %v6804, 2147483648
    %v6817 = vxor.u32 %v6805, 2147483648
    %v6818 = vmul.f32 %v6806, 1.442695
    %v6819 = vpow.pop %v6818
    %v6820 = vmul.f32 %v6807, 1.442695
    %v6821 = vpow.pop %v6820
    %v6822 = vmul.f32 %v6808, 1.442695
    %v6823 = vpow.pop %v6822
    %v6824 = vmul.f32 %v6809, 1.442695
    %v6825 = vpow.pop %v6824
    %v6826 = vmul.f32 %v6810, 1.442695
    %v6827 = vpow.pop %v6826
    %v6828 = vmul.f32 %v6811, 1.442695
    %v6829 = vpow.pop %v6828
    %v6830 = vmul.f32 %v6812, 1.442695
    %v6831 = vpow.pop %v6830
    %v6832 = vmul.f32 %v6813, 1.442695
    %v6833 = vpow.pop %v6832
    %v6834 = vmul.f32 %v6814, 1.442695
    %v6835 = vpow.pop %v6834
    %v6836 = vmul.f32 %v6815, 1.442695
    %v6837 = vpow.pop %v6836
    %v6838 = vmul.f32 %v6816, 1.442695
    %v6839 = vpow.pop %v6838
    %v6840 = vmul.f32 %v6817, 1.442695
    %v6841 = vpow.pop %v6840
    %v6842 = vadd.f32 %v6819, 1.0
    %v6843 = vadd.f32 %v6821, 1.0
    %v6844 = vadd.f32 %v6823, 1.0
    %v6845 = vadd.f32 %v6825, 1.0
    %v6846 = vadd.f32 %v6827, 1.0
    %v6847 = vadd.f32 %v6829, 1.0
    %v6848 = vadd.f32 %v6831, 1.0
    %v6849 = vadd.f32 %v6833, 1.0
    %v6850 = vadd.f32 %v6835, 1.0
    %v6851 = vadd.f32 %v6837, 1.0
    %v6852 = vadd.f32 %v6839, 1.0
    %v6853 = vadd.f32 %v6841, 1.0
    %v6854 = vrcp.pop %v6842
    %v6855 = vmul.f32 1.0, %v6854
    %v6856 = vrcp.pop %v6843
    %v6857 = vmul.f32 1.0, %v6856
    %v6858 = vrcp.pop %v6844
    %v6859 = vmul.f32 1.0, %v6858
    %v6860 = vrcp.pop %v6845
    %v6861 = vmul.f32 1.0, %v6860
    %v6862 = vrcp.pop %v6846
    %v6863 = vmul.f32 1.0, %v6862
    %v6864 = vrcp.pop %v6847
    %v6865 = vmul.f32 1.0, %v6864
    %v6866 = vrcp.pop %v6848
    %v6867 = vmul.f32 1.0, %v6866
    %v6868 = vrcp.pop %v6849
    %v6869 = vmul.f32 1.0, %v6868
    %v6870 = vrcp.pop %v6850
    %v6871 = vmul.f32 1.0, %v6870
    %v6872 = vrcp.pop %v6851
    %v6873 = vmul.f32 1.0, %v6872
    %v6874 = vrcp.pop %v6852
    %v6875 = vmul.f32 1.0, %v6874
    %v6876 = vrcp.pop %v6853
    %v6877 = vmul.f32 1.0, %v6876
    %v6878 = vmul.f32 %v6867, 2.0
    %v6879 = vmul.f32 %v6869, 2.0
    %v6880 = vmul.f32 %v6871, 2.0
    %v6881 = vsub.f32 %v6878, 1.0
    %v6882 = vsub.f32 %v6879, 1.0
    %v6883 = vsub.f32 %v6880, 1.0
    %v6887 = vrot.slane %v6266, 6
    %v6888 = vrot.slane %v6267, 6
    %v6889 = vrot.slane %v6268, 6
    %v6893 = vmul.f32 %v6861, %v6887
    %v6894 = vmul.f32 %v6863, %v6888
    %v6895 = vmul.f32 %v6865, %v6889
    %v6896 = vmul.f32 %v6855, %v6881
    %v6897 = vmul.f32 %v6857, %v6882
    %v6898 = vmul.f32 %v6859, %v6883
    %v6899 = vadd.f32 %v6893, %v6896
    %v6900 = vadd.f32 %v6894, %v6897
    %v6901 = vadd.f32 %v6895, %v6898
    %v6902 = vtanh.pop %v6899
    %v6903 = vtanh.pop %v6900
    %v6904 = vtanh.pop %v6901
    %v6905 = vmul.f32 %v6873, %v6902
    %v6906 = vmul.f32 %v6875, %v6903
    %v6907 = vmul.f32 %v6877, %v6904
    %6908 = vst [vmem:[#allocation14 + $0x18] sm:$0x3] %v6905
    %6909 = vst [vmem:[#allocation14 + $0x20] sm:$0x3] %v6906
    %6910 = vst [vmem:[#allocation14 + $0x28] sm:$0x3] %v6907
    %v6911 = vld [vmem:[#allocation2 + $0x60] sm:$0xc]
    %v6912 = vld [vmem:[#allocation2 + $0x68] sm:$0xc]
    %v6913 = vld [vmem:[#allocation2 + $0x70] sm:$0xc]
    %v6914 = vld [vmem:[#allocation2 + $0x78] sm:$0xc]
    %v6915 = vld [vmem:[#allocation2 + $0x80] sm:$0xc]
    %v6916 = vld [vmem:[#allocation2 + $0x88] sm:$0xc]
    %v6917 = vld [vmem:[#allocation2 + $0x90] sm:$0xc]
    %v6918 = vld [vmem:[#allocation2 + $0x98] sm:$0xc]
    %v6919 = vld [vmem:[#allocation2 + $0xa0] sm:$0xc]
    %v6920 = vld [vmem:[#allocation2 + $0xa8] sm:$0xc]
    %v6921 = vld [vmem:[#allocation2 + $0xb0] sm:$0xc]
    %v6922 = vld [vmem:[#allocation2 + $0xb8] sm:$0xc]
    %v6923 = vpack.c.bf16 %v6905, %v6905
    %v6924 = vpack.c.bf16 %v6906, %v6906
    %v6925 = vpack.c.bf16 %v6907, %v6907
    %6926 = vmatprep.subr.bf16.mxu0 %v3804
    %6927 = vmatpush1.bf16.msra.mxu0 %v3803
    %6928 = vmatprep.subr.bf16.mxu0 %v3792
    %6929 = vmatpush1.bf16.msra.mxu0 %v3791
    %6930 = vmatprep.subr.bf16.mxu0 %v3780
    %6931 = vmatpush1.bf16.msra.mxu0 %v3779
    %6932 = vmatprep.subr.bf16.mxu0 %v3768
    %6933 = vmatpush1.bf16.msra.mxu0 %v3767
    %6934 = vmatprep.subr.bf16.mxu0 %v3756
    %6935 = vmatpush1.bf16.msra.mxu0 %v3755
    %6936 = vmatprep.subr.bf16.mxu0 %v3744
    %6937 = vmatpush1.bf16.msra.mxu0 %v3743
    %6938 = vmatprep.subr.bf16.mxu0 %v3732
    %6939 = vmatpush1.bf16.msra.mxu0 %v3731
    %6940 = vmatprep.subr.bf16.mxu0 %v3720
    %6941 = vmatpush1.bf16.msra.mxu0 %v3719
    %6942 = vmatprep.subr.bf16.mxu0 %v3900
    %6943 = vmatpush2.bf16.msra.mxu0 %v3899
    %6944 = vmatprep.subr.bf16.mxu0 %v3888
    %6945 = vmatpush2.bf16.msra.mxu0 %v3887
    %6946 = vmatprep.subr.bf16.mxu0 %v3876
    %6947 = vmatpush2.bf16.msra.mxu0 %v3875
    %6948 = vmatprep.subr.bf16.mxu0 %v3864
    %6949 = vmatpush2.bf16.msra.mxu0 %v3863
    %6950 = vmatprep.subr.bf16.mxu0 %v3852
    %6951 = vmatpush2.bf16.msra.mxu0 %v3851
    %6952 = vmatprep.subr.bf16.mxu0 %v3840
    %6953 = vmatpush2.bf16.msra.mxu0 %v3839
    %6954 = vmatprep.subr.bf16.mxu0 %v3828
    %6955 = vmatpush2.bf16.msra.mxu0 %v3827
    %6956 = vmatprep.subr.bf16.mxu0 %v3816
    %6957 = vmatpush2.bf16.msra.mxu0 %v3815
    %6958 = vmatprep.mubr.bf16.mxu0 %v6924
    %6959 = vmatmul.mubr.bf16.gmra.mxu0 %v6923
    %v6960 = vpop.f32.mrf.mxu0
    %v6961 = vadd.f32 0.0, %v6960
    %v6962 = vpop.f32.mrf.mxu0
    %v6963 = vadd.f32 0.0, %v6962
    %v6964 = vpop.f32.mrf.mxu0
    %v6965 = vpop.f32.mrf.mxu0
    %6966 = vdwg.mxu0
    %6967 = vmatprep.subr.bf16.mxu0 %v3996
    %6968 = vmatpush1.bf16.msra.mxu0 %v3995
    %6969 = vmatprep.subr.bf16.mxu0 %v3984
    %6970 = vmatpush1.bf16.msra.mxu0 %v3983
    %6971 = vmatprep.subr.bf16.mxu0 %v3972
    %6972 = vmatpush1.bf16.msra.mxu0 %v3971
    %6973 = vmatprep.subr.bf16.mxu0 %v3960
    %6974 = vmatpush1.bf16.msra.mxu0 %v3959
    %6975 = vmatprep.subr.bf16.mxu0 %v3948
    %6976 = vmatpush1.bf16.msra.mxu0 %v3947
    %6977 = vmatprep.subr.bf16.mxu0 %v3936
    %6978 = vmatpush1.bf16.msra.mxu0 %v3935
    %6979 = vmatprep.subr.bf16.mxu0 %v3924
    %6980 = vmatpush1.bf16.msra.mxu0 %v3923
    %6981 = vmatprep.subr.bf16.mxu0 %v3912
    %6982 = vmatpush1.bf16.msra.mxu0 %v3911
    %6983 = vmatprep.subr.bf16.mxu0 0
    %6984 = vmatpush2.bf16.msra.mxu0 0
    %6985 = vmatprep.subr.bf16.mxu0 0
    %6986 = vmatpush2.bf16.msra.mxu0 0
    %6987 = vmatprep.subr.bf16.mxu0 0
    %6988 = vmatpush2.bf16.msra.mxu0 0
    %6989 = vmatprep.subr.bf16.mxu0 0
    %6990 = vmatpush2.bf16.msra.mxu0 0
    %6991 = vmatprep.subr.bf16.mxu0 0
    %6992 = vmatpush2.bf16.msra.mxu0 0
    %6993 = vmatprep.subr.bf16.mxu0 0
    %6994 = vmatpush2.bf16.msra.mxu0 0
    %6995 = vmatprep.subr.bf16.mxu0 0
    %6996 = vmatpush2.bf16.msra.mxu0 0
    %6997 = vmatprep.subr.bf16.mxu0 0
    %6998 = vmatpush2.bf16.msra.mxu0 0
    %6999 = vmatprep.mubr.bf16.mxu0 0
    %7000 = vmatmul.mubr.bf16.gmra.mxu0 %v6925
    %v7001 = vpop.f32.mrf.mxu0
    %v7002 = vadd.f32 %v6961, %v7001
    %v7003 = vpop.f32.mrf.mxu0
    %v7004 = vadd.f32 %v6963, %v7003
    %v7005 = vpop.f32.mrf.mxu0
    %v7006 = vpop.f32.mrf.mxu0
    %7007 = vdwg.mxu0
    %7008 = vmatprep.subr.bf16.mxu0 %v3806
    %7009 = vmatpush1.bf16.msra.mxu0 %v3805
    %7010 = vmatprep.subr.bf16.mxu0 %v3794
    %7011 = vmatpush1.bf16.msra.mxu0 %v3793
    %7012 = vmatprep.subr.bf16.mxu0 %v3782
    %7013 = vmatpush1.bf16.msra.mxu0 %v3781
    %7014 = vmatprep.subr.bf16.mxu0 %v3770
    %7015 = vmatpush1.bf16.msra.mxu0 %v3769
    %7016 = vmatprep.subr.bf16.mxu0 %v3758
    %7017 = vmatpush1.bf16.msra.mxu0 %v3757
    %7018 = vmatprep.subr.bf16.mxu0 %v3746
    %7019 = vmatpush1.bf16.msra.mxu0 %v3745
    %7020 = vmatprep.subr.bf16.mxu0 %v3734
    %7021 = vmatpush1.bf16.msra.mxu0 %v3733
    %7022 = vmatprep.subr.bf16.mxu0 %v3722
    %7023 = vmatpush1.bf16.msra.mxu0 %v3721
    %7024 = vmatprep.subr.bf16.mxu0 %v3902
    %7025 = vmatpush2.bf16.msra.mxu0 %v3901
    %7026 = vmatprep.subr.bf16.mxu0 %v3890
    %7027 = vmatpush2.bf16.msra.mxu0 %v3889
    %7028 = vmatprep.subr.bf16.mxu0 %v3878
    %7029 = vmatpush2.bf16.msra.mxu0 %v3877
    %7030 = vmatprep.subr.bf16.mxu0 %v3866
    %7031 = vmatpush2.bf16.msra.mxu0 %v3865
    %7032 = vmatprep.subr.bf16.mxu0 %v3854
    %7033 = vmatpush2.bf16.msra.mxu0 %v3853
    %7034 = vmatprep.subr.bf16.mxu0 %v3842
    %7035 = vmatpush2.bf16.msra.mxu0 %v3841
    %7036 = vmatprep.subr.bf16.mxu0 %v3830
    %7037 = vmatpush2.bf16.msra.mxu0 %v3829
    %7038 = vmatprep.subr.bf16.mxu0 %v3818
    %7039 = vmatpush2.bf16.msra.mxu0 %v3817
    %7040 = vmatprep.mubr.bf16.mxu0 %v6924
    %7041 = vmatmul.mubr.bf16.gmra.mxu0 %v6923
    %v7042 = vpop.f32.mrf.mxu0
    %v7043 = vadd.f32 0.0, %v7042
    %v7044 = vpop.f32.mrf.mxu0
    %v7045 = vadd.f32 0.0, %v7044
    %v7046 = vpop.f32.mrf.mxu0
    %v7047 = vpop.f32.mrf.mxu0
    %7048 = vdwg.mxu0
    %7049 = vmatprep.subr.bf16.mxu0 %v3998
    %7050 = vmatpush1.bf16.msra.mxu0 %v3997
    %7051 = vmatprep.subr.bf16.mxu0 %v3986
    %7052 = vmatpush1.bf16.msra.mxu0 %v3985
    %7053 = vmatprep.subr.bf16.mxu0 %v3974
    %7054 = vmatpush1.bf16.msra.mxu0 %v3973
    %7055 = vmatprep.subr.bf16.mxu0 %v3962
    %7056 = vmatpush1.bf16.msra.mxu0 %v3961
    %7057 = vmatprep.subr.bf16.mxu0 %v3950
    %7058 = vmatpush1.bf16.msra.mxu0 %v3949
    %7059 = vmatprep.subr.bf16.mxu0 %v3938
    %7060 = vmatpush1.bf16.msra.mxu0 %v3937
    %7061 = vmatprep.subr.bf16.mxu0 %v3926
    %7062 = vmatpush1.bf16.msra.mxu0 %v3925
    %7063 = vmatprep.subr.bf16.mxu0 %v3914
    %7064 = vmatpush1.bf16.msra.mxu0 %v3913
    %7065 = vmatprep.subr.bf16.mxu0 0
    %7066 = vmatpush2.bf16.msra.mxu0 0
    %7067 = vmatprep.subr.bf16.mxu0 0
    %7068 = vmatpush2.bf16.msra.mxu0 0
    %7069 = vmatprep.subr.bf16.mxu0 0
    %7070 = vmatpush2.bf16.msra.mxu0 0
    %7071 = vmatprep.subr.bf16.mxu0 0
    %7072 = vmatpush2.bf16.msra.mxu0 0
    %7073 = vmatprep.subr.bf16.mxu0 0
    %7074 = vmatpush2.bf16.msra.mxu0 0
    %7075 = vmatprep.subr.bf16.mxu0 0
    %7076 = vmatpush2.bf16.msra.mxu0 0
    %7077 = vmatprep.subr.bf16.mxu0 0
    %7078 = vmatpush2.bf16.msra.mxu0 0
    %7079 = vmatprep.subr.bf16.mxu0 0
    %7080 = vmatpush2.bf16.msra.mxu0 0
    %7081 = vmatprep.mubr.bf16.mxu0 0
    %7082 = vmatmul.mubr.bf16.gmra.mxu0 %v6925
    %v7083 = vpop.f32.mrf.mxu0
    %v7084 = vadd.f32 %v7043, %v7083
    %v7085 = vpop.f32.mrf.mxu0
    %v7086 = vadd.f32 %v7045, %v7085
    %v7087 = vpop.f32.mrf.mxu0
    %v7088 = vpop.f32.mrf.mxu0
    %7089 = vdwg.mxu0
    %7090 = vmatprep.subr.bf16.mxu0 %v3808
    %7091 = vmatpush1.bf16.msra.mxu0 %v3807
    %7092 = vmatprep.subr.bf16.mxu0 %v3796
    %7093 = vmatpush1.bf16.msra.mxu0 %v3795
    %7094 = vmatprep.subr.bf16.mxu0 %v3784
    %7095 = vmatpush1.bf16.msra.mxu0 %v3783
    %7096 = vmatprep.subr.bf16.mxu0 %v3772
    %7097 = vmatpush1.bf16.msra.mxu0 %v3771
    %7098 = vmatprep.subr.bf16.mxu0 %v3760
    %7099 = vmatpush1.bf16.msra.mxu0 %v3759
    %7100 = vmatprep.subr.bf16.mxu0 %v3748
    %7101 = vmatpush1.bf16.msra.mxu0 %v3747
    %7102 = vmatprep.subr.bf16.mxu0 %v3736
    %7103 = vmatpush1.bf16.msra.mxu0 %v3735
    %7104 = vmatprep.subr.bf16.mxu0 %v3724
    %7105 = vmatpush1.bf16.msra.mxu0 %v3723
    %7106 = vmatprep.subr.bf16.mxu0 %v3904
    %7107 = vmatpush2.bf16.msra.mxu0 %v3903
    %7108 = vmatprep.subr.bf16.mxu0 %v3892
    %7109 = vmatpush2.bf16.msra.mxu0 %v3891
    %7110 = vmatprep.subr.bf16.mxu0 %v3880
    %7111 = vmatpush2.bf16.msra.mxu0 %v3879
    %7112 = vmatprep.subr.bf16.mxu0 %v3868
    %7113 = vmatpush2.bf16.msra.mxu0 %v3867
    %7114 = vmatprep.subr.bf16.mxu0 %v3856
    %7115 = vmatpush2.bf16.msra.mxu0 %v3855
    %7116 = vmatprep.subr.bf16.mxu0 %v3844
    %7117 = vmatpush2.bf16.msra.mxu0 %v3843
    %7118 = vmatprep.subr.bf16.mxu0 %v3832
    %7119 = vmatpush2.bf16.msra.mxu0 %v3831
    %7120 = vmatprep.subr.bf16.mxu0 %v3820
    %7121 = vmatpush2.bf16.msra.mxu0 %v3819
    %7122 = vmatprep.mubr.bf16.mxu0 %v6924
    %7123 = vmatmul.mubr.bf16.gmra.mxu0 %v6923
    %v7124 = vpop.f32.mrf.mxu0
    %v7125 = vadd.f32 0.0, %v7124
    %v7126 = vpop.f32.mrf.mxu0
    %v7127 = vadd.f32 0.0, %v7126
    %v7128 = vpop.f32.mrf.mxu0
    %v7129 = vpop.f32.mrf.mxu0
    %7130 = vdwg.mxu0
    %7131 = vmatprep.subr.bf16.mxu0 %v4000
    %7132 = vmatpush1.bf16.msra.mxu0 %v3999
    %7133 = vmatprep.subr.bf16.mxu0 %v3988
    %7134 = vmatpush1.bf16.msra.mxu0 %v3987
    %7135 = vmatprep.subr.bf16.mxu0 %v3976
    %7136 = vmatpush1.bf16.msra.mxu0 %v3975
    %7137 = vmatprep.subr.bf16.mxu0 %v3964
    %7138 = vmatpush1.bf16.msra.mxu0 %v3963
    %7139 = vmatprep.subr.bf16.mxu0 %v3952
    %7140 = vmatpush1.bf16.msra.mxu0 %v3951
    %7141 = vmatprep.subr.bf16.mxu0 %v3940
    %7142 = vmatpush1.bf16.msra.mxu0 %v3939
    %7143 = vmatprep.subr.bf16.mxu0 %v3928
    %7144 = vmatpush1.bf16.msra.mxu0 %v3927
    %7145 = vmatprep.subr.bf16.mxu0 %v3916
    %7146 = vmatpush1.bf16.msra.mxu0 %v3915
    %7147 = vmatprep.subr.bf16.mxu0 0
    %7148 = vmatpush2.bf16.msra.mxu0 0
    %7149 = vmatprep.subr.bf16.mxu0 0
    %7150 = vmatpush2.bf16.msra.mxu0 0
    %7151 = vmatprep.subr.bf16.mxu0 0
    %7152 = vmatpush2.bf16.msra.mxu0 0
    %7153 = vmatprep.subr.bf16.mxu0 0
    %7154 = vmatpush2.bf16.msra.mxu0 0
    %7155 = vmatprep.subr.bf16.mxu0 0
    %7156 = vmatpush2.bf16.msra.mxu0 0
    %7157 = vmatprep.subr.bf16.mxu0 0
    %7158 = vmatpush2.bf16.msra.mxu0 0
    %7159 = vmatprep.subr.bf16.mxu0 0
    %7160 = vmatpush2.bf16.msra.mxu0 0
    %7161 = vmatprep.subr.bf16.mxu0 0
    %7162 = vmatpush2.bf16.msra.mxu0 0
    %7163 = vmatprep.mubr.bf16.mxu0 0
    %7164 = vmatmul.mubr.bf16.gmra.mxu0 %v6925
    %v7165 = vpop.f32.mrf.mxu0
    %v7166 = vadd.f32 %v7125, %v7165
    %v7167 = vpop.f32.mrf.mxu0
    %v7168 = vadd.f32 %v7127, %v7167
    %v7169 = vpop.f32.mrf.mxu0
    %v7170 = vpop.f32.mrf.mxu0
    %7171 = vdwg.mxu0
    %7172 = vmatprep.subr.bf16.mxu0 %v3810
    %7173 = vmatpush1.bf16.msra.mxu0 %v3809
    %7174 = vmatprep.subr.bf16.mxu0 %v3798
    %7175 = vmatpush1.bf16.msra.mxu0 %v3797
    %7176 = vmatprep.subr.bf16.mxu0 %v3786
    %7177 = vmatpush1.bf16.msra.mxu0 %v3785
    %7178 = vmatprep.subr.bf16.mxu0 %v3774
    %7179 = vmatpush1.bf16.msra.mxu0 %v3773
    %7180 = vmatprep.subr.bf16.mxu0 %v3762
    %7181 = vmatpush1.bf16.msra.mxu0 %v3761
    %7182 = vmatprep.subr.bf16.mxu0 %v3750
    %7183 = vmatpush1.bf16.msra.mxu0 %v3749
    %7184 = vmatprep.subr.bf16.mxu0 %v3738
    %7185 = vmatpush1.bf16.msra.mxu0 %v3737
    %7186 = vmatprep.subr.bf16.mxu0 %v3726
    %7187 = vmatpush1.bf16.msra.mxu0 %v3725
    %7188 = vmatprep.subr.bf16.mxu0 %v3906
    %7189 = vmatpush2.bf16.msra.mxu0 %v3905
    %7190 = vmatprep.subr.bf16.mxu0 %v3894
    %7191 = vmatpush2.bf16.msra.mxu0 %v3893
    %7192 = vmatprep.subr.bf16.mxu0 %v3882
    %7193 = vmatpush2.bf16.msra.mxu0 %v3881
    %7194 = vmatprep.subr.bf16.mxu0 %v3870
    %7195 = vmatpush2.bf16.msra.mxu0 %v3869
    %7196 = vmatprep.subr.bf16.mxu0 %v3858
    %7197 = vmatpush2.bf16.msra.mxu0 %v3857
    %7198 = vmatprep.subr.bf16.mxu0 %v3846
    %7199 = vmatpush2.bf16.msra.mxu0 %v3845
    %7200 = vmatprep.subr.bf16.mxu0 %v3834
    %7201 = vmatpush2.bf16.msra.mxu0 %v3833
    %7202 = vmatprep.subr.bf16.mxu0 %v3822
    %7203 = vmatpush2.bf16.msra.mxu0 %v3821
    %7204 = vmatprep.mubr.bf16.mxu0 %v6924
    %7205 = vmatmul.mubr.bf16.gmra.mxu0 %v6923
    %v7206 = vpop.f32.mrf.mxu0
    %v7207 = vadd.f32 0.0, %v7206
    %v7208 = vpop.f32.mrf.mxu0
    %v7209 = vadd.f32 0.0, %v7208
    %v7210 = vpop.f32.mrf.mxu0
    %v7211 = vpop.f32.mrf.mxu0
    %7212 = vdwg.mxu0
    %7213 = vmatprep.subr.bf16.mxu0 %v4002
    %7214 = vmatpush1.bf16.msra.mxu0 %v4001
    %7215 = vmatprep.subr.bf16.mxu0 %v3990
    %7216 = vmatpush1.bf16.msra.mxu0 %v3989
    %7217 = vmatprep.subr.bf16.mxu0 %v3978
    %7218 = vmatpush1.bf16.msra.mxu0 %v3977
    %7219 = vmatprep.subr.bf16.mxu0 %v3966
    %7220 = vmatpush1.bf16.msra.mxu0 %v3965
    %7221 = vmatprep.subr.bf16.mxu0 %v3954
    %7222 = vmatpush1.bf16.msra.mxu0 %v3953
    %7223 = vmatprep.subr.bf16.mxu0 %v3942
    %7224 = vmatpush1.bf16.msra.mxu0 %v3941
    %7225 = vmatprep.subr.bf16.mxu0 %v3930
    %7226 = vmatpush1.bf16.msra.mxu0 %v3929
    %7227 = vmatprep.subr.bf16.mxu0 %v3918
    %7228 = vmatpush1.bf16.msra.mxu0 %v3917
    %7229 = vmatprep.subr.bf16.mxu0 0
    %7230 = vmatpush2.bf16.msra.mxu0 0
    %7231 = vmatprep.subr.bf16.mxu0 0
    %7232 = vmatpush2.bf16.msra.mxu0 0
    %7233 = vmatprep.subr.bf16.mxu0 0
    %7234 = vmatpush2.bf16.msra.mxu0 0
    %7235 = vmatprep.subr.bf16.mxu0 0
    %7236 = vmatpush2.bf16.msra.mxu0 0
    %7237 = vmatprep.subr.bf16.mxu0 0
    %7238 = vmatpush2.bf16.msra.mxu0 0
    %7239 = vmatprep.subr.bf16.mxu0 0
    %7240 = vmatpush2.bf16.msra.mxu0 0
    %7241 = vmatprep.subr.bf16.mxu0 0
    %7242 = vmatpush2.bf16.msra.mxu0 0
    %7243 = vmatprep.subr.bf16.mxu0 0
    %7244 = vmatpush2.bf16.msra.mxu0 0
    %7245 = vmatprep.mubr.bf16.mxu0 0
    %7246 = vmatmul.mubr.bf16.gmra.mxu0 %v6925
    %v7247 = vpop.f32.mrf.mxu0
    %v7248 = vadd.f32 %v7207, %v7247
    %v7249 = vpop.f32.mrf.mxu0
    %v7250 = vadd.f32 %v7209, %v7249
    %v7251 = vpop.f32.mrf.mxu0
    %v7252 = vpop.f32.mrf.mxu0
    %7253 = vdwg.mxu0
    %7254 = vmatprep.subr.bf16.mxu0 %v3812
    %7255 = vmatpush1.bf16.msra.mxu0 %v3811
    %7256 = vmatprep.subr.bf16.mxu0 %v3800
    %7257 = vmatpush1.bf16.msra.mxu0 %v3799
    %7258 = vmatprep.subr.bf16.mxu0 %v3788
    %7259 = vmatpush1.bf16.msra.mxu0 %v3787
    %7260 = vmatprep.subr.bf16.mxu0 %v3776
    %7261 = vmatpush1.bf16.msra.mxu0 %v3775
    %7262 = vmatprep.subr.bf16.mxu0 %v3764
    %7263 = vmatpush1.bf16.msra.mxu0 %v3763
    %7264 = vmatprep.subr.bf16.mxu0 %v3752
    %7265 = vmatpush1.bf16.msra.mxu0 %v3751
    %7266 = vmatprep.subr.bf16.mxu0 %v3740
    %7267 = vmatpush1.bf16.msra.mxu0 %v3739
    %7268 = vmatprep.subr.bf16.mxu0 %v3728
    %7269 = vmatpush1.bf16.msra.mxu0 %v3727
    %7270 = vmatprep.subr.bf16.mxu0 %v3908
    %7271 = vmatpush2.bf16.msra.mxu0 %v3907
    %7272 = vmatprep.subr.bf16.mxu0 %v3896
    %7273 = vmatpush2.bf16.msra.mxu0 %v3895
    %7274 = vmatprep.subr.bf16.mxu0 %v3884
    %7275 = vmatpush2.bf16.msra.mxu0 %v3883
    %7276 = vmatprep.subr.bf16.mxu0 %v3872
    %7277 = vmatpush2.bf16.msra.mxu0 %v3871
    %7278 = vmatprep.subr.bf16.mxu0 %v3860
    %7279 = vmatpush2.bf16.msra.mxu0 %v3859
    %7280 = vmatprep.subr.bf16.mxu0 %v3848
    %7281 = vmatpush2.bf16.msra.mxu0 %v3847
    %7282 = vmatprep.subr.bf16.mxu0 %v3836
    %7283 = vmatpush2.bf16.msra.mxu0 %v3835
    %7284 = vmatprep.subr.bf16.mxu0 %v3824
    %7285 = vmatpush2.bf16.msra.mxu0 %v3823
    %7286 = vmatprep.mubr.bf16.mxu0 %v6924
    %7287 = vmatmul.mubr.bf16.gmra.mxu0 %v6923
    %v7288 = vpop.f32.mrf.mxu0
    %v7289 = vadd.f32 0.0, %v7288
    %v7290 = vpop.f32.mrf.mxu0
    %v7291 = vadd.f32 0.0, %v7290
    %v7292 = vpop.f32.mrf.mxu0
    %v7293 = vpop.f32.mrf.mxu0
    %7294 = vdwg.mxu0
    %7295 = vmatprep.subr.bf16.mxu0 %v4004
    %7296 = vmatpush1.bf16.msra.mxu0 %v4003
    %7297 = vmatprep.subr.bf16.mxu0 %v3992
    %7298 = vmatpush1.bf16.msra.mxu0 %v3991
    %7299 = vmatprep.subr.bf16.mxu0 %v3980
    %7300 = vmatpush1.bf16.msra.mxu0 %v3979
    %7301 = vmatprep.subr.bf16.mxu0 %v3968
    %7302 = vmatpush1.bf16.msra.mxu0 %v3967
    %7303 = vmatprep.subr.bf16.mxu0 %v3956
    %7304 = vmatpush1.bf16.msra.mxu0 %v3955
    %7305 = vmatprep.subr.bf16.mxu0 %v3944
    %7306 = vmatpush1.bf16.msra.mxu0 %v3943
    %7307 = vmatprep.subr.bf16.mxu0 %v3932
    %7308 = vmatpush1.bf16.msra.mxu0 %v3931
    %7309 = vmatprep.subr.bf16.mxu0 %v3920
    %7310 = vmatpush1.bf16.msra.mxu0 %v3919
    %7311 = vmatprep.subr.bf16.mxu0 0
    %7312 = vmatpush2.bf16.msra.mxu0 0
    %7313 = vmatprep.subr.bf16.mxu0 0
    %7314 = vmatpush2.bf16.msra.mxu0 0
    %7315 = vmatprep.subr.bf16.mxu0 0
    %7316 = vmatpush2.bf16.msra.mxu0 0
    %7317 = vmatprep.subr.bf16.mxu0 0
    %7318 = vmatpush2.bf16.msra.mxu0 0
    %7319 = vmatprep.subr.bf16.mxu0 0
    %7320 = vmatpush2.bf16.msra.mxu0 0
    %7321 = vmatprep.subr.bf16.mxu0 0
    %7322 = vmatpush2.bf16.msra.mxu0 0
    %7323 = vmatprep.subr.bf16.mxu0 0
    %7324 = vmatpush2.bf16.msra.mxu0 0
    %7325 = vmatprep.subr.bf16.mxu0 0
    %7326 = vmatpush2.bf16.msra.mxu0 0
    %7327 = vmatprep.mubr.bf16.mxu0 0
    %7328 = vmatmul.mubr.bf16.gmra.mxu0 %v6925
    %v7329 = vpop.f32.mrf.mxu0
    %v7330 = vadd.f32 %v7289, %v7329
    %v7331 = vpop.f32.mrf.mxu0
    %v7332 = vadd.f32 %v7291, %v7331
    %v7333 = vpop.f32.mrf.mxu0
    %v7334 = vpop.f32.mrf.mxu0
    %7335 = vdwg.mxu0
    %7336 = vmatprep.subr.bf16.mxu0 %v3814
    %7337 = vmatpush1.bf16.msra.mxu0 %v3813
    %7338 = vmatprep.subr.bf16.mxu0 %v3802
    %7339 = vmatpush1.bf16.msra.mxu0 %v3801
    %7340 = vmatprep.subr.bf16.mxu0 %v3790
    %7341 = vmatpush1.bf16.msra.mxu0 %v3789
    %7342 = vmatprep.subr.bf16.mxu0 %v3778
    %7343 = vmatpush1.bf16.msra.mxu0 %v3777
    %7344 = vmatprep.subr.bf16.mxu0 %v3766
    %7345 = vmatpush1.bf16.msra.mxu0 %v3765
    %7346 = vmatprep.subr.bf16.mxu0 %v3754
    %7347 = vmatpush1.bf16.msra.mxu0 %v3753
    %7348 = vmatprep.subr.bf16.mxu0 %v3742
    %7349 = vmatpush1.bf16.msra.mxu0 %v3741
    %7350 = vmatprep.subr.bf16.mxu0 %v3730
    %7351 = vmatpush1.bf16.msra.mxu0 %v3729
    %7352 = vmatprep.subr.bf16.mxu0 %v3910
    %7353 = vmatpush2.bf16.msra.mxu0 %v3909
    %7354 = vmatprep.subr.bf16.mxu0 %v3898
    %7355 = vmatpush2.bf16.msra.mxu0 %v3897
    %7356 = vmatprep.subr.bf16.mxu0 %v3886
    %7357 = vmatpush2.bf16.msra.mxu0 %v3885
    %7358 = vmatprep.subr.bf16.mxu0 %v3874
    %7359 = vmatpush2.bf16.msra.mxu0 %v3873
    %7360 = vmatprep.subr.bf16.mxu0 %v3862
    %7361 = vmatpush2.bf16.msra.mxu0 %v3861
    %7362 = vmatprep.subr.bf16.mxu0 %v3850
    %7363 = vmatpush2.bf16.msra.mxu0 %v3849
    %7364 = vmatprep.subr.bf16.mxu0 %v3838
    %7365 = vmatpush2.bf16.msra.mxu0 %v3837
    %7366 = vmatprep.subr.bf16.mxu0 %v3826
    %7367 = vmatpush2.bf16.msra.mxu0 %v3825
    %7368 = vmatprep.mubr.bf16.mxu0 %v6924
    %7369 = vmatmul.mubr.bf16.gmra.mxu0 %v6923
    %v7370 = vpop.f32.mrf.mxu0
    %v7371 = vadd.f32 0.0, %v7370
    %v7372 = vpop.f32.mrf.mxu0
    %v7373 = vadd.f32 0.0, %v7372
    %v7374 = vpop.f32.mrf.mxu0
    %v7375 = vpop.f32.mrf.mxu0
    %7376 = vdwg.mxu0
    %7377 = vmatprep.subr.bf16.mxu0 %v4006
    %7378 = vmatpush1.bf16.msra.mxu0 %v4005
    %7379 = vmatprep.subr.bf16.mxu0 %v3994
    %7380 = vmatpush1.bf16.msra.mxu0 %v3993
    %7381 = vmatprep.subr.bf16.mxu0 %v3982
    %7382 = vmatpush1.bf16.msra.mxu0 %v3981
    %7383 = vmatprep.subr.bf16.mxu0 %v3970
    %7384 = vmatpush1.bf16.msra.mxu0 %v3969
    %7385 = vmatprep.subr.bf16.mxu0 %v3958
    %7386 = vmatpush1.bf16.msra.mxu0 %v3957
    %7387 = vmatprep.subr.bf16.mxu0 %v3946
    %7388 = vmatpush1.bf16.msra.mxu0 %v3945
    %7389 = vmatprep.subr.bf16.mxu0 %v3934
    %7390 = vmatpush1.bf16.msra.mxu0 %v3933
    %7391 = vmatprep.subr.bf16.mxu0 %v3922
    %7392 = vmatpush1.bf16.msra.mxu0 %v3921
    %7393 = vmatprep.subr.bf16.mxu0 0
    %7394 = vmatpush2.bf16.msra.mxu0 0
    %7395 = vmatprep.subr.bf16.mxu0 0
    %7396 = vmatpush2.bf16.msra.mxu0 0
    %7397 = vmatprep.subr.bf16.mxu0 0
    %7398 = vmatpush2.bf16.msra.mxu0 0
    %7399 = vmatprep.subr.bf16.mxu0 0
    %7400 = vmatpush2.bf16.msra.mxu0 0
    %7401 = vmatprep.subr.bf16.mxu0 0
    %7402 = vmatpush2.bf16.msra.mxu0 0
    %7403 = vmatprep.subr.bf16.mxu0 0
    %7404 = vmatpush2.bf16.msra.mxu0 0
    %7405 = vmatprep.subr.bf16.mxu0 0
    %7406 = vmatpush2.bf16.msra.mxu0 0
    %7407 = vmatprep.subr.bf16.mxu0 0
    %7408 = vmatpush2.bf16.msra.mxu0 0
    %7409 = vmatprep.mubr.bf16.mxu0 0
    %7410 = vmatmul.mubr.bf16.gmra.mxu0 %v6925
    %v7411 = vpop.f32.mrf.mxu0
    %v7412 = vadd.f32 %v7371, %v7411
    %v7413 = vpop.f32.mrf.mxu0
    %v7414 = vadd.f32 %v7373, %v7413
    %v7415 = vpop.f32.mrf.mxu0
    %v7416 = vpop.f32.mrf.mxu0
    %7417 = vdwg.mxu0
    %v7430 = vrot.slane %v7002, 6
    %v7431 = vrot.slane %v7004, 6
    %v7432 = vrot.slane %v7084, 6
    %v7433 = vrot.slane %v7086, 6
    %v7434 = vrot.slane %v7166, 6
    %v7435 = vrot.slane %v7168, 6
    %v7436 = vrot.slane %v7248, 6
    %v7437 = vrot.slane %v7250, 6
    %v7438 = vrot.slane %v7330, 6
    %v7439 = vrot.slane %v7332, 6
    %v7440 = vrot.slane %v7412, 6
    %v7441 = vrot.slane %v7414, 6
    %v7454 = vadd.f32 %v6911, %v7430
    %v7455 = vadd.f32 %v6912, %v7431
    %v7456 = vadd.f32 %v6913, %v7432
    %v7457 = vadd.f32 %v6914, %v7433
    %v7458 = vadd.f32 %v6915, %v7434
    %v7459 = vadd.f32 %v6916, %v7435
    %v7460 = vadd.f32 %v6917, %v7436
    %v7461 = vadd.f32 %v6918, %v7437
    %v7462 = vadd.f32 %v6919, %v7438
    %v7463 = vadd.f32 %v6920, %v7439
    %v7464 = vadd.f32 %v6921, %v7440
    %v7465 = vadd.f32 %v6922, %v7441
    %v7466 = vxor.u32 %v7454, 2147483648
    %v7467 = vxor.u32 %v7455, 2147483648
    %v7468 = vxor.u32 %v7456, 2147483648
    %v7469 = vxor.u32 %v7457, 2147483648
    %v7470 = vxor.u32 %v7458, 2147483648
    %v7471 = vxor.u32 %v7459, 2147483648
    %v7472 = vxor.u32 %v7460, 2147483648
    %v7473 = vxor.u32 %v7461, 2147483648
    %v7474 = vxor.u32 %v7462, 2147483648
    %v7475 = vxor.u32 %v7463, 2147483648
    %v7476 = vxor.u32 %v7464, 2147483648
    %v7477 = vxor.u32 %v7465, 2147483648
    %v7478 = vmul.f32 %v7466, 1.442695
    %v7479 = vpow.pop %v7478
    %v7480 = vmul.f32 %v7467, 1.442695
    %v7481 = vpow.pop %v7480
    %v7482 = vmul.f32 %v7468, 1.442695
    %v7483 = vpow.pop %v7482
    %v7484 = vmul.f32 %v7469, 1.442695
    %v7485 = vpow.pop %v7484
    %v7486 = vmul.f32 %v7470, 1.442695
    %v7487 = vpow.pop %v7486
    %v7488 = vmul.f32 %v7471, 1.442695
    %v7489 = vpow.pop %v7488
    %v7490 = vmul.f32 %v7472, 1.442695
    %v7491 = vpow.pop %v7490
    %v7492 = vmul.f32 %v7473, 1.442695
    %v7493 = vpow.pop %v7492
    %v7494 = vmul.f32 %v7474, 1.442695
    %v7495 = vpow.pop %v7494
    %v7496 = vmul.f32 %v7475, 1.442695
    %v7497 = vpow.pop %v7496
    %v7498 = vmul.f32 %v7476, 1.442695
    %v7499 = vpow.pop %v7498
    %v7500 = vmul.f32 %v7477, 1.442695
    %v7501 = vpow.pop %v7500
    %v7502 = vadd.f32 %v7479, 1.0
    %v7503 = vadd.f32 %v7481, 1.0
    %v7504 = vadd.f32 %v7483, 1.0
    %v7505 = vadd.f32 %v7485, 1.0
    %v7506 = vadd.f32 %v7487, 1.0
    %v7507 = vadd.f32 %v7489, 1.0
    %v7508 = vadd.f32 %v7491, 1.0
    %v7509 = vadd.f32 %v7493, 1.0
    %v7510 = vadd.f32 %v7495, 1.0
    %v7511 = vadd.f32 %v7497, 1.0
    %v7512 = vadd.f32 %v7499, 1.0
    %v7513 = vadd.f32 %v7501, 1.0
    %v7514 = vrcp.pop %v7502
    %v7515 = vmul.f32 1.0, %v7514
    %v7516 = vrcp.pop %v7503
    %v7517 = vmul.f32 1.0, %v7516
    %v7518 = vrcp.pop %v7504
    %v7519 = vmul.f32 1.0, %v7518
    %v7520 = vrcp.pop %v7505
    %v7521 = vmul.f32 1.0, %v7520
    %v7522 = vrcp.pop %v7506
    %v7523 = vmul.f32 1.0, %v7522
    %v7524 = vrcp.pop %v7507
    %v7525 = vmul.f32 1.0, %v7524
    %v7526 = vrcp.pop %v7508
    %v7527 = vmul.f32 1.0, %v7526
    %v7528 = vrcp.pop %v7509
    %v7529 = vmul.f32 1.0, %v7528
    %v7530 = vrcp.pop %v7510
    %v7531 = vmul.f32 1.0, %v7530
    %v7532 = vrcp.pop %v7511
    %v7533 = vmul.f32 1.0, %v7532
    %v7534 = vrcp.pop %v7512
    %v7535 = vmul.f32 1.0, %v7534
    %v7536 = vrcp.pop %v7513
    %v7537 = vmul.f32 1.0, %v7536
    %v7538 = vmul.f32 %v7527, 2.0
    %v7539 = vmul.f32 %v7529, 2.0
    %v7540 = vmul.f32 %v7531, 2.0
    %v7541 = vsub.f32 %v7538, 1.0
    %v7542 = vsub.f32 %v7539, 1.0
    %v7543 = vsub.f32 %v7540, 1.0
    %v7547 = vrot.slane %v6899, 6
    %v7548 = vrot.slane %v6900, 6
    %v7549 = vrot.slane %v6901, 6
    %v7553 = vmul.f32 %v7521, %v7547
    %v7554 = vmul.f32 %v7523, %v7548
    %v7555 = vmul.f32 %v7525, %v7549
    %v7556 = vmul.f32 %v7515, %v7541
    %v7557 = vmul.f32 %v7517, %v7542
    %v7558 = vmul.f32 %v7519, %v7543
    %v7559 = vadd.f32 %v7553, %v7556
    %v7560 = vadd.f32 %v7554, %v7557
    %v7561 = vadd.f32 %v7555, %v7558
    %v7562 = vtanh.pop %v7559
    %v7563 = vtanh.pop %v7560
    %v7564 = vtanh.pop %v7561
    %v7565 = vmul.f32 %v7533, %v7562
    %v7566 = vmul.f32 %v7535, %v7563
    %v7567 = vmul.f32 %v7537, %v7564
    %7568 = vst [vmem:[#allocation14 + $0x18] sm:$0xc] %v7565
    %7569 = vst [vmem:[#allocation14 + $0x20] sm:$0xc] %v7566
    %7570 = vst [vmem:[#allocation14 + $0x28] sm:$0xc] %v7567
    %v7571 = vld [vmem:[#allocation2 + $0x60] sm:$0x30]
    %v7572 = vld [vmem:[#allocation2 + $0x68] sm:$0x30]
    %v7573 = vld [vmem:[#allocation2 + $0x70] sm:$0x30]
    %v7574 = vld [vmem:[#allocation2 + $0x78] sm:$0x30]
    %v7575 = vld [vmem:[#allocation2 + $0x80] sm:$0x30]
    %v7576 = vld [vmem:[#allocation2 + $0x88] sm:$0x30]
    %v7577 = vld [vmem:[#allocation2 + $0x90] sm:$0x30]
    %v7578 = vld [vmem:[#allocation2 + $0x98] sm:$0x30]
    %v7579 = vld [vmem:[#allocation2 + $0xa0] sm:$0x30]
    %v7580 = vld [vmem:[#allocation2 + $0xa8] sm:$0x30]
    %v7581 = vld [vmem:[#allocation2 + $0xb0] sm:$0x30]
    %v7582 = vld [vmem:[#allocation2 + $0xb8] sm:$0x30]
    %v7583 = vpack.c.bf16 %v7565, %v7565
    %v7584 = vpack.c.bf16 %v7566, %v7566
    %v7585 = vpack.c.bf16 %v7567, %v7567
    %v7589 = vrot.slane %v7583, 1
    %v7590 = vrot.slane %v7584, 1
    %v7591 = vrot.slane %v7585, 1
    %7595 = vmatprep.subr.bf16.mxu0 %v3804
    %7596 = vmatpush1.bf16.msra.mxu0 %v3803
    %7597 = vmatprep.subr.bf16.mxu0 %v3792
    %7598 = vmatpush1.bf16.msra.mxu0 %v3791
    %7599 = vmatprep.subr.bf16.mxu0 %v3780
    %7600 = vmatpush1.bf16.msra.mxu0 %v3779
    %7601 = vmatprep.subr.bf16.mxu0 %v3768
    %7602 = vmatpush1.bf16.msra.mxu0 %v3767
    %7603 = vmatprep.subr.bf16.mxu0 %v3756
    %7604 = vmatpush1.bf16.msra.mxu0 %v3755
    %7605 = vmatprep.subr.bf16.mxu0 %v3744
    %7606 = vmatpush1.bf16.msra.mxu0 %v3743
    %7607 = vmatprep.subr.bf16.mxu0 %v3732
    %7608 = vmatpush1.bf16.msra.mxu0 %v3731
    %7609 = vmatprep.subr.bf16.mxu0 %v3720
    %7610 = vmatpush1.bf16.msra.mxu0 %v3719
    %7611 = vmatprep.subr.bf16.mxu0 %v3900
    %7612 = vmatpush2.bf16.msra.mxu0 %v3899
    %7613 = vmatprep.subr.bf16.mxu0 %v3888
    %7614 = vmatpush2.bf16.msra.mxu0 %v3887
    %7615 = vmatprep.subr.bf16.mxu0 %v3876
    %7616 = vmatpush2.bf16.msra.mxu0 %v3875
    %7617 = vmatprep.subr.bf16.mxu0 %v3864
    %7618 = vmatpush2.bf16.msra.mxu0 %v3863
    %7619 = vmatprep.subr.bf16.mxu0 %v3852
    %7620 = vmatpush2.bf16.msra.mxu0 %v3851
    %7621 = vmatprep.subr.bf16.mxu0 %v3840
    %7622 = vmatpush2.bf16.msra.mxu0 %v3839
    %7623 = vmatprep.subr.bf16.mxu0 %v3828
    %7624 = vmatpush2.bf16.msra.mxu0 %v3827
    %7625 = vmatprep.subr.bf16.mxu0 %v3816
    %7626 = vmatpush2.bf16.msra.mxu0 %v3815
    %7627 = vmatprep.mubr.bf16.mxu0 %v7590
    %7628 = vmatmul.mubr.bf16.gmra.mxu0 %v7589
    %v7629 = vpop.f32.mrf.mxu0
    %v7630 = vadd.f32 0.0, %v7629
    %v7631 = vpop.f32.mrf.mxu0
    %v7632 = vadd.f32 0.0, %v7631
    %v7633 = vpop.f32.mrf.mxu0
    %v7634 = vpop.f32.mrf.mxu0
    %7635 = vdwg.mxu0
    %7636 = vmatprep.subr.bf16.mxu0 %v3996
    %7637 = vmatpush1.bf16.msra.mxu0 %v3995
    %7638 = vmatprep.subr.bf16.mxu0 %v3984
    %7639 = vmatpush1.bf16.msra.mxu0 %v3983
    %7640 = vmatprep.subr.bf16.mxu0 %v3972
    %7641 = vmatpush1.bf16.msra.mxu0 %v3971
    %7642 = vmatprep.subr.bf16.mxu0 %v3960
    %7643 = vmatpush1.bf16.msra.mxu0 %v3959
    %7644 = vmatprep.subr.bf16.mxu0 %v3948
    %7645 = vmatpush1.bf16.msra.mxu0 %v3947
    %7646 = vmatprep.subr.bf16.mxu0 %v3936
    %7647 = vmatpush1.bf16.msra.mxu0 %v3935
    %7648 = vmatprep.subr.bf16.mxu0 %v3924
    %7649 = vmatpush1.bf16.msra.mxu0 %v3923
    %7650 = vmatprep.subr.bf16.mxu0 %v3912
    %7651 = vmatpush1.bf16.msra.mxu0 %v3911
    %7652 = vmatprep.subr.bf16.mxu0 0
    %7653 = vmatpush2.bf16.msra.mxu0 0
    %7654 = vmatprep.subr.bf16.mxu0 0
    %7655 = vmatpush2.bf16.msra.mxu0 0
    %7656 = vmatprep.subr.bf16.mxu0 0
    %7657 = vmatpush2.bf16.msra.mxu0 0
    %7658 = vmatprep.subr.bf16.mxu0 0
    %7659 = vmatpush2.bf16.msra.mxu0 0
    %7660 = vmatprep.subr.bf16.mxu0 0
    %7661 = vmatpush2.bf16.msra.mxu0 0
    %7662 = vmatprep.subr.bf16.mxu0 0
    %7663 = vmatpush2.bf16.msra.mxu0 0
    %7664 = vmatprep.subr.bf16.mxu0 0
    %7665 = vmatpush2.bf16.msra.mxu0 0
    %7666 = vmatprep.subr.bf16.mxu0 0
    %7667 = vmatpush2.bf16.msra.mxu0 0
    %7668 = vmatprep.mubr.bf16.mxu0 0
    %7669 = vmatmul.mubr.bf16.gmra.mxu0 %v7591
    %v7670 = vpop.f32.mrf.mxu0
    %v7671 = vadd.f32 %v7630, %v7670
    %v7672 = vpop.f32.mrf.mxu0
    %v7673 = vadd.f32 %v7632, %v7672
    %v7674 = vpop.f32.mrf.mxu0
    %v7675 = vpop.f32.mrf.mxu0
    %7676 = vdwg.mxu0
    %7677 = vmatprep.subr.bf16.mxu0 %v3806
    %7678 = vmatpush1.bf16.msra.mxu0 %v3805
    %7679 = vmatprep.subr.bf16.mxu0 %v3794
    %7680 = vmatpush1.bf16.msra.mxu0 %v3793
    %7681 = vmatprep.subr.bf16.mxu0 %v3782
    %7682 = vmatpush1.bf16.msra.mxu0 %v3781
    %7683 = vmatprep.subr.bf16.mxu0 %v3770
    %7684 = vmatpush1.bf16.msra.mxu0 %v3769
    %7685 = vmatprep.subr.bf16.mxu0 %v3758
    %7686 = vmatpush1.bf16.msra.mxu0 %v3757
    %7687 = vmatprep.subr.bf16.mxu0 %v3746
    %7688 = vmatpush1.bf16.msra.mxu0 %v3745
    %7689 = vmatprep.subr.bf16.mxu0 %v3734
    %7690 = vmatpush1.bf16.msra.mxu0 %v3733
    %7691 = vmatprep.subr.bf16.mxu0 %v3722
    %7692 = vmatpush1.bf16.msra.mxu0 %v3721
    %7693 = vmatprep.subr.bf16.mxu0 %v3902
    %7694 = vmatpush2.bf16.msra.mxu0 %v3901
    %7695 = vmatprep.subr.bf16.mxu0 %v3890
    %7696 = vmatpush2.bf16.msra.mxu0 %v3889
    %7697 = vmatprep.subr.bf16.mxu0 %v3878
    %7698 = vmatpush2.bf16.msra.mxu0 %v3877
    %7699 = vmatprep.subr.bf16.mxu0 %v3866
    %7700 = vmatpush2.bf16.msra.mxu0 %v3865
    %7701 = vmatprep.subr.bf16.mxu0 %v3854
    %7702 = vmatpush2.bf16.msra.mxu0 %v3853
    %7703 = vmatprep.subr.bf16.mxu0 %v3842
    %7704 = vmatpush2.bf16.msra.mxu0 %v3841
    %7705 = vmatprep.subr.bf16.mxu0 %v3830
    %7706 = vmatpush2.bf16.msra.mxu0 %v3829
    %7707 = vmatprep.subr.bf16.mxu0 %v3818
    %7708 = vmatpush2.bf16.msra.mxu0 %v3817
    %7709 = vmatprep.mubr.bf16.mxu0 %v7590
    %7710 = vmatmul.mubr.bf16.gmra.mxu0 %v7589
    %v7711 = vpop.f32.mrf.mxu0
    %v7712 = vadd.f32 0.0, %v7711
    %v7713 = vpop.f32.mrf.mxu0
    %v7714 = vadd.f32 0.0, %v7713
    %v7715 = vpop.f32.mrf.mxu0
    %v7716 = vpop.f32.mrf.mxu0
    %7717 = vdwg.mxu0
    %7718 = vmatprep.subr.bf16.mxu0 %v3998
    %7719 = vmatpush1.bf16.msra.mxu0 %v3997
    %7720 = vmatprep.subr.bf16.mxu0 %v3986
    %7721 = vmatpush1.bf16.msra.mxu0 %v3985
    %7722 = vmatprep.subr.bf16.mxu0 %v3974
    %7723 = vmatpush1.bf16.msra.mxu0 %v3973
    %7724 = vmatprep.subr.bf16.mxu0 %v3962
    %7725 = vmatpush1.bf16.msra.mxu0 %v3961
    %7726 = vmatprep.subr.bf16.mxu0 %v3950
    %7727 = vmatpush1.bf16.msra.mxu0 %v3949
    %7728 = vmatprep.subr.bf16.mxu0 %v3938
    %7729 = vmatpush1.bf16.msra.mxu0 %v3937
    %7730 = vmatprep.subr.bf16.mxu0 %v3926
    %7731 = vmatpush1.bf16.msra.mxu0 %v3925
    %7732 = vmatprep.subr.bf16.mxu0 %v3914
    %7733 = vmatpush1.bf16.msra.mxu0 %v3913
    %7734 = vmatprep.subr.bf16.mxu0 0
    %7735 = vmatpush2.bf16.msra.mxu0 0
    %7736 = vmatprep.subr.bf16.mxu0 0
    %7737 = vmatpush2.bf16.msra.mxu0 0
    %7738 = vmatprep.subr.bf16.mxu0 0
    %7739 = vmatpush2.bf16.msra.mxu0 0
    %7740 = vmatprep.subr.bf16.mxu0 0
    %7741 = vmatpush2.bf16.msra.mxu0 0
    %7742 = vmatprep.subr.bf16.mxu0 0
    %7743 = vmatpush2.bf16.msra.mxu0 0
    %7744 = vmatprep.subr.bf16.mxu0 0
    %7745 = vmatpush2.bf16.msra.mxu0 0
    %7746 = vmatprep.subr.bf16.mxu0 0
    %7747 = vmatpush2.bf16.msra.mxu0 0
    %7748 = vmatprep.subr.bf16.mxu0 0
    %7749 = vmatpush2.bf16.msra.mxu0 0
    %7750 = vmatprep.mubr.bf16.mxu0 0
    %7751 = vmatmul.mubr.bf16.gmra.mxu0 %v7591
    %v7752 = vpop.f32.mrf.mxu0
    %v7753 = vadd.f32 %v7712, %v7752
    %v7754 = vpop.f32.mrf.mxu0
    %v7755 = vadd.f32 %v7714, %v7754
    %v7756 = vpop.f32.mrf.mxu0
    %v7757 = vpop.f32.mrf.mxu0
    %7758 = vdwg.mxu0
    %7759 = vmatprep.subr.bf16.mxu0 %v3808
    %7760 = vmatpush1.bf16.msra.mxu0 %v3807
    %7761 = vmatprep.subr.bf16.mxu0 %v3796
    %7762 = vmatpush1.bf16.msra.mxu0 %v3795
    %7763 = vmatprep.subr.bf16.mxu0 %v3784
    %7764 = vmatpush1.bf16.msra.mxu0 %v3783
    %7765 = vmatprep.subr.bf16.mxu0 %v3772
    %7766 = vmatpush1.bf16.msra.mxu0 %v3771
    %7767 = vmatprep.subr.bf16.mxu0 %v3760
    %7768 = vmatpush1.bf16.msra.mxu0 %v3759
    %7769 = vmatprep.subr.bf16.mxu0 %v3748
    %7770 = vmatpush1.bf16.msra.mxu0 %v3747
    %7771 = vmatprep.subr.bf16.mxu0 %v3736
    %7772 = vmatpush1.bf16.msra.mxu0 %v3735
    %7773 = vmatprep.subr.bf16.mxu0 %v3724
    %7774 = vmatpush1.bf16.msra.mxu0 %v3723
    %7775 = vmatprep.subr.bf16.mxu0 %v3904
    %7776 = vmatpush2.bf16.msra.mxu0 %v3903
    %7777 = vmatprep.subr.bf16.mxu0 %v3892
    %7778 = vmatpush2.bf16.msra.mxu0 %v3891
    %7779 = vmatprep.subr.bf16.mxu0 %v3880
    %7780 = vmatpush2.bf16.msra.mxu0 %v3879
    %7781 = vmatprep.subr.bf16.mxu0 %v3868
    %7782 = vmatpush2.bf16.msra.mxu0 %v3867
    %7783 = vmatprep.subr.bf16.mxu0 %v3856
    %7784 = vmatpush2.bf16.msra.mxu0 %v3855
    %7785 = vmatprep.subr.bf16.mxu0 %v3844
    %7786 = vmatpush2.bf16.msra.mxu0 %v3843
    %7787 = vmatprep.subr.bf16.mxu0 %v3832
    %7788 = vmatpush2.bf16.msra.mxu0 %v3831
    %7789 = vmatprep.subr.bf16.mxu0 %v3820
    %7790 = vmatpush2.bf16.msra.mxu0 %v3819
    %7791 = vmatprep.mubr.bf16.mxu0 %v7590
    %7792 = vmatmul.mubr.bf16.gmra.mxu0 %v7589
    %v7793 = vpop.f32.mrf.mxu0
    %v7794 = vadd.f32 0.0, %v7793
    %v7795 = vpop.f32.mrf.mxu0
    %v7796 = vadd.f32 0.0, %v7795
    %v7797 = vpop.f32.mrf.mxu0
    %v7798 = vpop.f32.mrf.mxu0
    %7799 = vdwg.mxu0
    %7800 = vmatprep.subr.bf16.mxu0 %v4000
    %7801 = vmatpush1.bf16.msra.mxu0 %v3999
    %7802 = vmatprep.subr.bf16.mxu0 %v3988
    %7803 = vmatpush1.bf16.msra.mxu0 %v3987
    %7804 = vmatprep.subr.bf16.mxu0 %v3976
    %7805 = vmatpush1.bf16.msra.mxu0 %v3975
    %7806 = vmatprep.subr.bf16.mxu0 %v3964
    %7807 = vmatpush1.bf16.msra.mxu0 %v3963
    %7808 = vmatprep.subr.bf16.mxu0 %v3952
    %7809 = vmatpush1.bf16.msra.mxu0 %v3951
    %7810 = vmatprep.subr.bf16.mxu0 %v3940
    %7811 = vmatpush1.bf16.msra.mxu0 %v3939
    %7812 = vmatprep.subr.bf16.mxu0 %v3928
    %7813 = vmatpush1.bf16.msra.mxu0 %v3927
    %7814 = vmatprep.subr.bf16.mxu0 %v3916
    %7815 = vmatpush1.bf16.msra.mxu0 %v3915
    %7816 = vmatprep.subr.bf16.mxu0 0
    %7817 = vmatpush2.bf16.msra.mxu0 0
    %7818 = vmatprep.subr.bf16.mxu0 0
    %7819 = vmatpush2.bf16.msra.mxu0 0
    %7820 = vmatprep.subr.bf16.mxu0 0
    %7821 = vmatpush2.bf16.msra.mxu0 0
    %7822 = vmatprep.subr.bf16.mxu0 0
    %7823 = vmatpush2.bf16.msra.mxu0 0
    %7824 = vmatprep.subr.bf16.mxu0 0
    %7825 = vmatpush2.bf16.msra.mxu0 0
    %7826 = vmatprep.subr.bf16.mxu0 0
    %7827 = vmatpush2.bf16.msra.mxu0 0
    %7828 = vmatprep.subr.bf16.mxu0 0
    %7829 = vmatpush2.bf16.msra.mxu0 0
    %7830 = vmatprep.subr.bf16.mxu0 0
    %7831 = vmatpush2.bf16.msra.mxu0 0
    %7832 = vmatprep.mubr.bf16.mxu0 0
    %7833 = vmatmul.mubr.bf16.gmra.mxu0 %v7591
    %v7834 = vpop.f32.mrf.mxu0
    %v7835 = vadd.f32 %v7794, %v7834
    %v7836 = vpop.f32.mrf.mxu0
    %v7837 = vadd.f32 %v7796, %v7836
    %v7838 = vpop.f32.mrf.mxu0
    %v7839 = vpop.f32.mrf.mxu0
    %7840 = vdwg.mxu0
    %7841 = vmatprep.subr.bf16.mxu0 %v3810
    %7842 = vmatpush1.bf16.msra.mxu0 %v3809
    %7843 = vmatprep.subr.bf16.mxu0 %v3798
    %7844 = vmatpush1.bf16.msra.mxu0 %v3797
    %7845 = vmatprep.subr.bf16.mxu0 %v3786
    %7846 = vmatpush1.bf16.msra.mxu0 %v3785
    %7847 = vmatprep.subr.bf16.mxu0 %v3774
    %7848 = vmatpush1.bf16.msra.mxu0 %v3773
    %7849 = vmatprep.subr.bf16.mxu0 %v3762
    %7850 = vmatpush1.bf16.msra.mxu0 %v3761
    %7851 = vmatprep.subr.bf16.mxu0 %v3750
    %7852 = vmatpush1.bf16.msra.mxu0 %v3749
    %7853 = vmatprep.subr.bf16.mxu0 %v3738
    %7854 = vmatpush1.bf16.msra.mxu0 %v3737
    %7855 = vmatprep.subr.bf16.mxu0 %v3726
    %7856 = vmatpush1.bf16.msra.mxu0 %v3725
    %7857 = vmatprep.subr.bf16.mxu0 %v3906
    %7858 = vmatpush2.bf16.msra.mxu0 %v3905
    %7859 = vmatprep.subr.bf16.mxu0 %v3894
    %7860 = vmatpush2.bf16.msra.mxu0 %v3893
    %7861 = vmatprep.subr.bf16.mxu0 %v3882
    %7862 = vmatpush2.bf16.msra.mxu0 %v3881
    %7863 = vmatprep.subr.bf16.mxu0 %v3870
    %7864 = vmatpush2.bf16.msra.mxu0 %v3869
    %7865 = vmatprep.subr.bf16.mxu0 %v3858
    %7866 = vmatpush2.bf16.msra.mxu0 %v3857
    %7867 = vmatprep.subr.bf16.mxu0 %v3846
    %7868 = vmatpush2.bf16.msra.mxu0 %v3845
    %7869 = vmatprep.subr.bf16.mxu0 %v3834
    %7870 = vmatpush2.bf16.msra.mxu0 %v3833
    %7871 = vmatprep.subr.bf16.mxu0 %v3822
    %7872 = vmatpush2.bf16.msra.mxu0 %v3821
    %7873 = vmatprep.mubr.bf16.mxu0 %v7590
    %7874 = vmatmul.mubr.bf16.gmra.mxu0 %v7589
    %v7875 = vpop.f32.mrf.mxu0
    %v7876 = vadd.f32 0.0, %v7875
    %v7877 = vpop.f32.mrf.mxu0
    %v7878 = vadd.f32 0.0, %v7877
    %v7879 = vpop.f32.mrf.mxu0
    %v7880 = vpop.f32.mrf.mxu0
    %7881 = vdwg.mxu0
    %7882 = vmatprep.subr.bf16.mxu0 %v4002
    %7883 = vmatpush1.bf16.msra.mxu0 %v4001
    %7884 = vmatprep.subr.bf16.mxu0 %v3990
    %7885 = vmatpush1.bf16.msra.mxu0 %v3989
    %7886 = vmatprep.subr.bf16.mxu0 %v3978
    %7887 = vmatpush1.bf16.msra.mxu0 %v3977
    %7888 = vmatprep.subr.bf16.mxu0 %v3966
    %7889 = vmatpush1.bf16.msra.mxu0 %v3965
    %7890 = vmatprep.subr.bf16.mxu0 %v3954
    %7891 = vmatpush1.bf16.msra.mxu0 %v3953
    %7892 = vmatprep.subr.bf16.mxu0 %v3942
    %7893 = vmatpush1.bf16.msra.mxu0 %v3941
    %7894 = vmatprep.subr.bf16.mxu0 %v3930
    %7895 = vmatpush1.bf16.msra.mxu0 %v3929
    %7896 = vmatprep.subr.bf16.mxu0 %v3918
    %7897 = vmatpush1.bf16.msra.mxu0 %v3917
    %7898 = vmatprep.subr.bf16.mxu0 0
    %7899 = vmatpush2.bf16.msra.mxu0 0
    %7900 = vmatprep.subr.bf16.mxu0 0
    %7901 = vmatpush2.bf16.msra.mxu0 0
    %7902 = vmatprep.subr.bf16.mxu0 0
    %7903 = vmatpush2.bf16.msra.mxu0 0
    %7904 = vmatprep.subr.bf16.mxu0 0
    %7905 = vmatpush2.bf16.msra.mxu0 0
    %7906 = vmatprep.subr.bf16.mxu0 0
    %7907 = vmatpush2.bf16.msra.mxu0 0
    %7908 = vmatprep.subr.bf16.mxu0 0
    %7909 = vmatpush2.bf16.msra.mxu0 0
    %7910 = vmatprep.subr.bf16.mxu0 0
    %7911 = vmatpush2.bf16.msra.mxu0 0
    %7912 = vmatprep.subr.bf16.mxu0 0
    %7913 = vmatpush2.bf16.msra.mxu0 0
    %7914 = vmatprep.mubr.bf16.mxu0 0
    %7915 = vmatmul.mubr.bf16.gmra.mxu0 %v7591
    %v7916 = vpop.f32.mrf.mxu0
    %v7917 = vadd.f32 %v7876, %v7916
    %v7918 = vpop.f32.mrf.mxu0
    %v7919 = vadd.f32 %v7878, %v7918
    %v7920 = vpop.f32.mrf.mxu0
    %v7921 = vpop.f32.mrf.mxu0
    %7922 = vdwg.mxu0
    %7923 = vmatprep.subr.bf16.mxu0 %v3812
    %7924 = vmatpush1.bf16.msra.mxu0 %v3811
    %7925 = vmatprep.subr.bf16.mxu0 %v3800
    %7926 = vmatpush1.bf16.msra.mxu0 %v3799
    %7927 = vmatprep.subr.bf16.mxu0 %v3788
    %7928 = vmatpush1.bf16.msra.mxu0 %v3787
    %7929 = vmatprep.subr.bf16.mxu0 %v3776
    %7930 = vmatpush1.bf16.msra.mxu0 %v3775
    %7931 = vmatprep.subr.bf16.mxu0 %v3764
    %7932 = vmatpush1.bf16.msra.mxu0 %v3763
    %7933 = vmatprep.subr.bf16.mxu0 %v3752
    %7934 = vmatpush1.bf16.msra.mxu0 %v3751
    %7935 = vmatprep.subr.bf16.mxu0 %v3740
    %7936 = vmatpush1.bf16.msra.mxu0 %v3739
    %7937 = vmatprep.subr.bf16.mxu0 %v3728
    %7938 = vmatpush1.bf16.msra.mxu0 %v3727
    %7939 = vmatprep.subr.bf16.mxu0 %v3908
    %7940 = vmatpush2.bf16.msra.mxu0 %v3907
    %7941 = vmatprep.subr.bf16.mxu0 %v3896
    %7942 = vmatpush2.bf16.msra.mxu0 %v3895
    %7943 = vmatprep.subr.bf16.mxu0 %v3884
    %7944 = vmatpush2.bf16.msra.mxu0 %v3883
    %7945 = vmatprep.subr.bf16.mxu0 %v3872
    %7946 = vmatpush2.bf16.msra.mxu0 %v3871
    %7947 = vmatprep.subr.bf16.mxu0 %v3860
    %7948 = vmatpush2.bf16.msra.mxu0 %v3859
    %7949 = vmatprep.subr.bf16.mxu0 %v3848
    %7950 = vmatpush2.bf16.msra.mxu0 %v3847
    %7951 = vmatprep.subr.bf16.mxu0 %v3836
    %7952 = vmatpush2.bf16.msra.mxu0 %v3835
    %7953 = vmatprep.subr.bf16.mxu0 %v3824
    %7954 = vmatpush2.bf16.msra.mxu0 %v3823
    %7955 = vmatprep.mubr.bf16.mxu0 %v7590
    %7956 = vmatmul.mubr.bf16.gmra.mxu0 %v7589
    %v7957 = vpop.f32.mrf.mxu0
    %v7958 = vadd.f32 0.0, %v7957
    %v7959 = vpop.f32.mrf.mxu0
    %v7960 = vadd.f32 0.0, %v7959
    %v7961 = vpop.f32.mrf.mxu0
    %v7962 = vpop.f32.mrf.mxu0
    %7963 = vdwg.mxu0
    %7964 = vmatprep.subr.bf16.mxu0 %v4004
    %7965 = vmatpush1.bf16.msra.mxu0 %v4003
    %7966 = vmatprep.subr.bf16.mxu0 %v3992
    %7967 = vmatpush1.bf16.msra.mxu0 %v3991
    %7968 = vmatprep.subr.bf16.mxu0 %v3980
    %7969 = vmatpush1.bf16.msra.mxu0 %v3979
    %7970 = vmatprep.subr.bf16.mxu0 %v3968
    %7971 = vmatpush1.bf16.msra.mxu0 %v3967
    %7972 = vmatprep.subr.bf16.mxu0 %v3956
    %7973 = vmatpush1.bf16.msra.mxu0 %v3955
    %7974 = vmatprep.subr.bf16.mxu0 %v3944
    %7975 = vmatpush1.bf16.msra.mxu0 %v3943
    %7976 = vmatprep.subr.bf16.mxu0 %v3932
    %7977 = vmatpush1.bf16.msra.mxu0 %v3931
    %7978 = vmatprep.subr.bf16.mxu0 %v3920
    %7979 = vmatpush1.bf16.msra.mxu0 %v3919
    %7980 = vmatprep.subr.bf16.mxu0 0
    %7981 = vmatpush2.bf16.msra.mxu0 0
    %7982 = vmatprep.subr.bf16.mxu0 0
    %7983 = vmatpush2.bf16.msra.mxu0 0
    %7984 = vmatprep.subr.bf16.mxu0 0
    %7985 = vmatpush2.bf16.msra.mxu0 0
    %7986 = vmatprep.subr.bf16.mxu0 0
    %7987 = vmatpush2.bf16.msra.mxu0 0
    %7988 = vmatprep.subr.bf16.mxu0 0
    %7989 = vmatpush2.bf16.msra.mxu0 0
    %7990 = vmatprep.subr.bf16.mxu0 0
    %7991 = vmatpush2.bf16.msra.mxu0 0
    %7992 = vmatprep.subr.bf16.mxu0 0
    %7993 = vmatpush2.bf16.msra.mxu0 0
    %7994 = vmatprep.subr.bf16.mxu0 0
    %7995 = vmatpush2.bf16.msra.mxu0 0
    %7996 = vmatprep.mubr.bf16.mxu0 0
    %7997 = vmatmul.mubr.bf16.gmra.mxu0 %v7591
    %v7998 = vpop.f32.mrf.mxu0
    %v7999 = vadd.f32 %v7958, %v7998
    %v8000 = vpop.f32.mrf.mxu0
    %v8001 = vadd.f32 %v7960, %v8000
    %v8002 = vpop.f32.mrf.mxu0
    %v8003 = vpop.f32.mrf.mxu0
    %8004 = vdwg.mxu0
    %8005 = vmatprep.subr.bf16.mxu0 %v3814
    %8006 = vmatpush1.bf16.msra.mxu0 %v3813
    %8007 = vmatprep.subr.bf16.mxu0 %v3802
    %8008 = vmatpush1.bf16.msra.mxu0 %v3801
    %8009 = vmatprep.subr.bf16.mxu0 %v3790
    %8010 = vmatpush1.bf16.msra.mxu0 %v3789
    %8011 = vmatprep.subr.bf16.mxu0 %v3778
    %8012 = vmatpush1.bf16.msra.mxu0 %v3777
    %8013 = vmatprep.subr.bf16.mxu0 %v3766
    %8014 = vmatpush1.bf16.msra.mxu0 %v3765
    %8015 = vmatprep.subr.bf16.mxu0 %v3754
    %8016 = vmatpush1.bf16.msra.mxu0 %v3753
    %8017 = vmatprep.subr.bf16.mxu0 %v3742
    %8018 = vmatpush1.bf16.msra.mxu0 %v3741
    %8019 = vmatprep.subr.bf16.mxu0 %v3730
    %8020 = vmatpush1.bf16.msra.mxu0 %v3729
    %8021 = vmatprep.subr.bf16.mxu0 %v3910
    %8022 = vmatpush2.bf16.msra.mxu0 %v3909
    %8023 = vmatprep.subr.bf16.mxu0 %v3898
    %8024 = vmatpush2.bf16.msra.mxu0 %v3897
    %8025 = vmatprep.subr.bf16.mxu0 %v3886
    %8026 = vmatpush2.bf16.msra.mxu0 %v3885
    %8027 = vmatprep.subr.bf16.mxu0 %v3874
    %8028 = vmatpush2.bf16.msra.mxu0 %v3873
    %8029 = vmatprep.subr.bf16.mxu0 %v3862
    %8030 = vmatpush2.bf16.msra.mxu0 %v3861
    %8031 = vmatprep.subr.bf16.mxu0 %v3850
    %8032 = vmatpush2.bf16.msra.mxu0 %v3849
    %8033 = vmatprep.subr.bf16.mxu0 %v3838
    %8034 = vmatpush2.bf16.msra.mxu0 %v3837
    %8035 = vmatprep.subr.bf16.mxu0 %v3826
    %8036 = vmatpush2.bf16.msra.mxu0 %v3825
    %8037 = vmatprep.mubr.bf16.mxu0 %v7590
    %8038 = vmatmul.mubr.bf16.gmra.mxu0 %v7589
    %v8039 = vpop.f32.mrf.mxu0
    %v8040 = vadd.f32 0.0, %v8039
    %v8041 = vpop.f32.mrf.mxu0
    %v8042 = vadd.f32 0.0, %v8041
    %v8043 = vpop.f32.mrf.mxu0
    %v8044 = vpop.f32.mrf.mxu0
    %8045 = vdwg.mxu0
    %8046 = vmatprep.subr.bf16.mxu0 %v4006
    %8047 = vmatpush1.bf16.msra.mxu0 %v4005
    %8048 = vmatprep.subr.bf16.mxu0 %v3994
    %8049 = vmatpush1.bf16.msra.mxu0 %v3993
    %8050 = vmatprep.subr.bf16.mxu0 %v3982
    %8051 = vmatpush1.bf16.msra.mxu0 %v3981
    %8052 = vmatprep.subr.bf16.mxu0 %v3970
    %8053 = vmatpush1.bf16.msra.mxu0 %v3969
    %8054 = vmatprep.subr.bf16.mxu0 %v3958
    %8055 = vmatpush1.bf16.msra.mxu0 %v3957
    %8056 = vmatprep.subr.bf16.mxu0 %v3946
    %8057 = vmatpush1.bf16.msra.mxu0 %v3945
    %8058 = vmatprep.subr.bf16.mxu0 %v3934
    %8059 = vmatpush1.bf16.msra.mxu0 %v3933
    %8060 = vmatprep.subr.bf16.mxu0 %v3922
    %8061 = vmatpush1.bf16.msra.mxu0 %v3921
    %8062 = vmatprep.subr.bf16.mxu0 0
    %8063 = vmatpush2.bf16.msra.mxu0 0
    %8064 = vmatprep.subr.bf16.mxu0 0
    %8065 = vmatpush2.bf16.msra.mxu0 0
    %8066 = vmatprep.subr.bf16.mxu0 0
    %8067 = vmatpush2.bf16.msra.mxu0 0
    %8068 = vmatprep.subr.bf16.mxu0 0
    %8069 = vmatpush2.bf16.msra.mxu0 0
    %8070 = vmatprep.subr.bf16.mxu0 0
    %8071 = vmatpush2.bf16.msra.mxu0 0
    %8072 = vmatprep.subr.bf16.mxu0 0
    %8073 = vmatpush2.bf16.msra.mxu0 0
    %8074 = vmatprep.subr.bf16.mxu0 0
    %8075 = vmatpush2.bf16.msra.mxu0 0
    %8076 = vmatprep.subr.bf16.mxu0 0
    %8077 = vmatpush2.bf16.msra.mxu0 0
    %8078 = vmatprep.mubr.bf16.mxu0 0
    %8079 = vmatmul.mubr.bf16.gmra.mxu0 %v7591
    %v8080 = vpop.f32.mrf.mxu0
    %v8081 = vadd.f32 %v8040, %v8080
    %v8082 = vpop.f32.mrf.mxu0
    %v8083 = vadd.f32 %v8042, %v8082
    %v8084 = vpop.f32.mrf.mxu0
    %v8085 = vpop.f32.mrf.mxu0
    %8086 = vdwg.mxu0
    %v8099 = vrot.slane %v7671, 4
    %v8100 = vrot.slane %v7673, 4
    %v8101 = vrot.slane %v7753, 4
    %v8102 = vrot.slane %v7755, 4
    %v8103 = vrot.slane %v7835, 4
    %v8104 = vrot.slane %v7837, 4
    %v8105 = vrot.slane %v7917, 4
    %v8106 = vrot.slane %v7919, 4
    %v8107 = vrot.slane %v7999, 4
    %v8108 = vrot.slane %v8001, 4
    %v8109 = vrot.slane %v8081, 4
    %v8110 = vrot.slane %v8083, 4
    %v8123 = vadd.f32 %v7571, %v8099
    %v8124 = vadd.f32 %v7572, %v8100
    %v8125 = vadd.f32 %v7573, %v8101
    %v8126 = vadd.f32 %v7574, %v8102
    %v8127 = vadd.f32 %v7575, %v8103
    %v8128 = vadd.f32 %v7576, %v8104
    %v8129 = vadd.f32 %v7577, %v8105
    %v8130 = vadd.f32 %v7578, %v8106
    %v8131 = vadd.f32 %v7579, %v8107
    %v8132 = vadd.f32 %v7580, %v8108
    %v8133 = vadd.f32 %v7581, %v8109
    %v8134 = vadd.f32 %v7582, %v8110
    %v8135 = vxor.u32 %v8123, 2147483648
    %v8136 = vxor.u32 %v8124, 2147483648
    %v8137 = vxor.u32 %v8125, 2147483648
    %v8138 = vxor.u32 %v8126, 2147483648
    %v8139 = vxor.u32 %v8127, 2147483648
    %v8140 = vxor.u32 %v8128, 2147483648
    %v8141 = vxor.u32 %v8129, 2147483648
    %v8142 = vxor.u32 %v8130, 2147483648
    %v8143 = vxor.u32 %v8131, 2147483648
    %v8144 = vxor.u32 %v8132, 2147483648
    %v8145 = vxor.u32 %v8133, 2147483648
    %v8146 = vxor.u32 %v8134, 2147483648
    %v8147 = vmul.f32 %v8135, 1.442695
    %v8148 = vpow.pop %v8147
    %v8149 = vmul.f32 %v8136, 1.442695
    %v8150 = vpow.pop %v8149
    %v8151 = vmul.f32 %v8137, 1.442695
    %v8152 = vpow.pop %v8151
    %v8153 = vmul.f32 %v8138, 1.442695
    %v8154 = vpow.pop %v8153
    %v8155 = vmul.f32 %v8139, 1.442695
    %v8156 = vpow.pop %v8155
    %v8157 = vmul.f32 %v8140, 1.442695
    %v8158 = vpow.pop %v8157
    %v8159 = vmul.f32 %v8141, 1.442695
    %v8160 = vpow.pop %v8159
    %v8161 = vmul.f32 %v8142, 1.442695
    %v8162 = vpow.pop %v8161
    %v8163 = vmul.f32 %v8143, 1.442695
    %v8164 = vpow.pop %v8163
    %v8165 = vmul.f32 %v8144, 1.442695
    %v8166 = vpow.pop %v8165
    %v8167 = vmul.f32 %v8145, 1.442695
    %v8168 = vpow.pop %v8167
    %v8169 = vmul.f32 %v8146, 1.442695
    %v8170 = vpow.pop %v8169
    %v8171 = vadd.f32 %v8148, 1.0
    %v8172 = vadd.f32 %v8150, 1.0
    %v8173 = vadd.f32 %v8152, 1.0
    %v8174 = vadd.f32 %v8154, 1.0
    %v8175 = vadd.f32 %v8156, 1.0
    %v8176 = vadd.f32 %v8158, 1.0
    %v8177 = vadd.f32 %v8160, 1.0
    %v8178 = vadd.f32 %v8162, 1.0
    %v8179 = vadd.f32 %v8164, 1.0
    %v8180 = vadd.f32 %v8166, 1.0
    %v8181 = vadd.f32 %v8168, 1.0
    %v8182 = vadd.f32 %v8170, 1.0
    %v8183 = vrcp.pop %v8171
    %v8184 = vmul.f32 1.0, %v8183
    %v8185 = vrcp.pop %v8172
    %v8186 = vmul.f32 1.0, %v8185
    %v8187 = vrcp.pop %v8173
    %v8188 = vmul.f32 1.0, %v8187
    %v8189 = vrcp.pop %v8174
    %v8190 = vmul.f32 1.0, %v8189
    %v8191 = vrcp.pop %v8175
    %v8192 = vmul.f32 1.0, %v8191
    %v8193 = vrcp.pop %v8176
    %v8194 = vmul.f32 1.0, %v8193
    %v8195 = vrcp.pop %v8177
    %v8196 = vmul.f32 1.0, %v8195
    %v8197 = vrcp.pop %v8178
    %v8198 = vmul.f32 1.0, %v8197
    %v8199 = vrcp.pop %v8179
    %v8200 = vmul.f32 1.0, %v8199
    %v8201 = vrcp.pop %v8180
    %v8202 = vmul.f32 1.0, %v8201
    %v8203 = vrcp.pop %v8181
    %v8204 = vmul.f32 1.0, %v8203
    %v8205 = vrcp.pop %v8182
    %v8206 = vmul.f32 1.0, %v8205
    %v8207 = vmul.f32 %v8196, 2.0
    %v8208 = vmul.f32 %v8198, 2.0
    %v8209 = vmul.f32 %v8200, 2.0
    %v8210 = vsub.f32 %v8207, 1.0
    %v8211 = vsub.f32 %v8208, 1.0
    %v8212 = vsub.f32 %v8209, 1.0
    %v8216 = vrot.slane %v7559, 6
    %v8217 = vrot.slane %v7560, 6
    %v8218 = vrot.slane %v7561, 6
    %v8222 = vmul.f32 %v8190, %v8216
    %v8223 = vmul.f32 %v8192, %v8217
    %v8224 = vmul.f32 %v8194, %v8218
    %v8225 = vmul.f32 %v8184, %v8210
    %v8226 = vmul.f32 %v8186, %v8211
    %v8227 = vmul.f32 %v8188, %v8212
    %v8228 = vadd.f32 %v8222, %v8225
    %v8229 = vadd.f32 %v8223, %v8226
    %v8230 = vadd.f32 %v8224, %v8227
    %v8231 = vtanh.pop %v8228
    %v8232 = vtanh.pop %v8229
    %v8233 = vtanh.pop %v8230
    %v8234 = vmul.f32 %v8202, %v8231
    %v8235 = vmul.f32 %v8204, %v8232
    %v8236 = vmul.f32 %v8206, %v8233
    %8237 = vst [vmem:[#allocation14 + $0x18] sm:$0x30] %v8234
    %8238 = vst [vmem:[#allocation14 + $0x20] sm:$0x30] %v8235
    %8239 = vst [vmem:[#allocation14 + $0x28] sm:$0x30] %v8236
    %v8240 = vld [vmem:[#allocation2 + $0x60] sm:$0xc0]
    %v8241 = vld [vmem:[#allocation2 + $0x68] sm:$0xc0]
    %v8242 = vld [vmem:[#allocation2 + $0x70] sm:$0xc0]
    %v8243 = vld [vmem:[#allocation2 + $0x78] sm:$0xc0]
    %v8244 = vld [vmem:[#allocation2 + $0x80] sm:$0xc0]
    %v8245 = vld [vmem:[#allocation2 + $0x88] sm:$0xc0]
    %v8246 = vld [vmem:[#allocation2 + $0x90] sm:$0xc0]
    %v8247 = vld [vmem:[#allocation2 + $0x98] sm:$0xc0]
    %v8248 = vld [vmem:[#allocation2 + $0xa0] sm:$0xc0]
    %v8249 = vld [vmem:[#allocation2 + $0xa8] sm:$0xc0]
    %v8250 = vld [vmem:[#allocation2 + $0xb0] sm:$0xc0]
    %v8251 = vld [vmem:[#allocation2 + $0xb8] sm:$0xc0]
    %v8252 = vpack.c.bf16 %v8234, %v8234
    %v8253 = vpack.c.bf16 %v8235, %v8235
    %v8254 = vpack.c.bf16 %v8236, %v8236
    %v8258 = vrot.slane %v8252, 2
    %v8259 = vrot.slane %v8253, 2
    %v8260 = vrot.slane %v8254, 2
    %8264 = vmatprep.subr.bf16.mxu0 %v3804
    %8265 = vmatpush1.bf16.msra.mxu0 %v3803
    %8266 = vmatprep.subr.bf16.mxu0 %v3792
    %8267 = vmatpush1.bf16.msra.mxu0 %v3791
    %8268 = vmatprep.subr.bf16.mxu0 %v3780
    %8269 = vmatpush1.bf16.msra.mxu0 %v3779
    %8270 = vmatprep.subr.bf16.mxu0 %v3768
    %8271 = vmatpush1.bf16.msra.mxu0 %v3767
    %8272 = vmatprep.subr.bf16.mxu0 %v3756
    %8273 = vmatpush1.bf16.msra.mxu0 %v3755
    %8274 = vmatprep.subr.bf16.mxu0 %v3744
    %8275 = vmatpush1.bf16.msra.mxu0 %v3743
    %8276 = vmatprep.subr.bf16.mxu0 %v3732
    %8277 = vmatpush1.bf16.msra.mxu0 %v3731
    %8278 = vmatprep.subr.bf16.mxu0 %v3720
    %8279 = vmatpush1.bf16.msra.mxu0 %v3719
    %8280 = vmatprep.subr.bf16.mxu0 %v3900
    %8281 = vmatpush2.bf16.msra.mxu0 %v3899
    %8282 = vmatprep.subr.bf16.mxu0 %v3888
    %8283 = vmatpush2.bf16.msra.mxu0 %v3887
    %8284 = vmatprep.subr.bf16.mxu0 %v3876
    %8285 = vmatpush2.bf16.msra.mxu0 %v3875
    %8286 = vmatprep.subr.bf16.mxu0 %v3864
    %8287 = vmatpush2.bf16.msra.mxu0 %v3863
    %8288 = vmatprep.subr.bf16.mxu0 %v3852
    %8289 = vmatpush2.bf16.msra.mxu0 %v3851
    %8290 = vmatprep.subr.bf16.mxu0 %v3840
    %8291 = vmatpush2.bf16.msra.mxu0 %v3839
    %8292 = vmatprep.subr.bf16.mxu0 %v3828
    %8293 = vmatpush2.bf16.msra.mxu0 %v3827
    %8294 = vmatprep.subr.bf16.mxu0 %v3816
    %8295 = vmatpush2.bf16.msra.mxu0 %v3815
    %8296 = vmatprep.mubr.bf16.mxu0 %v8259
    %8297 = vmatmul.mubr.bf16.gmra.mxu0 %v8258
    %v8298 = vpop.f32.mrf.mxu0
    %v8299 = vadd.f32 0.0, %v8298
    %v8300 = vpop.f32.mrf.mxu0
    %v8301 = vadd.f32 0.0, %v8300
    %v8302 = vpop.f32.mrf.mxu0
    %v8303 = vpop.f32.mrf.mxu0
    %8304 = vdwg.mxu0
    %8305 = vmatprep.subr.bf16.mxu0 %v3996
    %8306 = vmatpush1.bf16.msra.mxu0 %v3995
    %8307 = vmatprep.subr.bf16.mxu0 %v3984
    %8308 = vmatpush1.bf16.msra.mxu0 %v3983
    %8309 = vmatprep.subr.bf16.mxu0 %v3972
    %8310 = vmatpush1.bf16.msra.mxu0 %v3971
    %8311 = vmatprep.subr.bf16.mxu0 %v3960
    %8312 = vmatpush1.bf16.msra.mxu0 %v3959
    %8313 = vmatprep.subr.bf16.mxu0 %v3948
    %8314 = vmatpush1.bf16.msra.mxu0 %v3947
    %8315 = vmatprep.subr.bf16.mxu0 %v3936
    %8316 = vmatpush1.bf16.msra.mxu0 %v3935
    %8317 = vmatprep.subr.bf16.mxu0 %v3924
    %8318 = vmatpush1.bf16.msra.mxu0 %v3923
    %8319 = vmatprep.subr.bf16.mxu0 %v3912
    %8320 = vmatpush1.bf16.msra.mxu0 %v3911
    %8321 = vmatprep.subr.bf16.mxu0 0
    %8322 = vmatpush2.bf16.msra.mxu0 0
    %8323 = vmatprep.subr.bf16.mxu0 0
    %8324 = vmatpush2.bf16.msra.mxu0 0
    %8325 = vmatprep.subr.bf16.mxu0 0
    %8326 = vmatpush2.bf16.msra.mxu0 0
    %8327 = vmatprep.subr.bf16.mxu0 0
    %8328 = vmatpush2.bf16.msra.mxu0 0
    %8329 = vmatprep.subr.bf16.mxu0 0
    %8330 = vmatpush2.bf16.msra.mxu0 0
    %8331 = vmatprep.subr.bf16.mxu0 0
    %8332 = vmatpush2.bf16.msra.mxu0 0
    %8333 = vmatprep.subr.bf16.mxu0 0
    %8334 = vmatpush2.bf16.msra.mxu0 0
    %8335 = vmatprep.subr.bf16.mxu0 0
    %8336 = vmatpush2.bf16.msra.mxu0 0
    %8337 = vmatprep.mubr.bf16.mxu0 0
    %8338 = vmatmul.mubr.bf16.gmra.mxu0 %v8260
    %v8339 = vpop.f32.mrf.mxu0
    %v8340 = vadd.f32 %v8299, %v8339
    %v8341 = vpop.f32.mrf.mxu0
    %v8342 = vadd.f32 %v8301, %v8341
    %v8343 = vpop.f32.mrf.mxu0
    %v8344 = vpop.f32.mrf.mxu0
    %8345 = vdwg.mxu0
    %8346 = vmatprep.subr.bf16.mxu0 %v3806
    %8347 = vmatpush1.bf16.msra.mxu0 %v3805
    %8348 = vmatprep.subr.bf16.mxu0 %v3794
    %8349 = vmatpush1.bf16.msra.mxu0 %v3793
    %8350 = vmatprep.subr.bf16.mxu0 %v3782
    %8351 = vmatpush1.bf16.msra.mxu0 %v3781
    %8352 = vmatprep.subr.bf16.mxu0 %v3770
    %8353 = vmatpush1.bf16.msra.mxu0 %v3769
    %8354 = vmatprep.subr.bf16.mxu0 %v3758
    %8355 = vmatpush1.bf16.msra.mxu0 %v3757
    %8356 = vmatprep.subr.bf16.mxu0 %v3746
    %8357 = vmatpush1.bf16.msra.mxu0 %v3745
    %8358 = vmatprep.subr.bf16.mxu0 %v3734
    %8359 = vmatpush1.bf16.msra.mxu0 %v3733
    %8360 = vmatprep.subr.bf16.mxu0 %v3722
    %8361 = vmatpush1.bf16.msra.mxu0 %v3721
    %8362 = vmatprep.subr.bf16.mxu0 %v3902
    %8363 = vmatpush2.bf16.msra.mxu0 %v3901
    %8364 = vmatprep.subr.bf16.mxu0 %v3890
    %8365 = vmatpush2.bf16.msra.mxu0 %v3889
    %8366 = vmatprep.subr.bf16.mxu0 %v3878
    %8367 = vmatpush2.bf16.msra.mxu0 %v3877
    %8368 = vmatprep.subr.bf16.mxu0 %v3866
    %8369 = vmatpush2.bf16.msra.mxu0 %v3865
    %8370 = vmatprep.subr.bf16.mxu0 %v3854
    %8371 = vmatpush2.bf16.msra.mxu0 %v3853
    %8372 = vmatprep.subr.bf16.mxu0 %v3842
    %8373 = vmatpush2.bf16.msra.mxu0 %v3841
    %8374 = vmatprep.subr.bf16.mxu0 %v3830
    %8375 = vmatpush2.bf16.msra.mxu0 %v3829
    %8376 = vmatprep.subr.bf16.mxu0 %v3818
    %8377 = vmatpush2.bf16.msra.mxu0 %v3817
    %8378 = vmatprep.mubr.bf16.mxu0 %v8259
    %8379 = vmatmul.mubr.bf16.gmra.mxu0 %v8258
    %v8380 = vpop.f32.mrf.mxu0
    %v8381 = vadd.f32 0.0, %v8380
    %v8382 = vpop.f32.mrf.mxu0
    %v8383 = vadd.f32 0.0, %v8382
    %v8384 = vpop.f32.mrf.mxu0
    %v8385 = vpop.f32.mrf.mxu0
    %8386 = vdwg.mxu0
    %8387 = vmatprep.subr.bf16.mxu0 %v3998
    %8388 = vmatpush1.bf16.msra.mxu0 %v3997
    %8389 = vmatprep.subr.bf16.mxu0 %v3986
    %8390 = vmatpush1.bf16.msra.mxu0 %v3985
    %8391 = vmatprep.subr.bf16.mxu0 %v3974
    %8392 = vmatpush1.bf16.msra.mxu0 %v3973
    %8393 = vmatprep.subr.bf16.mxu0 %v3962
    %8394 = vmatpush1.bf16.msra.mxu0 %v3961
    %8395 = vmatprep.subr.bf16.mxu0 %v3950
    %8396 = vmatpush1.bf16.msra.mxu0 %v3949
    %8397 = vmatprep.subr.bf16.mxu0 %v3938
    %8398 = vmatpush1.bf16.msra.mxu0 %v3937
    %8399 = vmatprep.subr.bf16.mxu0 %v3926
    %8400 = vmatpush1.bf16.msra.mxu0 %v3925
    %8401 = vmatprep.subr.bf16.mxu0 %v3914
    %8402 = vmatpush1.bf16.msra.mxu0 %v3913
    %8403 = vmatprep.subr.bf16.mxu0 0
    %8404 = vmatpush2.bf16.msra.mxu0 0
    %8405 = vmatprep.subr.bf16.mxu0 0
    %8406 = vmatpush2.bf16.msra.mxu0 0
    %8407 = vmatprep.subr.bf16.mxu0 0
    %8408 = vmatpush2.bf16.msra.mxu0 0
    %8409 = vmatprep.subr.bf16.mxu0 0
    %8410 = vmatpush2.bf16.msra.mxu0 0
    %8411 = vmatprep.subr.bf16.mxu0 0
    %8412 = vmatpush2.bf16.msra.mxu0 0
    %8413 = vmatprep.subr.bf16.mxu0 0
    %8414 = vmatpush2.bf16.msra.mxu0 0
    %8415 = vmatprep.subr.bf16.mxu0 0
    %8416 = vmatpush2.bf16.msra.mxu0 0
    %8417 = vmatprep.subr.bf16.mxu0 0
    %8418 = vmatpush2.bf16.msra.mxu0 0
    %8419 = vmatprep.mubr.bf16.mxu0 0
    %8420 = vmatmul.mubr.bf16.gmra.mxu0 %v8260
    %v8421 = vpop.f32.mrf.mxu0
    %v8422 = vadd.f32 %v8381, %v8421
    %v8423 = vpop.f32.mrf.mxu0
    %v8424 = vadd.f32 %v8383, %v8423
    %v8425 = vpop.f32.mrf.mxu0
    %v8426 = vpop.f32.mrf.mxu0
    %8427 = vdwg.mxu0
    %8428 = vmatprep.subr.bf16.mxu0 %v3808
    %8429 = vmatpush1.bf16.msra.mxu0 %v3807
    %8430 = vmatprep.subr.bf16.mxu0 %v3796
    %8431 = vmatpush1.bf16.msra.mxu0 %v3795
    %8432 = vmatprep.subr.bf16.mxu0 %v3784
    %8433 = vmatpush1.bf16.msra.mxu0 %v3783
    %8434 = vmatprep.subr.bf16.mxu0 %v3772
    %8435 = vmatpush1.bf16.msra.mxu0 %v3771
    %8436 = vmatprep.subr.bf16.mxu0 %v3760
    %8437 = vmatpush1.bf16.msra.mxu0 %v3759
    %8438 = vmatprep.subr.bf16.mxu0 %v3748
    %8439 = vmatpush1.bf16.msra.mxu0 %v3747
    %8440 = vmatprep.subr.bf16.mxu0 %v3736
    %8441 = vmatpush1.bf16.msra.mxu0 %v3735
    %8442 = vmatprep.subr.bf16.mxu0 %v3724
    %8443 = vmatpush1.bf16.msra.mxu0 %v3723
    %8444 = vmatprep.subr.bf16.mxu0 %v3904
    %8445 = vmatpush2.bf16.msra.mxu0 %v3903
    %8446 = vmatprep.subr.bf16.mxu0 %v3892
    %8447 = vmatpush2.bf16.msra.mxu0 %v3891
    %8448 = vmatprep.subr.bf16.mxu0 %v3880
    %8449 = vmatpush2.bf16.msra.mxu0 %v3879
    %8450 = vmatprep.subr.bf16.mxu0 %v3868
    %8451 = vmatpush2.bf16.msra.mxu0 %v3867
    %8452 = vmatprep.subr.bf16.mxu0 %v3856
    %8453 = vmatpush2.bf16.msra.mxu0 %v3855
    %8454 = vmatprep.subr.bf16.mxu0 %v3844
    %8455 = vmatpush2.bf16.msra.mxu0 %v3843
    %8456 = vmatprep.subr.bf16.mxu0 %v3832
    %8457 = vmatpush2.bf16.msra.mxu0 %v3831
    %8458 = vmatprep.subr.bf16.mxu0 %v3820
    %8459 = vmatpush2.bf16.msra.mxu0 %v3819
    %8460 = vmatprep.mubr.bf16.mxu0 %v8259
    %8461 = vmatmul.mubr.bf16.gmra.mxu0 %v8258
    %v8462 = vpop.f32.mrf.mxu0
    %v8463 = vadd.f32 0.0, %v8462
    %v8464 = vpop.f32.mrf.mxu0
    %v8465 = vadd.f32 0.0, %v8464
    %v8466 = vpop.f32.mrf.mxu0
    %v8467 = vpop.f32.mrf.mxu0
    %8468 = vdwg.mxu0
    %8469 = vmatprep.subr.bf16.mxu0 %v4000
    %8470 = vmatpush1.bf16.msra.mxu0 %v3999
    %8471 = vmatprep.subr.bf16.mxu0 %v3988
    %8472 = vmatpush1.bf16.msra.mxu0 %v3987
    %8473 = vmatprep.subr.bf16.mxu0 %v3976
    %8474 = vmatpush1.bf16.msra.mxu0 %v3975
    %8475 = vmatprep.subr.bf16.mxu0 %v3964
    %8476 = vmatpush1.bf16.msra.mxu0 %v3963
    %8477 = vmatprep.subr.bf16.mxu0 %v3952
    %8478 = vmatpush1.bf16.msra.mxu0 %v3951
    %8479 = vmatprep.subr.bf16.mxu0 %v3940
    %8480 = vmatpush1.bf16.msra.mxu0 %v3939
    %8481 = vmatprep.subr.bf16.mxu0 %v3928
    %8482 = vmatpush1.bf16.msra.mxu0 %v3927
    %8483 = vmatprep.subr.bf16.mxu0 %v3916
    %8484 = vmatpush1.bf16.msra.mxu0 %v3915
    %8485 = vmatprep.subr.bf16.mxu0 0
    %8486 = vmatpush2.bf16.msra.mxu0 0
    %8487 = vmatprep.subr.bf16.mxu0 0
    %8488 = vmatpush2.bf16.msra.mxu0 0
    %8489 = vmatprep.subr.bf16.mxu0 0
    %8490 = vmatpush2.bf16.msra.mxu0 0
    %8491 = vmatprep.subr.bf16.mxu0 0
    %8492 = vmatpush2.bf16.msra.mxu0 0
    %8493 = vmatprep.subr.bf16.mxu0 0
    %8494 = vmatpush2.bf16.msra.mxu0 0
    %8495 = vmatprep.subr.bf16.mxu0 0
    %8496 = vmatpush2.bf16.msra.mxu0 0
    %8497 = vmatprep.subr.bf16.mxu0 0
    %8498 = vmatpush2.bf16.msra.mxu0 0
    %8499 = vmatprep.subr.bf16.mxu0 0
    %8500 = vmatpush2.bf16.msra.mxu0 0
    %8501 = vmatprep.mubr.bf16.mxu0 0
    %8502 = vmatmul.mubr.bf16.gmra.mxu0 %v8260
    %v8503 = vpop.f32.mrf.mxu0
    %v8504 = vadd.f32 %v8463, %v8503
    %v8505 = vpop.f32.mrf.mxu0
    %v8506 = vadd.f32 %v8465, %v8505
    %v8507 = vpop.f32.mrf.mxu0
    %v8508 = vpop.f32.mrf.mxu0
    %8509 = vdwg.mxu0
    %8510 = vmatprep.subr.bf16.mxu0 %v3810
    %8511 = vmatpush1.bf16.msra.mxu0 %v3809
    %8512 = vmatprep.subr.bf16.mxu0 %v3798
    %8513 = vmatpush1.bf16.msra.mxu0 %v3797
    %8514 = vmatprep.subr.bf16.mxu0 %v3786
    %8515 = vmatpush1.bf16.msra.mxu0 %v3785
    %8516 = vmatprep.subr.bf16.mxu0 %v3774
    %8517 = vmatpush1.bf16.msra.mxu0 %v3773
    %8518 = vmatprep.subr.bf16.mxu0 %v3762
    %8519 = vmatpush1.bf16.msra.mxu0 %v3761
    %8520 = vmatprep.subr.bf16.mxu0 %v3750
    %8521 = vmatpush1.bf16.msra.mxu0 %v3749
    %8522 = vmatprep.subr.bf16.mxu0 %v3738
    %8523 = vmatpush1.bf16.msra.mxu0 %v3737
    %8524 = vmatprep.subr.bf16.mxu0 %v3726
    %8525 = vmatpush1.bf16.msra.mxu0 %v3725
    %8526 = vmatprep.subr.bf16.mxu0 %v3906
    %8527 = vmatpush2.bf16.msra.mxu0 %v3905
    %8528 = vmatprep.subr.bf16.mxu0 %v3894
    %8529 = vmatpush2.bf16.msra.mxu0 %v3893
    %8530 = vmatprep.subr.bf16.mxu0 %v3882
    %8531 = vmatpush2.bf16.msra.mxu0 %v3881
    %8532 = vmatprep.subr.bf16.mxu0 %v3870
    %8533 = vmatpush2.bf16.msra.mxu0 %v3869
    %8534 = vmatprep.subr.bf16.mxu0 %v3858
    %8535 = vmatpush2.bf16.msra.mxu0 %v3857
    %8536 = vmatprep.subr.bf16.mxu0 %v3846
    %8537 = vmatpush2.bf16.msra.mxu0 %v3845
    %8538 = vmatprep.subr.bf16.mxu0 %v3834
    %8539 = vmatpush2.bf16.msra.mxu0 %v3833
    %8540 = vmatprep.subr.bf16.mxu0 %v3822
    %8541 = vmatpush2.bf16.msra.mxu0 %v3821
    %8542 = vmatprep.mubr.bf16.mxu0 %v8259
    %8543 = vmatmul.mubr.bf16.gmra.mxu0 %v8258
    %v8544 = vpop.f32.mrf.mxu0
    %v8545 = vadd.f32 0.0, %v8544
    %v8546 = vpop.f32.mrf.mxu0
    %v8547 = vadd.f32 0.0, %v8546
    %v8548 = vpop.f32.mrf.mxu0
    %v8549 = vpop.f32.mrf.mxu0
    %8550 = vdwg.mxu0
    %8551 = vmatprep.subr.bf16.mxu0 %v4002
    %8552 = vmatpush1.bf16.msra.mxu0 %v4001
    %8553 = vmatprep.subr.bf16.mxu0 %v3990
    %8554 = vmatpush1.bf16.msra.mxu0 %v3989
    %8555 = vmatprep.subr.bf16.mxu0 %v3978
    %8556 = vmatpush1.bf16.msra.mxu0 %v3977
    %8557 = vmatprep.subr.bf16.mxu0 %v3966
    %8558 = vmatpush1.bf16.msra.mxu0 %v3965
    %8559 = vmatprep.subr.bf16.mxu0 %v3954
    %8560 = vmatpush1.bf16.msra.mxu0 %v3953
    %8561 = vmatprep.subr.bf16.mxu0 %v3942
    %8562 = vmatpush1.bf16.msra.mxu0 %v3941
    %8563 = vmatprep.subr.bf16.mxu0 %v3930
    %8564 = vmatpush1.bf16.msra.mxu0 %v3929
    %8565 = vmatprep.subr.bf16.mxu0 %v3918
    %8566 = vmatpush1.bf16.msra.mxu0 %v3917
    %8567 = vmatprep.subr.bf16.mxu0 0
    %8568 = vmatpush2.bf16.msra.mxu0 0
    %8569 = vmatprep.subr.bf16.mxu0 0
    %8570 = vmatpush2.bf16.msra.mxu0 0
    %8571 = vmatprep.subr.bf16.mxu0 0
    %8572 = vmatpush2.bf16.msra.mxu0 0
    %8573 = vmatprep.subr.bf16.mxu0 0
    %8574 = vmatpush2.bf16.msra.mxu0 0
    %8575 = vmatprep.subr.bf16.mxu0 0
    %8576 = vmatpush2.bf16.msra.mxu0 0
    %8577 = vmatprep.subr.bf16.mxu0 0
    %8578 = vmatpush2.bf16.msra.mxu0 0
    %8579 = vmatprep.subr.bf16.mxu0 0
    %8580 = vmatpush2.bf16.msra.mxu0 0
    %8581 = vmatprep.subr.bf16.mxu0 0
    %8582 = vmatpush2.bf16.msra.mxu0 0
    %8583 = vmatprep.mubr.bf16.mxu0 0
    %8584 = vmatmul.mubr.bf16.gmra.mxu0 %v8260
    %v8585 = vpop.f32.mrf.mxu0
    %v8586 = vadd.f32 %v8545, %v8585
    %v8587 = vpop.f32.mrf.mxu0
    %v8588 = vadd.f32 %v8547, %v8587
    %v8589 = vpop.f32.mrf.mxu0
    %v8590 = vpop.f32.mrf.mxu0
    %8591 = vdwg.mxu0
    %8592 = vmatprep.subr.bf16.mxu0 %v3812
    %8593 = vmatpush1.bf16.msra.mxu0 %v3811
    %8594 = vmatprep.subr.bf16.mxu0 %v3800
    %8595 = vmatpush1.bf16.msra.mxu0 %v3799
    %8596 = vmatprep.subr.bf16.mxu0 %v3788
    %8597 = vmatpush1.bf16.msra.mxu0 %v3787
    %8598 = vmatprep.subr.bf16.mxu0 %v3776
    %8599 = vmatpush1.bf16.msra.mxu0 %v3775
    %8600 = vmatprep.subr.bf16.mxu0 %v3764
    %8601 = vmatpush1.bf16.msra.mxu0 %v3763
    %8602 = vmatprep.subr.bf16.mxu0 %v3752
    %8603 = vmatpush1.bf16.msra.mxu0 %v3751
    %8604 = vmatprep.subr.bf16.mxu0 %v3740
    %8605 = vmatpush1.bf16.msra.mxu0 %v3739
    %8606 = vmatprep.subr.bf16.mxu0 %v3728
    %8607 = vmatpush1.bf16.msra.mxu0 %v3727
    %8608 = vmatprep.subr.bf16.mxu0 %v3908
    %8609 = vmatpush2.bf16.msra.mxu0 %v3907
    %8610 = vmatprep.subr.bf16.mxu0 %v3896
    %8611 = vmatpush2.bf16.msra.mxu0 %v3895
    %8612 = vmatprep.subr.bf16.mxu0 %v3884
    %8613 = vmatpush2.bf16.msra.mxu0 %v3883
    %8614 = vmatprep.subr.bf16.mxu0 %v3872
    %8615 = vmatpush2.bf16.msra.mxu0 %v3871
    %8616 = vmatprep.subr.bf16.mxu0 %v3860
    %8617 = vmatpush2.bf16.msra.mxu0 %v3859
    %8618 = vmatprep.subr.bf16.mxu0 %v3848
    %8619 = vmatpush2.bf16.msra.mxu0 %v3847
    %8620 = vmatprep.subr.bf16.mxu0 %v3836
    %8621 = vmatpush2.bf16.msra.mxu0 %v3835
    %8622 = vmatprep.subr.bf16.mxu0 %v3824
    %8623 = vmatpush2.bf16.msra.mxu0 %v3823
    %8624 = vmatprep.mubr.bf16.mxu0 %v8259
    %8625 = vmatmul.mubr.bf16.gmra.mxu0 %v8258
    %v8626 = vpop.f32.mrf.mxu0
    %v8627 = vadd.f32 0.0, %v8626
    %v8628 = vpop.f32.mrf.mxu0
    %v8629 = vadd.f32 0.0, %v8628
    %v8630 = vpop.f32.mrf.mxu0
    %v8631 = vpop.f32.mrf.mxu0
    %8632 = vdwg.mxu0
    %8633 = vmatprep.subr.bf16.mxu0 %v4004
    %8634 = vmatpush1.bf16.msra.mxu0 %v4003
    %8635 = vmatprep.subr.bf16.mxu0 %v3992
    %8636 = vmatpush1.bf16.msra.mxu0 %v3991
    %8637 = vmatprep.subr.bf16.mxu0 %v3980
    %8638 = vmatpush1.bf16.msra.mxu0 %v3979
    %8639 = vmatprep.subr.bf16.mxu0 %v3968
    %8640 = vmatpush1.bf16.msra.mxu0 %v3967
    %8641 = vmatprep.subr.bf16.mxu0 %v3956
    %8642 = vmatpush1.bf16.msra.mxu0 %v3955
    %8643 = vmatprep.subr.bf16.mxu0 %v3944
    %8644 = vmatpush1.bf16.msra.mxu0 %v3943
    %8645 = vmatprep.subr.bf16.mxu0 %v3932
    %8646 = vmatpush1.bf16.msra.mxu0 %v3931
    %8647 = vmatprep.subr.bf16.mxu0 %v3920
    %8648 = vmatpush1.bf16.msra.mxu0 %v3919
    %8649 = vmatprep.subr.bf16.mxu0 0
    %8650 = vmatpush2.bf16.msra.mxu0 0
    %8651 = vmatprep.subr.bf16.mxu0 0
    %8652 = vmatpush2.bf16.msra.mxu0 0
    %8653 = vmatprep.subr.bf16.mxu0 0
    %8654 = vmatpush2.bf16.msra.mxu0 0
    %8655 = vmatprep.subr.bf16.mxu0 0
    %8656 = vmatpush2.bf16.msra.mxu0 0
    %8657 = vmatprep.subr.bf16.mxu0 0
    %8658 = vmatpush2.bf16.msra.mxu0 0
    %8659 = vmatprep.subr.bf16.mxu0 0
    %8660 = vmatpush2.bf16.msra.mxu0 0
    %8661 = vmatprep.subr.bf16.mxu0 0
    %8662 = vmatpush2.bf16.msra.mxu0 0
    %8663 = vmatprep.subr.bf16.mxu0 0
    %8664 = vmatpush2.bf16.msra.mxu0 0
    %8665 = vmatprep.mubr.bf16.mxu0 0
    %8666 = vmatmul.mubr.bf16.gmra.mxu0 %v8260
    %v8667 = vpop.f32.mrf.mxu0
    %v8668 = vadd.f32 %v8627, %v8667
    %v8669 = vpop.f32.mrf.mxu0
    %v8670 = vadd.f32 %v8629, %v8669
    %v8671 = vpop.f32.mrf.mxu0
    %v8672 = vpop.f32.mrf.mxu0
    %8673 = vdwg.mxu0
    %8674 = vmatprep.subr.bf16.mxu0 %v3814
    %8675 = vmatpush1.bf16.msra.mxu0 %v3813
    %8676 = vmatprep.subr.bf16.mxu0 %v3802
    %8677 = vmatpush1.bf16.msra.mxu0 %v3801
    %8678 = vmatprep.subr.bf16.mxu0 %v3790
    %8679 = vmatpush1.bf16.msra.mxu0 %v3789
    %8680 = vmatprep.subr.bf16.mxu0 %v3778
    %8681 = vmatpush1.bf16.msra.mxu0 %v3777
    %8682 = vmatprep.subr.bf16.mxu0 %v3766
    %8683 = vmatpush1.bf16.msra.mxu0 %v3765
    %8684 = vmatprep.subr.bf16.mxu0 %v3754
    %8685 = vmatpush1.bf16.msra.mxu0 %v3753
    %8686 = vmatprep.subr.bf16.mxu0 %v3742
    %8687 = vmatpush1.bf16.msra.mxu0 %v3741
    %8688 = vmatprep.subr.bf16.mxu0 %v3730
    %8689 = vmatpush1.bf16.msra.mxu0 %v3729
    %8690 = vmatprep.subr.bf16.mxu0 %v3910
    %8691 = vmatpush2.bf16.msra.mxu0 %v3909
    %8692 = vmatprep.subr.bf16.mxu0 %v3898
    %8693 = vmatpush2.bf16.msra.mxu0 %v3897
    %8694 = vmatprep.subr.bf16.mxu0 %v3886
    %8695 = vmatpush2.bf16.msra.mxu0 %v3885
    %8696 = vmatprep.subr.bf16.mxu0 %v3874
    %8697 = vmatpush2.bf16.msra.mxu0 %v3873
    %8698 = vmatprep.subr.bf16.mxu0 %v3862
    %8699 = vmatpush2.bf16.msra.mxu0 %v3861
    %8700 = vmatprep.subr.bf16.mxu0 %v3850
    %8701 = vmatpush2.bf16.msra.mxu0 %v3849
    %8702 = vmatprep.subr.bf16.mxu0 %v3838
    %8703 = vmatpush2.bf16.msra.mxu0 %v3837
    %8704 = vmatprep.subr.bf16.mxu0 %v3826
    %8705 = vmatpush2.bf16.msra.mxu0 %v3825
    %8706 = vmatprep.mubr.bf16.mxu0 %v8259
    %8707 = vmatmul.mubr.bf16.gmra.mxu0 %v8258
    %v8708 = vpop.f32.mrf.mxu0
    %v8709 = vadd.f32 0.0, %v8708
    %v8710 = vpop.f32.mrf.mxu0
    %v8711 = vadd.f32 0.0, %v8710
    %v8712 = vpop.f32.mrf.mxu0
    %v8713 = vpop.f32.mrf.mxu0
    %8714 = vdwg.mxu0
    %8715 = vmatprep.subr.bf16.mxu0 %v4006
    %8716 = vmatpush1.bf16.msra.mxu0 %v4005
    %8717 = vmatprep.subr.bf16.mxu0 %v3994
    %8718 = vmatpush1.bf16.msra.mxu0 %v3993
    %8719 = vmatprep.subr.bf16.mxu0 %v3982
    %8720 = vmatpush1.bf16.msra.mxu0 %v3981
    %8721 = vmatprep.subr.bf16.mxu0 %v3970
    %8722 = vmatpush1.bf16.msra.mxu0 %v3969
    %8723 = vmatprep.subr.bf16.mxu0 %v3958
    %8724 = vmatpush1.bf16.msra.mxu0 %v3957
    %8725 = vmatprep.subr.bf16.mxu0 %v3946
    %8726 = vmatpush1.bf16.msra.mxu0 %v3945
    %8727 = vmatprep.subr.bf16.mxu0 %v3934
    %8728 = vmatpush1.bf16.msra.mxu0 %v3933
    %8729 = vmatprep.subr.bf16.mxu0 %v3922
    %8730 = vmatpush1.bf16.msra.mxu0 %v3921
    %8731 = vmatprep.subr.bf16.mxu0 0
    %8732 = vmatpush2.bf16.msra.mxu0 0
    %8733 = vmatprep.subr.bf16.mxu0 0
    %8734 = vmatpush2.bf16.msra.mxu0 0
    %8735 = vmatprep.subr.bf16.mxu0 0
    %8736 = vmatpush2.bf16.msra.mxu0 0
    %8737 = vmatprep.subr.bf16.mxu0 0
    %8738 = vmatpush2.bf16.msra.mxu0 0
    %8739 = vmatprep.subr.bf16.mxu0 0
    %8740 = vmatpush2.bf16.msra.mxu0 0
    %8741 = vmatprep.subr.bf16.mxu0 0
    %8742 = vmatpush2.bf16.msra.mxu0 0
    %8743 = vmatprep.subr.bf16.mxu0 0
    %8744 = vmatpush2.bf16.msra.mxu0 0
    %8745 = vmatprep.subr.bf16.mxu0 0
    %8746 = vmatpush2.bf16.msra.mxu0 0
    %8747 = vmatprep.mubr.bf16.mxu0 0
    %8748 = vmatmul.mubr.bf16.gmra.mxu0 %v8260
    %v8749 = vpop.f32.mrf.mxu0
    %v8750 = vadd.f32 %v8709, %v8749
    %v8751 = vpop.f32.mrf.mxu0
    %v8752 = vadd.f32 %v8711, %v8751
    %v8753 = vpop.f32.mrf.mxu0
    %v8754 = vpop.f32.mrf.mxu0
    %8755 = vdwg.mxu0
    %v8768 = vrot.slane %v8340, 2
    %v8769 = vrot.slane %v8342, 2
    %v8770 = vrot.slane %v8422, 2
    %v8771 = vrot.slane %v8424, 2
    %v8772 = vrot.slane %v8504, 2
    %v8773 = vrot.slane %v8506, 2
    %v8774 = vrot.slane %v8586, 2
    %v8775 = vrot.slane %v8588, 2
    %v8776 = vrot.slane %v8668, 2
    %v8777 = vrot.slane %v8670, 2
    %v8778 = vrot.slane %v8750, 2
    %v8779 = vrot.slane %v8752, 2
    %v8792 = vadd.f32 %v8240, %v8768
    %v8793 = vadd.f32 %v8241, %v8769
    %v8794 = vadd.f32 %v8242, %v8770
    %v8795 = vadd.f32 %v8243, %v8771
    %v8796 = vadd.f32 %v8244, %v8772
    %v8797 = vadd.f32 %v8245, %v8773
    %v8798 = vadd.f32 %v8246, %v8774
    %v8799 = vadd.f32 %v8247, %v8775
    %v8800 = vadd.f32 %v8248, %v8776
    %v8801 = vadd.f32 %v8249, %v8777
    %v8802 = vadd.f32 %v8250, %v8778
    %v8803 = vadd.f32 %v8251, %v8779
    %v8804 = vxor.u32 %v8792, 2147483648
    %v8805 = vxor.u32 %v8793, 2147483648
    %v8806 = vxor.u32 %v8794, 2147483648
    %v8807 = vxor.u32 %v8795, 2147483648
    %v8808 = vxor.u32 %v8796, 2147483648
    %v8809 = vxor.u32 %v8797, 2147483648
    %v8810 = vxor.u32 %v8798, 2147483648
    %v8811 = vxor.u32 %v8799, 2147483648
    %v8812 = vxor.u32 %v8800, 2147483648
    %v8813 = vxor.u32 %v8801, 2147483648
    %v8814 = vxor.u32 %v8802, 2147483648
    %v8815 = vxor.u32 %v8803, 2147483648
    %v8816 = vmul.f32 %v8804, 1.442695
    %v8817 = vpow.pop %v8816
    %v8818 = vmul.f32 %v8805, 1.442695
    %v8819 = vpow.pop %v8818
    %v8820 = vmul.f32 %v8806, 1.442695
    %v8821 = vpow.pop %v8820
    %v8822 = vmul.f32 %v8807, 1.442695
    %v8823 = vpow.pop %v8822
    %v8824 = vmul.f32 %v8808, 1.442695
    %v8825 = vpow.pop %v8824
    %v8826 = vmul.f32 %v8809, 1.442695
    %v8827 = vpow.pop %v8826
    %v8828 = vmul.f32 %v8810, 1.442695
    %v8829 = vpow.pop %v8828
    %v8830 = vmul.f32 %v8811, 1.442695
    %v8831 = vpow.pop %v8830
    %v8832 = vmul.f32 %v8812, 1.442695
    %v8833 = vpow.pop %v8832
    %v8834 = vmul.f32 %v8813, 1.442695
    %v8835 = vpow.pop %v8834
    %v8836 = vmul.f32 %v8814, 1.442695
    %v8837 = vpow.pop %v8836
    %v8838 = vmul.f32 %v8815, 1.442695
    %v8839 = vpow.pop %v8838
    %v8840 = vadd.f32 %v8817, 1.0
    %v8841 = vadd.f32 %v8819, 1.0
    %v8842 = vadd.f32 %v8821, 1.0
    %v8843 = vadd.f32 %v8823, 1.0
    %v8844 = vadd.f32 %v8825, 1.0
    %v8845 = vadd.f32 %v8827, 1.0
    %v8846 = vadd.f32 %v8829, 1.0
    %v8847 = vadd.f32 %v8831, 1.0
    %v8848 = vadd.f32 %v8833, 1.0
    %v8849 = vadd.f32 %v8835, 1.0
    %v8850 = vadd.f32 %v8837, 1.0
    %v8851 = vadd.f32 %v8839, 1.0
    %v8852 = vrcp.pop %v8840
    %v8853 = vmul.f32 1.0, %v8852
    %v8854 = vrcp.pop %v8841
    %v8855 = vmul.f32 1.0, %v8854
    %v8856 = vrcp.pop %v8842
    %v8857 = vmul.f32 1.0, %v8856
    %v8858 = vrcp.pop %v8843
    %v8859 = vmul.f32 1.0, %v8858
    %v8860 = vrcp.pop %v8844
    %v8861 = vmul.f32 1.0, %v8860
    %v8862 = vrcp.pop %v8845
    %v8863 = vmul.f32 1.0, %v8862
    %v8864 = vrcp.pop %v8846
    %v8865 = vmul.f32 1.0, %v8864
    %v8866 = vrcp.pop %v8847
    %v8867 = vmul.f32 1.0, %v8866
    %v8868 = vrcp.pop %v8848
    %v8869 = vmul.f32 1.0, %v8868
    %v8870 = vrcp.pop %v8849
    %v8871 = vmul.f32 1.0, %v8870
    %v8872 = vrcp.pop %v8850
    %v8873 = vmul.f32 1.0, %v8872
    %v8874 = vrcp.pop %v8851
    %v8875 = vmul.f32 1.0, %v8874
    %v8876 = vmul.f32 %v8865, 2.0
    %v8877 = vmul.f32 %v8867, 2.0
    %v8878 = vmul.f32 %v8869, 2.0
    %v8879 = vsub.f32 %v8876, 1.0
    %v8880 = vsub.f32 %v8877, 1.0
    %v8881 = vsub.f32 %v8878, 1.0
    %v8885 = vrot.slane %v8228, 6
    %v8886 = vrot.slane %v8229, 6
    %v8887 = vrot.slane %v8230, 6
    %v8891 = vmul.f32 %v8859, %v8885
    %v8892 = vmul.f32 %v8861, %v8886
    %v8893 = vmul.f32 %v8863, %v8887
    %v8894 = vmul.f32 %v8853, %v8879
    %v8895 = vmul.f32 %v8855, %v8880
    %v8896 = vmul.f32 %v8857, %v8881
    %v8897 = vadd.f32 %v8891, %v8894
    %v8898 = vadd.f32 %v8892, %v8895
    %v8899 = vadd.f32 %v8893, %v8896
    %v8900 = vtanh.pop %v8897
    %v8901 = vtanh.pop %v8898
    %v8902 = vtanh.pop %v8899
    %v8903 = vmul.f32 %v8871, %v8900
    %v8904 = vmul.f32 %v8873, %v8901
    %v8905 = vmul.f32 %v8875, %v8902
    %8906 = vst [vmem:[#allocation14 + $0x18] sm:$0xc0] %v8903
    %8907 = vst [vmem:[#allocation14 + $0x20] sm:$0xc0] %v8904
    %8908 = vst [vmem:[#allocation14 + $0x28] sm:$0xc0] %v8905
    %v8912 = vcombine.high %v8897, %v8898
    %v8913 = vcombine.high %v8899, %v8899
    %v8915 = vunpack.c.l.s4 1983009808
    %v8916 = vunpack.c.0.s8 %v8915
    %v8917 = vlaneseq
    %v8918 = vshrl.u32 %v8917, 7
    %v8919 = vsub.s32 %v8916, %v8918
    %v8920 = vrot.slane %v8912, %v8919
    %v8922 = vunpack.c.l.s4 1983009808
    %v8923 = vunpack.c.0.s8 %v8922
    %v8924 = vlaneseq
    %v8925 = vshrl.u32 %v8924, 7
    %v8926 = vsub.s32 %v8923, %v8925
    %v8927 = vrot.slane %v8913, %v8926
    %v8928 = vcombine.high %v8920, %v8927
    %8930 = vst [vmem:[#allocation17] sm:$0x3f] %v8928
    %s8931 = smul.u32 %s2548, 4
    %s8932 = sshll.u32 %s8931, 4
    %8933 = dma.done %s87, %s8932
    %v8934 = vpack.c.bf16 %v8903, %v8903
    %v8935 = vpack.c.bf16 %v8904, %v8904
    %v8936 = vpack.c.bf16 %v8905, %v8905
    %v8937 = vld [vmem:[#allocation4] sm:$0xff]
    %v8938 = vld [vmem:[#allocation4 + $0x8] sm:$0xff]
    %v8939 = vld [vmem:[#allocation4 + $0x10] sm:$0xff]
    %v8940 = vld [vmem:[#allocation4 + $0x18] sm:$0xff]
    %v8941 = vld [vmem:[#allocation4 + $0x20] sm:$0xff]
    %v8942 = vld [vmem:[#allocation4 + $0x28] sm:$0xff]
    %v8943 = vld [vmem:[#allocation4 + $0x30] sm:$0xff]
    %v8944 = vld [vmem:[#allocation4 + $0x38] sm:$0xff]
    %v8945 = vld [vmem:[#allocation4 + $0x40] sm:$0xff]
    %v8946 = vld [vmem:[#allocation4 + $0x48] sm:$0xff]
    %v8947 = vld [vmem:[#allocation4 + $0x50] sm:$0xff]
    %v8948 = vld [vmem:[#allocation4 + $0x58] sm:$0xff]
    %v8949 = vld [vmem:[#allocation4 + $0x60] sm:$0xff]
    %v8950 = vld [vmem:[#allocation4 + $0x68] sm:$0xff]
    %v8951 = vld [vmem:[#allocation4 + $0x70] sm:$0xff]
    %v8952 = vld [vmem:[#allocation4 + $0x78] sm:$0xff]
    %v8953 = vld [vmem:[#allocation4 + $0x80] sm:$0xff]
    %v8954 = vld [vmem:[#allocation4 + $0x88] sm:$0xff]
    %v8955 = vld [vmem:[#allocation4 + $0x90] sm:$0xff]
    %v8956 = vld [vmem:[#allocation4 + $0x98] sm:$0xff]
    %v8957 = vld [vmem:[#allocation4 + $0xa0] sm:$0xff]
    %v8958 = vld [vmem:[#allocation4 + $0xa8] sm:$0xff]
    %v8959 = vld [vmem:[#allocation4 + $0xb0] sm:$0xff]
    %v8960 = vld [vmem:[#allocation4 + $0xb8] sm:$0xff]
    %v8961 = vld [vmem:[#allocation4 + $0xc0] sm:$0xff]
    %v8962 = vld [vmem:[#allocation4 + $0xc8] sm:$0xff]
    %v8963 = vld [vmem:[#allocation4 + $0xd0] sm:$0xff]
    %v8964 = vld [vmem:[#allocation4 + $0xd8] sm:$0xff]
    %v8965 = vld [vmem:[#allocation4 + $0xe0] sm:$0xff]
    %v8966 = vld [vmem:[#allocation4 + $0xe8] sm:$0xff]
    %v8967 = vld [vmem:[#allocation4 + $0xf0] sm:$0xff]
    %v8968 = vld [vmem:[#allocation4 + $0xf8] sm:$0xff]
    %v8969 = vld [vmem:[#allocation4 + $0x100] sm:$0xff]
    %v8970 = vld [vmem:[#allocation4 + $0x108] sm:$0xff]
    %v8971 = vld [vmem:[#allocation4 + $0x110] sm:$0xff]
    %v8972 = vld [vmem:[#allocation4 + $0x118] sm:$0xff]
    %v8973 = vld [vmem:[#allocation4 + $0x120] sm:$0xff]
    %v8974 = vld [vmem:[#allocation4 + $0x128] sm:$0xff]
    %v8975 = vld [vmem:[#allocation4 + $0x130] sm:$0xff]
    %v8976 = vld [vmem:[#allocation4 + $0x138] sm:$0xff]
    %v8977 = vld [vmem:[#allocation4 + $0x140] sm:$0xff]
    %v8978 = vld [vmem:[#allocation4 + $0x148] sm:$0xff]
    %v8979 = vld [vmem:[#allocation4 + $0x150] sm:$0xff]
    %v8980 = vld [vmem:[#allocation4 + $0x158] sm:$0xff]
    %v8981 = vld [vmem:[#allocation4 + $0x160] sm:$0xff]
    %v8982 = vld [vmem:[#allocation4 + $0x168] sm:$0xff]
    %v8983 = vld [vmem:[#allocation4 + $0x170] sm:$0xff]
    %v8984 = vld [vmem:[#allocation4 + $0x178] sm:$0xff]
    %v8985 = vld [vmem:[#allocation4 + $0x180] sm:$0xff]
    %v8986 = vld [vmem:[#allocation4 + $0x188] sm:$0xff]
    %v8987 = vld [vmem:[#allocation4 + $0x190] sm:$0xff]
    %v8988 = vld [vmem:[#allocation4 + $0x198] sm:$0xff]
    %v8989 = vld [vmem:[#allocation4 + $0x1a0] sm:$0xff]
    %v8990 = vld [vmem:[#allocation4 + $0x1a8] sm:$0xff]
    %v8991 = vld [vmem:[#allocation4 + $0x1b0] sm:$0xff]
    %v8992 = vld [vmem:[#allocation4 + $0x1b8] sm:$0xff]
    %v8993 = vld [vmem:[#allocation4 + $0x1c0] sm:$0xff]
    %v8994 = vld [vmem:[#allocation4 + $0x1c8] sm:$0xff]
    %v8995 = vld [vmem:[#allocation4 + $0x1d0] sm:$0xff]
    %v8996 = vld [vmem:[#allocation4 + $0x1d8] sm:$0xff]
    %v8997 = vld [vmem:[#allocation4 + $0x1e0] sm:$0xff]
    %v8998 = vld [vmem:[#allocation4 + $0x1e8] sm:$0xff]
    %v8999 = vld [vmem:[#allocation4 + $0x1f0] sm:$0xff]
    %v9000 = vld [vmem:[#allocation4 + $0x1f8] sm:$0xff]
    %v9001 = vld [vmem:[#allocation4 + $0x200] sm:$0xff]
    %v9002 = vld [vmem:[#allocation4 + $0x208] sm:$0xff]
    %v9003 = vld [vmem:[#allocation4 + $0x210] sm:$0xff]
    %v9004 = vld [vmem:[#allocation4 + $0x218] sm:$0xff]
    %v9005 = vld [vmem:[#allocation4 + $0x220] sm:$0xff]
    %v9006 = vld [vmem:[#allocation4 + $0x228] sm:$0xff]
    %v9007 = vld [vmem:[#allocation4 + $0x230] sm:$0xff]
    %v9008 = vld [vmem:[#allocation4 + $0x238] sm:$0xff]
    %v9009 = vld [vmem:[#allocation4 + $0x240] sm:$0xff]
    %v9010 = vld [vmem:[#allocation4 + $0x248] sm:$0xff]
    %v9011 = vld [vmem:[#allocation4 + $0x250] sm:$0xff]
    %v9012 = vld [vmem:[#allocation4 + $0x258] sm:$0xff]
    %v9013 = vld [vmem:[#allocation4 + $0x260] sm:$0xff]
    %v9014 = vld [vmem:[#allocation4 + $0x268] sm:$0xff]
    %v9015 = vld [vmem:[#allocation4 + $0x270] sm:$0xff]
    %v9016 = vld [vmem:[#allocation4 + $0x278] sm:$0xff]
    %v9017 = vld [vmem:[#allocation4 + $0x280] sm:$0xff]
    %v9018 = vld [vmem:[#allocation4 + $0x288] sm:$0xff]
    %v9019 = vld [vmem:[#allocation4 + $0x290] sm:$0xff]
    %v9020 = vld [vmem:[#allocation4 + $0x298] sm:$0xff]
    %v9021 = vld [vmem:[#allocation4 + $0x2a0] sm:$0xff]
    %v9022 = vld [vmem:[#allocation4 + $0x2a8] sm:$0xff]
    %v9023 = vld [vmem:[#allocation4 + $0x2b0] sm:$0xff]
    %v9024 = vld [vmem:[#allocation4 + $0x2b8] sm:$0xff]
    %v9025 = vld [vmem:[#allocation4 + $0x2c0] sm:$0xff]
    %v9026 = vld [vmem:[#allocation4 + $0x2c8] sm:$0xff]
    %v9027 = vld [vmem:[#allocation4 + $0x2d0] sm:$0xff]
    %v9028 = vld [vmem:[#allocation4 + $0x2d8] sm:$0xff]
    %v9029 = vld [vmem:[#allocation4 + $0x2e0] sm:$0xff]
    %v9030 = vld [vmem:[#allocation4 + $0x2e8] sm:$0xff]
    %v9031 = vld [vmem:[#allocation4 + $0x2f0] sm:$0xff]
    %v9032 = vld [vmem:[#allocation4 + $0x2f8] sm:$0xff]
    %v9033 = vld [vmem:[#allocation12] sm:$0xf]
    %v9035 = vlaneseq
    %v9036 = vshrl.u32 %v9035, 7
    %v9037 = vsub.s32 0, %v9036
    %v9038 = vrot.slane %v9033, %v9037
    %v9039 = vlaneseq
    %v9040 = vshrl.u32 %v9039, 7
    %v9041 = vsub.s32 1, %v9040
    %v9042 = vrot.slane %v9033, %v9041
    %v9043 = vlaneseq
    %v9044 = vshrl.u32 %v9043, 7
    %v9045 = vsub.s32 2, %v9044
    %v9046 = vrot.slane %v9033, %v9045
    %v9047 = vlaneseq
    %v9048 = vshrl.u32 %v9047, 7
    %v9049 = vsub.s32 3, %v9048
    %v9050 = vrot.slane %v9033, %v9049
    %v9058 = vrot.slane %v8934, 3
    %v9059 = vrot.slane %v8935, 3
    %v9060 = vrot.slane %v8936, 3
    %v9160 = vunpack.c.l.b16 %v8937
    %v9161 = vunpack.c.h.b16 %v8937
    %v9162 = vunpack.c.l.b16 %v8938
    %v9163 = vunpack.c.h.b16 %v8938
    %v9164 = vunpack.c.l.b16 %v8939
    %v9165 = vunpack.c.h.b16 %v8939
    %v9166 = vunpack.c.l.b16 %v8940
    %v9167 = vunpack.c.h.b16 %v8940
    %v9168 = vunpack.c.l.b16 %v8941
    %v9169 = vunpack.c.h.b16 %v8941
    %v9170 = vunpack.c.l.b16 %v8942
    %v9171 = vunpack.c.h.b16 %v8942
    %v9172 = vunpack.c.l.b16 %v8943
    %v9173 = vunpack.c.h.b16 %v8943
    %v9174 = vunpack.c.l.b16 %v8944
    %v9175 = vunpack.c.h.b16 %v8944
    %v9176 = vunpack.c.l.b16 %v8945
    %v9177 = vunpack.c.h.b16 %v8945
    %v9178 = vunpack.c.l.b16 %v8946
    %v9179 = vunpack.c.h.b16 %v8946
    %v9180 = vunpack.c.l.b16 %v8947
    %v9181 = vunpack.c.h.b16 %v8947
    %v9182 = vunpack.c.l.b16 %v8948
    %v9183 = vunpack.c.h.b16 %v8948
    %v9184 = vunpack.c.l.b16 %v8949
    %v9185 = vunpack.c.h.b16 %v8949
    %v9186 = vunpack.c.l.b16 %v8950
    %v9187 = vunpack.c.h.b16 %v8950
    %v9188 = vunpack.c.l.b16 %v8951
    %v9189 = vunpack.c.h.b16 %v8951
    %v9190 = vunpack.c.l.b16 %v8952
    %v9191 = vunpack.c.h.b16 %v8952
    %v9192 = vunpack.c.l.b16 %v8953
    %v9193 = vunpack.c.h.b16 %v8953
    %v9194 = vunpack.c.l.b16 %v8954
    %v9195 = vunpack.c.h.b16 %v8954
    %v9196 = vunpack.c.l.b16 %v8955
    %v9197 = vunpack.c.h.b16 %v8955
    %v9198 = vunpack.c.l.b16 %v8956
    %v9199 = vunpack.c.h.b16 %v8956
    %v9200 = vunpack.c.l.b16 %v8957
    %v9201 = vunpack.c.h.b16 %v8957
    %v9202 = vunpack.c.l.b16 %v8958
    %v9203 = vunpack.c.h.b16 %v8958
    %v9204 = vunpack.c.l.b16 %v8959
    %v9205 = vunpack.c.h.b16 %v8959
    %v9206 = vunpack.c.l.b16 %v8960
    %v9207 = vunpack.c.h.b16 %v8960
    %v9208 = vunpack.c.l.b16 %v8961
    %v9209 = vunpack.c.h.b16 %v8961
    %v9210 = vunpack.c.l.b16 %v8962
    %v9211 = vunpack.c.h.b16 %v8962
    %v9212 = vunpack.c.l.b16 %v8963
    %v9213 = vunpack.c.h.b16 %v8963
    %v9214 = vunpack.c.l.b16 %v8964
    %v9215 = vunpack.c.h.b16 %v8964
    %v9216 = vunpack.c.l.b16 %v8965
    %v9217 = vunpack.c.h.b16 %v8965
    %v9218 = vunpack.c.l.b16 %v8966
    %v9219 = vunpack.c.h.b16 %v8966
    %v9220 = vunpack.c.l.b16 %v8967
    %v9221 = vunpack.c.h.b16 %v8967
    %v9222 = vunpack.c.l.b16 %v8968
    %v9223 = vunpack.c.h.b16 %v8968
    %v9224 = vunpack.c.l.b16 %v8969
    %v9225 = vunpack.c.h.b16 %v8969
    %v9226 = vunpack.c.l.b16 %v8970
    %v9227 = vunpack.c.h.b16 %v8970
    %v9228 = vunpack.c.l.b16 %v8971
    %v9229 = vunpack.c.h.b16 %v8971
    %v9230 = vunpack.c.l.b16 %v8972
    %v9231 = vunpack.c.h.b16 %v8972
    %v9232 = vunpack.c.l.b16 %v8973
    %v9233 = vunpack.c.h.b16 %v8973
    %v9234 = vunpack.c.l.b16 %v8974
    %v9235 = vunpack.c.h.b16 %v8974
    %v9236 = vunpack.c.l.b16 %v8975
    %v9237 = vunpack.c.h.b16 %v8975
    %v9238 = vunpack.c.l.b16 %v8976
    %v9239 = vunpack.c.h.b16 %v8976
    %v9240 = vunpack.c.l.b16 %v8977
    %v9241 = vunpack.c.h.b16 %v8977
    %v9242 = vunpack.c.l.b16 %v8978
    %v9243 = vunpack.c.h.b16 %v8978
    %v9244 = vunpack.c.l.b16 %v8979
    %v9245 = vunpack.c.h.b16 %v8979
    %v9246 = vunpack.c.l.b16 %v8980
    %v9247 = vunpack.c.h.b16 %v8980
    %v9248 = vunpack.c.l.b16 %v8981
    %v9249 = vunpack.c.h.b16 %v8981
    %v9250 = vunpack.c.l.b16 %v8982
    %v9251 = vunpack.c.h.b16 %v8982
    %v9252 = vunpack.c.l.b16 %v8983
    %v9253 = vunpack.c.h.b16 %v8983
    %v9254 = vunpack.c.l.b16 %v8984
    %v9255 = vunpack.c.h.b16 %v8984
    %v9256 = vunpack.c.l.b16 %v8985
    %v9257 = vunpack.c.h.b16 %v8985
    %v9258 = vunpack.c.l.b16 %v8986
    %v9259 = vunpack.c.h.b16 %v8986
    %v9260 = vunpack.c.l.b16 %v8987
    %v9261 = vunpack.c.h.b16 %v8987
    %v9262 = vunpack.c.l.b16 %v8988
    %v9263 = vunpack.c.h.b16 %v8988
    %v9264 = vunpack.c.l.b16 %v8989
    %v9265 = vunpack.c.h.b16 %v8989
    %v9266 = vunpack.c.l.b16 %v8990
    %v9267 = vunpack.c.h.b16 %v8990
    %v9268 = vunpack.c.l.b16 %v8991
    %v9269 = vunpack.c.h.b16 %v8991
    %v9270 = vunpack.c.l.b16 %v8992
    %v9271 = vunpack.c.h.b16 %v8992
    %v9272 = vunpack.c.l.b16 %v8993
    %v9273 = vunpack.c.h.b16 %v8993
    %v9274 = vunpack.c.l.b16 %v8994
    %v9275 = vunpack.c.h.b16 %v8994
    %v9276 = vunpack.c.l.b16 %v8995
    %v9277 = vunpack.c.h.b16 %v8995
    %v9278 = vunpack.c.l.b16 %v8996
    %v9279 = vunpack.c.h.b16 %v8996
    %v9280 = vunpack.c.l.b16 %v8997
    %v9281 = vunpack.c.h.b16 %v8997
    %v9282 = vunpack.c.l.b16 %v8998
    %v9283 = vunpack.c.h.b16 %v8998
    %v9284 = vunpack.c.l.b16 %v8999
    %v9285 = vunpack.c.h.b16 %v8999
    %v9286 = vunpack.c.l.b16 %v9000
    %v9287 = vunpack.c.h.b16 %v9000
    %v9288 = vunpack.c.l.b16 %v9001
    %v9289 = vunpack.c.h.b16 %v9001
    %v9290 = vunpack.c.l.b16 %v9002
    %v9291 = vunpack.c.h.b16 %v9002
    %v9292 = vunpack.c.l.b16 %v9003
    %v9293 = vunpack.c.h.b16 %v9003
    %v9294 = vunpack.c.l.b16 %v9004
    %v9295 = vunpack.c.h.b16 %v9004
    %v9296 = vunpack.c.l.b16 %v9005
    %v9297 = vunpack.c.h.b16 %v9005
    %v9298 = vunpack.c.l.b16 %v9006
    %v9299 = vunpack.c.h.b16 %v9006
    %v9300 = vunpack.c.l.b16 %v9007
    %v9301 = vunpack.c.h.b16 %v9007
    %v9302 = vunpack.c.l.b16 %v9008
    %v9303 = vunpack.c.h.b16 %v9008
    %v9304 = vunpack.c.l.b16 %v9009
    %v9305 = vunpack.c.h.b16 %v9009
    %v9306 = vunpack.c.l.b16 %v9010
    %v9307 = vunpack.c.h.b16 %v9010
    %v9308 = vunpack.c.l.b16 %v9011
    %v9309 = vunpack.c.h.b16 %v9011
    %v9310 = vunpack.c.l.b16 %v9012
    %v9311 = vunpack.c.h.b16 %v9012
    %v9312 = vunpack.c.l.b16 %v9013
    %v9313 = vunpack.c.h.b16 %v9013
    %v9314 = vunpack.c.l.b16 %v9014
    %v9315 = vunpack.c.h.b16 %v9014
    %v9316 = vunpack.c.l.b16 %v9015
    %v9317 = vunpack.c.h.b16 %v9015
    %v9318 = vunpack.c.l.b16 %v9016
    %v9319 = vunpack.c.h.b16 %v9016
    %v9320 = vunpack.c.l.b16 %v9017
    %v9321 = vunpack.c.h.b16 %v9017
    %v9322 = vunpack.c.l.b16 %v9018
    %v9323 = vunpack.c.h.b16 %v9018
    %v9324 = vunpack.c.l.b16 %v9019
    %v9325 = vunpack.c.h.b16 %v9019
    %v9326 = vunpack.c.l.b16 %v9020
    %v9327 = vunpack.c.h.b16 %v9020
    %v9328 = vunpack.c.l.b16 %v9021
    %v9329 = vunpack.c.h.b16 %v9021
    %v9330 = vunpack.c.l.b16 %v9022
    %v9331 = vunpack.c.h.b16 %v9022
    %v9332 = vunpack.c.l.b16 %v9023
    %v9333 = vunpack.c.h.b16 %v9023
    %v9334 = vunpack.c.l.b16 %v9024
    %v9335 = vunpack.c.h.b16 %v9024
    %v9336 = vunpack.c.l.b16 %v9025
    %v9337 = vunpack.c.h.b16 %v9025
    %v9338 = vunpack.c.l.b16 %v9026
    %v9339 = vunpack.c.h.b16 %v9026
    %v9340 = vunpack.c.l.b16 %v9027
    %v9341 = vunpack.c.h.b16 %v9027
    %v9342 = vunpack.c.l.b16 %v9028
    %v9343 = vunpack.c.h.b16 %v9028
    %v9344 = vunpack.c.l.b16 %v9029
    %v9345 = vunpack.c.h.b16 %v9029
    %v9346 = vunpack.c.l.b16 %v9030
    %v9347 = vunpack.c.h.b16 %v9030
    %v9348 = vunpack.c.l.b16 %v9031
    %v9349 = vunpack.c.h.b16 %v9031
    %v9350 = vunpack.c.l.b16 %v9032
    %v9351 = vunpack.c.h.b16 %v9032
    %v9352 = vpack.c.b16 %v9164, %v9160
    %v9353 = vpack.c.b16 %v9165, %v9161
    %v9354 = vpack.c.b16 %v9166, %v9162
    %v9355 = vpack.c.b16 %v9167, %v9163
    %v9356 = vpack.c.b16 %v9172, %v9168
    %v9357 = vpack.c.b16 %v9173, %v9169
    %v9358 = vpack.c.b16 %v9174, %v9170
    %v9359 = vpack.c.b16 %v9175, %v9171
    %v9360 = vpack.c.b16 %v9180, %v9176
    %v9361 = vpack.c.b16 %v9181, %v9177
    %v9362 = vpack.c.b16 %v9182, %v9178
    %v9363 = vpack.c.b16 %v9183, %v9179
    %v9364 = vpack.c.b16 %v9188, %v9184
    %v9365 = vpack.c.b16 %v9189, %v9185
    %v9366 = vpack.c.b16 %v9190, %v9186
    %v9367 = vpack.c.b16 %v9191, %v9187
    %v9368 = vpack.c.b16 %v9196, %v9192
    %v9369 = vpack.c.b16 %v9197, %v9193
    %v9370 = vpack.c.b16 %v9198, %v9194
    %v9371 = vpack.c.b16 %v9199, %v9195
    %v9372 = vpack.c.b16 %v9204, %v9200
    %v9373 = vpack.c.b16 %v9205, %v9201
    %v9374 = vpack.c.b16 %v9206, %v9202
    %v9375 = vpack.c.b16 %v9207, %v9203
    %v9376 = vpack.c.b16 %v9212, %v9208
    %v9377 = vpack.c.b16 %v9213, %v9209
    %v9378 = vpack.c.b16 %v9214, %v9210
    %v9379 = vpack.c.b16 %v9215, %v9211
    %v9380 = vpack.c.b16 %v9220, %v9216
    %v9381 = vpack.c.b16 %v9221, %v9217
    %v9382 = vpack.c.b16 %v9222, %v9218
    %v9383 = vpack.c.b16 %v9223, %v9219
    %v9384 = vpack.c.b16 %v9228, %v9224
    %v9385 = vpack.c.b16 %v9229, %v9225
    %v9386 = vpack.c.b16 %v9230, %v9226
    %v9387 = vpack.c.b16 %v9231, %v9227
    %v9388 = vpack.c.b16 %v9236, %v9232
    %v9389 = vpack.c.b16 %v9237, %v9233
    %v9390 = vpack.c.b16 %v9238, %v9234
    %v9391 = vpack.c.b16 %v9239, %v9235
    %v9392 = vpack.c.b16 %v9244, %v9240
    %v9393 = vpack.c.b16 %v9245, %v9241
    %v9394 = vpack.c.b16 %v9246, %v9242
    %v9395 = vpack.c.b16 %v9247, %v9243
    %v9396 = vpack.c.b16 %v9252, %v9248
    %v9397 = vpack.c.b16 %v9253, %v9249
    %v9398 = vpack.c.b16 %v9254, %v9250
    %v9399 = vpack.c.b16 %v9255, %v9251
    %v9400 = vpack.c.b16 %v9260, %v9256
    %v9401 = vpack.c.b16 %v9261, %v9257
    %v9402 = vpack.c.b16 %v9262, %v9258
    %v9403 = vpack.c.b16 %v9263, %v9259
    %v9404 = vpack.c.b16 %v9268, %v9264
    %v9405 = vpack.c.b16 %v9269, %v9265
    %v9406 = vpack.c.b16 %v9270, %v9266
    %v9407 = vpack.c.b16 %v9271, %v9267
    %v9408 = vpack.c.b16 %v9276, %v9272
    %v9409 = vpack.c.b16 %v9277, %v9273
    %v9410 = vpack.c.b16 %v9278, %v9274
    %v9411 = vpack.c.b16 %v9279, %v9275
    %v9412 = vpack.c.b16 %v9284, %v9280
    %v9413 = vpack.c.b16 %v9285, %v9281
    %v9414 = vpack.c.b16 %v9286, %v9282
    %v9415 = vpack.c.b16 %v9287, %v9283
    %v9416 = vpack.c.b16 %v9292, %v9288
    %v9417 = vpack.c.b16 %v9293, %v9289
    %v9418 = vpack.c.b16 %v9294, %v9290
    %v9419 = vpack.c.b16 %v9295, %v9291
    %v9420 = vpack.c.b16 %v9300, %v9296
    %v9421 = vpack.c.b16 %v9301, %v9297
    %v9422 = vpack.c.b16 %v9302, %v9298
    %v9423 = vpack.c.b16 %v9303, %v9299
    %v9424 = vpack.c.b16 %v9308, %v9304
    %v9425 = vpack.c.b16 %v9309, %v9305
    %v9426 = vpack.c.b16 %v9310, %v9306
    %v9427 = vpack.c.b16 %v9311, %v9307
    %v9428 = vpack.c.b16 %v9316, %v9312
    %v9429 = vpack.c.b16 %v9317, %v9313
    %v9430 = vpack.c.b16 %v9318, %v9314
    %v9431 = vpack.c.b16 %v9319, %v9315
    %v9432 = vpack.c.b16 %v9324, %v9320
    %v9433 = vpack.c.b16 %v9325, %v9321
    %v9434 = vpack.c.b16 %v9326, %v9322
    %v9435 = vpack.c.b16 %v9327, %v9323
    %v9436 = vpack.c.b16 %v9332, %v9328
    %v9437 = vpack.c.b16 %v9333, %v9329
    %v9438 = vpack.c.b16 %v9334, %v9330
    %v9439 = vpack.c.b16 %v9335, %v9331
    %v9440 = vpack.c.b16 %v9340, %v9336
    %v9441 = vpack.c.b16 %v9341, %v9337
    %v9442 = vpack.c.b16 %v9342, %v9338
    %v9443 = vpack.c.b16 %v9343, %v9339
    %v9444 = vpack.c.b16 %v9348, %v9344
    %v9445 = vpack.c.b16 %v9349, %v9345
    %v9446 = vpack.c.b16 %v9350, %v9346
    %v9447 = vpack.c.b16 %v9351, %v9347
    %9544 = vmatprep.subr.bf16.mxu0 %v9381
    %9545 = vmatpush1.bf16.msra.mxu0 %v9380
    %9546 = vmatprep.subr.bf16.mxu0 %v9377
    %9547 = vmatpush1.bf16.msra.mxu0 %v9376
    %9548 = vmatprep.subr.bf16.mxu0 %v9373
    %9549 = vmatpush1.bf16.msra.mxu0 %v9372
    %9550 = vmatprep.subr.bf16.mxu0 %v9369
    %9551 = vmatpush1.bf16.msra.mxu0 %v9368
    %9552 = vmatprep.subr.bf16.mxu0 %v9365
    %9553 = vmatpush1.bf16.msra.mxu0 %v9364
    %9554 = vmatprep.subr.bf16.mxu0 %v9361
    %9555 = vmatpush1.bf16.msra.mxu0 %v9360
    %9556 = vmatprep.subr.bf16.mxu0 %v9357
    %9557 = vmatpush1.bf16.msra.mxu0 %v9356
    %9558 = vmatprep.subr.bf16.mxu0 %v9353
    %9559 = vmatpush1.bf16.msra.mxu0 %v9352
    %9560 = vmatprep.subr.bf16.mxu0 %v9413
    %9561 = vmatpush2.bf16.msra.mxu0 %v9412
    %9562 = vmatprep.subr.bf16.mxu0 %v9409
    %9563 = vmatpush2.bf16.msra.mxu0 %v9408
    %9564 = vmatprep.subr.bf16.mxu0 %v9405
    %9565 = vmatpush2.bf16.msra.mxu0 %v9404
    %9566 = vmatprep.subr.bf16.mxu0 %v9401
    %9567 = vmatpush2.bf16.msra.mxu0 %v9400
    %9568 = vmatprep.subr.bf16.mxu0 %v9397
    %9569 = vmatpush2.bf16.msra.mxu0 %v9396
    %9570 = vmatprep.subr.bf16.mxu0 %v9393
    %9571 = vmatpush2.bf16.msra.mxu0 %v9392
    %9572 = vmatprep.subr.bf16.mxu0 %v9389
    %9573 = vmatpush2.bf16.msra.mxu0 %v9388
    %9574 = vmatprep.subr.bf16.mxu0 %v9385
    %9575 = vmatpush2.bf16.msra.mxu0 %v9384
    %9576 = vmatprep.mubr.bf16.mxu0 %v9059
    %9577 = vmatmul.mubr.bf16.gmra.mxu0 %v9058
    %v9578 = vpop.f32.mrf.mxu0
    %v9579 = vadd.f32 %v9038, %v9578
    %v9580 = vpop.f32.mrf.mxu0
    %v9581 = vadd.f32 %v9042, %v9580
    %v9582 = vpop.f32.mrf.mxu0
    %v9583 = vpop.f32.mrf.mxu0
    %9584 = vdwg.mxu0
    %9585 = vmatprep.subr.bf16.mxu0 %v9445
    %9586 = vmatpush1.bf16.msra.mxu0 %v9444
    %9587 = vmatprep.subr.bf16.mxu0 %v9441
    %9588 = vmatpush1.bf16.msra.mxu0 %v9440
    %9589 = vmatprep.subr.bf16.mxu0 %v9437
    %9590 = vmatpush1.bf16.msra.mxu0 %v9436
    %9591 = vmatprep.subr.bf16.mxu0 %v9433
    %9592 = vmatpush1.bf16.msra.mxu0 %v9432
    %9593 = vmatprep.subr.bf16.mxu0 %v9429
    %9594 = vmatpush1.bf16.msra.mxu0 %v9428
    %9595 = vmatprep.subr.bf16.mxu0 %v9425
    %9596 = vmatpush1.bf16.msra.mxu0 %v9424
    %9597 = vmatprep.subr.bf16.mxu0 %v9421
    %9598 = vmatpush1.bf16.msra.mxu0 %v9420
    %9599 = vmatprep.subr.bf16.mxu0 %v9417
    %9600 = vmatpush1.bf16.msra.mxu0 %v9416
    %9601 = vmatprep.subr.bf16.mxu0 0
    %9602 = vmatpush2.bf16.msra.mxu0 0
    %9603 = vmatprep.subr.bf16.mxu0 0
    %9604 = vmatpush2.bf16.msra.mxu0 0
    %9605 = vmatprep.subr.bf16.mxu0 0
    %9606 = vmatpush2.bf16.msra.mxu0 0
    %9607 = vmatprep.subr.bf16.mxu0 0
    %9608 = vmatpush2.bf16.msra.mxu0 0
    %9609 = vmatprep.subr.bf16.mxu0 0
    %9610 = vmatpush2.bf16.msra.mxu0 0
    %9611 = vmatprep.subr.bf16.mxu0 0
    %9612 = vmatpush2.bf16.msra.mxu0 0
    %9613 = vmatprep.subr.bf16.mxu0 0
    %9614 = vmatpush2.bf16.msra.mxu0 0
    %9615 = vmatprep.subr.bf16.mxu0 0
    %9616 = vmatpush2.bf16.msra.mxu0 0
    %9617 = vmatprep.mubr.bf16.mxu0 0
    %9618 = vmatmul.mubr.bf16.gmra.mxu0 %v9060
    %v9619 = vpop.f32.mrf.mxu0
    %v9620 = vadd.f32 %v9579, %v9619
    %v9621 = vpop.f32.mrf.mxu0
    %v9622 = vadd.f32 %v9581, %v9621
    %v9623 = vpop.f32.mrf.mxu0
    %v9624 = vpop.f32.mrf.mxu0
    %9625 = vdwg.mxu0
    %9626 = vmatprep.subr.bf16.mxu0 %v9383
    %9627 = vmatpush1.bf16.msra.mxu0 %v9382
    %9628 = vmatprep.subr.bf16.mxu0 %v9379
    %9629 = vmatpush1.bf16.msra.mxu0 %v9378
    %9630 = vmatprep.subr.bf16.mxu0 %v9375
    %9631 = vmatpush1.bf16.msra.mxu0 %v9374
    %9632 = vmatprep.subr.bf16.mxu0 %v9371
    %9633 = vmatpush1.bf16.msra.mxu0 %v9370
    %9634 = vmatprep.subr.bf16.mxu0 %v9367
    %9635 = vmatpush1.bf16.msra.mxu0 %v9366
    %9636 = vmatprep.subr.bf16.mxu0 %v9363
    %9637 = vmatpush1.bf16.msra.mxu0 %v9362
    %9638 = vmatprep.subr.bf16.mxu0 %v9359
    %9639 = vmatpush1.bf16.msra.mxu0 %v9358
    %9640 = vmatprep.subr.bf16.mxu0 %v9355
    %9641 = vmatpush1.bf16.msra.mxu0 %v9354
    %9642 = vmatprep.subr.bf16.mxu0 %v9415
    %9643 = vmatpush2.bf16.msra.mxu0 %v9414
    %9644 = vmatprep.subr.bf16.mxu0 %v9411
    %9645 = vmatpush2.bf16.msra.mxu0 %v9410
    %9646 = vmatprep.subr.bf16.mxu0 %v9407
    %9647 = vmatpush2.bf16.msra.mxu0 %v9406
    %9648 = vmatprep.subr.bf16.mxu0 %v9403
    %9649 = vmatpush2.bf16.msra.mxu0 %v9402
    %9650 = vmatprep.subr.bf16.mxu0 %v9399
    %9651 = vmatpush2.bf16.msra.mxu0 %v9398
    %9652 = vmatprep.subr.bf16.mxu0 %v9395
    %9653 = vmatpush2.bf16.msra.mxu0 %v9394
    %9654 = vmatprep.subr.bf16.mxu0 %v9391
    %9655 = vmatpush2.bf16.msra.mxu0 %v9390
    %9656 = vmatprep.subr.bf16.mxu0 %v9387
    %9657 = vmatpush2.bf16.msra.mxu0 %v9386
    %9658 = vmatprep.mubr.bf16.mxu0 %v9059
    %9659 = vmatmul.mubr.bf16.gmra.mxu0 %v9058
    %v9660 = vpop.f32.mrf.mxu0
    %v9661 = vadd.f32 %v9046, %v9660
    %v9662 = vpop.f32.mrf.mxu0
    %v9663 = vadd.f32 %v9050, %v9662
    %v9664 = vpop.f32.mrf.mxu0
    %v9665 = vpop.f32.mrf.mxu0
    %9666 = vdwg.mxu0
    %9667 = vmatprep.subr.bf16.mxu0 %v9447
    %9668 = vmatpush1.bf16.msra.mxu0 %v9446
    %9669 = vmatprep.subr.bf16.mxu0 %v9443
    %9670 = vmatpush1.bf16.msra.mxu0 %v9442
    %9671 = vmatprep.subr.bf16.mxu0 %v9439
    %9672 = vmatpush1.bf16.msra.mxu0 %v9438
    %9673 = vmatprep.subr.bf16.mxu0 %v9435
    %9674 = vmatpush1.bf16.msra.mxu0 %v9434
    %9675 = vmatprep.subr.bf16.mxu0 %v9431
    %9676 = vmatpush1.bf16.msra.mxu0 %v9430
    %9677 = vmatprep.subr.bf16.mxu0 %v9427
    %9678 = vmatpush1.bf16.msra.mxu0 %v9426
    %9679 = vmatprep.subr.bf16.mxu0 %v9423
    %9680 = vmatpush1.bf16.msra.mxu0 %v9422
    %9681 = vmatprep.subr.bf16.mxu0 %v9419
    %9682 = vmatpush1.bf16.msra.mxu0 %v9418
    %9683 = vmatprep.subr.bf16.mxu0 0
    %9684 = vmatpush2.bf16.msra.mxu0 0
    %9685 = vmatprep.subr.bf16.mxu0 0
    %9686 = vmatpush2.bf16.msra.mxu0 0
    %9687 = vmatprep.subr.bf16.mxu0 0
    %9688 = vmatpush2.bf16.msra.mxu0 0
    %9689 = vmatprep.subr.bf16.mxu0 0
    %9690 = vmatpush2.bf16.msra.mxu0 0
    %9691 = vmatprep.subr.bf16.mxu0 0
    %9692 = vmatpush2.bf16.msra.mxu0 0
    %9693 = vmatprep.subr.bf16.mxu0 0
    %9694 = vmatpush2.bf16.msra.mxu0 0
    %9695 = vmatprep.subr.bf16.mxu0 0
    %9696 = vmatpush2.bf16.msra.mxu0 0
    %9697 = vmatprep.subr.bf16.mxu0 0
    %9698 = vmatpush2.bf16.msra.mxu0 0
    %9699 = vmatprep.mubr.bf16.mxu0 0
    %9700 = vmatmul.mubr.bf16.gmra.mxu0 %v9060
    %v9701 = vpop.f32.mrf.mxu0
    %v9702 = vadd.f32 %v9661, %v9701
    %v9703 = vpop.f32.mrf.mxu0
    %v9704 = vadd.f32 %v9663, %v9703
    %v9705 = vpop.f32.mrf.mxu0
    %v9706 = vpop.f32.mrf.mxu0
    %9707 = vdwg.mxu0
    %v9712 = vcombine.low %v9620, %v9622
    %v9713 = vcombine.low %v9702, %v9704
    %v9715 = vunpack.c.l.s4 1983009808
    %v9716 = vunpack.c.0.s8 %v9715
    %v9717 = vlaneseq
    %v9718 = vshrl.u32 %v9717, 7
    %v9719 = vsub.s32 %v9716, %v9718
    %v9720 = vrot.slane %v9712, %v9719
    %v9722 = vunpack.c.l.s4 1983009808
    %v9723 = vunpack.c.0.s8 %v9722
    %v9724 = vlaneseq
    %v9725 = vshrl.u32 %v9724, 7
    %v9726 = vsub.s32 %v9723, %v9725
    %v9727 = vrot.slane %v9713, %v9726
    %v9728 = vcombine.low %v9720, %v9727
    %9730 = vst [vmem:[#allocation15] sm:$0xff] %v9728
    // Predicated region
    $region42: #{tpu_custom_call.1} parent=1 // pred_check
      _
    $region43: #{tpu_custom_call.1} parent=1 // pred_check_branch
      %9732 = sbr.rel (0) target = $region45
    $region44: #{tpu_custom_call.1} parent=1 // pred_region
      %s9734 = ssub.s32 768, 768
      %9735 = vsyncadd [#allocation8], %s9734
      %s9736 = sshll.u32 [#allocation14], 4
      %s9737 = int_to_ptr.vmem [resolvable:$true] %s9736
      %9742 = dma.vmem_to_hbm [thread:$0]  %s9737, 768, %s6, [#allocation8], 384, 384, 24
    $region45: #{tpu_custom_call.1} parent=1 // pred_fallthru
      _
    // Predicated region
    $region46: #{tpu_custom_call.1} parent=1 // pred_check
      _
    $region47: #{tpu_custom_call.1} parent=1 // pred_check_branch
      %9744 = sbr.rel (0) target = $region49
    $region48: #{tpu_custom_call.1} parent=1 // pred_region
      %s9746 = ssub.s32 128, 128
      %9747 = vsyncadd [#allocation16], %s9746
      %s9749 = sshll.u32 [#allocation15], 4
      %s9750 = int_to_ptr.vmem [resolvable:$true] %s9749
      %9752 = dma.vmem_to_hbm [thread:$0]  %s9750, 128, %s7, [#allocation16]
    $region49: #{tpu_custom_call.1} parent=1 // pred_fallthru
      _
    // Predicated region
    $region50: #{tpu_custom_call.1} parent=1 // pred_check
      _
    $region51: #{tpu_custom_call.1} parent=1 // pred_check_branch
      %9754 = sbr.rel (0) target = $region53
    $region52: #{tpu_custom_call.1} parent=1 // pred_region
      %s9756 = ssub.s32 96, 96
      %9757 = vsyncadd [#allocation16], %s9756
      %s9759 = sshll.u32 [#allocation17], 4
      %s9760 = int_to_ptr.vmem [resolvable:$true] %s9759
      %9762 = dma.vmem_to_hbm [thread:$0]  %s9760, 96, %s8, [#allocation16]
    $region53: #{tpu_custom_call.1} parent=1 // pred_fallthru
      _
    // Predicated region
    $region54: #{tpu_custom_call.1} parent=1 // pred_check
      _
    $region55: #{tpu_custom_call.1} parent=1 // pred_check_branch
      %9764 = sbr.rel (0) target = $region57
    $region56: #{tpu_custom_call.1} parent=1 // pred_region
      %9765 = dma.done [#allocation8], 768
    $region57: #{tpu_custom_call.1} parent=1 // pred_fallthru
      _
    // Predicated region
    $region58: #{tpu_custom_call.1} parent=1 // pred_check
      _
    $region59: #{tpu_custom_call.1} parent=1 // pred_check_branch
      %9767 = sbr.rel (0) target = $region61
    $region60: #{tpu_custom_call.1} parent=1 // pred_region
      %9768 = dma.done [#allocation16], 128
    $region61: #{tpu_custom_call.1} parent=1 // pred_fallthru
      _
    // Predicated region
    $region62: #{tpu_custom_call.1} parent=1 // pred_check
      _
    $region63: #{tpu_custom_call.1} parent=1 // pred_check_branch
      %9770 = sbr.rel (0) target = $region65
    $region64: #{tpu_custom_call.1} parent=1 // pred_region
      %9771 = dma.done [#allocation16], 96
    $region65: #{tpu_custom_call.1} parent=1 // pred_fallthru
      _
    %9772 = vsyncpa [#allocation7], 1
    %9773 = vsyncpa [#allocation10], 1
    %9774 = vsyncpa [#allocation13], 1
    %9775 = vsyncpa [#allocation8], 1
    %9776 = vsyncpa [#allocation16], 1
  %9777 = vsyncmov [#allocation5]
  %s9778 = vpop.sfrf %9777
  %p9779 = scmp.eq.s32.totalorder %s9778, 0
  %p9780 = pneg %p9779
  %9782 = shalt.err (%p9780)
  %s9783 = scalar_lea.sflag [#allocation5], 1
  %9784 = vsyncmov %s9783
  %s9785 = vpop.sfrf %9784
  %p9786 = scmp.eq.s32.totalorder %s9785, 0
  %p9787 = pneg %p9786
  %9789 = shalt.err (%p9787)

</llo_original>
